<compile_context>
chip_gen: v5e
topology: v5e:2x2
jax: 0.10.0
libtpu: 0.0.40
codegen_flags: <defaults>
</compile_context>

<pallas_src>
import math
import functools

import jax
import jax.numpy as jnp
from jax import lax
from jax.experimental import pallas as pl
from jax.experimental.pallas import tpu as pltpu


# ---------------------------------- kernel ----------------------------------
def reward_kernel(tok_ref, len_ref,
                  w0t_ref, b0_ref, bhh0n_ref,
                  wblk_ref, wih1_ref, b1rz_ref, bih1n_ref, bhh1n_ref,
                  wprojt_ref, bproj_ref,
                  out_ref):
    f32 = jnp.float32
    bf16 = jnp.bfloat16

    threeH, V = w0t_ref.shape
    H = threeH // 3
    N = tok_ref.shape[2]          # T * 2B  (lane axis, n = t*B2 + b2)
    B2 = len_ref.shape[2]         # 2B  (left batch stacked with right batch)
    T = N // B2
    B = B2 // 2

    tok = tok_ref[0]              # (1, N)  int32, lane-dense
    lens = len_ref[0]             # (1, B2) int32

    # ---- resident weights / biases (hoisted out of the time loop) ----
    wblk = wblk_ref[...]          # (6H, 2H) bf16  block-diag [Whh0^T, Whh1^T]
    wih1 = wih1_ref[...]          # (3H, H)  bf16
    bhh0n = bhh0n_ref[...]        # (H, 1)   f32
    b1rz = b1rz_ref[...]          # (2H, 1)  f32  (bih1 + bhh1 on r,z gates)
    bih1n = bih1n_ref[...]        # (H, 1)   f32
    bhh1n = bhh1n_ref[...]        # (H, 1)   f32

    # ---- hoisted embedding gather + layer-0 input projection ----
    # gi0_all[:, t*B2 + b] = Wih0^T @ emb[tok_t_b] + (bih0 + bhh0|rz, bih0|n)
    onehot_t = (lax.broadcasted_iota(jnp.int32, (V, N), 0) == tok).astype(bf16)
    gi0_all = jnp.dot(w0t_ref[...], onehot_t,
                      preferred_element_type=f32) + b0_ref[...]           # (3H, N)

    h0 = jnp.zeros((H, B2), f32)
    h1 = jnp.zeros((H, B2), f32)

    # Fully unrolled recurrence (T is small and static).  Batch lives on the
    # lane axis, gates on sublanes, so all gate slices are sublane slices.
    for t in range(T):
        # one fused block-diagonal recurrent matmul for both layers
        hs = jnp.concatenate([h0, h1], axis=0).astype(bf16)               # (2H, B2)
        gh = jnp.dot(wblk, hs, preferred_element_type=f32)                # (6H, B2)
        gh0 = gh[:threeH]
        gh1 = gh[threeH:]
        gi0 = gi0_all[:, t * B2:(t + 1) * B2]                             # (3H, B2)

        # ----- layer-0 GRU cell (merged r/z sigmoid, rz biases pre-folded) ---
        rz0 = jax.nn.sigmoid(gi0[:2 * H] + gh0[:2 * H])
        r0, z0 = rz0[:H], rz0[H:]
        n0 = jnp.tanh(gi0[2 * H:] + r0 * (gh0[2 * H:] + bhh0n))
        h0_new = (1.0 - z0) * n0 + z0 * h0

        # ----- layer-1 GRU cell -----
        gi1 = jnp.dot(wih1, h0_new.astype(bf16),
                      preferred_element_type=f32)                         # (3H, B2)
        rz1 = jax.nn.sigmoid(gi1[:2 * H] + gh1[:2 * H] + b1rz)
        r1, z1 = rz1[:H], rz1[H:]
        n1 = jnp.tanh(gi1[2 * H:] + bih1n + r1 * (gh1[2 * H:] + bhh1n))
        h1_new = (1.0 - z1) * n1 + z1 * h1

        # packed-sequence semantics: only sequences with t < len advance.
        # (per-step compare on one 1xB2 vreg; cheaper than a precomputed mask
        #  plus per-step sublane slicing)
        m = (lens > t).astype(f32)                                        # (1, B2)
        h0 = m * h0_new + (1.0 - m) * h0
        h1 = m * h1_new + (1.0 - m) * h1

    # ---- fused projection for both sides + cosine similarity ----
    f_t = jnp.tanh(jnp.dot(wprojt_ref[...], h1.astype(bf16),
                           preferred_element_type=f32) + bproj_ref[...])  # (F, B2)
    fl = f_t[:, :B]
    fr = f_t[:, B:]
    eps = 1e-8
    dots = jnp.sum(fl * fr, axis=0, keepdims=True)                        # (1, B)
    nl2 = jnp.sum(fl * fl, axis=0, keepdims=True)
    nr2 = jnp.sum(fr * fr, axis=0, keepdims=True)
    inv = lax.rsqrt(jnp.maximum(nl2, eps * eps) * jnp.maximum(nr2, eps * eps))
    out_ref[0] = dots * inv                                               # lane-dense


# --------------------------------- wrapper ----------------------------------
@functools.partial(jax.jit, static_argnames=("block_pairs",))
def reward_model_forward(l_tokens, r_tokens, llen, rlen, params, *, block_pairs=16):
    """l_tokens, r_tokens: (B_total, T) int32 (batch-major, like the module);
    llen, rlen: (B_total,) int32 valid lengths (>= 1).
    Returns cosine similarity (B_total,) float32."""
    B_total, T = l_tokens.shape
    assert B_total % block_pairs == 0  # TODO(synk): pad the last block for ragged batches
    G = B_total // block_pairs
    BB = block_pairs
    B2 = 2 * BB
    N = T * B2

    emb, wih0, whh0 = params["emb"], params["wih0"], params["whh0"]
    bih0, bhh0 = params["bih0"][0], params["bhh0"][0]
    wih1, whh1 = params["wih1"], params["whh1"]
    bih1, bhh1 = params["bih1"][0], params["bhh1"][0]
    wproj, bproj = params["wproj"], params["bproj"][0]
    V, H = emb.shape
    F = wproj.shape[1]
    bf16 = jnp.bfloat16

    # ---- one-time weight prep (transposed layouts: gates on sublanes) ----
    w0t = (emb @ wih0).T.astype(bf16)                                  # (3H, V)
    b0 = jnp.concatenate([bih0[:2 * H] + bhh0[:2 * H], bih0[2 * H:]]).reshape(3 * H, 1)
    bhh0n = bhh0[2 * H:].reshape(H, 1)
    zhh = jnp.zeros((3 * H, H), jnp.float32)
    wblk_t = jnp.concatenate(
        [jnp.concatenate([whh0.T, zhh], axis=1),
         jnp.concatenate([zhh, whh1.T], axis=1)], axis=0).astype(bf16)  # (6H, 2H)
    wih1_t = wih1.T.astype(bf16)                                       # (3H, H)
    b1rz = (bih1[:2 * H] + bhh1[:2 * H]).reshape(2 * H, 1)
    bih1n = bih1[2 * H:].reshape(H, 1)
    bhh1n = bhh1[2 * H:].reshape(H, 1)
    wproj_t = wproj.T.astype(bf16)                                     # (F, H)
    bproj_c = bproj.reshape(F, 1)

    # ---- per-call data prep: stack left/right, time-major, lane-dense ----
    lt = l_tokens.reshape(G, BB, T)
    rt = r_tokens.reshape(G, BB, T)
    both = jnp.concatenate([lt, rt], axis=1)                           # (G, B2, T)
    tok_arr = jnp.transpose(both, (0, 2, 1)).reshape(G, 1, N).astype(jnp.int32)
    len_arr = jnp.concatenate([llen.reshape(G, BB), rlen.reshape(G, BB)],
                              axis=1).reshape(G, 1, B2).astype(jnp.int32)

    # weights get constant index_maps -> loaded to VMEM once, resident over the grid
    const2 = lambda shape: pl.BlockSpec(shape, lambda g: (0, 0))

    out = pl.pallas_call(
        reward_kernel,
        out_shape=jax.ShapeDtypeStruct((G, 1, BB), jnp.float32),
        grid=(G,),
        in_specs=[
            pl.BlockSpec((1, 1, N), lambda g: (g, 0, 0)),     # tokens (per block)
            pl.BlockSpec((1, 1, B2), lambda g: (g, 0, 0)),    # lengths (per block)
            const2((3 * H, V)),                               # w0t  = (emb @ Wih0)^T
            const2((3 * H, 1)),                               # b0
            const2((H, 1)),                                   # bhh0 | n
            const2((6 * H, 2 * H)),                           # blockdiag(Whh0^T, Whh1^T)
            const2((3 * H, H)),                               # Wih1^T
            const2((2 * H, 1)),                               # bih1+bhh1 | rz
            const2((H, 1)),                                   # bih1 | n
            const2((H, 1)),                                   # bhh1 | n
            const2((F, H)),                                   # Wproj^T
            const2((F, 1)),                                   # bproj
        ],
        out_specs=pl.BlockSpec((1, 1, BB), lambda g: (g, 0, 0)),
        compiler_params=pltpu.CompilerParams(
            dimension_semantics=("parallel",)),               # megacore on v7x
    )(tok_arr, len_arr, w0t, b0, bhh0n, wblk_t, wih1_t, b1rz, bih1n, bhh1n,
      wproj_t, bproj_c)
    return out.reshape(B_total)


# ----------------------------- pure-JAX reference ----------------------------
def reward_model_reference(l_tokens, r_tokens, llen, rlen, params):
    H = params["whh0"].shape[0]
    hi = lax.Precision.HIGHEST

    def gru_cell(x_t, h_prev, wih, whh, bih, bhh):
        gi = jnp.dot(x_t, wih, precision=hi) + bih
        gh = jnp.dot(h_prev, whh, precision=hi) + bhh
        r = jax.nn.sigmoid(gi[:, :H] + gh[:, :H])
        z = jax.nn.sigmoid(gi[:, H:2 * H] + gh[:, H:2 * H])
        n = jnp.tanh(gi[:, 2 * H:] + r * gh[:, 2 * H:])
        return (1.0 - z) * n + z * h_prev

    def run(tokens, lens):
        x = params["emb"][tokens]                       # (B, T, H)
        Bn, T, _ = x.shape
        h0 = jnp.zeros((Bn, H), jnp.float32)
        h1 = jnp.zeros((Bn, H), jnp.float32)
        for t in range(T):
            h0n = gru_cell(x[:, t], h0, params["wih0"], params["whh0"],
                           params["bih0"], params["bhh0"])
            h1n = gru_cell(h0n, h1, params["wih1"], params["whh1"],
                           params["bih1"], params["bhh1"])
            valid = (t < lens)[:, None]
            h0 = jnp.where(valid, h0n, h0)
            h1 = jnp.where(valid, h1n, h1)
        return jnp.tanh(jnp.dot(h1, params["wproj"], precision=hi) + params["bproj"])

    fl = run(l_tokens, llen)
    fr = run(r_tokens, rlen)
    eps = 1e-8
    dots = jnp.sum(fl * fr, axis=-1)
    nl = jnp.maximum(jnp.linalg.norm(fl, axis=-1), eps)
    nr = jnp.maximum(jnp.linalg.norm(fr, axis=-1), eps)
    return dots / (nl * nr)


# ------------------------------- param init ----------------------------------
def init_params(key, word_num, rnn_size, feature_size):
    H, F, V = rnn_size, feature_size, word_num
    ks = jax.random.split(key, 11)
    s = 1.0 / math.sqrt(H)
    u = lambda k, shape: jax.random.uniform(k, shape, jnp.float32, -s, s)
    return {
        "emb": jax.random.normal(ks[0], (V, H), jnp.float32),
        # GRU weights stored transposed as (in_dim, 3H), PyTorch gate order [r, z, n]
        "wih0": u(ks[1], (H, 3 * H)), "whh0": u(ks[2], (H, 3 * H)),
        "bih0": u(ks[3], (1, 3 * H)), "bhh0": u(ks[4], (1, 3 * H)),
        "wih1": u(ks[5], (H, 3 * H)), "whh1": u(ks[6], (H, 3 * H)),
        "bih1": u(ks[7], (1, 3 * H)), "bhh1": u(ks[8], (1, 3 * H)),
        # encoder2hid: Linear(H, F)
        "wproj": u(ks[9], (H, F)), "bproj": u(ks[10], (1, F)),
    }


if __name__ == "__main__":
    WORD_NUM, RNN_SIZE, FEAT_SIZE = 64, 32, 16
    T, B_TOTAL, BLOCK_PAIRS = 10, 64, 16          # 4 grid steps of 16 pairs each

    key = jax.random.PRNGKey(0)
    kp, k1, k2, k3, k4 = jax.random.split(key, 5)
    params = init_params(kp, WORD_NUM, RNN_SIZE, FEAT_SIZE)

    l_tokens = jax.random.randint(k1, (B_TOTAL, T), 0, WORD_NUM, jnp.int32)
    r_tokens = jax.random.randint(k2, (B_TOTAL, T), 0, WORD_NUM, jnp.int32)
    llen = jax.random.randint(k3, (B_TOTAL,), 1, T + 1, jnp.int32)
    rlen = jax.random.randint(k4, (B_TOTAL,), 1, T + 1, jnp.int32)

    cos_sim = reward_model_forward(l_tokens, r_tokens, llen, rlen, params,
                                   block_pairs=BLOCK_PAIRS)
    cos_sim = jax.block_until_ready(cos_sim)

    ref = reward_model_reference(l_tokens, r_tokens, llen, rlen, params)
    assert cos_sim.shape == (B_TOTAL,)
    assert bool(jnp.all(jnp.isfinite(cos_sim)))
    max_err = float(jnp.max(jnp.abs(cos_sim - ref)))
    # bf16 MXU operands (f32 accumulate) vs f32-HIGHEST reference
    assert max_err < 4e-2, (max_err, cos_sim[:8], ref[:8])
    print("KERNEL_OK")
</pallas_src>

<mosaic_0001>
module attributes {stable_mosaic.version = 11 : i64} {
  func.func @reward_kernel(%arg0: i32, %arg1: memref<1x1x320xi32, #tpu.memory_space<vmem>>, %arg2: memref<1x1x32xi32, #tpu.memory_space<vmem>>, %arg3: memref<96x64xbf16, #tpu.memory_space<vmem>>, %arg4: memref<96x1xf32, #tpu.memory_space<vmem>>, %arg5: memref<32x1xf32, #tpu.memory_space<vmem>>, %arg6: memref<192x64xbf16, #tpu.memory_space<vmem>>, %arg7: memref<96x32xbf16, #tpu.memory_space<vmem>>, %arg8: memref<64x1xf32, #tpu.memory_space<vmem>>, %arg9: memref<32x1xf32, #tpu.memory_space<vmem>>, %arg10: memref<32x1xf32, #tpu.memory_space<vmem>>, %arg11: memref<16x32xbf16, #tpu.memory_space<vmem>>, %arg12: memref<16x1xf32, #tpu.memory_space<vmem>>, %arg13: memref<1x1x16xf32, #tpu.memory_space<vmem>>) attributes {dimension_semantics = [#tpu.dimension_semantics<parallel>], iteration_bounds = array<i64: 4>, scalar_prefetch = 0 : i64, scratch_operands = 0 : i64, tpu.core_type = #tpu.core_type<tc>, window_params = [{transform_indices = @transform_0, window_bounds = array<i64: 1, 1, 320>}, {transform_indices = @transform_1, window_bounds = array<i64: 1, 1, 32>}, {pipeline_mode = #tpu.pipeline_mode<synchronous>, transform_indices = @transform_2, window_bounds = array<i64: 96, 64>}, {pipeline_mode = #tpu.pipeline_mode<synchronous>, transform_indices = @transform_3, window_bounds = array<i64: 96, 1>}, {pipeline_mode = #tpu.pipeline_mode<synchronous>, transform_indices = @transform_4, window_bounds = array<i64: 32, 1>}, {pipeline_mode = #tpu.pipeline_mode<synchronous>, transform_indices = @transform_5, window_bounds = array<i64: 192, 64>}, {pipeline_mode = #tpu.pipeline_mode<synchronous>, transform_indices = @transform_6, window_bounds = array<i64: 96, 32>}, {pipeline_mode = #tpu.pipeline_mode<synchronous>, transform_indices = @transform_7, window_bounds = array<i64: 64, 1>}, {pipeline_mode = #tpu.pipeline_mode<synchronous>, transform_indices = @transform_8, window_bounds = array<i64: 32, 1>}, {pipeline_mode = #tpu.pipeline_mode<synchronous>, transform_indices = @transform_9, window_bounds = array<i64: 32, 1>}, {pipeline_mode = #tpu.pipeline_mode<synchronous>, transform_indices = @transform_10, window_bounds = array<i64: 16, 32>}, {pipeline_mode = #tpu.pipeline_mode<synchronous>, transform_indices = @transform_11, window_bounds = array<i64: 16, 1>}, {transform_indices = @transform_12, window_bounds = array<i64: 1, 1, 16>}]} {
    %c0 = arith.constant 0 : index
    %c0_0 = arith.constant 0 : index
    %c0_1 = arith.constant 0 : index
    %0 = vector.load %arg1[%c0, %c0_0, %c0_1] : memref<1x1x320xi32, #tpu.memory_space<vmem>>, vector<1x1x320xi32>
    %1 = vector.shape_cast %0 : vector<1x1x320xi32> to vector<1x320xi32>
    %c0_2 = arith.constant 0 : index
    %c0_3 = arith.constant 0 : index
    %c0_4 = arith.constant 0 : index
    %2 = vector.load %arg2[%c0_2, %c0_3, %c0_4] : memref<1x1x32xi32, #tpu.memory_space<vmem>>, vector<1x1x32xi32>
    %3 = vector.shape_cast %2 : vector<1x1x32xi32> to vector<1x32xi32>
    %c0_5 = arith.constant 0 : index
    %c0_6 = arith.constant 0 : index
    %4 = vector.load %arg6[%c0_5, %c0_6] : memref<192x64xbf16, #tpu.memory_space<vmem>>, vector<192x64xbf16>
    %c0_7 = arith.constant 0 : index
    %c0_8 = arith.constant 0 : index
    %5 = vector.load %arg7[%c0_7, %c0_8] : memref<96x32xbf16, #tpu.memory_space<vmem>>, vector<96x32xbf16>
    %c0_9 = arith.constant 0 : index
    %c0_10 = arith.constant 0 : index
    %6 = vector.load %arg5[%c0_9, %c0_10] : memref<32x1xf32, #tpu.memory_space<vmem>>, vector<32x1xf32>
    %c0_11 = arith.constant 0 : index
    %c0_12 = arith.constant 0 : index
    %7 = vector.load %arg8[%c0_11, %c0_12] : memref<64x1xf32, #tpu.memory_space<vmem>>, vector<64x1xf32>
    %c0_13 = arith.constant 0 : index
    %c0_14 = arith.constant 0 : index
    %8 = vector.load %arg9[%c0_13, %c0_14] : memref<32x1xf32, #tpu.memory_space<vmem>>, vector<32x1xf32>
    %c0_15 = arith.constant 0 : index
    %c0_16 = arith.constant 0 : index
    %9 = vector.load %arg10[%c0_15, %c0_16] : memref<32x1xf32, #tpu.memory_space<vmem>>, vector<32x1xf32>
    %10 = tpu.iota {dimensions = array<i32: 0>} : vector<64x320xi32>
    %11 = vector.broadcast %1 : vector<1x320xi32> to vector<64x320xi32>
    %12 = arith.cmpi eq, %10, %11 : vector<64x320xi32>
    %13 = arith.extui %12 : vector<64x320xi1> to vector<64x320xi32>
    %14 = arith.sitofp %13 : vector<64x320xi32> to vector<64x320xf32>
    %15 = arith.truncf %14 : vector<64x320xf32> to vector<64x320xbf16>
    %c0_17 = arith.constant 0 : index
    %c0_18 = arith.constant 0 : index
    %16 = vector.load %arg3[%c0_17, %c0_18] : memref<96x64xbf16, #tpu.memory_space<vmem>>, vector<96x64xbf16>
    %cst = arith.constant dense<0.000000e+00> : vector<96x320xf32>
    %17 = tpu.matmul %16, %15, %cst {dimension_numbers = #tpu.dot_dimension_numbers<[1], [0], [0], [1], [0, 0, 1, 1], [], []>} : vector<96x64xbf16>, vector<64x320xbf16>, vector<96x320xf32> -> vector<96x320xf32>
    %c0_19 = arith.constant 0 : index
    %c0_20 = arith.constant 0 : index
    %18 = vector.load %arg4[%c0_19, %c0_20] : memref<96x1xf32, #tpu.memory_space<vmem>>, vector<96x1xf32>
    %19 = vector.broadcast %18 : vector<96x1xf32> to vector<96x320xf32>
    %20 = arith.addf %17, %19 : vector<96x320xf32>
    %cst_21 = arith.constant 0.000000e+00 : f32
    %21 = vector.broadcast %cst_21 : f32 to vector<32x32xf32>
    %cst_22 = arith.constant 0.000000e+00 : f32
    %22 = vector.broadcast %cst_22 : f32 to vector<32x32xf32>
    %23 = tpu.concatenate %21, %22 in 0 : vector<32x32xf32>, vector<32x32xf32> -> vector<64x32xf32>
    %24 = arith.truncf %23 : vector<64x32xf32> to vector<64x32xbf16>
    %cst_23 = arith.constant dense<0.000000e+00> : vector<192x32xf32>
    %25 = tpu.matmul %4, %24, %cst_23 {dimension_numbers = #tpu.dot_dimension_numbers<[1], [0], [0], [1], [0, 0, 1, 1], [], []>} : vector<192x64xbf16>, vector<64x32xbf16>, vector<192x32xf32> -> vector<192x32xf32>
    %26 = vector.extract_strided_slice %25 {offsets = [0, 0], sizes = [96, 32], strides = [1, 1]} : vector<192x32xf32> to vector<96x32xf32>
    %27 = vector.extract_strided_slice %25 {offsets = [96, 0], sizes = [96, 32], strides = [1, 1]} : vector<192x32xf32> to vector<96x32xf32>
    %28 = vector.extract_strided_slice %20 {offsets = [0, 0], sizes = [96, 32], strides = [1, 1]} : vector<96x320xf32> to vector<96x32xf32>
    %29 = vector.extract_strided_slice %28 {offsets = [0, 0], sizes = [64, 32], strides = [1, 1]} : vector<96x32xf32> to vector<64x32xf32>
    %30 = vector.extract_strided_slice %26 {offsets = [0, 0], sizes = [64, 32], strides = [1, 1]} : vector<96x32xf32> to vector<64x32xf32>
    %31 = arith.addf %29, %30 : vector<64x32xf32>
    %32 = arith.negf %31 : vector<64x32xf32>
    %33 = math.exp %32 : vector<64x32xf32>
    %cst_24 = arith.constant 1.000000e+00 : f32
    %34 = vector.broadcast %cst_24 : f32 to vector<64x32xf32>
    %35 = arith.addf %34, %33 : vector<64x32xf32>
    %36 = arith.divf %34, %35 : vector<64x32xf32>
    %37 = vector.extract_strided_slice %36 {offsets = [0, 0], sizes = [32, 32], strides = [1, 1]} : vector<64x32xf32> to vector<32x32xf32>
    %38 = vector.extract_strided_slice %36 {offsets = [32, 0], sizes = [32, 32], strides = [1, 1]} : vector<64x32xf32> to vector<32x32xf32>
    %39 = vector.extract_strided_slice %28 {offsets = [64, 0], sizes = [32, 32], strides = [1, 1]} : vector<96x32xf32> to vector<32x32xf32>
    %40 = vector.extract_strided_slice %26 {offsets = [64, 0], sizes = [32, 32], strides = [1, 1]} : vector<96x32xf32> to vector<32x32xf32>
    %41 = vector.broadcast %6 : vector<32x1xf32> to vector<32x32xf32>
    %42 = arith.addf %40, %41 : vector<32x32xf32>
    %43 = arith.mulf %37, %42 : vector<32x32xf32>
    %44 = arith.addf %39, %43 : vector<32x32xf32>
    %45 = math.tanh %44 : vector<32x32xf32>
    %cst_25 = arith.constant 1.000000e+00 : f32
    %46 = vector.broadcast %cst_25 : f32 to vector<32x32xf32>
    %47 = arith.subf %46, %38 : vector<32x32xf32>
    %48 = arith.mulf %47, %45 : vector<32x32xf32>
    %49 = arith.mulf %38, %21 : vector<32x32xf32>
    %50 = arith.addf %48, %49 : vector<32x32xf32>
    %51 = arith.truncf %50 : vector<32x32xf32> to vector<32x32xbf16>
    %cst_26 = arith.constant dense<0.000000e+00> : vector<96x32xf32>
    %52 = tpu.matmul %5, %51, %cst_26 {dimension_numbers = #tpu.dot_dimension_numbers<[1], [0], [0], [1], [0, 0, 1, 1], [], []>} : vector<96x32xbf16>, vector<32x32xbf16>, vector<96x32xf32> -> vector<96x32xf32>
    %53 = vector.extract_strided_slice %52 {offsets = [0, 0], sizes = [64, 32], strides = [1, 1]} : vector<96x32xf32> to vector<64x32xf32>
    %54 = vector.extract_strided_slice %27 {offsets = [0, 0], sizes = [64, 32], strides = [1, 1]} : vector<96x32xf32> to vector<64x32xf32>
    %55 = arith.addf %53, %54 : vector<64x32xf32>
    %56 = vector.broadcast %7 : vector<64x1xf32> to vector<64x32xf32>
    %57 = arith.addf %55, %56 : vector<64x32xf32>
    %58 = arith.negf %57 : vector<64x32xf32>
    %59 = math.exp %58 : vector<64x32xf32>
    %cst_27 = arith.constant 1.000000e+00 : f32
    %60 = vector.broadcast %cst_27 : f32 to vector<64x32xf32>
    %61 = arith.addf %60, %59 : vector<64x32xf32>
    %62 = arith.divf %60, %61 : vector<64x32xf32>
    %63 = vector.extract_strided_slice %62 {offsets = [0, 0], sizes = [32, 32], strides = [1, 1]} : vector<64x32xf32> to vector<32x32xf32>
    %64 = vector.extract_strided_slice %62 {offsets = [32, 0], sizes = [32, 32], strides = [1, 1]} : vector<64x32xf32> to vector<32x32xf32>
    %65 = vector.extract_strided_slice %52 {offsets = [64, 0], sizes = [32, 32], strides = [1, 1]} : vector<96x32xf32> to vector<32x32xf32>
    %66 = vector.broadcast %8 : vector<32x1xf32> to vector<32x32xf32>
    %67 = arith.addf %65, %66 : vector<32x32xf32>
    %68 = vector.extract_strided_slice %27 {offsets = [64, 0], sizes = [32, 32], strides = [1, 1]} : vector<96x32xf32> to vector<32x32xf32>
    %69 = vector.broadcast %9 : vector<32x1xf32> to vector<32x32xf32>
    %70 = arith.addf %68, %69 : vector<32x32xf32>
    %71 = arith.mulf %63, %70 : vector<32x32xf32>
    %72 = arith.addf %67, %71 : vector<32x32xf32>
    %73 = math.tanh %72 : vector<32x32xf32>
    %cst_28 = arith.constant 1.000000e+00 : f32
    %74 = vector.broadcast %cst_28 : f32 to vector<32x32xf32>
    %75 = arith.subf %74, %64 : vector<32x32xf32>
    %76 = arith.mulf %75, %73 : vector<32x32xf32>
    %77 = arith.mulf %64, %22 : vector<32x32xf32>
    %78 = arith.addf %76, %77 : vector<32x32xf32>
    %c0_i32 = arith.constant 0 : i32
    %79 = vector.broadcast %c0_i32 : i32 to vector<1x32xi32>
    %80 = arith.cmpi sgt, %3, %79 : vector<1x32xi32>
    %81 = arith.extui %80 : vector<1x32xi1> to vector<1x32xi32>
    %82 = arith.sitofp %81 : vector<1x32xi32> to vector<1x32xf32>
    %83 = vector.broadcast %82 : vector<1x32xf32> to vector<32x32xf32>
    %84 = arith.mulf %83, %50 : vector<32x32xf32>
    %cst_29 = arith.constant 1.000000e+00 : f32
    %85 = vector.broadcast %cst_29 : f32 to vector<1x32xf32>
    %86 = arith.subf %85, %82 : vector<1x32xf32>
    %87 = vector.broadcast %86 : vector<1x32xf32> to vector<32x32xf32>
    %88 = arith.mulf %87, %21 : vector<32x32xf32>
    %89 = arith.addf %84, %88 : vector<32x32xf32>
    %90 = vector.broadcast %82 : vector<1x32xf32> to vector<32x32xf32>
    %91 = arith.mulf %90, %78 : vector<32x32xf32>
    %cst_30 = arith.constant 1.000000e+00 : f32
    %92 = vector.broadcast %cst_30 : f32 to vector<1x32xf32>
    %93 = arith.subf %92, %82 : vector<1x32xf32>
    %94 = vector.broadcast %93 : vector<1x32xf32> to vector<32x32xf32>
    %95 = arith.mulf %94, %22 : vector<32x32xf32>
    %96 = arith.addf %91, %95 : vector<32x32xf32>
    %97 = tpu.concatenate %89, %96 in 0 : vector<32x32xf32>, vector<32x32xf32> -> vector<64x32xf32>
    %98 = arith.truncf %97 : vector<64x32xf32> to vector<64x32xbf16>
    %cst_31 = arith.constant dense<0.000000e+00> : vector<192x32xf32>
    %99 = tpu.matmul %4, %98, %cst_31 {dimension_numbers = #tpu.dot_dimension_numbers<[1], [0], [0], [1], [0, 0, 1, 1], [], []>} : vector<192x64xbf16>, vector<64x32xbf16>, vector<192x32xf32> -> vector<192x32xf32>
    %100 = vector.extract_strided_slice %99 {offsets = [0, 0], sizes = [96, 32], strides = [1, 1]} : vector<192x32xf32> to vector<96x32xf32>
    %101 = vector.extract_strided_slice %99 {offsets = [96, 0], sizes = [96, 32], strides = [1, 1]} : vector<192x32xf32> to vector<96x32xf32>
    %102 = vector.extract_strided_slice %20 {offsets = [0, 32], sizes = [96, 32], strides = [1, 1]} : vector<96x320xf32> to vector<96x32xf32>
    %103 = vector.extract_strided_slice %102 {offsets = [0, 0], sizes = [64, 32], strides = [1, 1]} : vector<96x32xf32> to vector<64x32xf32>
    %104 = vector.extract_strided_slice %100 {offsets = [0, 0], sizes = [64, 32], strides = [1, 1]} : vector<96x32xf32> to vector<64x32xf32>
    %105 = arith.addf %103, %104 : vector<64x32xf32>
    %106 = arith.negf %105 : vector<64x32xf32>
    %107 = math.exp %106 : vector<64x32xf32>
    %cst_32 = arith.constant 1.000000e+00 : f32
    %108 = vector.broadcast %cst_32 : f32 to vector<64x32xf32>
    %109 = arith.addf %108, %107 : vector<64x32xf32>
    %110 = arith.divf %108, %109 : vector<64x32xf32>
    %111 = vector.extract_strided_slice %110 {offsets = [0, 0], sizes = [32, 32], strides = [1, 1]} : vector<64x32xf32> to vector<32x32xf32>
    %112 = vector.extract_strided_slice %110 {offsets = [32, 0], sizes = [32, 32], strides = [1, 1]} : vector<64x32xf32> to vector<32x32xf32>
    %113 = vector.extract_strided_slice %102 {offsets = [64, 0], sizes = [32, 32], strides = [1, 1]} : vector<96x32xf32> to vector<32x32xf32>
    %114 = vector.extract_strided_slice %100 {offsets = [64, 0], sizes = [32, 32], strides = [1, 1]} : vector<96x32xf32> to vector<32x32xf32>
    %115 = vector.broadcast %6 : vector<32x1xf32> to vector<32x32xf32>
    %116 = arith.addf %114, %115 : vector<32x32xf32>
    %117 = arith.mulf %111, %116 : vector<32x32xf32>
    %118 = arith.addf %113, %117 : vector<32x32xf32>
    %119 = math.tanh %118 : vector<32x32xf32>
    %cst_33 = arith.constant 1.000000e+00 : f32
    %120 = vector.broadcast %cst_33 : f32 to vector<32x32xf32>
    %121 = arith.subf %120, %112 : vector<32x32xf32>
    %122 = arith.mulf %121, %119 : vector<32x32xf32>
    %123 = arith.mulf %112, %89 : vector<32x32xf32>
    %124 = arith.addf %122, %123 : vector<32x32xf32>
    %125 = arith.truncf %124 : vector<32x32xf32> to vector<32x32xbf16>
    %cst_34 = arith.constant dense<0.000000e+00> : vector<96x32xf32>
    %126 = tpu.matmul %5, %125, %cst_34 {dimension_numbers = #tpu.dot_dimension_numbers<[1], [0], [0], [1], [0, 0, 1, 1], [], []>} : vector<96x32xbf16>, vector<32x32xbf16>, vector<96x32xf32> -> vector<96x32xf32>
    %127 = vector.extract_strided_slice %126 {offsets = [0, 0], sizes = [64, 32], strides = [1, 1]} : vector<96x32xf32> to vector<64x32xf32>
    %128 = vector.extract_strided_slice %101 {offsets = [0, 0], sizes = [64, 32], strides = [1, 1]} : vector<96x32xf32> to vector<64x32xf32>
    %129 = arith.addf %127, %128 : vector<64x32xf32>
    %130 = vector.broadcast %7 : vector<64x1xf32> to vector<64x32xf32>
    %131 = arith.addf %129, %130 : vector<64x32xf32>
    %132 = arith.negf %131 : vector<64x32xf32>
    %133 = math.exp %132 : vector<64x32xf32>
    %cst_35 = arith.constant 1.000000e+00 : f32
    %134 = vector.broadcast %cst_35 : f32 to vector<64x32xf32>
    %135 = arith.addf %134, %133 : vector<64x32xf32>
    %136 = arith.divf %134, %135 : vector<64x32xf32>
    %137 = vector.extract_strided_slice %136 {offsets = [0, 0], sizes = [32, 32], strides = [1, 1]} : vector<64x32xf32> to vector<32x32xf32>
    %138 = vector.extract_strided_slice %136 {offsets = [32, 0], sizes = [32, 32], strides = [1, 1]} : vector<64x32xf32> to vector<32x32xf32>
    %139 = vector.extract_strided_slice %126 {offsets = [64, 0], sizes = [32, 32], strides = [1, 1]} : vector<96x32xf32> to vector<32x32xf32>
    %140 = vector.broadcast %8 : vector<32x1xf32> to vector<32x32xf32>
    %141 = arith.addf %139, %140 : vector<32x32xf32>
    %142 = vector.extract_strided_slice %101 {offsets = [64, 0], sizes = [32, 32], strides = [1, 1]} : vector<96x32xf32> to vector<32x32xf32>
    %143 = vector.broadcast %9 : vector<32x1xf32> to vector<32x32xf32>
    %144 = arith.addf %142, %143 : vector<32x32xf32>
    %145 = arith.mulf %137, %144 : vector<32x32xf32>
    %146 = arith.addf %141, %145 : vector<32x32xf32>
    %147 = math.tanh %146 : vector<32x32xf32>
    %cst_36 = arith.constant 1.000000e+00 : f32
    %148 = vector.broadcast %cst_36 : f32 to vector<32x32xf32>
    %149 = arith.subf %148, %138 : vector<32x32xf32>
    %150 = arith.mulf %149, %147 : vector<32x32xf32>
    %151 = arith.mulf %138, %96 : vector<32x32xf32>
    %152 = arith.addf %150, %151 : vector<32x32xf32>
    %c1_i32 = arith.constant 1 : i32
    %153 = vector.broadcast %c1_i32 : i32 to vector<1x32xi32>
    %154 = arith.cmpi sgt, %3, %153 : vector<1x32xi32>
    %155 = arith.extui %154 : vector<1x32xi1> to vector<1x32xi32>
    %156 = arith.sitofp %155 : vector<1x32xi32> to vector<1x32xf32>
    %157 = vector.broadcast %156 : vector<1x32xf32> to vector<32x32xf32>
    %158 = arith.mulf %157, %124 : vector<32x32xf32>
    %cst_37 = arith.constant 1.000000e+00 : f32
    %159 = vector.broadcast %cst_37 : f32 to vector<1x32xf32>
    %160 = arith.subf %159, %156 : vector<1x32xf32>
    %161 = vector.broadcast %160 : vector<1x32xf32> to vector<32x32xf32>
    %162 = arith.mulf %161, %89 : vector<32x32xf32>
    %163 = arith.addf %158, %162 : vector<32x32xf32>
    %164 = vector.broadcast %156 : vector<1x32xf32> to vector<32x32xf32>
    %165 = arith.mulf %164, %152 : vector<32x32xf32>
    %cst_38 = arith.constant 1.000000e+00 : f32
    %166 = vector.broadcast %cst_38 : f32 to vector<1x32xf32>
    %167 = arith.subf %166, %156 : vector<1x32xf32>
    %168 = vector.broadcast %167 : vector<1x32xf32> to vector<32x32xf32>
    %169 = arith.mulf %168, %96 : vector<32x32xf32>
    %170 = arith.addf %165, %169 : vector<32x32xf32>
    %171 = tpu.concatenate %163, %170 in 0 : vector<32x32xf32>, vector<32x32xf32> -> vector<64x32xf32>
    %172 = arith.truncf %171 : vector<64x32xf32> to vector<64x32xbf16>
    %cst_39 = arith.constant dense<0.000000e+00> : vector<192x32xf32>
    %173 = tpu.matmul %4, %172, %cst_39 {dimension_numbers = #tpu.dot_dimension_numbers<[1], [0], [0], [1], [0, 0, 1, 1], [], []>} : vector<192x64xbf16>, vector<64x32xbf16>, vector<192x32xf32> -> vector<192x32xf32>
    %174 = vector.extract_strided_slice %173 {offsets = [0, 0], sizes = [96, 32], strides = [1, 1]} : vector<192x32xf32> to vector<96x32xf32>
    %175 = vector.extract_strided_slice %173 {offsets = [96, 0], sizes = [96, 32], strides = [1, 1]} : vector<192x32xf32> to vector<96x32xf32>
    %176 = vector.extract_strided_slice %20 {offsets = [0, 64], sizes = [96, 32], strides = [1, 1]} : vector<96x320xf32> to vector<96x32xf32>
    %177 = vector.extract_strided_slice %176 {offsets = [0, 0], sizes = [64, 32], strides = [1, 1]} : vector<96x32xf32> to vector<64x32xf32>
    %178 = vector.extract_strided_slice %174 {offsets = [0, 0], sizes = [64, 32], strides = [1, 1]} : vector<96x32xf32> to vector<64x32xf32>
    %179 = arith.addf %177, %178 : vector<64x32xf32>
    %180 = arith.negf %179 : vector<64x32xf32>
    %181 = math.exp %180 : vector<64x32xf32>
    %cst_40 = arith.constant 1.000000e+00 : f32
    %182 = vector.broadcast %cst_40 : f32 to vector<64x32xf32>
    %183 = arith.addf %182, %181 : vector<64x32xf32>
    %184 = arith.divf %182, %183 : vector<64x32xf32>
    %185 = vector.extract_strided_slice %184 {offsets = [0, 0], sizes = [32, 32], strides = [1, 1]} : vector<64x32xf32> to vector<32x32xf32>
    %186 = vector.extract_strided_slice %184 {offsets = [32, 0], sizes = [32, 32], strides = [1, 1]} : vector<64x32xf32> to vector<32x32xf32>
    %187 = vector.extract_strided_slice %176 {offsets = [64, 0], sizes = [32, 32], strides = [1, 1]} : vector<96x32xf32> to vector<32x32xf32>
    %188 = vector.extract_strided_slice %174 {offsets = [64, 0], sizes = [32, 32], strides = [1, 1]} : vector<96x32xf32> to vector<32x32xf32>
    %189 = vector.broadcast %6 : vector<32x1xf32> to vector<32x32xf32>
    %190 = arith.addf %188, %189 : vector<32x32xf32>
    %191 = arith.mulf %185, %190 : vector<32x32xf32>
    %192 = arith.addf %187, %191 : vector<32x32xf32>
    %193 = math.tanh %192 : vector<32x32xf32>
    %cst_41 = arith.constant 1.000000e+00 : f32
    %194 = vector.broadcast %cst_41 : f32 to vector<32x32xf32>
    %195 = arith.subf %194, %186 : vector<32x32xf32>
    %196 = arith.mulf %195, %193 : vector<32x32xf32>
    %197 = arith.mulf %186, %163 : vector<32x32xf32>
    %198 = arith.addf %196, %197 : vector<32x32xf32>
    %199 = arith.truncf %198 : vector<32x32xf32> to vector<32x32xbf16>
    %cst_42 = arith.constant dense<0.000000e+00> : vector<96x32xf32>
    %200 = tpu.matmul %5, %199, %cst_42 {dimension_numbers = #tpu.dot_dimension_numbers<[1], [0], [0], [1], [0, 0, 1, 1], [], []>} : vector<96x32xbf16>, vector<32x32xbf16>, vector<96x32xf32> -> vector<96x32xf32>
    %201 = vector.extract_strided_slice %200 {offsets = [0, 0], sizes = [64, 32], strides = [1, 1]} : vector<96x32xf32> to vector<64x32xf32>
    %202 = vector.extract_strided_slice %175 {offsets = [0, 0], sizes = [64, 32], strides = [1, 1]} : vector<96x32xf32> to vector<64x32xf32>
    %203 = arith.addf %201, %202 : vector<64x32xf32>
    %204 = vector.broadcast %7 : vector<64x1xf32> to vector<64x32xf32>
    %205 = arith.addf %203, %204 : vector<64x32xf32>
    %206 = arith.negf %205 : vector<64x32xf32>
    %207 = math.exp %206 : vector<64x32xf32>
    %cst_43 = arith.constant 1.000000e+00 : f32
    %208 = vector.broadcast %cst_43 : f32 to vector<64x32xf32>
    %209 = arith.addf %208, %207 : vector<64x32xf32>
    %210 = arith.divf %208, %209 : vector<64x32xf32>
    %211 = vector.extract_strided_slice %210 {offsets = [0, 0], sizes = [32, 32], strides = [1, 1]} : vector<64x32xf32> to vector<32x32xf32>
    %212 = vector.extract_strided_slice %210 {offsets = [32, 0], sizes = [32, 32], strides = [1, 1]} : vector<64x32xf32> to vector<32x32xf32>
    %213 = vector.extract_strided_slice %200 {offsets = [64, 0], sizes = [32, 32], strides = [1, 1]} : vector<96x32xf32> to vector<32x32xf32>
    %214 = vector.broadcast %8 : vector<32x1xf32> to vector<32x32xf32>
    %215 = arith.addf %213, %214 : vector<32x32xf32>
    %216 = vector.extract_strided_slice %175 {offsets = [64, 0], sizes = [32, 32], strides = [1, 1]} : vector<96x32xf32> to vector<32x32xf32>
    %217 = vector.broadcast %9 : vector<32x1xf32> to vector<32x32xf32>
    %218 = arith.addf %216, %217 : vector<32x32xf32>
    %219 = arith.mulf %211, %218 : vector<32x32xf32>
    %220 = arith.addf %215, %219 : vector<32x32xf32>
    %221 = math.tanh %220 : vector<32x32xf32>
    %cst_44 = arith.constant 1.000000e+00 : f32
    %222 = vector.broadcast %cst_44 : f32 to vector<32x32xf32>
    %223 = arith.subf %222, %212 : vector<32x32xf32>
    %224 = arith.mulf %223, %221 : vector<32x32xf32>
    %225 = arith.mulf %212, %170 : vector<32x32xf32>
    %226 = arith.addf %224, %225 : vector<32x32xf32>
    %c2_i32 = arith.constant 2 : i32
    %227 = vector.broadcast %c2_i32 : i32 to vector<1x32xi32>
    %228 = arith.cmpi sgt, %3, %227 : vector<1x32xi32>
    %229 = arith.extui %228 : vector<1x32xi1> to vector<1x32xi32>
    %230 = arith.sitofp %229 : vector<1x32xi32> to vector<1x32xf32>
    %231 = vector.broadcast %230 : vector<1x32xf32> to vector<32x32xf32>
    %232 = arith.mulf %231, %198 : vector<32x32xf32>
    %cst_45 = arith.constant 1.000000e+00 : f32
    %233 = vector.broadcast %cst_45 : f32 to vector<1x32xf32>
    %234 = arith.subf %233, %230 : vector<1x32xf32>
    %235 = vector.broadcast %234 : vector<1x32xf32> to vector<32x32xf32>
    %236 = arith.mulf %235, %163 : vector<32x32xf32>
    %237 = arith.addf %232, %236 : vector<32x32xf32>
    %238 = vector.broadcast %230 : vector<1x32xf32> to vector<32x32xf32>
    %239 = arith.mulf %238, %226 : vector<32x32xf32>
    %cst_46 = arith.constant 1.000000e+00 : f32
    %240 = vector.broadcast %cst_46 : f32 to vector<1x32xf32>
    %241 = arith.subf %240, %230 : vector<1x32xf32>
    %242 = vector.broadcast %241 : vector<1x32xf32> to vector<32x32xf32>
    %243 = arith.mulf %242, %170 : vector<32x32xf32>
    %244 = arith.addf %239, %243 : vector<32x32xf32>
    %245 = tpu.concatenate %237, %244 in 0 : vector<32x32xf32>, vector<32x32xf32> -> vector<64x32xf32>
    %246 = arith.truncf %245 : vector<64x32xf32> to vector<64x32xbf16>
    %cst_47 = arith.constant dense<0.000000e+00> : vector<192x32xf32>
    %247 = tpu.matmul %4, %246, %cst_47 {dimension_numbers = #tpu.dot_dimension_numbers<[1], [0], [0], [1], [0, 0, 1, 1], [], []>} : vector<192x64xbf16>, vector<64x32xbf16>, vector<192x32xf32> -> vector<192x32xf32>
    %248 = vector.extract_strided_slice %247 {offsets = [0, 0], sizes = [96, 32], strides = [1, 1]} : vector<192x32xf32> to vector<96x32xf32>
    %249 = vector.extract_strided_slice %247 {offsets = [96, 0], sizes = [96, 32], strides = [1, 1]} : vector<192x32xf32> to vector<96x32xf32>
    %250 = vector.extract_strided_slice %20 {offsets = [0, 96], sizes = [96, 32], strides = [1, 1]} : vector<96x320xf32> to vector<96x32xf32>
    %251 = vector.extract_strided_slice %250 {offsets = [0, 0], sizes = [64, 32], strides = [1, 1]} : vector<96x32xf32> to vector<64x32xf32>
    %252 = vector.extract_strided_slice %248 {offsets = [0, 0], sizes = [64, 32], strides = [1, 1]} : vector<96x32xf32> to vector<64x32xf32>
    %253 = arith.addf %251, %252 : vector<64x32xf32>
    %254 = arith.negf %253 : vector<64x32xf32>
    %255 = math.exp %254 : vector<64x32xf32>
    %cst_48 = arith.constant 1.000000e+00 : f32
    %256 = vector.broadcast %cst_48 : f32 to vector<64x32xf32>
    %257 = arith.addf %256, %255 : vector<64x32xf32>
    %258 = arith.divf %256, %257 : vector<64x32xf32>
    %259 = vector.extract_strided_slice %258 {offsets = [0, 0], sizes = [32, 32], strides = [1, 1]} : vector<64x32xf32> to vector<32x32xf32>
    %260 = vector.extract_strided_slice %258 {offsets = [32, 0], sizes = [32, 32], strides = [1, 1]} : vector<64x32xf32> to vector<32x32xf32>
    %261 = vector.extract_strided_slice %250 {offsets = [64, 0], sizes = [32, 32], strides = [1, 1]} : vector<96x32xf32> to vector<32x32xf32>
    %262 = vector.extract_strided_slice %248 {offsets = [64, 0], sizes = [32, 32], strides = [1, 1]} : vector<96x32xf32> to vector<32x32xf32>
    %263 = vector.broadcast %6 : vector<32x1xf32> to vector<32x32xf32>
    %264 = arith.addf %262, %263 : vector<32x32xf32>
    %265 = arith.mulf %259, %264 : vector<32x32xf32>
    %266 = arith.addf %261, %265 : vector<32x32xf32>
    %267 = math.tanh %266 : vector<32x32xf32>
    %cst_49 = arith.constant 1.000000e+00 : f32
    %268 = vector.broadcast %cst_49 : f32 to vector<32x32xf32>
    %269 = arith.subf %268, %260 : vector<32x32xf32>
    %270 = arith.mulf %269, %267 : vector<32x32xf32>
    %271 = arith.mulf %260, %237 : vector<32x32xf32>
    %272 = arith.addf %270, %271 : vector<32x32xf32>
    %273 = arith.truncf %272 : vector<32x32xf32> to vector<32x32xbf16>
    %cst_50 = arith.constant dense<0.000000e+00> : vector<96x32xf32>
    %274 = tpu.matmul %5, %273, %cst_50 {dimension_numbers = #tpu.dot_dimension_numbers<[1], [0], [0], [1], [0, 0, 1, 1], [], []>} : vector<96x32xbf16>, vector<32x32xbf16>, vector<96x32xf32> -> vector<96x32xf32>
    %275 = vector.extract_strided_slice %274 {offsets = [0, 0], sizes = [64, 32], strides = [1, 1]} : vector<96x32xf32> to vector<64x32xf32>
    %276 = vector.extract_strided_slice %249 {offsets = [0, 0], sizes = [64, 32], strides = [1, 1]} : vector<96x32xf32> to vector<64x32xf32>
    %277 = arith.addf %275, %276 : vector<64x32xf32>
    %278 = vector.broadcast %7 : vector<64x1xf32> to vector<64x32xf32>
    %279 = arith.addf %277, %278 : vector<64x32xf32>
    %280 = arith.negf %279 : vector<64x32xf32>
    %281 = math.exp %280 : vector<64x32xf32>
    %cst_51 = arith.constant 1.000000e+00 : f32
    %282 = vector.broadcast %cst_51 : f32 to vector<64x32xf32>
    %283 = arith.addf %282, %281 : vector<64x32xf32>
    %284 = arith.divf %282, %283 : vector<64x32xf32>
    %285 = vector.extract_strided_slice %284 {offsets = [0, 0], sizes = [32, 32], strides = [1, 1]} : vector<64x32xf32> to vector<32x32xf32>
    %286 = vector.extract_strided_slice %284 {offsets = [32, 0], sizes = [32, 32], strides = [1, 1]} : vector<64x32xf32> to vector<32x32xf32>
    %287 = vector.extract_strided_slice %274 {offsets = [64, 0], sizes = [32, 32], strides = [1, 1]} : vector<96x32xf32> to vector<32x32xf32>
    %288 = vector.broadcast %8 : vector<32x1xf32> to vector<32x32xf32>
    %289 = arith.addf %287, %288 : vector<32x32xf32>
    %290 = vector.extract_strided_slice %249 {offsets = [64, 0], sizes = [32, 32], strides = [1, 1]} : vector<96x32xf32> to vector<32x32xf32>
    %291 = vector.broadcast %9 : vector<32x1xf32> to vector<32x32xf32>
    %292 = arith.addf %290, %291 : vector<32x32xf32>
    %293 = arith.mulf %285, %292 : vector<32x32xf32>
    %294 = arith.addf %289, %293 : vector<32x32xf32>
    %295 = math.tanh %294 : vector<32x32xf32>
    %cst_52 = arith.constant 1.000000e+00 : f32
    %296 = vector.broadcast %cst_52 : f32 to vector<32x32xf32>
    %297 = arith.subf %296, %286 : vector<32x32xf32>
    %298 = arith.mulf %297, %295 : vector<32x32xf32>
    %299 = arith.mulf %286, %244 : vector<32x32xf32>
    %300 = arith.addf %298, %299 : vector<32x32xf32>
    %c3_i32 = arith.constant 3 : i32
    %301 = vector.broadcast %c3_i32 : i32 to vector<1x32xi32>
    %302 = arith.cmpi sgt, %3, %301 : vector<1x32xi32>
    %303 = arith.extui %302 : vector<1x32xi1> to vector<1x32xi32>
    %304 = arith.sitofp %303 : vector<1x32xi32> to vector<1x32xf32>
    %305 = vector.broadcast %304 : vector<1x32xf32> to vector<32x32xf32>
    %306 = arith.mulf %305, %272 : vector<32x32xf32>
    %cst_53 = arith.constant 1.000000e+00 : f32
    %307 = vector.broadcast %cst_53 : f32 to vector<1x32xf32>
    %308 = arith.subf %307, %304 : vector<1x32xf32>
    %309 = vector.broadcast %308 : vector<1x32xf32> to vector<32x32xf32>
    %310 = arith.mulf %309, %237 : vector<32x32xf32>
    %311 = arith.addf %306, %310 : vector<32x32xf32>
    %312 = vector.broadcast %304 : vector<1x32xf32> to vector<32x32xf32>
    %313 = arith.mulf %312, %300 : vector<32x32xf32>
    %cst_54 = arith.constant 1.000000e+00 : f32
    %314 = vector.broadcast %cst_54 : f32 to vector<1x32xf32>
    %315 = arith.subf %314, %304 : vector<1x32xf32>
    %316 = vector.broadcast %315 : vector<1x32xf32> to vector<32x32xf32>
    %317 = arith.mulf %316, %244 : vector<32x32xf32>
    %318 = arith.addf %313, %317 : vector<32x32xf32>
    %319 = tpu.concatenate %311, %318 in 0 : vector<32x32xf32>, vector<32x32xf32> -> vector<64x32xf32>
    %320 = arith.truncf %319 : vector<64x32xf32> to vector<64x32xbf16>
    %cst_55 = arith.constant dense<0.000000e+00> : vector<192x32xf32>
    %321 = tpu.matmul %4, %320, %cst_55 {dimension_numbers = #tpu.dot_dimension_numbers<[1], [0], [0], [1], [0, 0, 1, 1], [], []>} : vector<192x64xbf16>, vector<64x32xbf16>, vector<192x32xf32> -> vector<192x32xf32>
    %322 = vector.extract_strided_slice %321 {offsets = [0, 0], sizes = [96, 32], strides = [1, 1]} : vector<192x32xf32> to vector<96x32xf32>
    %323 = vector.extract_strided_slice %321 {offsets = [96, 0], sizes = [96, 32], strides = [1, 1]} : vector<192x32xf32> to vector<96x32xf32>
    %324 = vector.extract_strided_slice %20 {offsets = [0, 128], sizes = [96, 32], strides = [1, 1]} : vector<96x320xf32> to vector<96x32xf32>
    %325 = vector.extract_strided_slice %324 {offsets = [0, 0], sizes = [64, 32], strides = [1, 1]} : vector<96x32xf32> to vector<64x32xf32>
    %326 = vector.extract_strided_slice %322 {offsets = [0, 0], sizes = [64, 32], strides = [1, 1]} : vector<96x32xf32> to vector<64x32xf32>
    %327 = arith.addf %325, %326 : vector<64x32xf32>
    %328 = arith.negf %327 : vector<64x32xf32>
    %329 = math.exp %328 : vector<64x32xf32>
    %cst_56 = arith.constant 1.000000e+00 : f32
    %330 = vector.broadcast %cst_56 : f32 to vector<64x32xf32>
    %331 = arith.addf %330, %329 : vector<64x32xf32>
    %332 = arith.divf %330, %331 : vector<64x32xf32>
    %333 = vector.extract_strided_slice %332 {offsets = [0, 0], sizes = [32, 32], strides = [1, 1]} : vector<64x32xf32> to vector<32x32xf32>
    %334 = vector.extract_strided_slice %332 {offsets = [32, 0], sizes = [32, 32], strides = [1, 1]} : vector<64x32xf32> to vector<32x32xf32>
    %335 = vector.extract_strided_slice %324 {offsets = [64, 0], sizes = [32, 32], strides = [1, 1]} : vector<96x32xf32> to vector<32x32xf32>
    %336 = vector.extract_strided_slice %322 {offsets = [64, 0], sizes = [32, 32], strides = [1, 1]} : vector<96x32xf32> to vector<32x32xf32>
    %337 = vector.broadcast %6 : vector<32x1xf32> to vector<32x32xf32>
    %338 = arith.addf %336, %337 : vector<32x32xf32>
    %339 = arith.mulf %333, %338 : vector<32x32xf32>
    %340 = arith.addf %335, %339 : vector<32x32xf32>
    %341 = math.tanh %340 : vector<32x32xf32>
    %cst_57 = arith.constant 1.000000e+00 : f32
    %342 = vector.broadcast %cst_57 : f32 to vector<32x32xf32>
    %343 = arith.subf %342, %334 : vector<32x32xf32>
    %344 = arith.mulf %343, %341 : vector<32x32xf32>
    %345 = arith.mulf %334, %311 : vector<32x32xf32>
    %346 = arith.addf %344, %345 : vector<32x32xf32>
    %347 = arith.truncf %346 : vector<32x32xf32> to vector<32x32xbf16>
    %cst_58 = arith.constant dense<0.000000e+00> : vector<96x32xf32>
    %348 = tpu.matmul %5, %347, %cst_58 {dimension_numbers = #tpu.dot_dimension_numbers<[1], [0], [0], [1], [0, 0, 1, 1], [], []>} : vector<96x32xbf16>, vector<32x32xbf16>, vector<96x32xf32> -> vector<96x32xf32>
    %349 = vector.extract_strided_slice %348 {offsets = [0, 0], sizes = [64, 32], strides = [1, 1]} : vector<96x32xf32> to vector<64x32xf32>
    %350 = vector.extract_strided_slice %323 {offsets = [0, 0], sizes = [64, 32], strides = [1, 1]} : vector<96x32xf32> to vector<64x32xf32>
    %351 = arith.addf %349, %350 : vector<64x32xf32>
    %352 = vector.broadcast %7 : vector<64x1xf32> to vector<64x32xf32>
    %353 = arith.addf %351, %352 : vector<64x32xf32>
    %354 = arith.negf %353 : vector<64x32xf32>
    %355 = math.exp %354 : vector<64x32xf32>
    %cst_59 = arith.constant 1.000000e+00 : f32
    %356 = vector.broadcast %cst_59 : f32 to vector<64x32xf32>
    %357 = arith.addf %356, %355 : vector<64x32xf32>
    %358 = arith.divf %356, %357 : vector<64x32xf32>
    %359 = vector.extract_strided_slice %358 {offsets = [0, 0], sizes = [32, 32], strides = [1, 1]} : vector<64x32xf32> to vector<32x32xf32>
    %360 = vector.extract_strided_slice %358 {offsets = [32, 0], sizes = [32, 32], strides = [1, 1]} : vector<64x32xf32> to vector<32x32xf32>
    %361 = vector.extract_strided_slice %348 {offsets = [64, 0], sizes = [32, 32], strides = [1, 1]} : vector<96x32xf32> to vector<32x32xf32>
    %362 = vector.broadcast %8 : vector<32x1xf32> to vector<32x32xf32>
    %363 = arith.addf %361, %362 : vector<32x32xf32>
    %364 = vector.extract_strided_slice %323 {offsets = [64, 0], sizes = [32, 32], strides = [1, 1]} : vector<96x32xf32> to vector<32x32xf32>
    %365 = vector.broadcast %9 : vector<32x1xf32> to vector<32x32xf32>
    %366 = arith.addf %364, %365 : vector<32x32xf32>
    %367 = arith.mulf %359, %366 : vector<32x32xf32>
    %368 = arith.addf %363, %367 : vector<32x32xf32>
    %369 = math.tanh %368 : vector<32x32xf32>
    %cst_60 = arith.constant 1.000000e+00 : f32
    %370 = vector.broadcast %cst_60 : f32 to vector<32x32xf32>
    %371 = arith.subf %370, %360 : vector<32x32xf32>
    %372 = arith.mulf %371, %369 : vector<32x32xf32>
    %373 = arith.mulf %360, %318 : vector<32x32xf32>
    %374 = arith.addf %372, %373 : vector<32x32xf32>
    %c4_i32 = arith.constant 4 : i32
    %375 = vector.broadcast %c4_i32 : i32 to vector<1x32xi32>
    %376 = arith.cmpi sgt, %3, %375 : vector<1x32xi32>
    %377 = arith.extui %376 : vector<1x32xi1> to vector<1x32xi32>
    %378 = arith.sitofp %377 : vector<1x32xi32> to vector<1x32xf32>
    %379 = vector.broadcast %378 : vector<1x32xf32> to vector<32x32xf32>
    %380 = arith.mulf %379, %346 : vector<32x32xf32>
    %cst_61 = arith.constant 1.000000e+00 : f32
    %381 = vector.broadcast %cst_61 : f32 to vector<1x32xf32>
    %382 = arith.subf %381, %378 : vector<1x32xf32>
    %383 = vector.broadcast %382 : vector<1x32xf32> to vector<32x32xf32>
    %384 = arith.mulf %383, %311 : vector<32x32xf32>
    %385 = arith.addf %380, %384 : vector<32x32xf32>
    %386 = vector.broadcast %378 : vector<1x32xf32> to vector<32x32xf32>
    %387 = arith.mulf %386, %374 : vector<32x32xf32>
    %cst_62 = arith.constant 1.000000e+00 : f32
    %388 = vector.broadcast %cst_62 : f32 to vector<1x32xf32>
    %389 = arith.subf %388, %378 : vector<1x32xf32>
    %390 = vector.broadcast %389 : vector<1x32xf32> to vector<32x32xf32>
    %391 = arith.mulf %390, %318 : vector<32x32xf32>
    %392 = arith.addf %387, %391 : vector<32x32xf32>
    %393 = tpu.concatenate %385, %392 in 0 : vector<32x32xf32>, vector<32x32xf32> -> vector<64x32xf32>
    %394 = arith.truncf %393 : vector<64x32xf32> to vector<64x32xbf16>
    %cst_63 = arith.constant dense<0.000000e+00> : vector<192x32xf32>
    %395 = tpu.matmul %4, %394, %cst_63 {dimension_numbers = #tpu.dot_dimension_numbers<[1], [0], [0], [1], [0, 0, 1, 1], [], []>} : vector<192x64xbf16>, vector<64x32xbf16>, vector<192x32xf32> -> vector<192x32xf32>
    %396 = vector.extract_strided_slice %395 {offsets = [0, 0], sizes = [96, 32], strides = [1, 1]} : vector<192x32xf32> to vector<96x32xf32>
    %397 = vector.extract_strided_slice %395 {offsets = [96, 0], sizes = [96, 32], strides = [1, 1]} : vector<192x32xf32> to vector<96x32xf32>
    %398 = vector.extract_strided_slice %20 {offsets = [0, 160], sizes = [96, 32], strides = [1, 1]} : vector<96x320xf32> to vector<96x32xf32>
    %399 = vector.extract_strided_slice %398 {offsets = [0, 0], sizes = [64, 32], strides = [1, 1]} : vector<96x32xf32> to vector<64x32xf32>
    %400 = vector.extract_strided_slice %396 {offsets = [0, 0], sizes = [64, 32], strides = [1, 1]} : vector<96x32xf32> to vector<64x32xf32>
    %401 = arith.addf %399, %400 : vector<64x32xf32>
    %402 = arith.negf %401 : vector<64x32xf32>
    %403 = math.exp %402 : vector<64x32xf32>
    %cst_64 = arith.constant 1.000000e+00 : f32
    %404 = vector.broadcast %cst_64 : f32 to vector<64x32xf32>
    %405 = arith.addf %404, %403 : vector<64x32xf32>
    %406 = arith.divf %404, %405 : vector<64x32xf32>
    %407 = vector.extract_strided_slice %406 {offsets = [0, 0], sizes = [32, 32], strides = [1, 1]} : vector<64x32xf32> to vector<32x32xf32>
    %408 = vector.extract_strided_slice %406 {offsets = [32, 0], sizes = [32, 32], strides = [1, 1]} : vector<64x32xf32> to vector<32x32xf32>
    %409 = vector.extract_strided_slice %398 {offsets = [64, 0], sizes = [32, 32], strides = [1, 1]} : vector<96x32xf32> to vector<32x32xf32>
    %410 = vector.extract_strided_slice %396 {offsets = [64, 0], sizes = [32, 32], strides = [1, 1]} : vector<96x32xf32> to vector<32x32xf32>
    %411 = vector.broadcast %6 : vector<32x1xf32> to vector<32x32xf32>
    %412 = arith.addf %410, %411 : vector<32x32xf32>
    %413 = arith.mulf %407, %412 : vector<32x32xf32>
    %414 = arith.addf %409, %413 : vector<32x32xf32>
    %415 = math.tanh %414 : vector<32x32xf32>
    %cst_65 = arith.constant 1.000000e+00 : f32
    %416 = vector.broadcast %cst_65 : f32 to vector<32x32xf32>
    %417 = arith.subf %416, %408 : vector<32x32xf32>
    %418 = arith.mulf %417, %415 : vector<32x32xf32>
    %419 = arith.mulf %408, %385 : vector<32x32xf32>
    %420 = arith.addf %418, %419 : vector<32x32xf32>
    %421 = arith.truncf %420 : vector<32x32xf32> to vector<32x32xbf16>
    %cst_66 = arith.constant dense<0.000000e+00> : vector<96x32xf32>
    %422 = tpu.matmul %5, %421, %cst_66 {dimension_numbers = #tpu.dot_dimension_numbers<[1], [0], [0], [1], [0, 0, 1, 1], [], []>} : vector<96x32xbf16>, vector<32x32xbf16>, vector<96x32xf32> -> vector<96x32xf32>
    %423 = vector.extract_strided_slice %422 {offsets = [0, 0], sizes = [64, 32], strides = [1, 1]} : vector<96x32xf32> to vector<64x32xf32>
    %424 = vector.extract_strided_slice %397 {offsets = [0, 0], sizes = [64, 32], strides = [1, 1]} : vector<96x32xf32> to vector<64x32xf32>
    %425 = arith.addf %423, %424 : vector<64x32xf32>
    %426 = vector.broadcast %7 : vector<64x1xf32> to vector<64x32xf32>
    %427 = arith.addf %425, %426 : vector<64x32xf32>
    %428 = arith.negf %427 : vector<64x32xf32>
    %429 = math.exp %428 : vector<64x32xf32>
    %cst_67 = arith.constant 1.000000e+00 : f32
    %430 = vector.broadcast %cst_67 : f32 to vector<64x32xf32>
    %431 = arith.addf %430, %429 : vector<64x32xf32>
    %432 = arith.divf %430, %431 : vector<64x32xf32>
    %433 = vector.extract_strided_slice %432 {offsets = [0, 0], sizes = [32, 32], strides = [1, 1]} : vector<64x32xf32> to vector<32x32xf32>
    %434 = vector.extract_strided_slice %432 {offsets = [32, 0], sizes = [32, 32], strides = [1, 1]} : vector<64x32xf32> to vector<32x32xf32>
    %435 = vector.extract_strided_slice %422 {offsets = [64, 0], sizes = [32, 32], strides = [1, 1]} : vector<96x32xf32> to vector<32x32xf32>
    %436 = vector.broadcast %8 : vector<32x1xf32> to vector<32x32xf32>
    %437 = arith.addf %435, %436 : vector<32x32xf32>
    %438 = vector.extract_strided_slice %397 {offsets = [64, 0], sizes = [32, 32], strides = [1, 1]} : vector<96x32xf32> to vector<32x32xf32>
    %439 = vector.broadcast %9 : vector<32x1xf32> to vector<32x32xf32>
    %440 = arith.addf %438, %439 : vector<32x32xf32>
    %441 = arith.mulf %433, %440 : vector<32x32xf32>
    %442 = arith.addf %437, %441 : vector<32x32xf32>
    %443 = math.tanh %442 : vector<32x32xf32>
    %cst_68 = arith.constant 1.000000e+00 : f32
    %444 = vector.broadcast %cst_68 : f32 to vector<32x32xf32>
    %445 = arith.subf %444, %434 : vector<32x32xf32>
    %446 = arith.mulf %445, %443 : vector<32x32xf32>
    %447 = arith.mulf %434, %392 : vector<32x32xf32>
    %448 = arith.addf %446, %447 : vector<32x32xf32>
    %c5_i32 = arith.constant 5 : i32
    %449 = vector.broadcast %c5_i32 : i32 to vector<1x32xi32>
    %450 = arith.cmpi sgt, %3, %449 : vector<1x32xi32>
    %451 = arith.extui %450 : vector<1x32xi1> to vector<1x32xi32>
    %452 = arith.sitofp %451 : vector<1x32xi32> to vector<1x32xf32>
    %453 = vector.broadcast %452 : vector<1x32xf32> to vector<32x32xf32>
    %454 = arith.mulf %453, %420 : vector<32x32xf32>
    %cst_69 = arith.constant 1.000000e+00 : f32
    %455 = vector.broadcast %cst_69 : f32 to vector<1x32xf32>
    %456 = arith.subf %455, %452 : vector<1x32xf32>
    %457 = vector.broadcast %456 : vector<1x32xf32> to vector<32x32xf32>
    %458 = arith.mulf %457, %385 : vector<32x32xf32>
    %459 = arith.addf %454, %458 : vector<32x32xf32>
    %460 = vector.broadcast %452 : vector<1x32xf32> to vector<32x32xf32>
    %461 = arith.mulf %460, %448 : vector<32x32xf32>
    %cst_70 = arith.constant 1.000000e+00 : f32
    %462 = vector.broadcast %cst_70 : f32 to vector<1x32xf32>
    %463 = arith.subf %462, %452 : vector<1x32xf32>
    %464 = vector.broadcast %463 : vector<1x32xf32> to vector<32x32xf32>
    %465 = arith.mulf %464, %392 : vector<32x32xf32>
    %466 = arith.addf %461, %465 : vector<32x32xf32>
    %467 = tpu.concatenate %459, %466 in 0 : vector<32x32xf32>, vector<32x32xf32> -> vector<64x32xf32>
    %468 = arith.truncf %467 : vector<64x32xf32> to vector<64x32xbf16>
    %cst_71 = arith.constant dense<0.000000e+00> : vector<192x32xf32>
    %469 = tpu.matmul %4, %468, %cst_71 {dimension_numbers = #tpu.dot_dimension_numbers<[1], [0], [0], [1], [0, 0, 1, 1], [], []>} : vector<192x64xbf16>, vector<64x32xbf16>, vector<192x32xf32> -> vector<192x32xf32>
    %470 = vector.extract_strided_slice %469 {offsets = [0, 0], sizes = [96, 32], strides = [1, 1]} : vector<192x32xf32> to vector<96x32xf32>
    %471 = vector.extract_strided_slice %469 {offsets = [96, 0], sizes = [96, 32], strides = [1, 1]} : vector<192x32xf32> to vector<96x32xf32>
    %472 = vector.extract_strided_slice %20 {offsets = [0, 192], sizes = [96, 32], strides = [1, 1]} : vector<96x320xf32> to vector<96x32xf32>
    %473 = vector.extract_strided_slice %472 {offsets = [0, 0], sizes = [64, 32], strides = [1, 1]} : vector<96x32xf32> to vector<64x32xf32>
    %474 = vector.extract_strided_slice %470 {offsets = [0, 0], sizes = [64, 32], strides = [1, 1]} : vector<96x32xf32> to vector<64x32xf32>
    %475 = arith.addf %473, %474 : vector<64x32xf32>
    %476 = arith.negf %475 : vector<64x32xf32>
    %477 = math.exp %476 : vector<64x32xf32>
    %cst_72 = arith.constant 1.000000e+00 : f32
    %478 = vector.broadcast %cst_72 : f32 to vector<64x32xf32>
    %479 = arith.addf %478, %477 : vector<64x32xf32>
    %480 = arith.divf %478, %479 : vector<64x32xf32>
    %481 = vector.extract_strided_slice %480 {offsets = [0, 0], sizes = [32, 32], strides = [1, 1]} : vector<64x32xf32> to vector<32x32xf32>
    %482 = vector.extract_strided_slice %480 {offsets = [32, 0], sizes = [32, 32], strides = [1, 1]} : vector<64x32xf32> to vector<32x32xf32>
    %483 = vector.extract_strided_slice %472 {offsets = [64, 0], sizes = [32, 32], strides = [1, 1]} : vector<96x32xf32> to vector<32x32xf32>
    %484 = vector.extract_strided_slice %470 {offsets = [64, 0], sizes = [32, 32], strides = [1, 1]} : vector<96x32xf32> to vector<32x32xf32>
    %485 = vector.broadcast %6 : vector<32x1xf32> to vector<32x32xf32>
    %486 = arith.addf %484, %485 : vector<32x32xf32>
    %487 = arith.mulf %481, %486 : vector<32x32xf32>
    %488 = arith.addf %483, %487 : vector<32x32xf32>
    %489 = math.tanh %488 : vector<32x32xf32>
    %cst_73 = arith.constant 1.000000e+00 : f32
    %490 = vector.broadcast %cst_73 : f32 to vector<32x32xf32>
    %491 = arith.subf %490, %482 : vector<32x32xf32>
    %492 = arith.mulf %491, %489 : vector<32x32xf32>
    %493 = arith.mulf %482, %459 : vector<32x32xf32>
    %494 = arith.addf %492, %493 : vector<32x32xf32>
    %495 = arith.truncf %494 : vector<32x32xf32> to vector<32x32xbf16>
    %cst_74 = arith.constant dense<0.000000e+00> : vector<96x32xf32>
    %496 = tpu.matmul %5, %495, %cst_74 {dimension_numbers = #tpu.dot_dimension_numbers<[1], [0], [0], [1], [0, 0, 1, 1], [], []>} : vector<96x32xbf16>, vector<32x32xbf16>, vector<96x32xf32> -> vector<96x32xf32>
    %497 = vector.extract_strided_slice %496 {offsets = [0, 0], sizes = [64, 32], strides = [1, 1]} : vector<96x32xf32> to vector<64x32xf32>
    %498 = vector.extract_strided_slice %471 {offsets = [0, 0], sizes = [64, 32], strides = [1, 1]} : vector<96x32xf32> to vector<64x32xf32>
    %499 = arith.addf %497, %498 : vector<64x32xf32>
    %500 = vector.broadcast %7 : vector<64x1xf32> to vector<64x32xf32>
    %501 = arith.addf %499, %500 : vector<64x32xf32>
    %502 = arith.negf %501 : vector<64x32xf32>
    %503 = math.exp %502 : vector<64x32xf32>
    %cst_75 = arith.constant 1.000000e+00 : f32
    %504 = vector.broadcast %cst_75 : f32 to vector<64x32xf32>
    %505 = arith.addf %504, %503 : vector<64x32xf32>
    %506 = arith.divf %504, %505 : vector<64x32xf32>
    %507 = vector.extract_strided_slice %506 {offsets = [0, 0], sizes = [32, 32], strides = [1, 1]} : vector<64x32xf32> to vector<32x32xf32>
    %508 = vector.extract_strided_slice %506 {offsets = [32, 0], sizes = [32, 32], strides = [1, 1]} : vector<64x32xf32> to vector<32x32xf32>
    %509 = vector.extract_strided_slice %496 {offsets = [64, 0], sizes = [32, 32], strides = [1, 1]} : vector<96x32xf32> to vector<32x32xf32>
    %510 = vector.broadcast %8 : vector<32x1xf32> to vector<32x32xf32>
    %511 = arith.addf %509, %510 : vector<32x32xf32>
    %512 = vector.extract_strided_slice %471 {offsets = [64, 0], sizes = [32, 32], strides = [1, 1]} : vector<96x32xf32> to vector<32x32xf32>
    %513 = vector.broadcast %9 : vector<32x1xf32> to vector<32x32xf32>
    %514 = arith.addf %512, %513 : vector<32x32xf32>
    %515 = arith.mulf %507, %514 : vector<32x32xf32>
    %516 = arith.addf %511, %515 : vector<32x32xf32>
    %517 = math.tanh %516 : vector<32x32xf32>
    %cst_76 = arith.constant 1.000000e+00 : f32
    %518 = vector.broadcast %cst_76 : f32 to vector<32x32xf32>
    %519 = arith.subf %518, %508 : vector<32x32xf32>
    %520 = arith.mulf %519, %517 : vector<32x32xf32>
    %521 = arith.mulf %508, %466 : vector<32x32xf32>
    %522 = arith.addf %520, %521 : vector<32x32xf32>
    %c6_i32 = arith.constant 6 : i32
    %523 = vector.broadcast %c6_i32 : i32 to vector<1x32xi32>
    %524 = arith.cmpi sgt, %3, %523 : vector<1x32xi32>
    %525 = arith.extui %524 : vector<1x32xi1> to vector<1x32xi32>
    %526 = arith.sitofp %525 : vector<1x32xi32> to vector<1x32xf32>
    %527 = vector.broadcast %526 : vector<1x32xf32> to vector<32x32xf32>
    %528 = arith.mulf %527, %494 : vector<32x32xf32>
    %cst_77 = arith.constant 1.000000e+00 : f32
    %529 = vector.broadcast %cst_77 : f32 to vector<1x32xf32>
    %530 = arith.subf %529, %526 : vector<1x32xf32>
    %531 = vector.broadcast %530 : vector<1x32xf32> to vector<32x32xf32>
    %532 = arith.mulf %531, %459 : vector<32x32xf32>
    %533 = arith.addf %528, %532 : vector<32x32xf32>
    %534 = vector.broadcast %526 : vector<1x32xf32> to vector<32x32xf32>
    %535 = arith.mulf %534, %522 : vector<32x32xf32>
    %cst_78 = arith.constant 1.000000e+00 : f32
    %536 = vector.broadcast %cst_78 : f32 to vector<1x32xf32>
    %537 = arith.subf %536, %526 : vector<1x32xf32>
    %538 = vector.broadcast %537 : vector<1x32xf32> to vector<32x32xf32>
    %539 = arith.mulf %538, %466 : vector<32x32xf32>
    %540 = arith.addf %535, %539 : vector<32x32xf32>
    %541 = tpu.concatenate %533, %540 in 0 : vector<32x32xf32>, vector<32x32xf32> -> vector<64x32xf32>
    %542 = arith.truncf %541 : vector<64x32xf32> to vector<64x32xbf16>
    %cst_79 = arith.constant dense<0.000000e+00> : vector<192x32xf32>
    %543 = tpu.matmul %4, %542, %cst_79 {dimension_numbers = #tpu.dot_dimension_numbers<[1], [0], [0], [1], [0, 0, 1, 1], [], []>} : vector<192x64xbf16>, vector<64x32xbf16>, vector<192x32xf32> -> vector<192x32xf32>
    %544 = vector.extract_strided_slice %543 {offsets = [0, 0], sizes = [96, 32], strides = [1, 1]} : vector<192x32xf32> to vector<96x32xf32>
    %545 = vector.extract_strided_slice %543 {offsets = [96, 0], sizes = [96, 32], strides = [1, 1]} : vector<192x32xf32> to vector<96x32xf32>
    %546 = vector.extract_strided_slice %20 {offsets = [0, 224], sizes = [96, 32], strides = [1, 1]} : vector<96x320xf32> to vector<96x32xf32>
    %547 = vector.extract_strided_slice %546 {offsets = [0, 0], sizes = [64, 32], strides = [1, 1]} : vector<96x32xf32> to vector<64x32xf32>
    %548 = vector.extract_strided_slice %544 {offsets = [0, 0], sizes = [64, 32], strides = [1, 1]} : vector<96x32xf32> to vector<64x32xf32>
    %549 = arith.addf %547, %548 : vector<64x32xf32>
    %550 = arith.negf %549 : vector<64x32xf32>
    %551 = math.exp %550 : vector<64x32xf32>
    %cst_80 = arith.constant 1.000000e+00 : f32
    %552 = vector.broadcast %cst_80 : f32 to vector<64x32xf32>
    %553 = arith.addf %552, %551 : vector<64x32xf32>
    %554 = arith.divf %552, %553 : vector<64x32xf32>
    %555 = vector.extract_strided_slice %554 {offsets = [0, 0], sizes = [32, 32], strides = [1, 1]} : vector<64x32xf32> to vector<32x32xf32>
    %556 = vector.extract_strided_slice %554 {offsets = [32, 0], sizes = [32, 32], strides = [1, 1]} : vector<64x32xf32> to vector<32x32xf32>
    %557 = vector.extract_strided_slice %546 {offsets = [64, 0], sizes = [32, 32], strides = [1, 1]} : vector<96x32xf32> to vector<32x32xf32>
    %558 = vector.extract_strided_slice %544 {offsets = [64, 0], sizes = [32, 32], strides = [1, 1]} : vector<96x32xf32> to vector<32x32xf32>
    %559 = vector.broadcast %6 : vector<32x1xf32> to vector<32x32xf32>
    %560 = arith.addf %558, %559 : vector<32x32xf32>
    %561 = arith.mulf %555, %560 : vector<32x32xf32>
    %562 = arith.addf %557, %561 : vector<32x32xf32>
    %563 = math.tanh %562 : vector<32x32xf32>
    %cst_81 = arith.constant 1.000000e+00 : f32
    %564 = vector.broadcast %cst_81 : f32 to vector<32x32xf32>
    %565 = arith.subf %564, %556 : vector<32x32xf32>
    %566 = arith.mulf %565, %563 : vector<32x32xf32>
    %567 = arith.mulf %556, %533 : vector<32x32xf32>
    %568 = arith.addf %566, %567 : vector<32x32xf32>
    %569 = arith.truncf %568 : vector<32x32xf32> to vector<32x32xbf16>
    %cst_82 = arith.constant dense<0.000000e+00> : vector<96x32xf32>
    %570 = tpu.matmul %5, %569, %cst_82 {dimension_numbers = #tpu.dot_dimension_numbers<[1], [0], [0], [1], [0, 0, 1, 1], [], []>} : vector<96x32xbf16>, vector<32x32xbf16>, vector<96x32xf32> -> vector<96x32xf32>
    %571 = vector.extract_strided_slice %570 {offsets = [0, 0], sizes = [64, 32], strides = [1, 1]} : vector<96x32xf32> to vector<64x32xf32>
    %572 = vector.extract_strided_slice %545 {offsets = [0, 0], sizes = [64, 32], strides = [1, 1]} : vector<96x32xf32> to vector<64x32xf32>
    %573 = arith.addf %571, %572 : vector<64x32xf32>
    %574 = vector.broadcast %7 : vector<64x1xf32> to vector<64x32xf32>
    %575 = arith.addf %573, %574 : vector<64x32xf32>
    %576 = arith.negf %575 : vector<64x32xf32>
    %577 = math.exp %576 : vector<64x32xf32>
    %cst_83 = arith.constant 1.000000e+00 : f32
    %578 = vector.broadcast %cst_83 : f32 to vector<64x32xf32>
    %579 = arith.addf %578, %577 : vector<64x32xf32>
    %580 = arith.divf %578, %579 : vector<64x32xf32>
    %581 = vector.extract_strided_slice %580 {offsets = [0, 0], sizes = [32, 32], strides = [1, 1]} : vector<64x32xf32> to vector<32x32xf32>
    %582 = vector.extract_strided_slice %580 {offsets = [32, 0], sizes = [32, 32], strides = [1, 1]} : vector<64x32xf32> to vector<32x32xf32>
    %583 = vector.extract_strided_slice %570 {offsets = [64, 0], sizes = [32, 32], strides = [1, 1]} : vector<96x32xf32> to vector<32x32xf32>
    %584 = vector.broadcast %8 : vector<32x1xf32> to vector<32x32xf32>
    %585 = arith.addf %583, %584 : vector<32x32xf32>
    %586 = vector.extract_strided_slice %545 {offsets = [64, 0], sizes = [32, 32], strides = [1, 1]} : vector<96x32xf32> to vector<32x32xf32>
    %587 = vector.broadcast %9 : vector<32x1xf32> to vector<32x32xf32>
    %588 = arith.addf %586, %587 : vector<32x32xf32>
    %589 = arith.mulf %581, %588 : vector<32x32xf32>
    %590 = arith.addf %585, %589 : vector<32x32xf32>
    %591 = math.tanh %590 : vector<32x32xf32>
    %cst_84 = arith.constant 1.000000e+00 : f32
    %592 = vector.broadcast %cst_84 : f32 to vector<32x32xf32>
    %593 = arith.subf %592, %582 : vector<32x32xf32>
    %594 = arith.mulf %593, %591 : vector<32x32xf32>
    %595 = arith.mulf %582, %540 : vector<32x32xf32>
    %596 = arith.addf %594, %595 : vector<32x32xf32>
    %c7_i32 = arith.constant 7 : i32
    %597 = vector.broadcast %c7_i32 : i32 to vector<1x32xi32>
    %598 = arith.cmpi sgt, %3, %597 : vector<1x32xi32>
    %599 = arith.extui %598 : vector<1x32xi1> to vector<1x32xi32>
    %600 = arith.sitofp %599 : vector<1x32xi32> to vector<1x32xf32>
    %601 = vector.broadcast %600 : vector<1x32xf32> to vector<32x32xf32>
    %602 = arith.mulf %601, %568 : vector<32x32xf32>
    %cst_85 = arith.constant 1.000000e+00 : f32
    %603 = vector.broadcast %cst_85 : f32 to vector<1x32xf32>
    %604 = arith.subf %603, %600 : vector<1x32xf32>
    %605 = vector.broadcast %604 : vector<1x32xf32> to vector<32x32xf32>
    %606 = arith.mulf %605, %533 : vector<32x32xf32>
    %607 = arith.addf %602, %606 : vector<32x32xf32>
    %608 = vector.broadcast %600 : vector<1x32xf32> to vector<32x32xf32>
    %609 = arith.mulf %608, %596 : vector<32x32xf32>
    %cst_86 = arith.constant 1.000000e+00 : f32
    %610 = vector.broadcast %cst_86 : f32 to vector<1x32xf32>
    %611 = arith.subf %610, %600 : vector<1x32xf32>
    %612 = vector.broadcast %611 : vector<1x32xf32> to vector<32x32xf32>
    %613 = arith.mulf %612, %540 : vector<32x32xf32>
    %614 = arith.addf %609, %613 : vector<32x32xf32>
    %615 = tpu.concatenate %607, %614 in 0 : vector<32x32xf32>, vector<32x32xf32> -> vector<64x32xf32>
    %616 = arith.truncf %615 : vector<64x32xf32> to vector<64x32xbf16>
    %cst_87 = arith.constant dense<0.000000e+00> : vector<192x32xf32>
    %617 = tpu.matmul %4, %616, %cst_87 {dimension_numbers = #tpu.dot_dimension_numbers<[1], [0], [0], [1], [0, 0, 1, 1], [], []>} : vector<192x64xbf16>, vector<64x32xbf16>, vector<192x32xf32> -> vector<192x32xf32>
    %618 = vector.extract_strided_slice %617 {offsets = [0, 0], sizes = [96, 32], strides = [1, 1]} : vector<192x32xf32> to vector<96x32xf32>
    %619 = vector.extract_strided_slice %617 {offsets = [96, 0], sizes = [96, 32], strides = [1, 1]} : vector<192x32xf32> to vector<96x32xf32>
    %620 = vector.extract_strided_slice %20 {offsets = [0, 256], sizes = [96, 32], strides = [1, 1]} : vector<96x320xf32> to vector<96x32xf32>
    %621 = vector.extract_strided_slice %620 {offsets = [0, 0], sizes = [64, 32], strides = [1, 1]} : vector<96x32xf32> to vector<64x32xf32>
    %622 = vector.extract_strided_slice %618 {offsets = [0, 0], sizes = [64, 32], strides = [1, 1]} : vector<96x32xf32> to vector<64x32xf32>
    %623 = arith.addf %621, %622 : vector<64x32xf32>
    %624 = arith.negf %623 : vector<64x32xf32>
    %625 = math.exp %624 : vector<64x32xf32>
    %cst_88 = arith.constant 1.000000e+00 : f32
    %626 = vector.broadcast %cst_88 : f32 to vector<64x32xf32>
    %627 = arith.addf %626, %625 : vector<64x32xf32>
    %628 = arith.divf %626, %627 : vector<64x32xf32>
    %629 = vector.extract_strided_slice %628 {offsets = [0, 0], sizes = [32, 32], strides = [1, 1]} : vector<64x32xf32> to vector<32x32xf32>
    %630 = vector.extract_strided_slice %628 {offsets = [32, 0], sizes = [32, 32], strides = [1, 1]} : vector<64x32xf32> to vector<32x32xf32>
    %631 = vector.extract_strided_slice %620 {offsets = [64, 0], sizes = [32, 32], strides = [1, 1]} : vector<96x32xf32> to vector<32x32xf32>
    %632 = vector.extract_strided_slice %618 {offsets = [64, 0], sizes = [32, 32], strides = [1, 1]} : vector<96x32xf32> to vector<32x32xf32>
    %633 = vector.broadcast %6 : vector<32x1xf32> to vector<32x32xf32>
    %634 = arith.addf %632, %633 : vector<32x32xf32>
    %635 = arith.mulf %629, %634 : vector<32x32xf32>
    %636 = arith.addf %631, %635 : vector<32x32xf32>
    %637 = math.tanh %636 : vector<32x32xf32>
    %cst_89 = arith.constant 1.000000e+00 : f32
    %638 = vector.broadcast %cst_89 : f32 to vector<32x32xf32>
    %639 = arith.subf %638, %630 : vector<32x32xf32>
    %640 = arith.mulf %639, %637 : vector<32x32xf32>
    %641 = arith.mulf %630, %607 : vector<32x32xf32>
    %642 = arith.addf %640, %641 : vector<32x32xf32>
    %643 = arith.truncf %642 : vector<32x32xf32> to vector<32x32xbf16>
    %cst_90 = arith.constant dense<0.000000e+00> : vector<96x32xf32>
    %644 = tpu.matmul %5, %643, %cst_90 {dimension_numbers = #tpu.dot_dimension_numbers<[1], [0], [0], [1], [0, 0, 1, 1], [], []>} : vector<96x32xbf16>, vector<32x32xbf16>, vector<96x32xf32> -> vector<96x32xf32>
    %645 = vector.extract_strided_slice %644 {offsets = [0, 0], sizes = [64, 32], strides = [1, 1]} : vector<96x32xf32> to vector<64x32xf32>
    %646 = vector.extract_strided_slice %619 {offsets = [0, 0], sizes = [64, 32], strides = [1, 1]} : vector<96x32xf32> to vector<64x32xf32>
    %647 = arith.addf %645, %646 : vector<64x32xf32>
    %648 = vector.broadcast %7 : vector<64x1xf32> to vector<64x32xf32>
    %649 = arith.addf %647, %648 : vector<64x32xf32>
    %650 = arith.negf %649 : vector<64x32xf32>
    %651 = math.exp %650 : vector<64x32xf32>
    %cst_91 = arith.constant 1.000000e+00 : f32
    %652 = vector.broadcast %cst_91 : f32 to vector<64x32xf32>
    %653 = arith.addf %652, %651 : vector<64x32xf32>
    %654 = arith.divf %652, %653 : vector<64x32xf32>
    %655 = vector.extract_strided_slice %654 {offsets = [0, 0], sizes = [32, 32], strides = [1, 1]} : vector<64x32xf32> to vector<32x32xf32>
    %656 = vector.extract_strided_slice %654 {offsets = [32, 0], sizes = [32, 32], strides = [1, 1]} : vector<64x32xf32> to vector<32x32xf32>
    %657 = vector.extract_strided_slice %644 {offsets = [64, 0], sizes = [32, 32], strides = [1, 1]} : vector<96x32xf32> to vector<32x32xf32>
    %658 = vector.broadcast %8 : vector<32x1xf32> to vector<32x32xf32>
    %659 = arith.addf %657, %658 : vector<32x32xf32>
    %660 = vector.extract_strided_slice %619 {offsets = [64, 0], sizes = [32, 32], strides = [1, 1]} : vector<96x32xf32> to vector<32x32xf32>
    %661 = vector.broadcast %9 : vector<32x1xf32> to vector<32x32xf32>
    %662 = arith.addf %660, %661 : vector<32x32xf32>
    %663 = arith.mulf %655, %662 : vector<32x32xf32>
    %664 = arith.addf %659, %663 : vector<32x32xf32>
    %665 = math.tanh %664 : vector<32x32xf32>
    %cst_92 = arith.constant 1.000000e+00 : f32
    %666 = vector.broadcast %cst_92 : f32 to vector<32x32xf32>
    %667 = arith.subf %666, %656 : vector<32x32xf32>
    %668 = arith.mulf %667, %665 : vector<32x32xf32>
    %669 = arith.mulf %656, %614 : vector<32x32xf32>
    %670 = arith.addf %668, %669 : vector<32x32xf32>
    %c8_i32 = arith.constant 8 : i32
    %671 = vector.broadcast %c8_i32 : i32 to vector<1x32xi32>
    %672 = arith.cmpi sgt, %3, %671 : vector<1x32xi32>
    %673 = arith.extui %672 : vector<1x32xi1> to vector<1x32xi32>
    %674 = arith.sitofp %673 : vector<1x32xi32> to vector<1x32xf32>
    %675 = vector.broadcast %674 : vector<1x32xf32> to vector<32x32xf32>
    %676 = arith.mulf %675, %642 : vector<32x32xf32>
    %cst_93 = arith.constant 1.000000e+00 : f32
    %677 = vector.broadcast %cst_93 : f32 to vector<1x32xf32>
    %678 = arith.subf %677, %674 : vector<1x32xf32>
    %679 = vector.broadcast %678 : vector<1x32xf32> to vector<32x32xf32>
    %680 = arith.mulf %679, %607 : vector<32x32xf32>
    %681 = arith.addf %676, %680 : vector<32x32xf32>
    %682 = vector.broadcast %674 : vector<1x32xf32> to vector<32x32xf32>
    %683 = arith.mulf %682, %670 : vector<32x32xf32>
    %cst_94 = arith.constant 1.000000e+00 : f32
    %684 = vector.broadcast %cst_94 : f32 to vector<1x32xf32>
    %685 = arith.subf %684, %674 : vector<1x32xf32>
    %686 = vector.broadcast %685 : vector<1x32xf32> to vector<32x32xf32>
    %687 = arith.mulf %686, %614 : vector<32x32xf32>
    %688 = arith.addf %683, %687 : vector<32x32xf32>
    %689 = tpu.concatenate %681, %688 in 0 : vector<32x32xf32>, vector<32x32xf32> -> vector<64x32xf32>
    %690 = arith.truncf %689 : vector<64x32xf32> to vector<64x32xbf16>
    %cst_95 = arith.constant dense<0.000000e+00> : vector<192x32xf32>
    %691 = tpu.matmul %4, %690, %cst_95 {dimension_numbers = #tpu.dot_dimension_numbers<[1], [0], [0], [1], [0, 0, 1, 1], [], []>} : vector<192x64xbf16>, vector<64x32xbf16>, vector<192x32xf32> -> vector<192x32xf32>
    %692 = vector.extract_strided_slice %691 {offsets = [0, 0], sizes = [96, 32], strides = [1, 1]} : vector<192x32xf32> to vector<96x32xf32>
    %693 = vector.extract_strided_slice %691 {offsets = [96, 0], sizes = [96, 32], strides = [1, 1]} : vector<192x32xf32> to vector<96x32xf32>
    %694 = vector.extract_strided_slice %20 {offsets = [0, 288], sizes = [96, 32], strides = [1, 1]} : vector<96x320xf32> to vector<96x32xf32>
    %695 = vector.extract_strided_slice %694 {offsets = [0, 0], sizes = [64, 32], strides = [1, 1]} : vector<96x32xf32> to vector<64x32xf32>
    %696 = vector.extract_strided_slice %692 {offsets = [0, 0], sizes = [64, 32], strides = [1, 1]} : vector<96x32xf32> to vector<64x32xf32>
    %697 = arith.addf %695, %696 : vector<64x32xf32>
    %698 = arith.negf %697 : vector<64x32xf32>
    %699 = math.exp %698 : vector<64x32xf32>
    %cst_96 = arith.constant 1.000000e+00 : f32
    %700 = vector.broadcast %cst_96 : f32 to vector<64x32xf32>
    %701 = arith.addf %700, %699 : vector<64x32xf32>
    %702 = arith.divf %700, %701 : vector<64x32xf32>
    %703 = vector.extract_strided_slice %702 {offsets = [0, 0], sizes = [32, 32], strides = [1, 1]} : vector<64x32xf32> to vector<32x32xf32>
    %704 = vector.extract_strided_slice %702 {offsets = [32, 0], sizes = [32, 32], strides = [1, 1]} : vector<64x32xf32> to vector<32x32xf32>
    %705 = vector.extract_strided_slice %694 {offsets = [64, 0], sizes = [32, 32], strides = [1, 1]} : vector<96x32xf32> to vector<32x32xf32>
    %706 = vector.extract_strided_slice %692 {offsets = [64, 0], sizes = [32, 32], strides = [1, 1]} : vector<96x32xf32> to vector<32x32xf32>
    %707 = vector.broadcast %6 : vector<32x1xf32> to vector<32x32xf32>
    %708 = arith.addf %706, %707 : vector<32x32xf32>
    %709 = arith.mulf %703, %708 : vector<32x32xf32>
    %710 = arith.addf %705, %709 : vector<32x32xf32>
    %711 = math.tanh %710 : vector<32x32xf32>
    %cst_97 = arith.constant 1.000000e+00 : f32
    %712 = vector.broadcast %cst_97 : f32 to vector<32x32xf32>
    %713 = arith.subf %712, %704 : vector<32x32xf32>
    %714 = arith.mulf %713, %711 : vector<32x32xf32>
    %715 = arith.mulf %704, %681 : vector<32x32xf32>
    %716 = arith.addf %714, %715 : vector<32x32xf32>
    %717 = arith.truncf %716 : vector<32x32xf32> to vector<32x32xbf16>
    %cst_98 = arith.constant dense<0.000000e+00> : vector<96x32xf32>
    %718 = tpu.matmul %5, %717, %cst_98 {dimension_numbers = #tpu.dot_dimension_numbers<[1], [0], [0], [1], [0, 0, 1, 1], [], []>} : vector<96x32xbf16>, vector<32x32xbf16>, vector<96x32xf32> -> vector<96x32xf32>
    %719 = vector.extract_strided_slice %718 {offsets = [0, 0], sizes = [64, 32], strides = [1, 1]} : vector<96x32xf32> to vector<64x32xf32>
    %720 = vector.extract_strided_slice %693 {offsets = [0, 0], sizes = [64, 32], strides = [1, 1]} : vector<96x32xf32> to vector<64x32xf32>
    %721 = arith.addf %719, %720 : vector<64x32xf32>
    %722 = vector.broadcast %7 : vector<64x1xf32> to vector<64x32xf32>
    %723 = arith.addf %721, %722 : vector<64x32xf32>
    %724 = arith.negf %723 : vector<64x32xf32>
    %725 = math.exp %724 : vector<64x32xf32>
    %cst_99 = arith.constant 1.000000e+00 : f32
    %726 = vector.broadcast %cst_99 : f32 to vector<64x32xf32>
    %727 = arith.addf %726, %725 : vector<64x32xf32>
    %728 = arith.divf %726, %727 : vector<64x32xf32>
    %729 = vector.extract_strided_slice %728 {offsets = [0, 0], sizes = [32, 32], strides = [1, 1]} : vector<64x32xf32> to vector<32x32xf32>
    %730 = vector.extract_strided_slice %728 {offsets = [32, 0], sizes = [32, 32], strides = [1, 1]} : vector<64x32xf32> to vector<32x32xf32>
    %731 = vector.extract_strided_slice %718 {offsets = [64, 0], sizes = [32, 32], strides = [1, 1]} : vector<96x32xf32> to vector<32x32xf32>
    %732 = vector.broadcast %8 : vector<32x1xf32> to vector<32x32xf32>
    %733 = arith.addf %731, %732 : vector<32x32xf32>
    %734 = vector.extract_strided_slice %693 {offsets = [64, 0], sizes = [32, 32], strides = [1, 1]} : vector<96x32xf32> to vector<32x32xf32>
    %735 = vector.broadcast %9 : vector<32x1xf32> to vector<32x32xf32>
    %736 = arith.addf %734, %735 : vector<32x32xf32>
    %737 = arith.mulf %729, %736 : vector<32x32xf32>
    %738 = arith.addf %733, %737 : vector<32x32xf32>
    %739 = math.tanh %738 : vector<32x32xf32>
    %cst_100 = arith.constant 1.000000e+00 : f32
    %740 = vector.broadcast %cst_100 : f32 to vector<32x32xf32>
    %741 = arith.subf %740, %730 : vector<32x32xf32>
    %742 = arith.mulf %741, %739 : vector<32x32xf32>
    %743 = arith.mulf %730, %688 : vector<32x32xf32>
    %744 = arith.addf %742, %743 : vector<32x32xf32>
    %c9_i32 = arith.constant 9 : i32
    %745 = vector.broadcast %c9_i32 : i32 to vector<1x32xi32>
    %746 = arith.cmpi sgt, %3, %745 : vector<1x32xi32>
    %747 = arith.extui %746 : vector<1x32xi1> to vector<1x32xi32>
    %748 = arith.sitofp %747 : vector<1x32xi32> to vector<1x32xf32>
    %749 = vector.broadcast %748 : vector<1x32xf32> to vector<32x32xf32>
    %750 = arith.mulf %749, %744 : vector<32x32xf32>
    %cst_101 = arith.constant 1.000000e+00 : f32
    %751 = vector.broadcast %cst_101 : f32 to vector<1x32xf32>
    %752 = arith.subf %751, %748 : vector<1x32xf32>
    %753 = vector.broadcast %752 : vector<1x32xf32> to vector<32x32xf32>
    %754 = arith.mulf %753, %688 : vector<32x32xf32>
    %755 = arith.addf %750, %754 : vector<32x32xf32>
    %c0_102 = arith.constant 0 : index
    %c0_103 = arith.constant 0 : index
    %756 = vector.load %arg11[%c0_102, %c0_103] : memref<16x32xbf16, #tpu.memory_space<vmem>>, vector<16x32xbf16>
    %757 = arith.truncf %755 : vector<32x32xf32> to vector<32x32xbf16>
    %cst_104 = arith.constant dense<0.000000e+00> : vector<16x32xf32>
    %758 = tpu.matmul %756, %757, %cst_104 {dimension_numbers = #tpu.dot_dimension_numbers<[1], [0], [0], [1], [0, 0, 1, 1], [], []>} : vector<16x32xbf16>, vector<32x32xbf16>, vector<16x32xf32> -> vector<16x32xf32>
    %c0_105 = arith.constant 0 : index
    %c0_106 = arith.constant 0 : index
    %759 = vector.load %arg12[%c0_105, %c0_106] : memref<16x1xf32, #tpu.memory_space<vmem>>, vector<16x1xf32>
    %760 = vector.broadcast %759 : vector<16x1xf32> to vector<16x32xf32>
    %761 = arith.addf %758, %760 : vector<16x32xf32>
    %762 = math.tanh %761 : vector<16x32xf32>
    %763 = vector.extract_strided_slice %762 {offsets = [0, 0], sizes = [16, 16], strides = [1, 1]} : vector<16x32xf32> to vector<16x16xf32>
    %764 = vector.extract_strided_slice %762 {offsets = [0, 16], sizes = [16, 16], strides = [1, 1]} : vector<16x32xf32> to vector<16x16xf32>
    %765 = arith.mulf %763, %764 : vector<16x16xf32>
    %cst_107 = arith.constant dense<0.000000e+00> : vector<16xf32>
    %766 = vector.multi_reduction <add>, %765, %cst_107 [0] : vector<16x16xf32> to vector<16xf32>
    %767 = vector.shape_cast %766 : vector<16xf32> to vector<1x16xf32>
    %768 = arith.mulf %763, %763 : vector<16x16xf32>
    %cst_108 = arith.constant dense<0.000000e+00> : vector<16xf32>
    %769 = vector.multi_reduction <add>, %768, %cst_108 [0] : vector<16x16xf32> to vector<16xf32>
    %770 = vector.shape_cast %769 : vector<16xf32> to vector<1x16xf32>
    %771 = arith.mulf %764, %764 : vector<16x16xf32>
    %cst_109 = arith.constant dense<0.000000e+00> : vector<16xf32>
    %772 = vector.multi_reduction <add>, %771, %cst_109 [0] : vector<16x16xf32> to vector<16xf32>
    %773 = vector.shape_cast %772 : vector<16xf32> to vector<1x16xf32>
    %cst_110 = arith.constant 1.000000e-16 : f32
    %774 = vector.broadcast %cst_110 : f32 to vector<1x16xf32>
    %775 = arith.maximumf %770, %774 : vector<1x16xf32>
    %cst_111 = arith.constant 1.000000e-16 : f32
    %776 = vector.broadcast %cst_111 : f32 to vector<1x16xf32>
    %777 = arith.maximumf %773, %776 : vector<1x16xf32>
    %778 = arith.mulf %775, %777 : vector<1x16xf32>
    %779 = math.rsqrt %778 : vector<1x16xf32>
    %780 = arith.mulf %767, %779 : vector<1x16xf32>
    %c0_112 = arith.constant 0 : index
    %c0_113 = arith.constant 0 : index
    %c0_114 = arith.constant 0 : index
    %781 = vector.load %arg13[%c0_112, %c0_113, %c0_114] : memref<1x1x16xf32, #tpu.memory_space<vmem>>, vector<1x1x16xf32>
    %782 = vector.shape_cast %781 : vector<1x1x16xf32> to vector<1x16xf32>
    %783 = vector.shape_cast %780 : vector<1x16xf32> to vector<1x1x16xf32>
    tpu.vector_store %arg13[%c0_112, %c0_113, %c0_114], %783 {strides = array<i32>} : memref<1x1x16xf32, #tpu.memory_space<vmem>>, vector<1x1x16xf32>,
    return
  }
  func.func @transform_0(%arg0: i32) -> (i32, i32, i32) {
    %c0_i32 = arith.constant 0 : i32
    %c0_i32_0 = arith.constant 0 : i32
    %c0_i32_1 = arith.constant 0 : i32
    return %arg0, %c0_i32, %c0_i32_0 : i32, i32, i32
  }
  func.func @transform_1(%arg0: i32) -> (i32, i32, i32) {
    %c0_i32 = arith.constant 0 : i32
    %c0_i32_0 = arith.constant 0 : i32
    %c0_i32_1 = arith.constant 0 : i32
    return %arg0, %c0_i32, %c0_i32_0 : i32, i32, i32
  }
  func.func @transform_2(%arg0: i32) -> (i32, i32) {
    %c0_i32 = arith.constant 0 : i32
    %c0_i32_0 = arith.constant 0 : i32
    %c0_i32_1 = arith.constant 0 : i32
    return %c0_i32, %c0_i32_0 : i32, i32
  }
  func.func @transform_3(%arg0: i32) -> (i32, i32) {
    %c0_i32 = arith.constant 0 : i32
    %c0_i32_0 = arith.constant 0 : i32
    %c0_i32_1 = arith.constant 0 : i32
    return %c0_i32, %c0_i32_0 : i32, i32
  }
  func.func @transform_4(%arg0: i32) -> (i32, i32) {
    %c0_i32 = arith.constant 0 : i32
    %c0_i32_0 = arith.constant 0 : i32
    %c0_i32_1 = arith.constant 0 : i32
    return %c0_i32, %c0_i32_0 : i32, i32
  }
  func.func @transform_5(%arg0: i32) -> (i32, i32) {
    %c0_i32 = arith.constant 0 : i32
    %c0_i32_0 = arith.constant 0 : i32
    %c0_i32_1 = arith.constant 0 : i32
    return %c0_i32, %c0_i32_0 : i32, i32
  }
  func.func @transform_6(%arg0: i32) -> (i32, i32) {
    %c0_i32 = arith.constant 0 : i32
    %c0_i32_0 = arith.constant 0 : i32
    %c0_i32_1 = arith.constant 0 : i32
    return %c0_i32, %c0_i32_0 : i32, i32
  }
  func.func @transform_7(%arg0: i32) -> (i32, i32) {
    %c0_i32 = arith.constant 0 : i32
    %c0_i32_0 = arith.constant 0 : i32
    %c0_i32_1 = arith.constant 0 : i32
    return %c0_i32, %c0_i32_0 : i32, i32
  }
  func.func @transform_8(%arg0: i32) -> (i32, i32) {
    %c0_i32 = arith.constant 0 : i32
    %c0_i32_0 = arith.constant 0 : i32
    %c0_i32_1 = arith.constant 0 : i32
    return %c0_i32, %c0_i32_0 : i32, i32
  }
  func.func @transform_9(%arg0: i32) -> (i32, i32) {
    %c0_i32 = arith.constant 0 : i32
    %c0_i32_0 = arith.constant 0 : i32
    %c0_i32_1 = arith.constant 0 : i32
    return %c0_i32, %c0_i32_0 : i32, i32
  }
  func.func @transform_10(%arg0: i32) -> (i32, i32) {
    %c0_i32 = arith.constant 0 : i32
    %c0_i32_0 = arith.constant 0 : i32
    %c0_i32_1 = arith.constant 0 : i32
    return %c0_i32, %c0_i32_0 : i32, i32
  }
  func.func @transform_11(%arg0: i32) -> (i32, i32) {
    %c0_i32 = arith.constant 0 : i32
    %c0_i32_0 = arith.constant 0 : i32
    %c0_i32_1 = arith.constant 0 : i32
    return %c0_i32, %c0_i32_0 : i32, i32
  }
  func.func @transform_12(%arg0: i32) -> (i32, i32, i32) {
    %c0_i32 = arith.constant 0 : i32
    %c0_i32_0 = arith.constant 0 : i32
    %c0_i32_1 = arith.constant 0 : i32
    return %arg0, %c0_i32, %c0_i32_0 : i32, i32, i32
  }
}

</mosaic_0001>

<llo_original>
// kernel: reward_model_forward.1
$region0: #{reward_model_forward.1}
  #allocation0 [shape = 'u32[]', space=smem, size = 0x4, offset = 0x4, fixed_abs, tag = 'smem constant byte address 0x4 - core index']
  #allocation1 [shape = 'u32[72,128]{1,0:T(1,128)}', space=vmem, size = 0x9000, scoped, tag = 'internal scratch']
  %s0 = inlined_call_operand.vmem [shape: s32[4,1,320], index: 0, kind: input, shape index: {}]
  %s1 = inlined_call_operand.vmem [shape: s32[4,1,32], index: 1, kind: input, shape index: {}]
  %s2 = inlined_call_operand.vmem [shape: bf16[96,64], index: 2, kind: input, shape index: {}]
  %s3 = inlined_call_operand.vmem [shape: f32[96,1], index: 3, kind: input, shape index: {}]
  %s4 = inlined_call_operand.vmem [shape: f32[32,1], index: 4, kind: input, shape index: {}]
  %s5 = inlined_call_operand.vmem [shape: bf16[192,64], index: 5, kind: input, shape index: {}]
  %s6 = inlined_call_operand.vmem [shape: bf16[96,32], index: 6, kind: input, shape index: {}]
  %s7 = inlined_call_operand.vmem [shape: f32[64,1], index: 7, kind: input, shape index: {}]
  %s8 = inlined_call_operand.vmem [shape: f32[32,1], index: 8, kind: input, shape index: {}]
  %s9 = inlined_call_operand.vmem [shape: f32[32,1], index: 9, kind: input, shape index: {}]
  %s10 = inlined_call_operand.vmem [shape: bf16[16,32], index: 10, kind: input, shape index: {}]
  %s11 = inlined_call_operand.vmem [shape: f32[16,1], index: 11, kind: input, shape index: {}]
  %s12 = inlined_call_operand.vmem [shape: f32[4,1,16], index: 12, kind: output, shape index: {}]
  %s13 = sld [smem:[#allocation0]]
  $region81: #{reward_model_forward.1} parent=0
    _
  %s15 = ssub.s32 1, %s13
  %s16 = scalar_select 0, %s15, %s13
  loop: start=0, step=1, limit=6
  $region2: #{reward_model_forward.1} parent=0 // loop_pre_header
    _
  $region3: #{reward_model_forward.1} parent=0 // loop_header
    %s18 = sphi 0, %s22
    %p19 = scmp.ge.s32.totalorder %s18, 6
    %s28 = sphi 0, %s30
    %s31 = sphi 0, %s28
    %s32 = sphi 0, %s31
    %s48 = sphi 0, %s32
    %s54 = sphi 0, %s56
    %s57 = sphi 0, %s54
    %s58 = sphi 0, %s57
    %s74 = sphi 0, %s58
    %s78 = sphi 0, %s78
    %s80 = sphi 0, %s78
    %s81 = sphi 0, %s80
    %s95 = sphi 0, %s81
    %s99 = sphi 0, %s99
    %s101 = sphi 0, %s99
    %s102 = sphi 0, %s101
    %s116 = sphi 0, %s102
    %s120 = sphi 0, %s120
    %s122 = sphi 0, %s120
    %s123 = sphi 0, %s122
    %s137 = sphi 0, %s123
    %s141 = sphi 0, %s141
    %s143 = sphi 0, %s141
    %s144 = sphi 0, %s143
    %s158 = sphi 0, %s144
    %s162 = sphi 0, %s162
    %s164 = sphi 0, %s162
    %s165 = sphi 0, %s164
    %s179 = sphi 0, %s165
    %s183 = sphi 0, %s183
    %s185 = sphi 0, %s183
    %s186 = sphi 0, %s185
    %s200 = sphi 0, %s186
    %s204 = sphi 0, %s204
    %s206 = sphi 0, %s204
    %s207 = sphi 0, %s206
    %s221 = sphi 0, %s207
    %s225 = sphi 0, %s225
    %s227 = sphi 0, %s225
    %s228 = sphi 0, %s227
    %s242 = sphi 0, %s228
    %s246 = sphi 0, %s246
    %s248 = sphi 0, %s246
    %s249 = sphi 0, %s248
    %s263 = sphi 0, %s249
    %s267 = sphi 0, %s267
    %s269 = sphi 0, %s267
    %s270 = sphi 0, %s269
    %s284 = sphi 0, %s270
    %s290 = sphi 0, %s292
    %s293 = sphi 0, %s290
    %s294 = sphi 0, %s293
    %s310 = sphi 0, %s294
  $region4: #{reward_model_forward.1} parent=0 // loop_header_branch
    %21 = sbr.rel (%p19) target = $region8
  $region5: #{reward_model_forward.1} parent=0 // loop_body
    %s23 = ssub.s32 %s18, 1
    %s24 = ssub.s32 %s18, 2
    %s25 = sadd.s32 %s18, 1
    %s26 = ssub.s32 %s18, %s25
    %p27 = scmp.eq.s32.totalorder %s26, 0
    %s29 = sadd.s32 %s28, 1
    %s30 = scalar_select %p27, %s28, %s29
    %p33 = pneg %p27
    %p34 = scmp.eq.s32.totalorder %s18, 3
    %p35 = por %p33, %p34
    %p36 = scmp.ne.s32.totalorder %s28, %s31
    %p37 = scmp.eq.s32.totalorder %s18, 0
    %p38 = por %p36, %p37
    %p39 = scmp.ne.s32.totalorder %s28, %s31
    %p40 = scmp.eq.s32.totalorder %s23, 3
    %p41 = por %p39, %p40
    %p42 = scmp.ne.s32.totalorder %s31, %s32
    %p43 = scmp.eq.s32.totalorder %s23, 0
    %p44 = por %p42, %p43
    %p45 = scmp.ne.s32.totalorder %s31, %s32
    %p46 = scmp.eq.s32.totalorder %s24, 3
    %p47 = por %p45, %p46
    %p49 = scmp.ne.s32.totalorder %s32, %s48
    %p50 = scmp.eq.s32.totalorder %s24, 0
    %p51 = por %p49, %p50
    %s52 = ssub.s32 %s18, %s25
    %p53 = scmp.eq.s32.totalorder %s52, 0
    %s55 = sadd.s32 %s54, 1
    %s56 = scalar_select %p53, %s54, %s55
    %p59 = pneg %p53
    %p60 = scmp.eq.s32.totalorder %s18, 3
    %p61 = por %p59, %p60
    %p62 = scmp.ne.s32.totalorder %s54, %s57
    %p63 = scmp.eq.s32.totalorder %s18, 0
    %p64 = por %p62, %p63
    %p65 = scmp.ne.s32.totalorder %s54, %s57
    %p66 = scmp.eq.s32.totalorder %s23, 3
    %p67 = por %p65, %p66
    %p68 = scmp.ne.s32.totalorder %s57, %s58
    %p69 = scmp.eq.s32.totalorder %s23, 0
    %p70 = por %p68, %p69
    %p71 = scmp.ne.s32.totalorder %s57, %s58
    %p72 = scmp.eq.s32.totalorder %s24, 3
    %p73 = por %p71, %p72
    %p75 = scmp.ne.s32.totalorder %s58, %s74
    %p76 = scmp.eq.s32.totalorder %s24, 0
    %p77 = por %p75, %p76
    %s79 = sadd.s32 %s78, 1
    %p82 = scmp.eq.s32.totalorder %s18, 3
    %p83 = scmp.ne.s32.totalorder %s78, %s80
    %p84 = scmp.eq.s32.totalorder %s18, 0
    %p85 = por %p83, %p84
    %p86 = scmp.ne.s32.totalorder %s78, %s80
    %p87 = scmp.eq.s32.totalorder %s23, 3
    %p88 = por %p86, %p87
    %p89 = scmp.ne.s32.totalorder %s80, %s81
    %p90 = scmp.eq.s32.totalorder %s23, 0
    %p91 = por %p89, %p90
    %p92 = scmp.ne.s32.totalorder %s80, %s81
    %p93 = scmp.eq.s32.totalorder %s24, 3
    %p94 = por %p92, %p93
    %p96 = scmp.ne.s32.totalorder %s81, %s95
    %p97 = scmp.eq.s32.totalorder %s24, 0
    %p98 = por %p96, %p97
    %s100 = sadd.s32 %s99, 1
    %p103 = scmp.eq.s32.totalorder %s18, 3
    %p104 = scmp.ne.s32.totalorder %s99, %s101
    %p105 = scmp.eq.s32.totalorder %s18, 0
    %p106 = por %p104, %p105
    %p107 = scmp.ne.s32.totalorder %s99, %s101
    %p108 = scmp.eq.s32.totalorder %s23, 3
    %p109 = por %p107, %p108
    %p110 = scmp.ne.s32.totalorder %s101, %s102
    %p111 = scmp.eq.s32.totalorder %s23, 0
    %p112 = por %p110, %p111
    %p113 = scmp.ne.s32.totalorder %s101, %s102
    %p114 = scmp.eq.s32.totalorder %s24, 3
    %p115 = por %p113, %p114
    %p117 = scmp.ne.s32.totalorder %s102, %s116
    %p118 = scmp.eq.s32.totalorder %s24, 0
    %p119 = por %p117, %p118
    %s121 = sadd.s32 %s120, 1
    %p124 = scmp.eq.s32.totalorder %s18, 3
    %p125 = scmp.ne.s32.totalorder %s120, %s122
    %p126 = scmp.eq.s32.totalorder %s18, 0
    %p127 = por %p125, %p126
    %p128 = scmp.ne.s32.totalorder %s120, %s122
    %p129 = scmp.eq.s32.totalorder %s23, 3
    %p130 = por %p128, %p129
    %p131 = scmp.ne.s32.totalorder %s122, %s123
    %p132 = scmp.eq.s32.totalorder %s23, 0
    %p133 = por %p131, %p132
    %p134 = scmp.ne.s32.totalorder %s122, %s123
    %p135 = scmp.eq.s32.totalorder %s24, 3
    %p136 = por %p134, %p135
    %p138 = scmp.ne.s32.totalorder %s123, %s137
    %p139 = scmp.eq.s32.totalorder %s24, 0
    %p140 = por %p138, %p139
    %s142 = sadd.s32 %s141, 1
    %p145 = scmp.eq.s32.totalorder %s18, 3
    %p146 = scmp.ne.s32.totalorder %s141, %s143
    %p147 = scmp.eq.s32.totalorder %s18, 0
    %p148 = por %p146, %p147
    %p149 = scmp.ne.s32.totalorder %s141, %s143
    %p150 = scmp.eq.s32.totalorder %s23, 3
    %p151 = por %p149, %p150
    %p152 = scmp.ne.s32.totalorder %s143, %s144
    %p153 = scmp.eq.s32.totalorder %s23, 0
    %p154 = por %p152, %p153
    %p155 = scmp.ne.s32.totalorder %s143, %s144
    %p156 = scmp.eq.s32.totalorder %s24, 3
    %p157 = por %p155, %p156
    %p159 = scmp.ne.s32.totalorder %s144, %s158
    %p160 = scmp.eq.s32.totalorder %s24, 0
    %p161 = por %p159, %p160
    %s163 = sadd.s32 %s162, 1
    %p166 = scmp.eq.s32.totalorder %s18, 3
    %p167 = scmp.ne.s32.totalorder %s162, %s164
    %p168 = scmp.eq.s32.totalorder %s18, 0
    %p169 = por %p167, %p168
    %p170 = scmp.ne.s32.totalorder %s162, %s164
    %p171 = scmp.eq.s32.totalorder %s23, 3
    %p172 = por %p170, %p171
    %p173 = scmp.ne.s32.totalorder %s164, %s165
    %p174 = scmp.eq.s32.totalorder %s23, 0
    %p175 = por %p173, %p174
    %p176 = scmp.ne.s32.totalorder %s164, %s165
    %p177 = scmp.eq.s32.totalorder %s24, 3
    %p178 = por %p176, %p177
    %p180 = scmp.ne.s32.totalorder %s165, %s179
    %p181 = scmp.eq.s32.totalorder %s24, 0
    %p182 = por %p180, %p181
    %s184 = sadd.s32 %s183, 1
    %p187 = scmp.eq.s32.totalorder %s18, 3
    %p188 = scmp.ne.s32.totalorder %s183, %s185
    %p189 = scmp.eq.s32.totalorder %s18, 0
    %p190 = por %p188, %p189
    %p191 = scmp.ne.s32.totalorder %s183, %s185
    %p192 = scmp.eq.s32.totalorder %s23, 3
    %p193 = por %p191, %p192
    %p194 = scmp.ne.s32.totalorder %s185, %s186
    %p195 = scmp.eq.s32.totalorder %s23, 0
    %p196 = por %p194, %p195
    %p197 = scmp.ne.s32.totalorder %s185, %s186
    %p198 = scmp.eq.s32.totalorder %s24, 3
    %p199 = por %p197, %p198
    %p201 = scmp.ne.s32.totalorder %s186, %s200
    %p202 = scmp.eq.s32.totalorder %s24, 0
    %p203 = por %p201, %p202
    %s205 = sadd.s32 %s204, 1
    %p208 = scmp.eq.s32.totalorder %s18, 3
    %p209 = scmp.ne.s32.totalorder %s204, %s206
    %p210 = scmp.eq.s32.totalorder %s18, 0
    %p211 = por %p209, %p210
    %p212 = scmp.ne.s32.totalorder %s204, %s206
    %p213 = scmp.eq.s32.totalorder %s23, 3
    %p214 = por %p212, %p213
    %p215 = scmp.ne.s32.totalorder %s206, %s207
    %p216 = scmp.eq.s32.totalorder %s23, 0
    %p217 = por %p215, %p216
    %p218 = scmp.ne.s32.totalorder %s206, %s207
    %p219 = scmp.eq.s32.totalorder %s24, 3
    %p220 = por %p218, %p219
    %p222 = scmp.ne.s32.totalorder %s207, %s221
    %p223 = scmp.eq.s32.totalorder %s24, 0
    %p224 = por %p222, %p223
    %s226 = sadd.s32 %s225, 1
    %p229 = scmp.eq.s32.totalorder %s18, 3
    %p230 = scmp.ne.s32.totalorder %s225, %s227
    %p231 = scmp.eq.s32.totalorder %s18, 0
    %p232 = por %p230, %p231
    %p233 = scmp.ne.s32.totalorder %s225, %s227
    %p234 = scmp.eq.s32.totalorder %s23, 3
    %p235 = por %p233, %p234
    %p236 = scmp.ne.s32.totalorder %s227, %s228
    %p237 = scmp.eq.s32.totalorder %s23, 0
    %p238 = por %p236, %p237
    %p239 = scmp.ne.s32.totalorder %s227, %s228
    %p240 = scmp.eq.s32.totalorder %s24, 3
    %p241 = por %p239, %p240
    %p243 = scmp.ne.s32.totalorder %s228, %s242
    %p244 = scmp.eq.s32.totalorder %s24, 0
    %p245 = por %p243, %p244
    %s247 = sadd.s32 %s246, 1
    %p250 = scmp.eq.s32.totalorder %s18, 3
    %p251 = scmp.ne.s32.totalorder %s246, %s248
    %p252 = scmp.eq.s32.totalorder %s18, 0
    %p253 = por %p251, %p252
    %p254 = scmp.ne.s32.totalorder %s246, %s248
    %p255 = scmp.eq.s32.totalorder %s23, 3
    %p256 = por %p254, %p255
    %p257 = scmp.ne.s32.totalorder %s248, %s249
    %p258 = scmp.eq.s32.totalorder %s23, 0
    %p259 = por %p257, %p258
    %p260 = scmp.ne.s32.totalorder %s248, %s249
    %p261 = scmp.eq.s32.totalorder %s24, 3
    %p262 = por %p260, %p261
    %p264 = scmp.ne.s32.totalorder %s249, %s263
    %p265 = scmp.eq.s32.totalorder %s24, 0
    %p266 = por %p264, %p265
    %s268 = sadd.s32 %s267, 1
    %p271 = scmp.eq.s32.totalorder %s18, 3
    %p272 = scmp.ne.s32.totalorder %s267, %s269
    %p273 = scmp.eq.s32.totalorder %s18, 0
    %p274 = por %p272, %p273
    %p275 = scmp.ne.s32.totalorder %s267, %s269
    %p276 = scmp.eq.s32.totalorder %s23, 3
    %p277 = por %p275, %p276
    %p278 = scmp.ne.s32.totalorder %s269, %s270
    %p279 = scmp.eq.s32.totalorder %s23, 0
    %p280 = por %p278, %p279
    %p281 = scmp.ne.s32.totalorder %s269, %s270
    %p282 = scmp.eq.s32.totalorder %s24, 3
    %p283 = por %p281, %p282
    %p285 = scmp.ne.s32.totalorder %s270, %s284
    %p286 = scmp.eq.s32.totalorder %s24, 0
    %p287 = por %p285, %p286
    %s288 = ssub.s32 %s18, %s25
    %p289 = scmp.eq.s32.totalorder %s288, 0
    %s291 = sadd.s32 %s290, 1
    %s292 = scalar_select %p289, %s290, %s291
    %p295 = pneg %p289
    %p296 = scmp.eq.s32.totalorder %s18, 3
    %p297 = por %p295, %p296
    %p298 = scmp.ne.s32.totalorder %s290, %s293
    %p299 = scmp.eq.s32.totalorder %s18, 0
    %p300 = por %p298, %p299
    %p301 = scmp.ne.s32.totalorder %s290, %s293
    %p302 = scmp.eq.s32.totalorder %s23, 3
    %p303 = por %p301, %p302
    %p304 = scmp.ne.s32.totalorder %s293, %s294
    %p305 = scmp.eq.s32.totalorder %s23, 0
    %p306 = por %p304, %p305
    %p307 = scmp.ne.s32.totalorder %s293, %s294
    %p308 = scmp.eq.s32.totalorder %s24, 3
    %p309 = por %p307, %p308
    %p311 = scmp.ne.s32.totalorder %s294, %s310
    %p312 = scmp.eq.s32.totalorder %s24, 0
    %p313 = por %p311, %p312
    %p314 = scmp.le.s32.totalorder 1, %s18
    %p315 = scmp.lt.s32.totalorder %s18, 5
    %p316 = pnand %p314, %p315
    %p317 = pneg %p316
    // Predicated region
    $region9: #{reward_model_forward.1} parent=5 // pred_check
      _
    $region10: #{reward_model_forward.1} parent=5 // pred_check_branch
      %319 = sbr.rel (%p316) target = $region12
    $region11: #{reward_model_forward.1} parent=5 // pred_region
      %s320 = ssub.s32 %s18, 1
      // Predicated region
      $region13: #{reward_model_forward.1} parent=11 // pred_check
        %p321 = pneg %p91
      $region14: #{reward_model_forward.1} parent=11 // pred_check_branch
        %323 = sbr.rel (%p321) target = $region16
      $region15: #{reward_model_forward.1} parent=11 // pred_region
        _
      $region16: #{reward_model_forward.1} parent=11 // pred_fallthru
        _
      // Predicated region
      $region17: #{reward_model_forward.1} parent=11 // pred_check
        %p324 = pneg %p112
      $region18: #{reward_model_forward.1} parent=11 // pred_check_branch
        %326 = sbr.rel (%p324) target = $region20
      $region19: #{reward_model_forward.1} parent=11 // pred_region
        _
      $region20: #{reward_model_forward.1} parent=11 // pred_fallthru
        _
      // Predicated region
      $region21: #{reward_model_forward.1} parent=11 // pred_check
        %p327 = pneg %p133
      $region22: #{reward_model_forward.1} parent=11 // pred_check_branch
        %329 = sbr.rel (%p327) target = $region24
      $region23: #{reward_model_forward.1} parent=11 // pred_region
        _
      $region24: #{reward_model_forward.1} parent=11 // pred_fallthru
        _
      // Predicated region
      $region25: #{reward_model_forward.1} parent=11 // pred_check
        %p330 = pneg %p154
      $region26: #{reward_model_forward.1} parent=11 // pred_check_branch
        %332 = sbr.rel (%p330) target = $region28
      $region27: #{reward_model_forward.1} parent=11 // pred_region
        _
      $region28: #{reward_model_forward.1} parent=11 // pred_fallthru
        _
      // Predicated region
      $region29: #{reward_model_forward.1} parent=11 // pred_check
        %p333 = pneg %p175
      $region30: #{reward_model_forward.1} parent=11 // pred_check_branch
        %335 = sbr.rel (%p333) target = $region32
      $region31: #{reward_model_forward.1} parent=11 // pred_region
        _
      $region32: #{reward_model_forward.1} parent=11 // pred_fallthru
        _
      // Predicated region
      $region33: #{reward_model_forward.1} parent=11 // pred_check
        %p336 = pneg %p196
      $region34: #{reward_model_forward.1} parent=11 // pred_check_branch
        %338 = sbr.rel (%p336) target = $region36
      $region35: #{reward_model_forward.1} parent=11 // pred_region
        _
      $region36: #{reward_model_forward.1} parent=11 // pred_fallthru
        _
      // Predicated region
      $region37: #{reward_model_forward.1} parent=11 // pred_check
        %p339 = pneg %p217
      $region38: #{reward_model_forward.1} parent=11 // pred_check_branch
        %341 = sbr.rel (%p339) target = $region40
      $region39: #{reward_model_forward.1} parent=11 // pred_region
        _
      $region40: #{reward_model_forward.1} parent=11 // pred_fallthru
        _
      // Predicated region
      $region41: #{reward_model_forward.1} parent=11 // pred_check
        %p342 = pneg %p238
      $region42: #{reward_model_forward.1} parent=11 // pred_check_branch
        %344 = sbr.rel (%p342) target = $region44
      $region43: #{reward_model_forward.1} parent=11 // pred_region
        _
      $region44: #{reward_model_forward.1} parent=11 // pred_fallthru
        _
      // Predicated region
      $region45: #{reward_model_forward.1} parent=11 // pred_check
        %p345 = pneg %p259
      $region46: #{reward_model_forward.1} parent=11 // pred_check_branch
        %347 = sbr.rel (%p345) target = $region48
      $region47: #{reward_model_forward.1} parent=11 // pred_region
        _
      $region48: #{reward_model_forward.1} parent=11 // pred_fallthru
        _
      // Predicated region
      $region49: #{reward_model_forward.1} parent=11 // pred_check
        %p348 = pneg %p280
      $region50: #{reward_model_forward.1} parent=11 // pred_check_branch
        %350 = sbr.rel (%p348) target = $region52
      $region51: #{reward_model_forward.1} parent=11 // pred_region
        _
      $region52: #{reward_model_forward.1} parent=11 // pred_fallthru
        _
    $region12: #{reward_model_forward.1} parent=5 // pred_fallthru
      _
    %p351 = scmp.lt.s32.totalorder %s18, 4
    // Predicated region
    $region53: #{reward_model_forward.1} parent=5 // pred_check
      %p352 = pneg %p351
    $region54: #{reward_model_forward.1} parent=5 // pred_check_branch
      %354 = sbr.rel (%p352) target = $region56
    $region55: #{reward_model_forward.1} parent=5 // pred_region
      // Predicated region
      $region57: #{reward_model_forward.1} parent=55 // pred_check
        %p355 = pneg %p38
      $region58: #{reward_model_forward.1} parent=55 // pred_check_branch
        %357 = sbr.rel (%p355) target = $region60
      $region59: #{reward_model_forward.1} parent=55 // pred_region
        %p358 = scmp.lt.s32.totalorder %s18, 3
        %s359 = scalar_select %p358, %s18, 3
        %s360 = smul.addr %s359, 3
        %s361 = scalar_lea.vmem %s0, %s360
      $region60: #{reward_model_forward.1} parent=55 // pred_fallthru
        _
      // Predicated region
      $region61: #{reward_model_forward.1} parent=55 // pred_check
        %p362 = pneg %p64
      $region62: #{reward_model_forward.1} parent=55 // pred_check_branch
        %364 = sbr.rel (%p362) target = $region64
      $region63: #{reward_model_forward.1} parent=55 // pred_region
        %p365 = scmp.lt.s32.totalorder %s18, 3
        %s366 = scalar_select %p365, %s18, 3
        %s367 = scalar_lea.vmem %s1, %s366
      $region64: #{reward_model_forward.1} parent=55 // pred_fallthru
        _
    $region56: #{reward_model_forward.1} parent=5 // pred_fallthru
      _
    %p368 = scmp.le.s32.totalorder 1, %s18
    %p369 = scmp.lt.s32.totalorder %s18, 5
    %p370 = pnand %p368, %p369
    %p371 = pneg %p370
    // Predicated region
    $region65: #{reward_model_forward.1} parent=5 // pred_check
      _
    $region66: #{reward_model_forward.1} parent=5 // pred_check_branch
      %373 = sbr.rel (%p370) target = $region68
    $region67: #{reward_model_forward.1} parent=5 // pred_region
      %s374 = ssub.s32 %s18, 1
      %p375 = scmp.lt.s32.totalorder %s23, 3
      %s376 = scalar_select %p375, %s23, 3
      %s377 = smul.addr %s376, 3
      %s378 = scalar_lea.vmem %s0, %s377
      %p379 = pneg %p44
      %p380 = pneg %p41
      %p381 = scmp.lt.s32.totalorder %s23, 3
      %s382 = scalar_select %p381, %s23, 3
      %s383 = scalar_lea.vmem %s1, %s382
      %p384 = pneg %p70
      %p385 = pneg %p67
      %p386 = pneg %p91
      %p387 = pneg %p88
      %p388 = pneg %p112
      %p389 = pneg %p109
      %p390 = pneg %p133
      %p391 = pneg %p130
      %p392 = pneg %p154
      %p393 = pneg %p151
      %p394 = pneg %p175
      %p395 = pneg %p172
      %p396 = pneg %p196
      %p397 = pneg %p193
      %p398 = pneg %p217
      %p399 = pneg %p214
      %p400 = pneg %p238
      %p401 = pneg %p235
      %p402 = pneg %p259
      %p403 = pneg %p256
      %p404 = pneg %p280
      %p405 = pneg %p277
      %p406 = pneg %p306
      %p407 = pneg %p303
      %p408 = scmp.lt.s32.totalorder %s23, 3
      %s409 = scalar_select %p408, %s23, 3
      %s410 = scalar_lea.vmem %s12, %s409
      %p411 = scmp.lt.s32.totalorder %s23, 3
      %s412 = scalar_select %p411, %s23, 3
      %s413 = smul.addr %s412, 3
      %s414 = scalar_lea.vmem %s0, %s413
      %p415 = scmp.lt.s32.totalorder %s23, 3
      %s416 = scalar_select %p415, %s23, 3
      %s417 = scalar_lea.vmem %s1, %s416
      %p418 = scmp.lt.s32.totalorder %s23, 3
      %s419 = scalar_select %p418, %s23, 3
      %s420 = scalar_lea.vmem %s12, %s419
      %v422 = vld [vmem:[%s414] sm:$0x7]
      %v423 = vld [vmem:[%s417] sm:$0x1]
      %v424 = vld [vmem:[%s5] sm:$0xf]
      %v425 = vld [vmem:[%s5 + $0x4] sm:$0xf]
      %v426 = vld [vmem:[%s5 + $0x8] sm:$0xf]
      %v427 = vld [vmem:[%s5 + $0xc] sm:$0xf]
      %v428 = vld [vmem:[%s5 + $0x10] sm:$0xf]
      %v429 = vld [vmem:[%s5 + $0x14] sm:$0xf]
      %v430 = vld [vmem:[%s5 + $0x18] sm:$0xf]
      %v431 = vld [vmem:[%s5 + $0x1c] sm:$0xf]
      %v432 = vld [vmem:[%s5 + $0x20] sm:$0xf]
      %v433 = vld [vmem:[%s5 + $0x24] sm:$0xf]
      %v434 = vld [vmem:[%s5 + $0x28] sm:$0xf]
      %v435 = vld [vmem:[%s5 + $0x2c] sm:$0xf]
      %v436 = vld [vmem:[%s5 + $0x30] sm:$0xf]
      %v437 = vld [vmem:[%s5 + $0x34] sm:$0xf]
      %v438 = vld [vmem:[%s5 + $0x38] sm:$0xf]
      %v439 = vld [vmem:[%s5 + $0x3c] sm:$0xf]
      %v440 = vld [vmem:[%s5 + $0x40] sm:$0xf]
      %v441 = vld [vmem:[%s5 + $0x44] sm:$0xf]
      %v442 = vld [vmem:[%s5 + $0x48] sm:$0xf]
      %v443 = vld [vmem:[%s5 + $0x4c] sm:$0xf]
      %v444 = vld [vmem:[%s5 + $0x50] sm:$0xf]
      %v445 = vld [vmem:[%s5 + $0x54] sm:$0xf]
      %v446 = vld [vmem:[%s5 + $0x58] sm:$0xf]
      %v447 = vld [vmem:[%s5 + $0x5c] sm:$0xf]
      %v448 = vld [vmem:[%s6] sm:$0xf]
      %v449 = vld [vmem:[%s6 + $0x4] sm:$0xf]
      %v450 = vld [vmem:[%s6 + $0x8] sm:$0xf]
      %v451 = vld [vmem:[%s6 + $0xc] sm:$0xf]
      %v452 = vld [vmem:[%s6 + $0x10] sm:$0xf]
      %v453 = vld [vmem:[%s6 + $0x14] sm:$0xf]
      %v454 = vld [vmem:[%s6 + $0x18] sm:$0xf]
      %v455 = vld [vmem:[%s6 + $0x1c] sm:$0xf]
      %v456 = vld [vmem:[%s6 + $0x20] sm:$0xf]
      %v457 = vld [vmem:[%s6 + $0x24] sm:$0xf]
      %v458 = vld [vmem:[%s6 + $0x28] sm:$0xf]
      %v459 = vld [vmem:[%s6 + $0x2c] sm:$0xf]
      %v460 = vld [vmem:[%s4] sm:$0xff]
      %v461 = vld [vmem:[%s4 + $0x8] sm:$0xff]
      %v462 = vld [vmem:[%s4 + $0x10] sm:$0xff]
      %v463 = vld [vmem:[%s4 + $0x18] sm:$0xff]
      %v464 = vld [vmem:[%s7] sm:$0xff]
      %v465 = vld [vmem:[%s7 + $0x8] sm:$0xff]
      %v466 = vld [vmem:[%s7 + $0x10] sm:$0xff]
      %v467 = vld [vmem:[%s7 + $0x18] sm:$0xff]
      %v468 = vld [vmem:[%s7 + $0x20] sm:$0xff]
      %v469 = vld [vmem:[%s7 + $0x28] sm:$0xff]
      %v470 = vld [vmem:[%s7 + $0x30] sm:$0xff]
      %v471 = vld [vmem:[%s7 + $0x38] sm:$0xff]
      %v472 = vld [vmem:[%s8] sm:$0xff]
      %v473 = vld [vmem:[%s8 + $0x8] sm:$0xff]
      %v474 = vld [vmem:[%s8 + $0x10] sm:$0xff]
      %v475 = vld [vmem:[%s8 + $0x18] sm:$0xff]
      %v476 = vld [vmem:[%s9] sm:$0xff]
      %v477 = vld [vmem:[%s9 + $0x8] sm:$0xff]
      %v478 = vld [vmem:[%s9 + $0x10] sm:$0xff]
      %v479 = vld [vmem:[%s9 + $0x18] sm:$0xff]
      %v480 = vlaneseq
      %v481 = vshrl.u32 %v480, 7
      %v482 = vadd.s32 %v481, 8
      %v483 = vadd.s32 %v481, 16
      %v484 = vadd.s32 %v481, 24
      %v485 = vadd.s32 %v481, 32
      %v486 = vadd.s32 %v481, 40
      %v487 = vadd.s32 %v481, 48
      %v488 = vadd.s32 %v481, 56
      %v489 = vperm.slane %v422, 0
      %v490 = vperm.slane %v422, 1
      %v491 = vperm.slane %v422, 2
      %vm492 = vcmp.eq.s32.totalorder %v481, %v489
      %vm493 = vcmp.eq.s32.totalorder %v481, %v490
      %vm494 = vcmp.eq.s32.totalorder %v481, %v491
      %vm495 = vcmp.eq.s32.totalorder %v482, %v489
      %vm496 = vcmp.eq.s32.totalorder %v482, %v490
      %vm497 = vcmp.eq.s32.totalorder %v482, %v491
      %vm498 = vcmp.eq.s32.totalorder %v483, %v489
      %vm499 = vcmp.eq.s32.totalorder %v483, %v490
      %vm500 = vcmp.eq.s32.totalorder %v483, %v491
      %vm501 = vcmp.eq.s32.totalorder %v484, %v489
      %vm502 = vcmp.eq.s32.totalorder %v484, %v490
      %vm503 = vcmp.eq.s32.totalorder %v484, %v491
      %vm504 = vcmp.eq.s32.totalorder %v485, %v489
      %vm505 = vcmp.eq.s32.totalorder %v485, %v490
      %vm506 = vcmp.eq.s32.totalorder %v485, %v491
      %vm507 = vcmp.eq.s32.totalorder %v486, %v489
      %vm508 = vcmp.eq.s32.totalorder %v486, %v490
      %vm509 = vcmp.eq.s32.totalorder %v486, %v491
      %vm510 = vcmp.eq.s32.totalorder %v487, %v489
      %vm511 = vcmp.eq.s32.totalorder %v487, %v490
      %vm512 = vcmp.eq.s32.totalorder %v487, %v491
      %vm513 = vcmp.eq.s32.totalorder %v488, %v489
      %vm514 = vcmp.eq.s32.totalorder %v488, %v490
      %vm515 = vcmp.eq.s32.totalorder %v488, %v491
      %v516 = vsel %vm492, 1, 0
      %v517 = vsel %vm493, 1, 0
      %v518 = vsel %vm494, 1, 0
      %v519 = vsel %vm495, 1, 0
      %v520 = vsel %vm496, 1, 0
      %v521 = vsel %vm497, 1, 0
      %v522 = vsel %vm498, 1, 0
      %v523 = vsel %vm499, 1, 0
      %v524 = vsel %vm500, 1, 0
      %v525 = vsel %vm501, 1, 0
      %v526 = vsel %vm502, 1, 0
      %v527 = vsel %vm503, 1, 0
      %v528 = vsel %vm504, 1, 0
      %v529 = vsel %vm505, 1, 0
      %v530 = vsel %vm506, 1, 0
      %v531 = vsel %vm507, 1, 0
      %v532 = vsel %vm508, 1, 0
      %v533 = vsel %vm509, 1, 0
      %v534 = vsel %vm510, 1, 0
      %v535 = vsel %vm511, 1, 0
      %v536 = vsel %vm512, 1, 0
      %v537 = vsel %vm513, 1, 0
      %v538 = vsel %vm514, 1, 0
      %v539 = vsel %vm515, 1, 0
      %v540 = vcvt.s32.f32 %v516
      %v541 = vcvt.s32.f32 %v517
      %v542 = vcvt.s32.f32 %v518
      %v543 = vcvt.s32.f32 %v519
      %v544 = vcvt.s32.f32 %v520
      %v545 = vcvt.s32.f32 %v521
      %v546 = vcvt.s32.f32 %v522
      %v547 = vcvt.s32.f32 %v523
      %v548 = vcvt.s32.f32 %v524
      %v549 = vcvt.s32.f32 %v525
      %v550 = vcvt.s32.f32 %v526
      %v551 = vcvt.s32.f32 %v527
      %v552 = vcvt.s32.f32 %v528
      %v553 = vcvt.s32.f32 %v529
      %v554 = vcvt.s32.f32 %v530
      %v555 = vcvt.s32.f32 %v531
      %v556 = vcvt.s32.f32 %v532
      %v557 = vcvt.s32.f32 %v533
      %v558 = vcvt.s32.f32 %v534
      %v559 = vcvt.s32.f32 %v535
      %v560 = vcvt.s32.f32 %v536
      %v561 = vcvt.s32.f32 %v537
      %v562 = vcvt.s32.f32 %v538
      %v563 = vcvt.s32.f32 %v539
      %v564 = vpack.c.bf16 %v543, %v540
      %v565 = vpack.c.bf16 %v544, %v541
      %v566 = vpack.c.bf16 %v545, %v542
      %v567 = vpack.c.bf16 %v549, %v546
      %v568 = vpack.c.bf16 %v550, %v547
      %v569 = vpack.c.bf16 %v551, %v548
      %v570 = vpack.c.bf16 %v555, %v552
      %v571 = vpack.c.bf16 %v556, %v553
      %v572 = vpack.c.bf16 %v557, %v554
      %v573 = vpack.c.bf16 %v561, %v558
      %v574 = vpack.c.bf16 %v562, %v559
      %v575 = vpack.c.bf16 %v563, %v560
      %v576 = vld [vmem:[%s2] sm:$0xf]
      %v577 = vld [vmem:[%s2 + $0x4] sm:$0xf]
      %v578 = vld [vmem:[%s2 + $0x8] sm:$0xf]
      %v579 = vld [vmem:[%s2 + $0xc] sm:$0xf]
      %v580 = vld [vmem:[%s2 + $0x10] sm:$0xf]
      %v581 = vld [vmem:[%s2 + $0x14] sm:$0xf]
      %v582 = vld [vmem:[%s2 + $0x18] sm:$0xf]
      %v583 = vld [vmem:[%s2 + $0x1c] sm:$0xf]
      %v584 = vld [vmem:[%s2 + $0x20] sm:$0xf]
      %v585 = vld [vmem:[%s2 + $0x24] sm:$0xf]
      %v586 = vld [vmem:[%s2 + $0x28] sm:$0xf]
      %v587 = vld [vmem:[%s2 + $0x2c] sm:$0xf]
      %v588 = vld [vmem:[%s3] sm:$0xff]
      %v589 = vld [vmem:[%s3 + $0x8] sm:$0xff]
      %v590 = vld [vmem:[%s3 + $0x10] sm:$0xff]
      %v591 = vld [vmem:[%s3 + $0x18] sm:$0xff]
      %v592 = vld [vmem:[%s3 + $0x20] sm:$0xff]
      %v593 = vld [vmem:[%s3 + $0x28] sm:$0xff]
      %v594 = vld [vmem:[%s3 + $0x30] sm:$0xff]
      %v595 = vld [vmem:[%s3 + $0x38] sm:$0xff]
      %v596 = vld [vmem:[%s3 + $0x40] sm:$0xff]
      %v597 = vld [vmem:[%s3 + $0x48] sm:$0xff]
      %v598 = vld [vmem:[%s3 + $0x50] sm:$0xff]
      %v599 = vld [vmem:[%s3 + $0x58] sm:$0xff]
      %601 = vset.pattern.permute.xlu0 0
      %602 = vperm.xlu0 %601, %v588
      %v603 = vpop.permute.xlu0 %602
      %606 = vset.pattern.permute.xlu0 0
      %607 = vperm.xlu0 %606, %v589
      %v608 = vpop.permute.xlu0 %607
      %611 = vset.pattern.permute.xlu0 0
      %612 = vperm.xlu0 %611, %v590
      %v613 = vpop.permute.xlu0 %612
      %616 = vset.pattern.permute.xlu0 0
      %617 = vperm.xlu0 %616, %v591
      %v618 = vpop.permute.xlu0 %617
      %621 = vset.pattern.permute.xlu0 0
      %622 = vperm.xlu0 %621, %v592
      %v623 = vpop.permute.xlu0 %622
      %626 = vset.pattern.permute.xlu0 0
      %627 = vperm.xlu0 %626, %v593
      %v628 = vpop.permute.xlu0 %627
      %631 = vset.pattern.permute.xlu0 0
      %632 = vperm.xlu0 %631, %v594
      %v633 = vpop.permute.xlu0 %632
      %636 = vset.pattern.permute.xlu0 0
      %637 = vperm.xlu0 %636, %v595
      %v638 = vpop.permute.xlu0 %637
      %641 = vset.pattern.permute.xlu0 0
      %642 = vperm.xlu0 %641, %v596
      %v643 = vpop.permute.xlu0 %642
      %646 = vset.pattern.permute.xlu0 0
      %647 = vperm.xlu0 %646, %v597
      %v648 = vpop.permute.xlu0 %647
      %651 = vset.pattern.permute.xlu0 0
      %652 = vperm.xlu0 %651, %v598
      %v653 = vpop.permute.xlu0 %652
      %656 = vset.pattern.permute.xlu0 0
      %657 = vperm.xlu0 %656, %v599
      %v658 = vpop.permute.xlu0 %657
      %v672 = vunpack.c.l.b16 %v576
      %v673 = vunpack.c.l.b16 %v577
      %v674 = vunpack.c.l.b16 %v578
      %v675 = vunpack.c.l.b16 %v579
      %v676 = vunpack.c.l.b16 %v580
      %v677 = vunpack.c.l.b16 %v581
      %v678 = vunpack.c.l.b16 %v582
      %v679 = vunpack.c.l.b16 %v583
      %v680 = vunpack.c.l.b16 %v584
      %v681 = vunpack.c.l.b16 %v585
      %v682 = vunpack.c.l.b16 %v586
      %v683 = vunpack.c.l.b16 %v587
      %v684 = vpack.c.b16 %v673, %v672
      %v685 = vpack.c.b16 %v675, %v674
      %v686 = vpack.c.b16 %v677, %v676
      %v687 = vpack.c.b16 %v679, %v678
      %v688 = vpack.c.b16 %v681, %v680
      %v689 = vpack.c.b16 %v683, %v682
      %vm690 = vcmask 523264
      %v692 = vsel %vm690, %v684, 0
      %v695 = vsel %vm690, %v685, 0
      %v698 = vsel %vm690, %v686, 0
      %v701 = vsel %vm690, %v687, 0
      %v704 = vsel %vm690, %v688, 0
      %v707 = vsel %vm690, %v689, 0
      %709 = vmatpush.bf16.msra.mxu0 0
      %710 = vmatpush.bf16.msra.mxu0 0
      %711 = vmatpush.bf16.msra.mxu0 0
      %712 = vmatpush.bf16.msra.mxu0 0
      %713 = vmatpush.bf16.msra.mxu0 %v573
      %714 = vmatpush.bf16.msra.mxu0 %v570
      %715 = vmatpush.bf16.msra.mxu0 %v567
      %716 = vmatpush.bf16.msra.mxu0 %v564
      %717 = vmatmul.bf16.gmra.mxu0 %v692
      %v718 = vpop.f32.mrf.mxu0
      %v719 = vadd.f32 %v603, %v718
      %v720 = vpop.f32.mrf.mxu0
      %v721 = vadd.f32 %v608, %v720
      %722 = vmatmul.bf16.gmra.mxu0 %v695
      %v723 = vpop.f32.mrf.mxu0
      %v724 = vadd.f32 %v613, %v723
      %v725 = vpop.f32.mrf.mxu0
      %v726 = vadd.f32 %v618, %v725
      %727 = vmatmul.bf16.gmra.mxu0 %v698
      %v728 = vpop.f32.mrf.mxu0
      %v729 = vadd.f32 %v623, %v728
      %v730 = vpop.f32.mrf.mxu0
      %v731 = vadd.f32 %v628, %v730
      %732 = vmatmul.bf16.gmra.mxu0 %v701
      %v733 = vpop.f32.mrf.mxu0
      %v734 = vadd.f32 %v633, %v733
      %v735 = vpop.f32.mrf.mxu0
      %v736 = vadd.f32 %v638, %v735
      %737 = vmatmul.bf16.gmra.mxu0 %v704
      %v738 = vpop.f32.mrf.mxu0
      %v739 = vadd.f32 %v643, %v738
      %v740 = vpop.f32.mrf.mxu0
      %v741 = vadd.f32 %v648, %v740
      %742 = vmatmul.bf16.gmra.mxu0 %v707
      %v743 = vpop.f32.mrf.mxu0
      %v744 = vadd.f32 %v653, %v743
      %v745 = vpop.f32.mrf.mxu0
      %v746 = vadd.f32 %v658, %v745
      %747 = vdwg.mxu0
      %748 = vmatpush.bf16.msra.mxu0 0
      %749 = vmatpush.bf16.msra.mxu0 0
      %750 = vmatpush.bf16.msra.mxu0 0
      %751 = vmatpush.bf16.msra.mxu0 0
      %752 = vmatpush.bf16.msra.mxu0 %v574
      %753 = vmatpush.bf16.msra.mxu0 %v571
      %754 = vmatpush.bf16.msra.mxu0 %v568
      %755 = vmatpush.bf16.msra.mxu0 %v565
      %756 = vmatmul.bf16.gmra.mxu0 %v692
      %v757 = vpop.f32.mrf.mxu0
      %v758 = vadd.f32 %v603, %v757
      %v759 = vpop.f32.mrf.mxu0
      %v760 = vadd.f32 %v608, %v759
      %761 = vmatmul.bf16.gmra.mxu0 %v695
      %v762 = vpop.f32.mrf.mxu0
      %v763 = vadd.f32 %v613, %v762
      %v764 = vpop.f32.mrf.mxu0
      %v765 = vadd.f32 %v618, %v764
      %766 = vmatmul.bf16.gmra.mxu0 %v698
      %v767 = vpop.f32.mrf.mxu0
      %v768 = vadd.f32 %v623, %v767
      %v769 = vpop.f32.mrf.mxu0
      %v770 = vadd.f32 %v628, %v769
      %771 = vmatmul.bf16.gmra.mxu0 %v701
      %v772 = vpop.f32.mrf.mxu0
      %v773 = vadd.f32 %v633, %v772
      %v774 = vpop.f32.mrf.mxu0
      %v775 = vadd.f32 %v638, %v774
      %776 = vmatmul.bf16.gmra.mxu0 %v704
      %v777 = vpop.f32.mrf.mxu0
      %v778 = vadd.f32 %v643, %v777
      %v779 = vpop.f32.mrf.mxu0
      %v780 = vadd.f32 %v648, %v779
      %781 = vmatmul.bf16.gmra.mxu0 %v707
      %v782 = vpop.f32.mrf.mxu0
      %v783 = vadd.f32 %v653, %v782
      %v784 = vpop.f32.mrf.mxu0
      %v785 = vadd.f32 %v658, %v784
      %786 = vdwg.mxu0
      %787 = vmatpush.bf16.msra.mxu0 0
      %788 = vmatpush.bf16.msra.mxu0 0
      %789 = vmatpush.bf16.msra.mxu0 0
      %790 = vmatpush.bf16.msra.mxu0 0
      %791 = vmatpush.bf16.msra.mxu0 %v575
      %792 = vmatpush.bf16.msra.mxu0 %v572
      %793 = vmatpush.bf16.msra.mxu0 %v569
      %794 = vmatpush.bf16.msra.mxu0 %v566
      %795 = vmatmul.bf16.gmra.mxu0 %v692
      %v796 = vpop.f32.mrf.mxu0
      %v797 = vadd.f32 %v603, %v796
      %v798 = vpop.f32.mrf.mxu0
      %v799 = vadd.f32 %v608, %v798
      %800 = vmatmul.bf16.gmra.mxu0 %v695
      %v801 = vpop.f32.mrf.mxu0
      %v802 = vadd.f32 %v613, %v801
      %v803 = vpop.f32.mrf.mxu0
      %v804 = vadd.f32 %v618, %v803
      %805 = vmatmul.bf16.gmra.mxu0 %v698
      %v806 = vpop.f32.mrf.mxu0
      %v807 = vadd.f32 %v623, %v806
      %v808 = vpop.f32.mrf.mxu0
      %v809 = vadd.f32 %v628, %v808
      %810 = vmatmul.bf16.gmra.mxu0 %v701
      %v811 = vpop.f32.mrf.mxu0
      %v812 = vadd.f32 %v633, %v811
      %v813 = vpop.f32.mrf.mxu0
      %v814 = vadd.f32 %v638, %v813
      %815 = vmatmul.bf16.gmra.mxu0 %v704
      %v816 = vpop.f32.mrf.mxu0
      %v817 = vadd.f32 %v643, %v816
      %v818 = vpop.f32.mrf.mxu0
      %v819 = vadd.f32 %v648, %v818
      %820 = vmatmul.bf16.gmra.mxu0 %v707
      %v821 = vpop.f32.mrf.mxu0
      %v822 = vadd.f32 %v653, %v821
      %v823 = vpop.f32.mrf.mxu0
      %v824 = vadd.f32 %v658, %v823
      %825 = vdwg.mxu0
      %v826 = vpack.c.bf16 0.0, 0.0
      %v851 = vunpack.c.l.b16 %v424
      %v852 = vunpack.c.l.b16 %v425
      %v853 = vunpack.c.l.b16 %v426
      %v854 = vunpack.c.l.b16 %v427
      %v855 = vunpack.c.l.b16 %v428
      %v856 = vunpack.c.l.b16 %v429
      %v857 = vunpack.c.l.b16 %v430
      %v858 = vunpack.c.l.b16 %v431
      %v859 = vunpack.c.l.b16 %v432
      %v860 = vunpack.c.l.b16 %v433
      %v861 = vunpack.c.l.b16 %v434
      %v862 = vunpack.c.l.b16 %v435
      %v863 = vunpack.c.l.b16 %v436
      %v864 = vunpack.c.l.b16 %v437
      %v865 = vunpack.c.l.b16 %v438
      %v866 = vunpack.c.l.b16 %v439
      %v867 = vunpack.c.l.b16 %v440
      %v868 = vunpack.c.l.b16 %v441
      %v869 = vunpack.c.l.b16 %v442
      %v870 = vunpack.c.l.b16 %v443
      %v871 = vunpack.c.l.b16 %v444
      %v872 = vunpack.c.l.b16 %v445
      %v873 = vunpack.c.l.b16 %v446
      %v874 = vunpack.c.l.b16 %v447
      %v875 = vpack.c.b16 %v852, %v851
      %v876 = vpack.c.b16 %v854, %v853
      %v877 = vpack.c.b16 %v856, %v855
      %v878 = vpack.c.b16 %v858, %v857
      %v879 = vpack.c.b16 %v860, %v859
      %v880 = vpack.c.b16 %v862, %v861
      %v881 = vpack.c.b16 %v864, %v863
      %v882 = vpack.c.b16 %v866, %v865
      %v883 = vpack.c.b16 %v868, %v867
      %v884 = vpack.c.b16 %v870, %v869
      %v885 = vpack.c.b16 %v872, %v871
      %v886 = vpack.c.b16 %v874, %v873
      %v888 = vsel %vm690, %v875, 0
      %v891 = vsel %vm690, %v876, 0
      %v894 = vsel %vm690, %v877, 0
      %v897 = vsel %vm690, %v878, 0
      %v900 = vsel %vm690, %v879, 0
      %v903 = vsel %vm690, %v880, 0
      %v906 = vsel %vm690, %v881, 0
      %v909 = vsel %vm690, %v882, 0
      %v912 = vsel %vm690, %v883, 0
      %v915 = vsel %vm690, %v884, 0
      %v918 = vsel %vm690, %v885, 0
      %v921 = vsel %vm690, %v886, 0
      %923 = vmatpush.bf16.msra.mxu0 0
      %924 = vmatpush.bf16.msra.mxu0 0
      %925 = vmatpush.bf16.msra.mxu0 0
      %926 = vmatpush.bf16.msra.mxu0 0
      %927 = vmatpush.bf16.msra.mxu0 %v826
      %928 = vmatpush.bf16.msra.mxu0 %v826
      %929 = vmatpush.bf16.msra.mxu0 %v826
      %930 = vmatpush.bf16.msra.mxu0 %v826
      %931 = vmatmul.bf16.gmra.mxu0 %v888
      %v932 = vpop.f32.mrf.mxu0
      %v933 = vadd.f32 0.0, %v932
      %v934 = vpop.f32.mrf.mxu0
      %v935 = vadd.f32 0.0, %v934
      %936 = vmatmul.bf16.gmra.mxu0 %v891
      %v937 = vpop.f32.mrf.mxu0
      %v938 = vadd.f32 0.0, %v937
      %v939 = vpop.f32.mrf.mxu0
      %v940 = vadd.f32 0.0, %v939
      %941 = vmatmul.bf16.gmra.mxu0 %v894
      %v942 = vpop.f32.mrf.mxu0
      %v943 = vadd.f32 0.0, %v942
      %v944 = vpop.f32.mrf.mxu0
      %v945 = vadd.f32 0.0, %v944
      %946 = vmatmul.bf16.gmra.mxu0 %v897
      %v947 = vpop.f32.mrf.mxu0
      %v948 = vadd.f32 0.0, %v947
      %v949 = vpop.f32.mrf.mxu0
      %v950 = vadd.f32 0.0, %v949
      %951 = vmatmul.bf16.gmra.mxu0 %v900
      %v952 = vpop.f32.mrf.mxu0
      %v953 = vadd.f32 0.0, %v952
      %v954 = vpop.f32.mrf.mxu0
      %v955 = vadd.f32 0.0, %v954
      %956 = vmatmul.bf16.gmra.mxu0 %v903
      %v957 = vpop.f32.mrf.mxu0
      %v958 = vadd.f32 0.0, %v957
      %v959 = vpop.f32.mrf.mxu0
      %v960 = vadd.f32 0.0, %v959
      %961 = vmatmul.bf16.gmra.mxu0 %v906
      %v962 = vpop.f32.mrf.mxu0
      %v963 = vadd.f32 0.0, %v962
      %v964 = vpop.f32.mrf.mxu0
      %v965 = vadd.f32 0.0, %v964
      %966 = vmatmul.bf16.gmra.mxu0 %v909
      %v967 = vpop.f32.mrf.mxu0
      %v968 = vadd.f32 0.0, %v967
      %v969 = vpop.f32.mrf.mxu0
      %v970 = vadd.f32 0.0, %v969
      %971 = vmatmul.bf16.gmra.mxu0 %v912
      %v972 = vpop.f32.mrf.mxu0
      %v973 = vadd.f32 0.0, %v972
      %v974 = vpop.f32.mrf.mxu0
      %v975 = vadd.f32 0.0, %v974
      %976 = vmatmul.bf16.gmra.mxu0 %v915
      %v977 = vpop.f32.mrf.mxu0
      %v978 = vadd.f32 0.0, %v977
      %v979 = vpop.f32.mrf.mxu0
      %v980 = vadd.f32 0.0, %v979
      %981 = vmatmul.bf16.gmra.mxu0 %v918
      %v982 = vpop.f32.mrf.mxu0
      %v983 = vadd.f32 0.0, %v982
      %v984 = vpop.f32.mrf.mxu0
      %v985 = vadd.f32 0.0, %v984
      %986 = vmatmul.bf16.gmra.mxu0 %v921
      %v987 = vpop.f32.mrf.mxu0
      %v988 = vadd.f32 0.0, %v987
      %v989 = vpop.f32.mrf.mxu0
      %v990 = vadd.f32 0.0, %v989
      %991 = vdwg.mxu0
      %v992 = vadd.f32 %v719, %v933
      %v993 = vadd.f32 %v721, %v935
      %v994 = vadd.f32 %v724, %v938
      %v995 = vadd.f32 %v726, %v940
      %v996 = vadd.f32 %v729, %v943
      %v997 = vadd.f32 %v731, %v945
      %v998 = vadd.f32 %v734, %v948
      %v999 = vadd.f32 %v736, %v950
      %v1000 = vxor.u32 %v992, 2147483648
      %v1001 = vxor.u32 %v993, 2147483648
      %v1002 = vxor.u32 %v994, 2147483648
      %v1003 = vxor.u32 %v995, 2147483648
      %v1004 = vxor.u32 %v996, 2147483648
      %v1005 = vxor.u32 %v997, 2147483648
      %v1006 = vxor.u32 %v998, 2147483648
      %v1007 = vxor.u32 %v999, 2147483648
      %v1008 = vmul.f32 %v1000, 1.442695
      %v1009 = vpow.pop %v1008
      %v1010 = vmul.f32 %v1001, 1.442695
      %v1011 = vpow.pop %v1010
      %v1012 = vmul.f32 %v1002, 1.442695
      %v1013 = vpow.pop %v1012
      %v1014 = vmul.f32 %v1003, 1.442695
      %v1015 = vpow.pop %v1014
      %v1016 = vmul.f32 %v1004, 1.442695
      %v1017 = vpow.pop %v1016
      %v1018 = vmul.f32 %v1005, 1.442695
      %v1019 = vpow.pop %v1018
      %v1020 = vmul.f32 %v1006, 1.442695
      %v1021 = vpow.pop %v1020
      %v1022 = vmul.f32 %v1007, 1.442695
      %v1023 = vpow.pop %v1022
      %v1024 = vadd.f32 %v1009, 1.0
      %v1025 = vadd.f32 %v1011, 1.0
      %v1026 = vadd.f32 %v1013, 1.0
      %v1027 = vadd.f32 %v1015, 1.0
      %v1028 = vadd.f32 %v1017, 1.0
      %v1029 = vadd.f32 %v1019, 1.0
      %v1030 = vadd.f32 %v1021, 1.0
      %v1031 = vadd.f32 %v1023, 1.0
      %v1032 = vrcp.pop %v1024
      %v1033 = vmul.f32 %v1024, %v1032
      %v1034 = vsub.f32 1.0, %v1033
      %v1035 = vmul.f32 %v1032, %v1034
      %v1036 = vadd.f32 %v1032, %v1035
      %vm1037 = vweird.f32 %v1024
      %vm1038 = vweird.f32 %v1032
      %vm1039 = vmor %vm1037, %vm1038
      %v1040 = vsel %vm1039, %v1032, %v1036
      %v1041 = vand.u32 2147483647, %v1024
      %vm1042 = vcmp.eq.f32.partialorder %v1041, 8.507059e+37
      %v1043 = vand.u32 %v1024, 2147483648
      %v1044 = vor.u32 1.1754944e-38, %v1043
      %v1045 = vsel %vm1042, %v1044, %v1040
      %v1046 = vmul.f32 1.0, %v1045
      %v1047 = vrcp.pop %v1025
      %v1048 = vmul.f32 %v1025, %v1047
      %v1049 = vsub.f32 1.0, %v1048
      %v1050 = vmul.f32 %v1047, %v1049
      %v1051 = vadd.f32 %v1047, %v1050
      %vm1052 = vweird.f32 %v1025
      %vm1053 = vweird.f32 %v1047
      %vm1054 = vmor %vm1052, %vm1053
      %v1055 = vsel %vm1054, %v1047, %v1051
      %v1056 = vand.u32 2147483647, %v1025
      %vm1057 = vcmp.eq.f32.partialorder %v1056, 8.507059e+37
      %v1058 = vand.u32 %v1025, 2147483648
      %v1059 = vor.u32 1.1754944e-38, %v1058
      %v1060 = vsel %vm1057, %v1059, %v1055
      %v1061 = vmul.f32 1.0, %v1060
      %v1062 = vrcp.pop %v1026
      %v1063 = vmul.f32 %v1026, %v1062
      %v1064 = vsub.f32 1.0, %v1063
      %v1065 = vmul.f32 %v1062, %v1064
      %v1066 = vadd.f32 %v1062, %v1065
      %vm1067 = vweird.f32 %v1026
      %vm1068 = vweird.f32 %v1062
      %vm1069 = vmor %vm1067, %vm1068
      %v1070 = vsel %vm1069, %v1062, %v1066
      %v1071 = vand.u32 2147483647, %v1026
      %vm1072 = vcmp.eq.f32.partialorder %v1071, 8.507059e+37
      %v1073 = vand.u32 %v1026, 2147483648
      %v1074 = vor.u32 1.1754944e-38, %v1073
      %v1075 = vsel %vm1072, %v1074, %v1070
      %v1076 = vmul.f32 1.0, %v1075
      %v1077 = vrcp.pop %v1027
      %v1078 = vmul.f32 %v1027, %v1077
      %v1079 = vsub.f32 1.0, %v1078
      %v1080 = vmul.f32 %v1077, %v1079
      %v1081 = vadd.f32 %v1077, %v1080
      %vm1082 = vweird.f32 %v1027
      %vm1083 = vweird.f32 %v1077
      %vm1084 = vmor %vm1082, %vm1083
      %v1085 = vsel %vm1084, %v1077, %v1081
      %v1086 = vand.u32 2147483647, %v1027
      %vm1087 = vcmp.eq.f32.partialorder %v1086, 8.507059e+37
      %v1088 = vand.u32 %v1027, 2147483648
      %v1089 = vor.u32 1.1754944e-38, %v1088
      %v1090 = vsel %vm1087, %v1089, %v1085
      %v1091 = vmul.f32 1.0, %v1090
      %v1092 = vrcp.pop %v1028
      %v1093 = vmul.f32 %v1028, %v1092
      %v1094 = vsub.f32 1.0, %v1093
      %v1095 = vmul.f32 %v1092, %v1094
      %v1096 = vadd.f32 %v1092, %v1095
      %vm1097 = vweird.f32 %v1028
      %vm1098 = vweird.f32 %v1092
      %vm1099 = vmor %vm1097, %vm1098
      %v1100 = vsel %vm1099, %v1092, %v1096
      %v1101 = vand.u32 2147483647, %v1028
      %vm1102 = vcmp.eq.f32.partialorder %v1101, 8.507059e+37
      %v1103 = vand.u32 %v1028, 2147483648
      %v1104 = vor.u32 1.1754944e-38, %v1103
      %v1105 = vsel %vm1102, %v1104, %v1100
      %v1106 = vmul.f32 1.0, %v1105
      %v1107 = vrcp.pop %v1029
      %v1108 = vmul.f32 %v1029, %v1107
      %v1109 = vsub.f32 1.0, %v1108
      %v1110 = vmul.f32 %v1107, %v1109
      %v1111 = vadd.f32 %v1107, %v1110
      %vm1112 = vweird.f32 %v1029
      %vm1113 = vweird.f32 %v1107
      %vm1114 = vmor %vm1112, %vm1113
      %v1115 = vsel %vm1114, %v1107, %v1111
      %v1116 = vand.u32 2147483647, %v1029
      %vm1117 = vcmp.eq.f32.partialorder %v1116, 8.507059e+37
      %v1118 = vand.u32 %v1029, 2147483648
      %v1119 = vor.u32 1.1754944e-38, %v1118
      %v1120 = vsel %vm1117, %v1119, %v1115
      %v1121 = vmul.f32 1.0, %v1120
      %v1122 = vrcp.pop %v1030
      %v1123 = vmul.f32 %v1030, %v1122
      %v1124 = vsub.f32 1.0, %v1123
      %v1125 = vmul.f32 %v1122, %v1124
      %v1126 = vadd.f32 %v1122, %v1125
      %vm1127 = vweird.f32 %v1030
      %vm1128 = vweird.f32 %v1122
      %vm1129 = vmor %vm1127, %vm1128
      %v1130 = vsel %vm1129, %v1122, %v1126
      %v1131 = vand.u32 2147483647, %v1030
      %vm1132 = vcmp.eq.f32.partialorder %v1131, 8.507059e+37
      %v1133 = vand.u32 %v1030, 2147483648
      %v1134 = vor.u32 1.1754944e-38, %v1133
      %v1135 = vsel %vm1132, %v1134, %v1130
      %v1136 = vmul.f32 1.0, %v1135
      %v1137 = vrcp.pop %v1031
      %v1138 = vmul.f32 %v1031, %v1137
      %v1139 = vsub.f32 1.0, %v1138
      %v1140 = vmul.f32 %v1137, %v1139
      %v1141 = vadd.f32 %v1137, %v1140
      %vm1142 = vweird.f32 %v1031
      %vm1143 = vweird.f32 %v1137
      %vm1144 = vmor %vm1142, %vm1143
      %v1145 = vsel %vm1144, %v1137, %v1141
      %v1146 = vand.u32 2147483647, %v1031
      %vm1147 = vcmp.eq.f32.partialorder %v1146, 8.507059e+37
      %v1148 = vand.u32 %v1031, 2147483648
      %v1149 = vor.u32 1.1754944e-38, %v1148
      %v1150 = vsel %vm1147, %v1149, %v1145
      %v1151 = vmul.f32 1.0, %v1150
      %1153 = vset.pattern.permute.xlu0 0
      %1154 = vperm.xlu0 %1153, %v460
      %v1155 = vpop.permute.xlu0 %1154
      %1158 = vset.pattern.permute.xlu0 0
      %1159 = vperm.xlu0 %1158, %v461
      %v1160 = vpop.permute.xlu0 %1159
      %1163 = vset.pattern.permute.xlu0 0
      %1164 = vperm.xlu0 %1163, %v462
      %v1165 = vpop.permute.xlu0 %1164
      %1168 = vset.pattern.permute.xlu0 0
      %1169 = vperm.xlu0 %1168, %v463
      %v1170 = vpop.permute.xlu0 %1169
      %v1172 = vadd.f32 %v953, %v1155
      %v1173 = vadd.f32 %v955, %v1160
      %v1174 = vadd.f32 %v958, %v1165
      %v1175 = vadd.f32 %v960, %v1170
      %v1176 = vmul.f32 %v1046, %v1172
      %v1177 = vmul.f32 %v1061, %v1173
      %v1178 = vmul.f32 %v1076, %v1174
      %v1179 = vmul.f32 %v1091, %v1175
      %v1180 = vadd.f32 %v739, %v1176
      %v1181 = vadd.f32 %v741, %v1177
      %v1182 = vadd.f32 %v744, %v1178
      %v1183 = vadd.f32 %v746, %v1179
      %v1184 = vtanh.pop %v1180
      %v1185 = vtanh.pop %v1181
      %v1186 = vtanh.pop %v1182
      %v1187 = vtanh.pop %v1183
      %v1188 = vsub.f32 1.0, %v1106
      %v1189 = vsub.f32 1.0, %v1121
      %v1190 = vsub.f32 1.0, %v1136
      %v1191 = vsub.f32 1.0, %v1151
      %v1192 = vmul.f32 %v1188, %v1184
      %v1193 = vmul.f32 %v1189, %v1185
      %v1194 = vmul.f32 %v1190, %v1186
      %v1195 = vmul.f32 %v1191, %v1187
      %v1196 = vmul.f32 %v1106, 0.0
      %v1197 = vmul.f32 %v1121, 0.0
      %v1198 = vmul.f32 %v1136, 0.0
      %v1199 = vmul.f32 %v1151, 0.0
      %v1200 = vadd.f32 %v1192, %v1196
      %v1201 = vadd.f32 %v1193, %v1197
      %v1202 = vadd.f32 %v1194, %v1198
      %v1203 = vadd.f32 %v1195, %v1199
      %v1204 = vpack.c.bf16 %v1201, %v1200
      %v1205 = vpack.c.bf16 %v1203, %v1202
      %v1218 = vunpack.c.l.b16 %v448
      %v1219 = vunpack.c.l.b16 %v449
      %v1220 = vunpack.c.l.b16 %v450
      %v1221 = vunpack.c.l.b16 %v451
      %v1222 = vunpack.c.l.b16 %v452
      %v1223 = vunpack.c.l.b16 %v453
      %v1224 = vunpack.c.l.b16 %v454
      %v1225 = vunpack.c.l.b16 %v455
      %v1226 = vunpack.c.l.b16 %v456
      %v1227 = vunpack.c.l.b16 %v457
      %v1228 = vunpack.c.l.b16 %v458
      %v1229 = vunpack.c.l.b16 %v459
      %v1230 = vpack.c.b16 %v1219, %v1218
      %v1231 = vpack.c.b16 %v1221, %v1220
      %v1232 = vpack.c.b16 %v1223, %v1222
      %v1233 = vpack.c.b16 %v1225, %v1224
      %v1234 = vpack.c.b16 %v1227, %v1226
      %v1235 = vpack.c.b16 %v1229, %v1228
      %vm1236 = vcmask 261120
      %v1238 = vsel %vm1236, %v1230, 0
      %v1241 = vsel %vm1236, %v1231, 0
      %v1244 = vsel %vm1236, %v1232, 0
      %v1247 = vsel %vm1236, %v1233, 0
      %v1250 = vsel %vm1236, %v1234, 0
      %v1253 = vsel %vm1236, %v1235, 0
      %1255 = vmatpush.bf16.msra.mxu0 0
      %1256 = vmatpush.bf16.msra.mxu0 0
      %1257 = vmatpush.bf16.msra.mxu0 0
      %1258 = vmatpush.bf16.msra.mxu0 0
      %1259 = vmatpush.bf16.msra.mxu0 0
      %1260 = vmatpush.bf16.msra.mxu0 0
      %1261 = vmatpush.bf16.msra.mxu0 %v1205
      %1262 = vmatpush.bf16.msra.mxu0 %v1204
      %1263 = vmatmul.bf16.gmra.mxu0 %v1238
      %v1264 = vpop.f32.mrf.mxu0
      %v1265 = vadd.f32 0.0, %v1264
      %v1266 = vpop.f32.mrf.mxu0
      %v1267 = vadd.f32 0.0, %v1266
      %1268 = vmatmul.bf16.gmra.mxu0 %v1241
      %v1269 = vpop.f32.mrf.mxu0
      %v1270 = vadd.f32 0.0, %v1269
      %v1271 = vpop.f32.mrf.mxu0
      %v1272 = vadd.f32 0.0, %v1271
      %1273 = vmatmul.bf16.gmra.mxu0 %v1244
      %v1274 = vpop.f32.mrf.mxu0
      %v1275 = vadd.f32 0.0, %v1274
      %v1276 = vpop.f32.mrf.mxu0
      %v1277 = vadd.f32 0.0, %v1276
      %1278 = vmatmul.bf16.gmra.mxu0 %v1247
      %v1279 = vpop.f32.mrf.mxu0
      %v1280 = vadd.f32 0.0, %v1279
      %v1281 = vpop.f32.mrf.mxu0
      %v1282 = vadd.f32 0.0, %v1281
      %1283 = vmatmul.bf16.gmra.mxu0 %v1250
      %v1284 = vpop.f32.mrf.mxu0
      %v1285 = vadd.f32 0.0, %v1284
      %v1286 = vpop.f32.mrf.mxu0
      %v1287 = vadd.f32 0.0, %v1286
      %1288 = vmatmul.bf16.gmra.mxu0 %v1253
      %v1289 = vpop.f32.mrf.mxu0
      %v1290 = vadd.f32 0.0, %v1289
      %v1291 = vpop.f32.mrf.mxu0
      %v1292 = vadd.f32 0.0, %v1291
      %1293 = vdwg.mxu0
      %v1294 = vadd.f32 %v1265, %v963
      %v1295 = vadd.f32 %v1267, %v965
      %v1296 = vadd.f32 %v1270, %v968
      %v1297 = vadd.f32 %v1272, %v970
      %v1298 = vadd.f32 %v1275, %v973
      %v1299 = vadd.f32 %v1277, %v975
      %v1300 = vadd.f32 %v1280, %v978
      %v1301 = vadd.f32 %v1282, %v980
      %1303 = vset.pattern.permute.xlu0 0
      %1304 = vperm.xlu0 %1303, %v464
      %v1305 = vpop.permute.xlu0 %1304
      %1308 = vset.pattern.permute.xlu0 0
      %1309 = vperm.xlu0 %1308, %v465
      %v1310 = vpop.permute.xlu0 %1309
      %1313 = vset.pattern.permute.xlu0 0
      %1314 = vperm.xlu0 %1313, %v466
      %v1315 = vpop.permute.xlu0 %1314
      %1318 = vset.pattern.permute.xlu0 0
      %1319 = vperm.xlu0 %1318, %v467
      %v1320 = vpop.permute.xlu0 %1319
      %1323 = vset.pattern.permute.xlu0 0
      %1324 = vperm.xlu0 %1323, %v468
      %v1325 = vpop.permute.xlu0 %1324
      %1328 = vset.pattern.permute.xlu0 0
      %1329 = vperm.xlu0 %1328, %v469
      %v1330 = vpop.permute.xlu0 %1329
      %1333 = vset.pattern.permute.xlu0 0
      %1334 = vperm.xlu0 %1333, %v470
      %v1335 = vpop.permute.xlu0 %1334
      %1338 = vset.pattern.permute.xlu0 0
      %1339 = vperm.xlu0 %1338, %v471
      %v1340 = vpop.permute.xlu0 %1339
      %v1342 = vadd.f32 %v1294, %v1305
      %v1343 = vadd.f32 %v1295, %v1310
      %v1344 = vadd.f32 %v1296, %v1315
      %v1345 = vadd.f32 %v1297, %v1320
      %v1346 = vadd.f32 %v1298, %v1325
      %v1347 = vadd.f32 %v1299, %v1330
      %v1348 = vadd.f32 %v1300, %v1335
      %v1349 = vadd.f32 %v1301, %v1340
      %v1350 = vxor.u32 %v1342, 2147483648
      %v1351 = vxor.u32 %v1343, 2147483648
      %v1352 = vxor.u32 %v1344, 2147483648
      %v1353 = vxor.u32 %v1345, 2147483648
      %v1354 = vxor.u32 %v1346, 2147483648
      %v1355 = vxor.u32 %v1347, 2147483648
      %v1356 = vxor.u32 %v1348, 2147483648
      %v1357 = vxor.u32 %v1349, 2147483648
      %v1358 = vmul.f32 %v1350, 1.442695
      %v1359 = vpow.pop %v1358
      %v1360 = vmul.f32 %v1351, 1.442695
      %v1361 = vpow.pop %v1360
      %v1362 = vmul.f32 %v1352, 1.442695
      %v1363 = vpow.pop %v1362
      %v1364 = vmul.f32 %v1353, 1.442695
      %v1365 = vpow.pop %v1364
      %v1366 = vmul.f32 %v1354, 1.442695
      %v1367 = vpow.pop %v1366
      %v1368 = vmul.f32 %v1355, 1.442695
      %v1369 = vpow.pop %v1368
      %v1370 = vmul.f32 %v1356, 1.442695
      %v1371 = vpow.pop %v1370
      %v1372 = vmul.f32 %v1357, 1.442695
      %v1373 = vpow.pop %v1372
      %v1374 = vadd.f32 %v1359, 1.0
      %v1375 = vadd.f32 %v1361, 1.0
      %v1376 = vadd.f32 %v1363, 1.0
      %v1377 = vadd.f32 %v1365, 1.0
      %v1378 = vadd.f32 %v1367, 1.0
      %v1379 = vadd.f32 %v1369, 1.0
      %v1380 = vadd.f32 %v1371, 1.0
      %v1381 = vadd.f32 %v1373, 1.0
      %v1382 = vrcp.pop %v1374
      %v1383 = vmul.f32 %v1374, %v1382
      %v1384 = vsub.f32 1.0, %v1383
      %v1385 = vmul.f32 %v1382, %v1384
      %v1386 = vadd.f32 %v1382, %v1385
      %vm1387 = vweird.f32 %v1374
      %vm1388 = vweird.f32 %v1382
      %vm1389 = vmor %vm1387, %vm1388
      %v1390 = vsel %vm1389, %v1382, %v1386
      %v1391 = vand.u32 2147483647, %v1374
      %vm1392 = vcmp.eq.f32.partialorder %v1391, 8.507059e+37
      %v1393 = vand.u32 %v1374, 2147483648
      %v1394 = vor.u32 1.1754944e-38, %v1393
      %v1395 = vsel %vm1392, %v1394, %v1390
      %v1396 = vmul.f32 1.0, %v1395
      %v1397 = vrcp.pop %v1375
      %v1398 = vmul.f32 %v1375, %v1397
      %v1399 = vsub.f32 1.0, %v1398
      %v1400 = vmul.f32 %v1397, %v1399
      %v1401 = vadd.f32 %v1397, %v1400
      %vm1402 = vweird.f32 %v1375
      %vm1403 = vweird.f32 %v1397
      %vm1404 = vmor %vm1402, %vm1403
      %v1405 = vsel %vm1404, %v1397, %v1401
      %v1406 = vand.u32 2147483647, %v1375
      %vm1407 = vcmp.eq.f32.partialorder %v1406, 8.507059e+37
      %v1408 = vand.u32 %v1375, 2147483648
      %v1409 = vor.u32 1.1754944e-38, %v1408
      %v1410 = vsel %vm1407, %v1409, %v1405
      %v1411 = vmul.f32 1.0, %v1410
      %v1412 = vrcp.pop %v1376
      %v1413 = vmul.f32 %v1376, %v1412
      %v1414 = vsub.f32 1.0, %v1413
      %v1415 = vmul.f32 %v1412, %v1414
      %v1416 = vadd.f32 %v1412, %v1415
      %vm1417 = vweird.f32 %v1376
      %vm1418 = vweird.f32 %v1412
      %vm1419 = vmor %vm1417, %vm1418
      %v1420 = vsel %vm1419, %v1412, %v1416
      %v1421 = vand.u32 2147483647, %v1376
      %vm1422 = vcmp.eq.f32.partialorder %v1421, 8.507059e+37
      %v1423 = vand.u32 %v1376, 2147483648
      %v1424 = vor.u32 1.1754944e-38, %v1423
      %v1425 = vsel %vm1422, %v1424, %v1420
      %v1426 = vmul.f32 1.0, %v1425
      %v1427 = vrcp.pop %v1377
      %v1428 = vmul.f32 %v1377, %v1427
      %v1429 = vsub.f32 1.0, %v1428
      %v1430 = vmul.f32 %v1427, %v1429
      %v1431 = vadd.f32 %v1427, %v1430
      %vm1432 = vweird.f32 %v1377
      %vm1433 = vweird.f32 %v1427
      %vm1434 = vmor %vm1432, %vm1433
      %v1435 = vsel %vm1434, %v1427, %v1431
      %v1436 = vand.u32 2147483647, %v1377
      %vm1437 = vcmp.eq.f32.partialorder %v1436, 8.507059e+37
      %v1438 = vand.u32 %v1377, 2147483648
      %v1439 = vor.u32 1.1754944e-38, %v1438
      %v1440 = vsel %vm1437, %v1439, %v1435
      %v1441 = vmul.f32 1.0, %v1440
      %v1442 = vrcp.pop %v1378
      %v1443 = vmul.f32 %v1378, %v1442
      %v1444 = vsub.f32 1.0, %v1443
      %v1445 = vmul.f32 %v1442, %v1444
      %v1446 = vadd.f32 %v1442, %v1445
      %vm1447 = vweird.f32 %v1378
      %vm1448 = vweird.f32 %v1442
      %vm1449 = vmor %vm1447, %vm1448
      %v1450 = vsel %vm1449, %v1442, %v1446
      %v1451 = vand.u32 2147483647, %v1378
      %vm1452 = vcmp.eq.f32.partialorder %v1451, 8.507059e+37
      %v1453 = vand.u32 %v1378, 2147483648
      %v1454 = vor.u32 1.1754944e-38, %v1453
      %v1455 = vsel %vm1452, %v1454, %v1450
      %v1456 = vmul.f32 1.0, %v1455
      %v1457 = vrcp.pop %v1379
      %v1458 = vmul.f32 %v1379, %v1457
      %v1459 = vsub.f32 1.0, %v1458
      %v1460 = vmul.f32 %v1457, %v1459
      %v1461 = vadd.f32 %v1457, %v1460
      %vm1462 = vweird.f32 %v1379
      %vm1463 = vweird.f32 %v1457
      %vm1464 = vmor %vm1462, %vm1463
      %v1465 = vsel %vm1464, %v1457, %v1461
      %v1466 = vand.u32 2147483647, %v1379
      %vm1467 = vcmp.eq.f32.partialorder %v1466, 8.507059e+37
      %v1468 = vand.u32 %v1379, 2147483648
      %v1469 = vor.u32 1.1754944e-38, %v1468
      %v1470 = vsel %vm1467, %v1469, %v1465
      %v1471 = vmul.f32 1.0, %v1470
      %v1472 = vrcp.pop %v1380
      %v1473 = vmul.f32 %v1380, %v1472
      %v1474 = vsub.f32 1.0, %v1473
      %v1475 = vmul.f32 %v1472, %v1474
      %v1476 = vadd.f32 %v1472, %v1475
      %vm1477 = vweird.f32 %v1380
      %vm1478 = vweird.f32 %v1472
      %vm1479 = vmor %vm1477, %vm1478
      %v1480 = vsel %vm1479, %v1472, %v1476
      %v1481 = vand.u32 2147483647, %v1380
      %vm1482 = vcmp.eq.f32.partialorder %v1481, 8.507059e+37
      %v1483 = vand.u32 %v1380, 2147483648
      %v1484 = vor.u32 1.1754944e-38, %v1483
      %v1485 = vsel %vm1482, %v1484, %v1480
      %v1486 = vmul.f32 1.0, %v1485
      %v1487 = vrcp.pop %v1381
      %v1488 = vmul.f32 %v1381, %v1487
      %v1489 = vsub.f32 1.0, %v1488
      %v1490 = vmul.f32 %v1487, %v1489
      %v1491 = vadd.f32 %v1487, %v1490
      %vm1492 = vweird.f32 %v1381
      %vm1493 = vweird.f32 %v1487
      %vm1494 = vmor %vm1492, %vm1493
      %v1495 = vsel %vm1494, %v1487, %v1491
      %v1496 = vand.u32 2147483647, %v1381
      %vm1497 = vcmp.eq.f32.partialorder %v1496, 8.507059e+37
      %v1498 = vand.u32 %v1381, 2147483648
      %v1499 = vor.u32 1.1754944e-38, %v1498
      %v1500 = vsel %vm1497, %v1499, %v1495
      %v1501 = vmul.f32 1.0, %v1500
      %1503 = vset.pattern.permute.xlu0 0
      %1504 = vperm.xlu0 %1503, %v472
      %v1505 = vpop.permute.xlu0 %1504
      %1508 = vset.pattern.permute.xlu0 0
      %1509 = vperm.xlu0 %1508, %v473
      %v1510 = vpop.permute.xlu0 %1509
      %1513 = vset.pattern.permute.xlu0 0
      %1514 = vperm.xlu0 %1513, %v474
      %v1515 = vpop.permute.xlu0 %1514
      %1518 = vset.pattern.permute.xlu0 0
      %1519 = vperm.xlu0 %1518, %v475
      %v1520 = vpop.permute.xlu0 %1519
      %v1522 = vadd.f32 %v1285, %v1505
      %v1523 = vadd.f32 %v1287, %v1510
      %v1524 = vadd.f32 %v1290, %v1515
      %v1525 = vadd.f32 %v1292, %v1520
      %1527 = vset.pattern.permute.xlu0 0
      %1528 = vperm.xlu0 %1527, %v476
      %v1529 = vpop.permute.xlu0 %1528
      %1532 = vset.pattern.permute.xlu0 0
      %1533 = vperm.xlu0 %1532, %v477
      %v1534 = vpop.permute.xlu0 %1533
      %1537 = vset.pattern.permute.xlu0 0
      %1538 = vperm.xlu0 %1537, %v478
      %v1539 = vpop.permute.xlu0 %1538
      %1542 = vset.pattern.permute.xlu0 0
      %1543 = vperm.xlu0 %1542, %v479
      %v1544 = vpop.permute.xlu0 %1543
      %v1546 = vadd.f32 %v983, %v1529
      %v1547 = vadd.f32 %v985, %v1534
      %v1548 = vadd.f32 %v988, %v1539
      %v1549 = vadd.f32 %v990, %v1544
      %v1550 = vmul.f32 %v1396, %v1546
      %v1551 = vmul.f32 %v1411, %v1547
      %v1552 = vmul.f32 %v1426, %v1548
      %v1553 = vmul.f32 %v1441, %v1549
      %v1554 = vadd.f32 %v1522, %v1550
      %v1555 = vadd.f32 %v1523, %v1551
      %v1556 = vadd.f32 %v1524, %v1552
      %v1557 = vadd.f32 %v1525, %v1553
      %v1558 = vtanh.pop %v1554
      %v1559 = vtanh.pop %v1555
      %v1560 = vtanh.pop %v1556
      %v1561 = vtanh.pop %v1557
      %v1562 = vsub.f32 1.0, %v1456
      %v1563 = vsub.f32 1.0, %v1471
      %v1564 = vsub.f32 1.0, %v1486
      %v1565 = vsub.f32 1.0, %v1501
      %v1566 = vmul.f32 %v1562, %v1558
      %v1567 = vmul.f32 %v1563, %v1559
      %v1568 = vmul.f32 %v1564, %v1560
      %v1569 = vmul.f32 %v1565, %v1561
      %v1570 = vmul.f32 %v1456, 0.0
      %v1571 = vmul.f32 %v1471, 0.0
      %v1572 = vmul.f32 %v1486, 0.0
      %v1573 = vmul.f32 %v1501, 0.0
      %v1574 = vadd.f32 %v1566, %v1570
      %v1575 = vadd.f32 %v1567, %v1571
      %v1576 = vadd.f32 %v1568, %v1572
      %v1577 = vadd.f32 %v1569, %v1573
      %vm1578 = vcmp.gt.s32.totalorder %v423, 0
      %v1579 = vsel %vm1578, 1, 0
      %v1580 = vcvt.s32.f32 %v1579
      %v1582 = vperm.slane %v1580, 0
      %v1584 = vmul.f32 %v1582, %v1200
      %v1585 = vmul.f32 %v1582, %v1201
      %v1586 = vmul.f32 %v1582, %v1202
      %v1587 = vmul.f32 %v1582, %v1203
      %v1588 = vsub.f32 1.0, %v1580
      %v1590 = vperm.slane %v1588, 0
      %v1592 = vmul.f32 %v1590, 0.0
      %v1593 = vadd.f32 %v1584, %v1592
      %v1594 = vadd.f32 %v1585, %v1592
      %v1595 = vadd.f32 %v1586, %v1592
      %v1596 = vadd.f32 %v1587, %v1592
      %v1597 = vmul.f32 %v1582, %v1574
      %v1598 = vmul.f32 %v1582, %v1575
      %v1599 = vmul.f32 %v1582, %v1576
      %v1600 = vmul.f32 %v1582, %v1577
      %v1601 = vadd.f32 %v1597, %v1592
      %v1602 = vadd.f32 %v1598, %v1592
      %v1603 = vadd.f32 %v1599, %v1592
      %v1604 = vadd.f32 %v1600, %v1592
      %v1605 = vpack.c.bf16 %v1594, %v1593
      %v1606 = vpack.c.bf16 %v1596, %v1595
      %v1607 = vpack.c.bf16 %v1602, %v1601
      %v1608 = vpack.c.bf16 %v1604, %v1603
      %1609 = vmatpush.bf16.msra.mxu0 0
      %1610 = vmatpush.bf16.msra.mxu0 0
      %1611 = vmatpush.bf16.msra.mxu0 0
      %1612 = vmatpush.bf16.msra.mxu0 0
      %1613 = vmatpush.bf16.msra.mxu0 %v1608
      %1614 = vmatpush.bf16.msra.mxu0 %v1607
      %1615 = vmatpush.bf16.msra.mxu0 %v1606
      %1616 = vmatpush.bf16.msra.mxu0 %v1605
      %1617 = vmatmul.bf16.gmra.mxu0 %v888
      %v1618 = vpop.f32.mrf.mxu0
      %v1619 = vadd.f32 0.0, %v1618
      %v1620 = vpop.f32.mrf.mxu0
      %v1621 = vadd.f32 0.0, %v1620
      %1622 = vmatmul.bf16.gmra.mxu0 %v891
      %v1623 = vpop.f32.mrf.mxu0
      %v1624 = vadd.f32 0.0, %v1623
      %v1625 = vpop.f32.mrf.mxu0
      %v1626 = vadd.f32 0.0, %v1625
      %1627 = vmatmul.bf16.gmra.mxu0 %v894
      %v1628 = vpop.f32.mrf.mxu0
      %v1629 = vadd.f32 0.0, %v1628
      %v1630 = vpop.f32.mrf.mxu0
      %v1631 = vadd.f32 0.0, %v1630
      %1632 = vmatmul.bf16.gmra.mxu0 %v897
      %v1633 = vpop.f32.mrf.mxu0
      %v1634 = vadd.f32 0.0, %v1633
      %v1635 = vpop.f32.mrf.mxu0
      %v1636 = vadd.f32 0.0, %v1635
      %1637 = vmatmul.bf16.gmra.mxu0 %v900
      %v1638 = vpop.f32.mrf.mxu0
      %v1639 = vadd.f32 0.0, %v1638
      %v1640 = vpop.f32.mrf.mxu0
      %v1641 = vadd.f32 0.0, %v1640
      %1642 = vmatmul.bf16.gmra.mxu0 %v903
      %v1643 = vpop.f32.mrf.mxu0
      %v1644 = vadd.f32 0.0, %v1643
      %v1645 = vpop.f32.mrf.mxu0
      %v1646 = vadd.f32 0.0, %v1645
      %1647 = vmatmul.bf16.gmra.mxu0 %v906
      %v1648 = vpop.f32.mrf.mxu0
      %v1649 = vadd.f32 0.0, %v1648
      %v1650 = vpop.f32.mrf.mxu0
      %v1651 = vadd.f32 0.0, %v1650
      %1652 = vmatmul.bf16.gmra.mxu0 %v909
      %v1653 = vpop.f32.mrf.mxu0
      %v1654 = vadd.f32 0.0, %v1653
      %v1655 = vpop.f32.mrf.mxu0
      %v1656 = vadd.f32 0.0, %v1655
      %1657 = vmatmul.bf16.gmra.mxu0 %v912
      %v1658 = vpop.f32.mrf.mxu0
      %v1659 = vadd.f32 0.0, %v1658
      %v1660 = vpop.f32.mrf.mxu0
      %v1661 = vadd.f32 0.0, %v1660
      %1662 = vmatmul.bf16.gmra.mxu0 %v915
      %v1663 = vpop.f32.mrf.mxu0
      %v1664 = vadd.f32 0.0, %v1663
      %v1665 = vpop.f32.mrf.mxu0
      %v1666 = vadd.f32 0.0, %v1665
      %1667 = vmatmul.bf16.gmra.mxu0 %v918
      %v1668 = vpop.f32.mrf.mxu0
      %v1669 = vadd.f32 0.0, %v1668
      %v1670 = vpop.f32.mrf.mxu0
      %v1671 = vadd.f32 0.0, %v1670
      %1672 = vmatmul.bf16.gmra.mxu0 %v921
      %v1673 = vpop.f32.mrf.mxu0
      %v1674 = vadd.f32 0.0, %v1673
      %v1675 = vpop.f32.mrf.mxu0
      %v1676 = vadd.f32 0.0, %v1675
      %1677 = vdwg.mxu0
      %1686 = vrot.lane.b32.xlu0 %v1619, 32
      %v1687 = vpop.permute.xlu0 %1686
      %1688 = vrot.lane.b32.xlu0 %v1621, 32
      %v1689 = vpop.permute.xlu0 %1688
      %1690 = vrot.lane.b32.xlu0 %v1624, 32
      %v1691 = vpop.permute.xlu0 %1690
      %1692 = vrot.lane.b32.xlu0 %v1626, 32
      %v1693 = vpop.permute.xlu0 %1692
      %1694 = vrot.lane.b32.xlu0 %v1629, 32
      %v1695 = vpop.permute.xlu0 %1694
      %1696 = vrot.lane.b32.xlu0 %v1631, 32
      %v1697 = vpop.permute.xlu0 %1696
      %1698 = vrot.lane.b32.xlu0 %v1634, 32
      %v1699 = vpop.permute.xlu0 %1698
      %1700 = vrot.lane.b32.xlu0 %v1636, 32
      %v1701 = vpop.permute.xlu0 %1700
      %v1710 = vadd.f32 %v719, %v1687
      %v1711 = vadd.f32 %v721, %v1689
      %v1712 = vadd.f32 %v724, %v1691
      %v1713 = vadd.f32 %v726, %v1693
      %v1714 = vadd.f32 %v729, %v1695
      %v1715 = vadd.f32 %v731, %v1697
      %v1716 = vadd.f32 %v734, %v1699
      %v1717 = vadd.f32 %v736, %v1701
      %v1718 = vxor.u32 %v1710, 2147483648
      %v1719 = vxor.u32 %v1711, 2147483648
      %v1720 = vxor.u32 %v1712, 2147483648
      %v1721 = vxor.u32 %v1713, 2147483648
      %v1722 = vxor.u32 %v1714, 2147483648
      %v1723 = vxor.u32 %v1715, 2147483648
      %v1724 = vxor.u32 %v1716, 2147483648
      %v1725 = vxor.u32 %v1717, 2147483648
      %v1726 = vmul.f32 %v1718, 1.442695
      %v1727 = vpow.pop %v1726
      %v1728 = vmul.f32 %v1719, 1.442695
      %v1729 = vpow.pop %v1728
      %v1730 = vmul.f32 %v1720, 1.442695
      %v1731 = vpow.pop %v1730
      %v1732 = vmul.f32 %v1721, 1.442695
      %v1733 = vpow.pop %v1732
      %v1734 = vmul.f32 %v1722, 1.442695
      %v1735 = vpow.pop %v1734
      %v1736 = vmul.f32 %v1723, 1.442695
      %v1737 = vpow.pop %v1736
      %v1738 = vmul.f32 %v1724, 1.442695
      %v1739 = vpow.pop %v1738
      %v1740 = vmul.f32 %v1725, 1.442695
      %v1741 = vpow.pop %v1740
      %v1742 = vadd.f32 %v1727, 1.0
      %v1743 = vadd.f32 %v1729, 1.0
      %v1744 = vadd.f32 %v1731, 1.0
      %v1745 = vadd.f32 %v1733, 1.0
      %v1746 = vadd.f32 %v1735, 1.0
      %v1747 = vadd.f32 %v1737, 1.0
      %v1748 = vadd.f32 %v1739, 1.0
      %v1749 = vadd.f32 %v1741, 1.0
      %v1750 = vrcp.pop %v1742
      %v1751 = vmul.f32 %v1742, %v1750
      %v1752 = vsub.f32 1.0, %v1751
      %v1753 = vmul.f32 %v1750, %v1752
      %v1754 = vadd.f32 %v1750, %v1753
      %vm1755 = vweird.f32 %v1742
      %vm1756 = vweird.f32 %v1750
      %vm1757 = vmor %vm1755, %vm1756
      %v1758 = vsel %vm1757, %v1750, %v1754
      %v1759 = vand.u32 2147483647, %v1742
      %vm1760 = vcmp.eq.f32.partialorder %v1759, 8.507059e+37
      %v1761 = vand.u32 %v1742, 2147483648
      %v1762 = vor.u32 1.1754944e-38, %v1761
      %v1763 = vsel %vm1760, %v1762, %v1758
      %v1764 = vmul.f32 1.0, %v1763
      %v1765 = vrcp.pop %v1743
      %v1766 = vmul.f32 %v1743, %v1765
      %v1767 = vsub.f32 1.0, %v1766
      %v1768 = vmul.f32 %v1765, %v1767
      %v1769 = vadd.f32 %v1765, %v1768
      %vm1770 = vweird.f32 %v1743
      %vm1771 = vweird.f32 %v1765
      %vm1772 = vmor %vm1770, %vm1771
      %v1773 = vsel %vm1772, %v1765, %v1769
      %v1774 = vand.u32 2147483647, %v1743
      %vm1775 = vcmp.eq.f32.partialorder %v1774, 8.507059e+37
      %v1776 = vand.u32 %v1743, 2147483648
      %v1777 = vor.u32 1.1754944e-38, %v1776
      %v1778 = vsel %vm1775, %v1777, %v1773
      %v1779 = vmul.f32 1.0, %v1778
      %v1780 = vrcp.pop %v1744
      %v1781 = vmul.f32 %v1744, %v1780
      %v1782 = vsub.f32 1.0, %v1781
      %v1783 = vmul.f32 %v1780, %v1782
      %v1784 = vadd.f32 %v1780, %v1783
      %vm1785 = vweird.f32 %v1744
      %vm1786 = vweird.f32 %v1780
      %vm1787 = vmor %vm1785, %vm1786
      %v1788 = vsel %vm1787, %v1780, %v1784
      %v1789 = vand.u32 2147483647, %v1744
      %vm1790 = vcmp.eq.f32.partialorder %v1789, 8.507059e+37
      %v1791 = vand.u32 %v1744, 2147483648
      %v1792 = vor.u32 1.1754944e-38, %v1791
      %v1793 = vsel %vm1790, %v1792, %v1788
      %v1794 = vmul.f32 1.0, %v1793
      %v1795 = vrcp.pop %v1745
      %v1796 = vmul.f32 %v1745, %v1795
      %v1797 = vsub.f32 1.0, %v1796
      %v1798 = vmul.f32 %v1795, %v1797
      %v1799 = vadd.f32 %v1795, %v1798
      %vm1800 = vweird.f32 %v1745
      %vm1801 = vweird.f32 %v1795
      %vm1802 = vmor %vm1800, %vm1801
      %v1803 = vsel %vm1802, %v1795, %v1799
      %v1804 = vand.u32 2147483647, %v1745
      %vm1805 = vcmp.eq.f32.partialorder %v1804, 8.507059e+37
      %v1806 = vand.u32 %v1745, 2147483648
      %v1807 = vor.u32 1.1754944e-38, %v1806
      %v1808 = vsel %vm1805, %v1807, %v1803
      %v1809 = vmul.f32 1.0, %v1808
      %v1810 = vrcp.pop %v1746
      %v1811 = vmul.f32 %v1746, %v1810
      %v1812 = vsub.f32 1.0, %v1811
      %v1813 = vmul.f32 %v1810, %v1812
      %v1814 = vadd.f32 %v1810, %v1813
      %vm1815 = vweird.f32 %v1746
      %vm1816 = vweird.f32 %v1810
      %vm1817 = vmor %vm1815, %vm1816
      %v1818 = vsel %vm1817, %v1810, %v1814
      %v1819 = vand.u32 2147483647, %v1746
      %vm1820 = vcmp.eq.f32.partialorder %v1819, 8.507059e+37
      %v1821 = vand.u32 %v1746, 2147483648
      %v1822 = vor.u32 1.1754944e-38, %v1821
      %v1823 = vsel %vm1820, %v1822, %v1818
      %v1824 = vmul.f32 1.0, %v1823
      %v1825 = vrcp.pop %v1747
      %v1826 = vmul.f32 %v1747, %v1825
      %v1827 = vsub.f32 1.0, %v1826
      %v1828 = vmul.f32 %v1825, %v1827
      %v1829 = vadd.f32 %v1825, %v1828
      %vm1830 = vweird.f32 %v1747
      %vm1831 = vweird.f32 %v1825
      %vm1832 = vmor %vm1830, %vm1831
      %v1833 = vsel %vm1832, %v1825, %v1829
      %v1834 = vand.u32 2147483647, %v1747
      %vm1835 = vcmp.eq.f32.partialorder %v1834, 8.507059e+37
      %v1836 = vand.u32 %v1747, 2147483648
      %v1837 = vor.u32 1.1754944e-38, %v1836
      %v1838 = vsel %vm1835, %v1837, %v1833
      %v1839 = vmul.f32 1.0, %v1838
      %v1840 = vrcp.pop %v1748
      %v1841 = vmul.f32 %v1748, %v1840
      %v1842 = vsub.f32 1.0, %v1841
      %v1843 = vmul.f32 %v1840, %v1842
      %v1844 = vadd.f32 %v1840, %v1843
      %vm1845 = vweird.f32 %v1748
      %vm1846 = vweird.f32 %v1840
      %vm1847 = vmor %vm1845, %vm1846
      %v1848 = vsel %vm1847, %v1840, %v1844
      %v1849 = vand.u32 2147483647, %v1748
      %vm1850 = vcmp.eq.f32.partialorder %v1849, 8.507059e+37
      %v1851 = vand.u32 %v1748, 2147483648
      %v1852 = vor.u32 1.1754944e-38, %v1851
      %v1853 = vsel %vm1850, %v1852, %v1848
      %v1854 = vmul.f32 1.0, %v1853
      %v1855 = vrcp.pop %v1749
      %v1856 = vmul.f32 %v1749, %v1855
      %v1857 = vsub.f32 1.0, %v1856
      %v1858 = vmul.f32 %v1855, %v1857
      %v1859 = vadd.f32 %v1855, %v1858
      %vm1860 = vweird.f32 %v1749
      %vm1861 = vweird.f32 %v1855
      %vm1862 = vmor %vm1860, %vm1861
      %v1863 = vsel %vm1862, %v1855, %v1859
      %v1864 = vand.u32 2147483647, %v1749
      %vm1865 = vcmp.eq.f32.partialorder %v1864, 8.507059e+37
      %v1866 = vand.u32 %v1749, 2147483648
      %v1867 = vor.u32 1.1754944e-38, %v1866
      %v1868 = vsel %vm1865, %v1867, %v1863
      %v1869 = vmul.f32 1.0, %v1868
      %v1870 = vadd.f32 %v1639, %v1155
      %v1871 = vadd.f32 %v1641, %v1160
      %v1872 = vadd.f32 %v1644, %v1165
      %v1873 = vadd.f32 %v1646, %v1170
      %1878 = vrot.lane.b32.xlu0 %v1870, 32
      %v1879 = vpop.permute.xlu0 %1878
      %1880 = vrot.lane.b32.xlu0 %v1871, 32
      %v1881 = vpop.permute.xlu0 %1880
      %1882 = vrot.lane.b32.xlu0 %v1872, 32
      %v1883 = vpop.permute.xlu0 %1882
      %1884 = vrot.lane.b32.xlu0 %v1873, 32
      %v1885 = vpop.permute.xlu0 %1884
      %v1890 = vmul.f32 %v1764, %v1879
      %v1891 = vmul.f32 %v1779, %v1881
      %v1892 = vmul.f32 %v1794, %v1883
      %v1893 = vmul.f32 %v1809, %v1885
      %v1894 = vadd.f32 %v739, %v1890
      %v1895 = vadd.f32 %v741, %v1891
      %v1896 = vadd.f32 %v744, %v1892
      %v1897 = vadd.f32 %v746, %v1893
      %v1898 = vtanh.pop %v1894
      %v1899 = vtanh.pop %v1895
      %v1900 = vtanh.pop %v1896
      %v1901 = vtanh.pop %v1897
      %v1902 = vsub.f32 1.0, %v1824
      %v1903 = vsub.f32 1.0, %v1839
      %v1904 = vsub.f32 1.0, %v1854
      %v1905 = vsub.f32 1.0, %v1869
      %v1906 = vmul.f32 %v1902, %v1898
      %v1907 = vmul.f32 %v1903, %v1899
      %v1908 = vmul.f32 %v1904, %v1900
      %v1909 = vmul.f32 %v1905, %v1901
      %1914 = vrot.lane.b32.xlu0 %v1593, 32
      %v1915 = vpop.permute.xlu0 %1914
      %1916 = vrot.lane.b32.xlu0 %v1594, 32
      %v1917 = vpop.permute.xlu0 %1916
      %1918 = vrot.lane.b32.xlu0 %v1595, 32
      %v1919 = vpop.permute.xlu0 %1918
      %1920 = vrot.lane.b32.xlu0 %v1596, 32
      %v1921 = vpop.permute.xlu0 %1920
      %v1926 = vmul.f32 %v1824, %v1915
      %v1927 = vmul.f32 %v1839, %v1917
      %v1928 = vmul.f32 %v1854, %v1919
      %v1929 = vmul.f32 %v1869, %v1921
      %v1930 = vadd.f32 %v1906, %v1926
      %v1931 = vadd.f32 %v1907, %v1927
      %v1932 = vadd.f32 %v1908, %v1928
      %v1933 = vadd.f32 %v1909, %v1929
      %v1934 = vpack.c.bf16 %v1931, %v1930
      %v1935 = vpack.c.bf16 %v1933, %v1932
      %1938 = vrot.lane.b32.xlu0 %v1934, 96
      %v1939 = vpop.permute.xlu0 %1938
      %1940 = vrot.lane.b32.xlu0 %v1935, 96
      %v1941 = vpop.permute.xlu0 %1940
      %1944 = vmatpush.bf16.msra.mxu0 0
      %1945 = vmatpush.bf16.msra.mxu0 0
      %1946 = vmatpush.bf16.msra.mxu0 0
      %1947 = vmatpush.bf16.msra.mxu0 0
      %1948 = vmatpush.bf16.msra.mxu0 0
      %1949 = vmatpush.bf16.msra.mxu0 0
      %1950 = vmatpush.bf16.msra.mxu0 %v1941
      %1951 = vmatpush.bf16.msra.mxu0 %v1939
      %1952 = vmatmul.bf16.gmra.mxu0 %v1238
      %v1953 = vpop.f32.mrf.mxu0
      %v1954 = vadd.f32 0.0, %v1953
      %v1955 = vpop.f32.mrf.mxu0
      %v1956 = vadd.f32 0.0, %v1955
      %1957 = vmatmul.bf16.gmra.mxu0 %v1241
      %v1958 = vpop.f32.mrf.mxu0
      %v1959 = vadd.f32 0.0, %v1958
      %v1960 = vpop.f32.mrf.mxu0
      %v1961 = vadd.f32 0.0, %v1960
      %1962 = vmatmul.bf16.gmra.mxu0 %v1244
      %v1963 = vpop.f32.mrf.mxu0
      %v1964 = vadd.f32 0.0, %v1963
      %v1965 = vpop.f32.mrf.mxu0
      %v1966 = vadd.f32 0.0, %v1965
      %1967 = vmatmul.bf16.gmra.mxu0 %v1247
      %v1968 = vpop.f32.mrf.mxu0
      %v1969 = vadd.f32 0.0, %v1968
      %v1970 = vpop.f32.mrf.mxu0
      %v1971 = vadd.f32 0.0, %v1970
      %1972 = vmatmul.bf16.gmra.mxu0 %v1250
      %v1973 = vpop.f32.mrf.mxu0
      %v1974 = vadd.f32 0.0, %v1973
      %v1975 = vpop.f32.mrf.mxu0
      %v1976 = vadd.f32 0.0, %v1975
      %1977 = vmatmul.bf16.gmra.mxu0 %v1253
      %v1978 = vpop.f32.mrf.mxu0
      %v1979 = vadd.f32 0.0, %v1978
      %v1980 = vpop.f32.mrf.mxu0
      %v1981 = vadd.f32 0.0, %v1980
      %1982 = vdwg.mxu0
      %v1983 = vadd.f32 %v1954, %v1649
      %v1984 = vadd.f32 %v1956, %v1651
      %v1985 = vadd.f32 %v1959, %v1654
      %v1986 = vadd.f32 %v1961, %v1656
      %v1987 = vadd.f32 %v1964, %v1659
      %v1988 = vadd.f32 %v1966, %v1661
      %v1989 = vadd.f32 %v1969, %v1664
      %v1990 = vadd.f32 %v1971, %v1666
      %v1991 = vadd.f32 %v1983, %v1305
      %v1992 = vadd.f32 %v1984, %v1310
      %v1993 = vadd.f32 %v1985, %v1315
      %v1994 = vadd.f32 %v1986, %v1320
      %v1995 = vadd.f32 %v1987, %v1325
      %v1996 = vadd.f32 %v1988, %v1330
      %v1997 = vadd.f32 %v1989, %v1335
      %v1998 = vadd.f32 %v1990, %v1340
      %v1999 = vxor.u32 %v1991, 2147483648
      %v2000 = vxor.u32 %v1992, 2147483648
      %v2001 = vxor.u32 %v1993, 2147483648
      %v2002 = vxor.u32 %v1994, 2147483648
      %v2003 = vxor.u32 %v1995, 2147483648
      %v2004 = vxor.u32 %v1996, 2147483648
      %v2005 = vxor.u32 %v1997, 2147483648
      %v2006 = vxor.u32 %v1998, 2147483648
      %v2007 = vmul.f32 %v1999, 1.442695
      %v2008 = vpow.pop %v2007
      %v2009 = vmul.f32 %v2000, 1.442695
      %v2010 = vpow.pop %v2009
      %v2011 = vmul.f32 %v2001, 1.442695
      %v2012 = vpow.pop %v2011
      %v2013 = vmul.f32 %v2002, 1.442695
      %v2014 = vpow.pop %v2013
      %v2015 = vmul.f32 %v2003, 1.442695
      %v2016 = vpow.pop %v2015
      %v2017 = vmul.f32 %v2004, 1.442695
      %v2018 = vpow.pop %v2017
      %v2019 = vmul.f32 %v2005, 1.442695
      %v2020 = vpow.pop %v2019
      %v2021 = vmul.f32 %v2006, 1.442695
      %v2022 = vpow.pop %v2021
      %v2023 = vadd.f32 %v2008, 1.0
      %v2024 = vadd.f32 %v2010, 1.0
      %v2025 = vadd.f32 %v2012, 1.0
      %v2026 = vadd.f32 %v2014, 1.0
      %v2027 = vadd.f32 %v2016, 1.0
      %v2028 = vadd.f32 %v2018, 1.0
      %v2029 = vadd.f32 %v2020, 1.0
      %v2030 = vadd.f32 %v2022, 1.0
      %v2031 = vrcp.pop %v2023
      %v2032 = vmul.f32 %v2023, %v2031
      %v2033 = vsub.f32 1.0, %v2032
      %v2034 = vmul.f32 %v2031, %v2033
      %v2035 = vadd.f32 %v2031, %v2034
      %vm2036 = vweird.f32 %v2023
      %vm2037 = vweird.f32 %v2031
      %vm2038 = vmor %vm2036, %vm2037
      %v2039 = vsel %vm2038, %v2031, %v2035
      %v2040 = vand.u32 2147483647, %v2023
      %vm2041 = vcmp.eq.f32.partialorder %v2040, 8.507059e+37
      %v2042 = vand.u32 %v2023, 2147483648
      %v2043 = vor.u32 1.1754944e-38, %v2042
      %v2044 = vsel %vm2041, %v2043, %v2039
      %v2045 = vmul.f32 1.0, %v2044
      %v2046 = vrcp.pop %v2024
      %v2047 = vmul.f32 %v2024, %v2046
      %v2048 = vsub.f32 1.0, %v2047
      %v2049 = vmul.f32 %v2046, %v2048
      %v2050 = vadd.f32 %v2046, %v2049
      %vm2051 = vweird.f32 %v2024
      %vm2052 = vweird.f32 %v2046
      %vm2053 = vmor %vm2051, %vm2052
      %v2054 = vsel %vm2053, %v2046, %v2050
      %v2055 = vand.u32 2147483647, %v2024
      %vm2056 = vcmp.eq.f32.partialorder %v2055, 8.507059e+37
      %v2057 = vand.u32 %v2024, 2147483648
      %v2058 = vor.u32 1.1754944e-38, %v2057
      %v2059 = vsel %vm2056, %v2058, %v2054
      %v2060 = vmul.f32 1.0, %v2059
      %v2061 = vrcp.pop %v2025
      %v2062 = vmul.f32 %v2025, %v2061
      %v2063 = vsub.f32 1.0, %v2062
      %v2064 = vmul.f32 %v2061, %v2063
      %v2065 = vadd.f32 %v2061, %v2064
      %vm2066 = vweird.f32 %v2025
      %vm2067 = vweird.f32 %v2061
      %vm2068 = vmor %vm2066, %vm2067
      %v2069 = vsel %vm2068, %v2061, %v2065
      %v2070 = vand.u32 2147483647, %v2025
      %vm2071 = vcmp.eq.f32.partialorder %v2070, 8.507059e+37
      %v2072 = vand.u32 %v2025, 2147483648
      %v2073 = vor.u32 1.1754944e-38, %v2072
      %v2074 = vsel %vm2071, %v2073, %v2069
      %v2075 = vmul.f32 1.0, %v2074
      %v2076 = vrcp.pop %v2026
      %v2077 = vmul.f32 %v2026, %v2076
      %v2078 = vsub.f32 1.0, %v2077
      %v2079 = vmul.f32 %v2076, %v2078
      %v2080 = vadd.f32 %v2076, %v2079
      %vm2081 = vweird.f32 %v2026
      %vm2082 = vweird.f32 %v2076
      %vm2083 = vmor %vm2081, %vm2082
      %v2084 = vsel %vm2083, %v2076, %v2080
      %v2085 = vand.u32 2147483647, %v2026
      %vm2086 = vcmp.eq.f32.partialorder %v2085, 8.507059e+37
      %v2087 = vand.u32 %v2026, 2147483648
      %v2088 = vor.u32 1.1754944e-38, %v2087
      %v2089 = vsel %vm2086, %v2088, %v2084
      %v2090 = vmul.f32 1.0, %v2089
      %v2091 = vrcp.pop %v2027
      %v2092 = vmul.f32 %v2027, %v2091
      %v2093 = vsub.f32 1.0, %v2092
      %v2094 = vmul.f32 %v2091, %v2093
      %v2095 = vadd.f32 %v2091, %v2094
      %vm2096 = vweird.f32 %v2027
      %vm2097 = vweird.f32 %v2091
      %vm2098 = vmor %vm2096, %vm2097
      %v2099 = vsel %vm2098, %v2091, %v2095
      %v2100 = vand.u32 2147483647, %v2027
      %vm2101 = vcmp.eq.f32.partialorder %v2100, 8.507059e+37
      %v2102 = vand.u32 %v2027, 2147483648
      %v2103 = vor.u32 1.1754944e-38, %v2102
      %v2104 = vsel %vm2101, %v2103, %v2099
      %v2105 = vmul.f32 1.0, %v2104
      %v2106 = vrcp.pop %v2028
      %v2107 = vmul.f32 %v2028, %v2106
      %v2108 = vsub.f32 1.0, %v2107
      %v2109 = vmul.f32 %v2106, %v2108
      %v2110 = vadd.f32 %v2106, %v2109
      %vm2111 = vweird.f32 %v2028
      %vm2112 = vweird.f32 %v2106
      %vm2113 = vmor %vm2111, %vm2112
      %v2114 = vsel %vm2113, %v2106, %v2110
      %v2115 = vand.u32 2147483647, %v2028
      %vm2116 = vcmp.eq.f32.partialorder %v2115, 8.507059e+37
      %v2117 = vand.u32 %v2028, 2147483648
      %v2118 = vor.u32 1.1754944e-38, %v2117
      %v2119 = vsel %vm2116, %v2118, %v2114
      %v2120 = vmul.f32 1.0, %v2119
      %v2121 = vrcp.pop %v2029
      %v2122 = vmul.f32 %v2029, %v2121
      %v2123 = vsub.f32 1.0, %v2122
      %v2124 = vmul.f32 %v2121, %v2123
      %v2125 = vadd.f32 %v2121, %v2124
      %vm2126 = vweird.f32 %v2029
      %vm2127 = vweird.f32 %v2121
      %vm2128 = vmor %vm2126, %vm2127
      %v2129 = vsel %vm2128, %v2121, %v2125
      %v2130 = vand.u32 2147483647, %v2029
      %vm2131 = vcmp.eq.f32.partialorder %v2130, 8.507059e+37
      %v2132 = vand.u32 %v2029, 2147483648
      %v2133 = vor.u32 1.1754944e-38, %v2132
      %v2134 = vsel %vm2131, %v2133, %v2129
      %v2135 = vmul.f32 1.0, %v2134
      %v2136 = vrcp.pop %v2030
      %v2137 = vmul.f32 %v2030, %v2136
      %v2138 = vsub.f32 1.0, %v2137
      %v2139 = vmul.f32 %v2136, %v2138
      %v2140 = vadd.f32 %v2136, %v2139
      %vm2141 = vweird.f32 %v2030
      %vm2142 = vweird.f32 %v2136
      %vm2143 = vmor %vm2141, %vm2142
      %v2144 = vsel %vm2143, %v2136, %v2140
      %v2145 = vand.u32 2147483647, %v2030
      %vm2146 = vcmp.eq.f32.partialorder %v2145, 8.507059e+37
      %v2147 = vand.u32 %v2030, 2147483648
      %v2148 = vor.u32 1.1754944e-38, %v2147
      %v2149 = vsel %vm2146, %v2148, %v2144
      %v2150 = vmul.f32 1.0, %v2149
      %v2151 = vadd.f32 %v1974, %v1505
      %v2152 = vadd.f32 %v1976, %v1510
      %v2153 = vadd.f32 %v1979, %v1515
      %v2154 = vadd.f32 %v1981, %v1520
      %v2155 = vadd.f32 %v1669, %v1529
      %v2156 = vadd.f32 %v1671, %v1534
      %v2157 = vadd.f32 %v1674, %v1539
      %v2158 = vadd.f32 %v1676, %v1544
      %v2159 = vmul.f32 %v2045, %v2155
      %v2160 = vmul.f32 %v2060, %v2156
      %v2161 = vmul.f32 %v2075, %v2157
      %v2162 = vmul.f32 %v2090, %v2158
      %v2163 = vadd.f32 %v2151, %v2159
      %v2164 = vadd.f32 %v2152, %v2160
      %v2165 = vadd.f32 %v2153, %v2161
      %v2166 = vadd.f32 %v2154, %v2162
      %v2167 = vtanh.pop %v2163
      %v2168 = vtanh.pop %v2164
      %v2169 = vtanh.pop %v2165
      %v2170 = vtanh.pop %v2166
      %v2171 = vsub.f32 1.0, %v2105
      %v2172 = vsub.f32 1.0, %v2120
      %v2173 = vsub.f32 1.0, %v2135
      %v2174 = vsub.f32 1.0, %v2150
      %v2175 = vmul.f32 %v2171, %v2167
      %v2176 = vmul.f32 %v2172, %v2168
      %v2177 = vmul.f32 %v2173, %v2169
      %v2178 = vmul.f32 %v2174, %v2170
      %v2179 = vmul.f32 %v2105, %v1601
      %v2180 = vmul.f32 %v2120, %v1602
      %v2181 = vmul.f32 %v2135, %v1603
      %v2182 = vmul.f32 %v2150, %v1604
      %v2183 = vadd.f32 %v2175, %v2179
      %v2184 = vadd.f32 %v2176, %v2180
      %v2185 = vadd.f32 %v2177, %v2181
      %v2186 = vadd.f32 %v2178, %v2182
      %vm2187 = vcmp.gt.s32.totalorder %v423, 1
      %v2188 = vsel %vm2187, 1, 0
      %v2189 = vcvt.s32.f32 %v2188
      %v2191 = vperm.slane %v2189, 0
      %2197 = vrot.lane.b32.xlu0 %v1930, 96
      %v2198 = vpop.permute.xlu0 %2197
      %2199 = vrot.lane.b32.xlu0 %v1931, 96
      %v2200 = vpop.permute.xlu0 %2199
      %2201 = vrot.lane.b32.xlu0 %v1932, 96
      %v2202 = vpop.permute.xlu0 %2201
      %2203 = vrot.lane.b32.xlu0 %v1933, 96
      %v2204 = vpop.permute.xlu0 %2203
      %v2209 = vmul.f32 %v2191, %v2198
      %v2210 = vmul.f32 %v2191, %v2200
      %v2211 = vmul.f32 %v2191, %v2202
      %v2212 = vmul.f32 %v2191, %v2204
      %v2213 = vsub.f32 1.0, %v2189
      %v2215 = vperm.slane %v2213, 0
      %v2217 = vmul.f32 %v2215, %v1593
      %v2218 = vmul.f32 %v2215, %v1594
      %v2219 = vmul.f32 %v2215, %v1595
      %v2220 = vmul.f32 %v2215, %v1596
      %v2221 = vadd.f32 %v2209, %v2217
      %v2222 = vadd.f32 %v2210, %v2218
      %v2223 = vadd.f32 %v2211, %v2219
      %v2224 = vadd.f32 %v2212, %v2220
      %v2225 = vmul.f32 %v2191, %v2183
      %v2226 = vmul.f32 %v2191, %v2184
      %v2227 = vmul.f32 %v2191, %v2185
      %v2228 = vmul.f32 %v2191, %v2186
      %v2229 = vmul.f32 %v2215, %v1601
      %v2230 = vmul.f32 %v2215, %v1602
      %v2231 = vmul.f32 %v2215, %v1603
      %v2232 = vmul.f32 %v2215, %v1604
      %v2233 = vadd.f32 %v2225, %v2229
      %v2234 = vadd.f32 %v2226, %v2230
      %v2235 = vadd.f32 %v2227, %v2231
      %v2236 = vadd.f32 %v2228, %v2232
      %v2237 = vpack.c.bf16 %v2222, %v2221
      %v2238 = vpack.c.bf16 %v2224, %v2223
      %v2239 = vpack.c.bf16 %v2234, %v2233
      %v2240 = vpack.c.bf16 %v2236, %v2235
      %2241 = vmatpush.bf16.msra.mxu0 0
      %2242 = vmatpush.bf16.msra.mxu0 0
      %2243 = vmatpush.bf16.msra.mxu0 0
      %2244 = vmatpush.bf16.msra.mxu0 0
      %2245 = vmatpush.bf16.msra.mxu0 %v2240
      %2246 = vmatpush.bf16.msra.mxu0 %v2239
      %2247 = vmatpush.bf16.msra.mxu0 %v2238
      %2248 = vmatpush.bf16.msra.mxu0 %v2237
      %2249 = vmatmul.bf16.gmra.mxu0 %v888
      %v2250 = vpop.f32.mrf.mxu0
      %v2251 = vadd.f32 0.0, %v2250
      %v2252 = vpop.f32.mrf.mxu0
      %v2253 = vadd.f32 0.0, %v2252
      %2254 = vmatmul.bf16.gmra.mxu0 %v891
      %v2255 = vpop.f32.mrf.mxu0
      %v2256 = vadd.f32 0.0, %v2255
      %v2257 = vpop.f32.mrf.mxu0
      %v2258 = vadd.f32 0.0, %v2257
      %2259 = vmatmul.bf16.gmra.mxu0 %v894
      %v2260 = vpop.f32.mrf.mxu0
      %v2261 = vadd.f32 0.0, %v2260
      %v2262 = vpop.f32.mrf.mxu0
      %v2263 = vadd.f32 0.0, %v2262
      %2264 = vmatmul.bf16.gmra.mxu0 %v897
      %v2265 = vpop.f32.mrf.mxu0
      %v2266 = vadd.f32 0.0, %v2265
      %v2267 = vpop.f32.mrf.mxu0
      %v2268 = vadd.f32 0.0, %v2267
      %2269 = vmatmul.bf16.gmra.mxu0 %v900
      %v2270 = vpop.f32.mrf.mxu0
      %v2271 = vadd.f32 0.0, %v2270
      %v2272 = vpop.f32.mrf.mxu0
      %v2273 = vadd.f32 0.0, %v2272
      %2274 = vmatmul.bf16.gmra.mxu0 %v903
      %v2275 = vpop.f32.mrf.mxu0
      %v2276 = vadd.f32 0.0, %v2275
      %v2277 = vpop.f32.mrf.mxu0
      %v2278 = vadd.f32 0.0, %v2277
      %2279 = vmatmul.bf16.gmra.mxu0 %v906
      %v2280 = vpop.f32.mrf.mxu0
      %v2281 = vadd.f32 0.0, %v2280
      %v2282 = vpop.f32.mrf.mxu0
      %v2283 = vadd.f32 0.0, %v2282
      %2284 = vmatmul.bf16.gmra.mxu0 %v909
      %v2285 = vpop.f32.mrf.mxu0
      %v2286 = vadd.f32 0.0, %v2285
      %v2287 = vpop.f32.mrf.mxu0
      %v2288 = vadd.f32 0.0, %v2287
      %2289 = vmatmul.bf16.gmra.mxu0 %v912
      %v2290 = vpop.f32.mrf.mxu0
      %v2291 = vadd.f32 0.0, %v2290
      %v2292 = vpop.f32.mrf.mxu0
      %v2293 = vadd.f32 0.0, %v2292
      %2294 = vmatmul.bf16.gmra.mxu0 %v915
      %v2295 = vpop.f32.mrf.mxu0
      %v2296 = vadd.f32 0.0, %v2295
      %v2297 = vpop.f32.mrf.mxu0
      %v2298 = vadd.f32 0.0, %v2297
      %2299 = vmatmul.bf16.gmra.mxu0 %v918
      %v2300 = vpop.f32.mrf.mxu0
      %v2301 = vadd.f32 0.0, %v2300
      %v2302 = vpop.f32.mrf.mxu0
      %v2303 = vadd.f32 0.0, %v2302
      %2304 = vmatmul.bf16.gmra.mxu0 %v921
      %v2305 = vpop.f32.mrf.mxu0
      %v2306 = vadd.f32 0.0, %v2305
      %v2307 = vpop.f32.mrf.mxu0
      %v2308 = vadd.f32 0.0, %v2307
      %2309 = vdwg.mxu0
      %2318 = vrot.lane.b32.xlu0 %v2251, 64
      %v2319 = vpop.permute.xlu0 %2318
      %2320 = vrot.lane.b32.xlu0 %v2253, 64
      %v2321 = vpop.permute.xlu0 %2320
      %2322 = vrot.lane.b32.xlu0 %v2256, 64
      %v2323 = vpop.permute.xlu0 %2322
      %2324 = vrot.lane.b32.xlu0 %v2258, 64
      %v2325 = vpop.permute.xlu0 %2324
      %2326 = vrot.lane.b32.xlu0 %v2261, 64
      %v2327 = vpop.permute.xlu0 %2326
      %2328 = vrot.lane.b32.xlu0 %v2263, 64
      %v2329 = vpop.permute.xlu0 %2328
      %2330 = vrot.lane.b32.xlu0 %v2266, 64
      %v2331 = vpop.permute.xlu0 %2330
      %2332 = vrot.lane.b32.xlu0 %v2268, 64
      %v2333 = vpop.permute.xlu0 %2332
      %v2342 = vadd.f32 %v719, %v2319
      %v2343 = vadd.f32 %v721, %v2321
      %v2344 = vadd.f32 %v724, %v2323
      %v2345 = vadd.f32 %v726, %v2325
      %v2346 = vadd.f32 %v729, %v2327
      %v2347 = vadd.f32 %v731, %v2329
      %v2348 = vadd.f32 %v734, %v2331
      %v2349 = vadd.f32 %v736, %v2333
      %v2350 = vxor.u32 %v2342, 2147483648
      %v2351 = vxor.u32 %v2343, 2147483648
      %v2352 = vxor.u32 %v2344, 2147483648
      %v2353 = vxor.u32 %v2345, 2147483648
      %v2354 = vxor.u32 %v2346, 2147483648
      %v2355 = vxor.u32 %v2347, 2147483648
      %v2356 = vxor.u32 %v2348, 2147483648
      %v2357 = vxor.u32 %v2349, 2147483648
      %v2358 = vmul.f32 %v2350, 1.442695
      %v2359 = vpow.pop %v2358
      %v2360 = vmul.f32 %v2351, 1.442695
      %v2361 = vpow.pop %v2360
      %v2362 = vmul.f32 %v2352, 1.442695
      %v2363 = vpow.pop %v2362
      %v2364 = vmul.f32 %v2353, 1.442695
      %v2365 = vpow.pop %v2364
      %v2366 = vmul.f32 %v2354, 1.442695
      %v2367 = vpow.pop %v2366
      %v2368 = vmul.f32 %v2355, 1.442695
      %v2369 = vpow.pop %v2368
      %v2370 = vmul.f32 %v2356, 1.442695
      %v2371 = vpow.pop %v2370
      %v2372 = vmul.f32 %v2357, 1.442695
      %v2373 = vpow.pop %v2372
      %v2374 = vadd.f32 %v2359, 1.0
      %v2375 = vadd.f32 %v2361, 1.0
      %v2376 = vadd.f32 %v2363, 1.0
      %v2377 = vadd.f32 %v2365, 1.0
      %v2378 = vadd.f32 %v2367, 1.0
      %v2379 = vadd.f32 %v2369, 1.0
      %v2380 = vadd.f32 %v2371, 1.0
      %v2381 = vadd.f32 %v2373, 1.0
      %v2382 = vrcp.pop %v2374
      %v2383 = vmul.f32 %v2374, %v2382
      %v2384 = vsub.f32 1.0, %v2383
      %v2385 = vmul.f32 %v2382, %v2384
      %v2386 = vadd.f32 %v2382, %v2385
      %vm2387 = vweird.f32 %v2374
      %vm2388 = vweird.f32 %v2382
      %vm2389 = vmor %vm2387, %vm2388
      %v2390 = vsel %vm2389, %v2382, %v2386
      %v2391 = vand.u32 2147483647, %v2374
      %vm2392 = vcmp.eq.f32.partialorder %v2391, 8.507059e+37
      %v2393 = vand.u32 %v2374, 2147483648
      %v2394 = vor.u32 1.1754944e-38, %v2393
      %v2395 = vsel %vm2392, %v2394, %v2390
      %v2396 = vmul.f32 1.0, %v2395
      %v2397 = vrcp.pop %v2375
      %v2398 = vmul.f32 %v2375, %v2397
      %v2399 = vsub.f32 1.0, %v2398
      %v2400 = vmul.f32 %v2397, %v2399
      %v2401 = vadd.f32 %v2397, %v2400
      %vm2402 = vweird.f32 %v2375
      %vm2403 = vweird.f32 %v2397
      %vm2404 = vmor %vm2402, %vm2403
      %v2405 = vsel %vm2404, %v2397, %v2401
      %v2406 = vand.u32 2147483647, %v2375
      %vm2407 = vcmp.eq.f32.partialorder %v2406, 8.507059e+37
      %v2408 = vand.u32 %v2375, 2147483648
      %v2409 = vor.u32 1.1754944e-38, %v2408
      %v2410 = vsel %vm2407, %v2409, %v2405
      %v2411 = vmul.f32 1.0, %v2410
      %v2412 = vrcp.pop %v2376
      %v2413 = vmul.f32 %v2376, %v2412
      %v2414 = vsub.f32 1.0, %v2413
      %v2415 = vmul.f32 %v2412, %v2414
      %v2416 = vadd.f32 %v2412, %v2415
      %vm2417 = vweird.f32 %v2376
      %vm2418 = vweird.f32 %v2412
      %vm2419 = vmor %vm2417, %vm2418
      %v2420 = vsel %vm2419, %v2412, %v2416
      %v2421 = vand.u32 2147483647, %v2376
      %vm2422 = vcmp.eq.f32.partialorder %v2421, 8.507059e+37
      %v2423 = vand.u32 %v2376, 2147483648
      %v2424 = vor.u32 1.1754944e-38, %v2423
      %v2425 = vsel %vm2422, %v2424, %v2420
      %v2426 = vmul.f32 1.0, %v2425
      %v2427 = vrcp.pop %v2377
      %v2428 = vmul.f32 %v2377, %v2427
      %v2429 = vsub.f32 1.0, %v2428
      %v2430 = vmul.f32 %v2427, %v2429
      %v2431 = vadd.f32 %v2427, %v2430
      %vm2432 = vweird.f32 %v2377
      %vm2433 = vweird.f32 %v2427
      %vm2434 = vmor %vm2432, %vm2433
      %v2435 = vsel %vm2434, %v2427, %v2431
      %v2436 = vand.u32 2147483647, %v2377
      %vm2437 = vcmp.eq.f32.partialorder %v2436, 8.507059e+37
      %v2438 = vand.u32 %v2377, 2147483648
      %v2439 = vor.u32 1.1754944e-38, %v2438
      %v2440 = vsel %vm2437, %v2439, %v2435
      %v2441 = vmul.f32 1.0, %v2440
      %v2442 = vrcp.pop %v2378
      %v2443 = vmul.f32 %v2378, %v2442
      %v2444 = vsub.f32 1.0, %v2443
      %v2445 = vmul.f32 %v2442, %v2444
      %v2446 = vadd.f32 %v2442, %v2445
      %vm2447 = vweird.f32 %v2378
      %vm2448 = vweird.f32 %v2442
      %vm2449 = vmor %vm2447, %vm2448
      %v2450 = vsel %vm2449, %v2442, %v2446
      %v2451 = vand.u32 2147483647, %v2378
      %vm2452 = vcmp.eq.f32.partialorder %v2451, 8.507059e+37
      %v2453 = vand.u32 %v2378, 2147483648
      %v2454 = vor.u32 1.1754944e-38, %v2453
      %v2455 = vsel %vm2452, %v2454, %v2450
      %v2456 = vmul.f32 1.0, %v2455
      %v2457 = vrcp.pop %v2379
      %v2458 = vmul.f32 %v2379, %v2457
      %v2459 = vsub.f32 1.0, %v2458
      %v2460 = vmul.f32 %v2457, %v2459
      %v2461 = vadd.f32 %v2457, %v2460
      %vm2462 = vweird.f32 %v2379
      %vm2463 = vweird.f32 %v2457
      %vm2464 = vmor %vm2462, %vm2463
      %v2465 = vsel %vm2464, %v2457, %v2461
      %v2466 = vand.u32 2147483647, %v2379
      %vm2467 = vcmp.eq.f32.partialorder %v2466, 8.507059e+37
      %v2468 = vand.u32 %v2379, 2147483648
      %v2469 = vor.u32 1.1754944e-38, %v2468
      %v2470 = vsel %vm2467, %v2469, %v2465
      %v2471 = vmul.f32 1.0, %v2470
      %v2472 = vrcp.pop %v2380
      %v2473 = vmul.f32 %v2380, %v2472
      %v2474 = vsub.f32 1.0, %v2473
      %v2475 = vmul.f32 %v2472, %v2474
      %v2476 = vadd.f32 %v2472, %v2475
      %vm2477 = vweird.f32 %v2380
      %vm2478 = vweird.f32 %v2472
      %vm2479 = vmor %vm2477, %vm2478
      %v2480 = vsel %vm2479, %v2472, %v2476
      %v2481 = vand.u32 2147483647, %v2380
      %vm2482 = vcmp.eq.f32.partialorder %v2481, 8.507059e+37
      %v2483 = vand.u32 %v2380, 2147483648
      %v2484 = vor.u32 1.1754944e-38, %v2483
      %v2485 = vsel %vm2482, %v2484, %v2480
      %v2486 = vmul.f32 1.0, %v2485
      %v2487 = vrcp.pop %v2381
      %v2488 = vmul.f32 %v2381, %v2487
      %v2489 = vsub.f32 1.0, %v2488
      %v2490 = vmul.f32 %v2487, %v2489
      %v2491 = vadd.f32 %v2487, %v2490
      %vm2492 = vweird.f32 %v2381
      %vm2493 = vweird.f32 %v2487
      %vm2494 = vmor %vm2492, %vm2493
      %v2495 = vsel %vm2494, %v2487, %v2491
      %v2496 = vand.u32 2147483647, %v2381
      %vm2497 = vcmp.eq.f32.partialorder %v2496, 8.507059e+37
      %v2498 = vand.u32 %v2381, 2147483648
      %v2499 = vor.u32 1.1754944e-38, %v2498
      %v2500 = vsel %vm2497, %v2499, %v2495
      %v2501 = vmul.f32 1.0, %v2500
      %v2502 = vadd.f32 %v2271, %v1155
      %v2503 = vadd.f32 %v2273, %v1160
      %v2504 = vadd.f32 %v2276, %v1165
      %v2505 = vadd.f32 %v2278, %v1170
      %2510 = vrot.lane.b32.xlu0 %v2502, 64
      %v2511 = vpop.permute.xlu0 %2510
      %2512 = vrot.lane.b32.xlu0 %v2503, 64
      %v2513 = vpop.permute.xlu0 %2512
      %2514 = vrot.lane.b32.xlu0 %v2504, 64
      %v2515 = vpop.permute.xlu0 %2514
      %2516 = vrot.lane.b32.xlu0 %v2505, 64
      %v2517 = vpop.permute.xlu0 %2516
      %v2522 = vmul.f32 %v2396, %v2511
      %v2523 = vmul.f32 %v2411, %v2513
      %v2524 = vmul.f32 %v2426, %v2515
      %v2525 = vmul.f32 %v2441, %v2517
      %v2526 = vadd.f32 %v739, %v2522
      %v2527 = vadd.f32 %v741, %v2523
      %v2528 = vadd.f32 %v744, %v2524
      %v2529 = vadd.f32 %v746, %v2525
      %v2530 = vtanh.pop %v2526
      %v2531 = vtanh.pop %v2527
      %v2532 = vtanh.pop %v2528
      %v2533 = vtanh.pop %v2529
      %v2534 = vsub.f32 1.0, %v2456
      %v2535 = vsub.f32 1.0, %v2471
      %v2536 = vsub.f32 1.0, %v2486
      %v2537 = vsub.f32 1.0, %v2501
      %v2538 = vmul.f32 %v2534, %v2530
      %v2539 = vmul.f32 %v2535, %v2531
      %v2540 = vmul.f32 %v2536, %v2532
      %v2541 = vmul.f32 %v2537, %v2533
      %2546 = vrot.lane.b32.xlu0 %v2221, 64
      %v2547 = vpop.permute.xlu0 %2546
      %2548 = vrot.lane.b32.xlu0 %v2222, 64
      %v2549 = vpop.permute.xlu0 %2548
      %2550 = vrot.lane.b32.xlu0 %v2223, 64
      %v2551 = vpop.permute.xlu0 %2550
      %2552 = vrot.lane.b32.xlu0 %v2224, 64
      %v2553 = vpop.permute.xlu0 %2552
      %v2558 = vmul.f32 %v2456, %v2547
      %v2559 = vmul.f32 %v2471, %v2549
      %v2560 = vmul.f32 %v2486, %v2551
      %v2561 = vmul.f32 %v2501, %v2553
      %v2562 = vadd.f32 %v2538, %v2558
      %v2563 = vadd.f32 %v2539, %v2559
      %v2564 = vadd.f32 %v2540, %v2560
      %v2565 = vadd.f32 %v2541, %v2561
      %v2566 = vpack.c.bf16 %v2563, %v2562
      %v2567 = vpack.c.bf16 %v2565, %v2564
      %2570 = vrot.lane.b32.xlu0 %v2566, 64
      %v2571 = vpop.permute.xlu0 %2570
      %2572 = vrot.lane.b32.xlu0 %v2567, 64
      %v2573 = vpop.permute.xlu0 %2572
      %2576 = vmatpush.bf16.msra.mxu0 0
      %2577 = vmatpush.bf16.msra.mxu0 0
      %2578 = vmatpush.bf16.msra.mxu0 0
      %2579 = vmatpush.bf16.msra.mxu0 0
      %2580 = vmatpush.bf16.msra.mxu0 0
      %2581 = vmatpush.bf16.msra.mxu0 0
      %2582 = vmatpush.bf16.msra.mxu0 %v2573
      %2583 = vmatpush.bf16.msra.mxu0 %v2571
      %2584 = vmatmul.bf16.gmra.mxu0 %v1238
      %v2585 = vpop.f32.mrf.mxu0
      %v2586 = vadd.f32 0.0, %v2585
      %v2587 = vpop.f32.mrf.mxu0
      %v2588 = vadd.f32 0.0, %v2587
      %2589 = vmatmul.bf16.gmra.mxu0 %v1241
      %v2590 = vpop.f32.mrf.mxu0
      %v2591 = vadd.f32 0.0, %v2590
      %v2592 = vpop.f32.mrf.mxu0
      %v2593 = vadd.f32 0.0, %v2592
      %2594 = vmatmul.bf16.gmra.mxu0 %v1244
      %v2595 = vpop.f32.mrf.mxu0
      %v2596 = vadd.f32 0.0, %v2595
      %v2597 = vpop.f32.mrf.mxu0
      %v2598 = vadd.f32 0.0, %v2597
      %2599 = vmatmul.bf16.gmra.mxu0 %v1247
      %v2600 = vpop.f32.mrf.mxu0
      %v2601 = vadd.f32 0.0, %v2600
      %v2602 = vpop.f32.mrf.mxu0
      %v2603 = vadd.f32 0.0, %v2602
      %2604 = vmatmul.bf16.gmra.mxu0 %v1250
      %v2605 = vpop.f32.mrf.mxu0
      %v2606 = vadd.f32 0.0, %v2605
      %v2607 = vpop.f32.mrf.mxu0
      %v2608 = vadd.f32 0.0, %v2607
      %2609 = vmatmul.bf16.gmra.mxu0 %v1253
      %v2610 = vpop.f32.mrf.mxu0
      %v2611 = vadd.f32 0.0, %v2610
      %v2612 = vpop.f32.mrf.mxu0
      %v2613 = vadd.f32 0.0, %v2612
      %2614 = vdwg.mxu0
      %v2615 = vadd.f32 %v2586, %v2281
      %v2616 = vadd.f32 %v2588, %v2283
      %v2617 = vadd.f32 %v2591, %v2286
      %v2618 = vadd.f32 %v2593, %v2288
      %v2619 = vadd.f32 %v2596, %v2291
      %v2620 = vadd.f32 %v2598, %v2293
      %v2621 = vadd.f32 %v2601, %v2296
      %v2622 = vadd.f32 %v2603, %v2298
      %v2623 = vadd.f32 %v2615, %v1305
      %v2624 = vadd.f32 %v2616, %v1310
      %v2625 = vadd.f32 %v2617, %v1315
      %v2626 = vadd.f32 %v2618, %v1320
      %v2627 = vadd.f32 %v2619, %v1325
      %v2628 = vadd.f32 %v2620, %v1330
      %v2629 = vadd.f32 %v2621, %v1335
      %v2630 = vadd.f32 %v2622, %v1340
      %v2631 = vxor.u32 %v2623, 2147483648
      %v2632 = vxor.u32 %v2624, 2147483648
      %v2633 = vxor.u32 %v2625, 2147483648
      %v2634 = vxor.u32 %v2626, 2147483648
      %v2635 = vxor.u32 %v2627, 2147483648
      %v2636 = vxor.u32 %v2628, 2147483648
      %v2637 = vxor.u32 %v2629, 2147483648
      %v2638 = vxor.u32 %v2630, 2147483648
      %v2639 = vmul.f32 %v2631, 1.442695
      %v2640 = vpow.pop %v2639
      %v2641 = vmul.f32 %v2632, 1.442695
      %v2642 = vpow.pop %v2641
      %v2643 = vmul.f32 %v2633, 1.442695
      %v2644 = vpow.pop %v2643
      %v2645 = vmul.f32 %v2634, 1.442695
      %v2646 = vpow.pop %v2645
      %v2647 = vmul.f32 %v2635, 1.442695
      %v2648 = vpow.pop %v2647
      %v2649 = vmul.f32 %v2636, 1.442695
      %v2650 = vpow.pop %v2649
      %v2651 = vmul.f32 %v2637, 1.442695
      %v2652 = vpow.pop %v2651
      %v2653 = vmul.f32 %v2638, 1.442695
      %v2654 = vpow.pop %v2653
      %v2655 = vadd.f32 %v2640, 1.0
      %v2656 = vadd.f32 %v2642, 1.0
      %v2657 = vadd.f32 %v2644, 1.0
      %v2658 = vadd.f32 %v2646, 1.0
      %v2659 = vadd.f32 %v2648, 1.0
      %v2660 = vadd.f32 %v2650, 1.0
      %v2661 = vadd.f32 %v2652, 1.0
      %v2662 = vadd.f32 %v2654, 1.0
      %v2663 = vrcp.pop %v2655
      %v2664 = vmul.f32 %v2655, %v2663
      %v2665 = vsub.f32 1.0, %v2664
      %v2666 = vmul.f32 %v2663, %v2665
      %v2667 = vadd.f32 %v2663, %v2666
      %vm2668 = vweird.f32 %v2655
      %vm2669 = vweird.f32 %v2663
      %vm2670 = vmor %vm2668, %vm2669
      %v2671 = vsel %vm2670, %v2663, %v2667
      %v2672 = vand.u32 2147483647, %v2655
      %vm2673 = vcmp.eq.f32.partialorder %v2672, 8.507059e+37
      %v2674 = vand.u32 %v2655, 2147483648
      %v2675 = vor.u32 1.1754944e-38, %v2674
      %v2676 = vsel %vm2673, %v2675, %v2671
      %v2677 = vmul.f32 1.0, %v2676
      %v2678 = vrcp.pop %v2656
      %v2679 = vmul.f32 %v2656, %v2678
      %v2680 = vsub.f32 1.0, %v2679
      %v2681 = vmul.f32 %v2678, %v2680
      %v2682 = vadd.f32 %v2678, %v2681
      %vm2683 = vweird.f32 %v2656
      %vm2684 = vweird.f32 %v2678
      %vm2685 = vmor %vm2683, %vm2684
      %v2686 = vsel %vm2685, %v2678, %v2682
      %v2687 = vand.u32 2147483647, %v2656
      %vm2688 = vcmp.eq.f32.partialorder %v2687, 8.507059e+37
      %v2689 = vand.u32 %v2656, 2147483648
      %v2690 = vor.u32 1.1754944e-38, %v2689
      %v2691 = vsel %vm2688, %v2690, %v2686
      %v2692 = vmul.f32 1.0, %v2691
      %v2693 = vrcp.pop %v2657
      %v2694 = vmul.f32 %v2657, %v2693
      %v2695 = vsub.f32 1.0, %v2694
      %v2696 = vmul.f32 %v2693, %v2695
      %v2697 = vadd.f32 %v2693, %v2696
      %vm2698 = vweird.f32 %v2657
      %vm2699 = vweird.f32 %v2693
      %vm2700 = vmor %vm2698, %vm2699
      %v2701 = vsel %vm2700, %v2693, %v2697
      %v2702 = vand.u32 2147483647, %v2657
      %vm2703 = vcmp.eq.f32.partialorder %v2702, 8.507059e+37
      %v2704 = vand.u32 %v2657, 2147483648
      %v2705 = vor.u32 1.1754944e-38, %v2704
      %v2706 = vsel %vm2703, %v2705, %v2701
      %v2707 = vmul.f32 1.0, %v2706
      %v2708 = vrcp.pop %v2658
      %v2709 = vmul.f32 %v2658, %v2708
      %v2710 = vsub.f32 1.0, %v2709
      %v2711 = vmul.f32 %v2708, %v2710
      %v2712 = vadd.f32 %v2708, %v2711
      %vm2713 = vweird.f32 %v2658
      %vm2714 = vweird.f32 %v2708
      %vm2715 = vmor %vm2713, %vm2714
      %v2716 = vsel %vm2715, %v2708, %v2712
      %v2717 = vand.u32 2147483647, %v2658
      %vm2718 = vcmp.eq.f32.partialorder %v2717, 8.507059e+37
      %v2719 = vand.u32 %v2658, 2147483648
      %v2720 = vor.u32 1.1754944e-38, %v2719
      %v2721 = vsel %vm2718, %v2720, %v2716
      %v2722 = vmul.f32 1.0, %v2721
      %v2723 = vrcp.pop %v2659
      %v2724 = vmul.f32 %v2659, %v2723
      %v2725 = vsub.f32 1.0, %v2724
      %v2726 = vmul.f32 %v2723, %v2725
      %v2727 = vadd.f32 %v2723, %v2726
      %vm2728 = vweird.f32 %v2659
      %vm2729 = vweird.f32 %v2723
      %vm2730 = vmor %vm2728, %vm2729
      %v2731 = vsel %vm2730, %v2723, %v2727
      %v2732 = vand.u32 2147483647, %v2659
      %vm2733 = vcmp.eq.f32.partialorder %v2732, 8.507059e+37
      %v2734 = vand.u32 %v2659, 2147483648
      %v2735 = vor.u32 1.1754944e-38, %v2734
      %v2736 = vsel %vm2733, %v2735, %v2731
      %v2737 = vmul.f32 1.0, %v2736
      %v2738 = vrcp.pop %v2660
      %v2739 = vmul.f32 %v2660, %v2738
      %v2740 = vsub.f32 1.0, %v2739
      %v2741 = vmul.f32 %v2738, %v2740
      %v2742 = vadd.f32 %v2738, %v2741
      %vm2743 = vweird.f32 %v2660
      %vm2744 = vweird.f32 %v2738
      %vm2745 = vmor %vm2743, %vm2744
      %v2746 = vsel %vm2745, %v2738, %v2742
      %v2747 = vand.u32 2147483647, %v2660
      %vm2748 = vcmp.eq.f32.partialorder %v2747, 8.507059e+37
      %v2749 = vand.u32 %v2660, 2147483648
      %v2750 = vor.u32 1.1754944e-38, %v2749
      %v2751 = vsel %vm2748, %v2750, %v2746
      %v2752 = vmul.f32 1.0, %v2751
      %v2753 = vrcp.pop %v2661
      %v2754 = vmul.f32 %v2661, %v2753
      %v2755 = vsub.f32 1.0, %v2754
      %v2756 = vmul.f32 %v2753, %v2755
      %v2757 = vadd.f32 %v2753, %v2756
      %vm2758 = vweird.f32 %v2661
      %vm2759 = vweird.f32 %v2753
      %vm2760 = vmor %vm2758, %vm2759
      %v2761 = vsel %vm2760, %v2753, %v2757
      %v2762 = vand.u32 2147483647, %v2661
      %vm2763 = vcmp.eq.f32.partialorder %v2762, 8.507059e+37
      %v2764 = vand.u32 %v2661, 2147483648
      %v2765 = vor.u32 1.1754944e-38, %v2764
      %v2766 = vsel %vm2763, %v2765, %v2761
      %v2767 = vmul.f32 1.0, %v2766
      %v2768 = vrcp.pop %v2662
      %v2769 = vmul.f32 %v2662, %v2768
      %v2770 = vsub.f32 1.0, %v2769
      %v2771 = vmul.f32 %v2768, %v2770
      %v2772 = vadd.f32 %v2768, %v2771
      %vm2773 = vweird.f32 %v2662
      %vm2774 = vweird.f32 %v2768
      %vm2775 = vmor %vm2773, %vm2774
      %v2776 = vsel %vm2775, %v2768, %v2772
      %v2777 = vand.u32 2147483647, %v2662
      %vm2778 = vcmp.eq.f32.partialorder %v2777, 8.507059e+37
      %v2779 = vand.u32 %v2662, 2147483648
      %v2780 = vor.u32 1.1754944e-38, %v2779
      %v2781 = vsel %vm2778, %v2780, %v2776
      %v2782 = vmul.f32 1.0, %v2781
      %v2783 = vadd.f32 %v2606, %v1505
      %v2784 = vadd.f32 %v2608, %v1510
      %v2785 = vadd.f32 %v2611, %v1515
      %v2786 = vadd.f32 %v2613, %v1520
      %v2787 = vadd.f32 %v2301, %v1529
      %v2788 = vadd.f32 %v2303, %v1534
      %v2789 = vadd.f32 %v2306, %v1539
      %v2790 = vadd.f32 %v2308, %v1544
      %v2791 = vmul.f32 %v2677, %v2787
      %v2792 = vmul.f32 %v2692, %v2788
      %v2793 = vmul.f32 %v2707, %v2789
      %v2794 = vmul.f32 %v2722, %v2790
      %v2795 = vadd.f32 %v2783, %v2791
      %v2796 = vadd.f32 %v2784, %v2792
      %v2797 = vadd.f32 %v2785, %v2793
      %v2798 = vadd.f32 %v2786, %v2794
      %v2799 = vtanh.pop %v2795
      %v2800 = vtanh.pop %v2796
      %v2801 = vtanh.pop %v2797
      %v2802 = vtanh.pop %v2798
      %v2803 = vsub.f32 1.0, %v2737
      %v2804 = vsub.f32 1.0, %v2752
      %v2805 = vsub.f32 1.0, %v2767
      %v2806 = vsub.f32 1.0, %v2782
      %v2807 = vmul.f32 %v2803, %v2799
      %v2808 = vmul.f32 %v2804, %v2800
      %v2809 = vmul.f32 %v2805, %v2801
      %v2810 = vmul.f32 %v2806, %v2802
      %v2811 = vmul.f32 %v2737, %v2233
      %v2812 = vmul.f32 %v2752, %v2234
      %v2813 = vmul.f32 %v2767, %v2235
      %v2814 = vmul.f32 %v2782, %v2236
      %v2815 = vadd.f32 %v2807, %v2811
      %v2816 = vadd.f32 %v2808, %v2812
      %v2817 = vadd.f32 %v2809, %v2813
      %v2818 = vadd.f32 %v2810, %v2814
      %vm2819 = vcmp.gt.s32.totalorder %v423, 2
      %v2820 = vsel %vm2819, 1, 0
      %v2821 = vcvt.s32.f32 %v2820
      %v2823 = vperm.slane %v2821, 0
      %2829 = vrot.lane.b32.xlu0 %v2562, 64
      %v2830 = vpop.permute.xlu0 %2829
      %2831 = vrot.lane.b32.xlu0 %v2563, 64
      %v2832 = vpop.permute.xlu0 %2831
      %2833 = vrot.lane.b32.xlu0 %v2564, 64
      %v2834 = vpop.permute.xlu0 %2833
      %2835 = vrot.lane.b32.xlu0 %v2565, 64
      %v2836 = vpop.permute.xlu0 %2835
      %v2841 = vmul.f32 %v2823, %v2830
      %v2842 = vmul.f32 %v2823, %v2832
      %v2843 = vmul.f32 %v2823, %v2834
      %v2844 = vmul.f32 %v2823, %v2836
      %v2845 = vsub.f32 1.0, %v2821
      %v2847 = vperm.slane %v2845, 0
      %v2849 = vmul.f32 %v2847, %v2221
      %v2850 = vmul.f32 %v2847, %v2222
      %v2851 = vmul.f32 %v2847, %v2223
      %v2852 = vmul.f32 %v2847, %v2224
      %v2853 = vadd.f32 %v2841, %v2849
      %v2854 = vadd.f32 %v2842, %v2850
      %v2855 = vadd.f32 %v2843, %v2851
      %v2856 = vadd.f32 %v2844, %v2852
      %v2857 = vmul.f32 %v2823, %v2815
      %v2858 = vmul.f32 %v2823, %v2816
      %v2859 = vmul.f32 %v2823, %v2817
      %v2860 = vmul.f32 %v2823, %v2818
      %v2861 = vmul.f32 %v2847, %v2233
      %v2862 = vmul.f32 %v2847, %v2234
      %v2863 = vmul.f32 %v2847, %v2235
      %v2864 = vmul.f32 %v2847, %v2236
      %v2865 = vadd.f32 %v2857, %v2861
      %v2866 = vadd.f32 %v2858, %v2862
      %v2867 = vadd.f32 %v2859, %v2863
      %v2868 = vadd.f32 %v2860, %v2864
      %v2869 = vpack.c.bf16 %v2854, %v2853
      %v2870 = vpack.c.bf16 %v2856, %v2855
      %v2871 = vpack.c.bf16 %v2866, %v2865
      %v2872 = vpack.c.bf16 %v2868, %v2867
      %2873 = vmatpush.bf16.msra.mxu0 0
      %2874 = vmatpush.bf16.msra.mxu0 0
      %2875 = vmatpush.bf16.msra.mxu0 0
      %2876 = vmatpush.bf16.msra.mxu0 0
      %2877 = vmatpush.bf16.msra.mxu0 %v2872
      %2878 = vmatpush.bf16.msra.mxu0 %v2871
      %2879 = vmatpush.bf16.msra.mxu0 %v2870
      %2880 = vmatpush.bf16.msra.mxu0 %v2869
      %2881 = vmatmul.bf16.gmra.mxu0 %v888
      %v2882 = vpop.f32.mrf.mxu0
      %v2883 = vadd.f32 0.0, %v2882
      %v2884 = vpop.f32.mrf.mxu0
      %v2885 = vadd.f32 0.0, %v2884
      %2886 = vmatmul.bf16.gmra.mxu0 %v891
      %v2887 = vpop.f32.mrf.mxu0
      %v2888 = vadd.f32 0.0, %v2887
      %v2889 = vpop.f32.mrf.mxu0
      %v2890 = vadd.f32 0.0, %v2889
      %2891 = vmatmul.bf16.gmra.mxu0 %v894
      %v2892 = vpop.f32.mrf.mxu0
      %v2893 = vadd.f32 0.0, %v2892
      %v2894 = vpop.f32.mrf.mxu0
      %v2895 = vadd.f32 0.0, %v2894
      %2896 = vmatmul.bf16.gmra.mxu0 %v897
      %v2897 = vpop.f32.mrf.mxu0
      %v2898 = vadd.f32 0.0, %v2897
      %v2899 = vpop.f32.mrf.mxu0
      %v2900 = vadd.f32 0.0, %v2899
      %2901 = vmatmul.bf16.gmra.mxu0 %v900
      %v2902 = vpop.f32.mrf.mxu0
      %v2903 = vadd.f32 0.0, %v2902
      %v2904 = vpop.f32.mrf.mxu0
      %v2905 = vadd.f32 0.0, %v2904
      %2906 = vmatmul.bf16.gmra.mxu0 %v903
      %v2907 = vpop.f32.mrf.mxu0
      %v2908 = vadd.f32 0.0, %v2907
      %v2909 = vpop.f32.mrf.mxu0
      %v2910 = vadd.f32 0.0, %v2909
      %2911 = vmatmul.bf16.gmra.mxu0 %v906
      %v2912 = vpop.f32.mrf.mxu0
      %v2913 = vadd.f32 0.0, %v2912
      %v2914 = vpop.f32.mrf.mxu0
      %v2915 = vadd.f32 0.0, %v2914
      %2916 = vmatmul.bf16.gmra.mxu0 %v909
      %v2917 = vpop.f32.mrf.mxu0
      %v2918 = vadd.f32 0.0, %v2917
      %v2919 = vpop.f32.mrf.mxu0
      %v2920 = vadd.f32 0.0, %v2919
      %2921 = vmatmul.bf16.gmra.mxu0 %v912
      %v2922 = vpop.f32.mrf.mxu0
      %v2923 = vadd.f32 0.0, %v2922
      %v2924 = vpop.f32.mrf.mxu0
      %v2925 = vadd.f32 0.0, %v2924
      %2926 = vmatmul.bf16.gmra.mxu0 %v915
      %v2927 = vpop.f32.mrf.mxu0
      %v2928 = vadd.f32 0.0, %v2927
      %v2929 = vpop.f32.mrf.mxu0
      %v2930 = vadd.f32 0.0, %v2929
      %2931 = vmatmul.bf16.gmra.mxu0 %v918
      %v2932 = vpop.f32.mrf.mxu0
      %v2933 = vadd.f32 0.0, %v2932
      %v2934 = vpop.f32.mrf.mxu0
      %v2935 = vadd.f32 0.0, %v2934
      %2936 = vmatmul.bf16.gmra.mxu0 %v921
      %v2937 = vpop.f32.mrf.mxu0
      %v2938 = vadd.f32 0.0, %v2937
      %v2939 = vpop.f32.mrf.mxu0
      %v2940 = vadd.f32 0.0, %v2939
      %2941 = vdwg.mxu0
      %2950 = vrot.lane.b32.xlu0 %v2883, 96
      %v2951 = vpop.permute.xlu0 %2950
      %2952 = vrot.lane.b32.xlu0 %v2885, 96
      %v2953 = vpop.permute.xlu0 %2952
      %2954 = vrot.lane.b32.xlu0 %v2888, 96
      %v2955 = vpop.permute.xlu0 %2954
      %2956 = vrot.lane.b32.xlu0 %v2890, 96
      %v2957 = vpop.permute.xlu0 %2956
      %2958 = vrot.lane.b32.xlu0 %v2893, 96
      %v2959 = vpop.permute.xlu0 %2958
      %2960 = vrot.lane.b32.xlu0 %v2895, 96
      %v2961 = vpop.permute.xlu0 %2960
      %2962 = vrot.lane.b32.xlu0 %v2898, 96
      %v2963 = vpop.permute.xlu0 %2962
      %2964 = vrot.lane.b32.xlu0 %v2900, 96
      %v2965 = vpop.permute.xlu0 %2964
      %v2974 = vadd.f32 %v719, %v2951
      %v2975 = vadd.f32 %v721, %v2953
      %v2976 = vadd.f32 %v724, %v2955
      %v2977 = vadd.f32 %v726, %v2957
      %v2978 = vadd.f32 %v729, %v2959
      %v2979 = vadd.f32 %v731, %v2961
      %v2980 = vadd.f32 %v734, %v2963
      %v2981 = vadd.f32 %v736, %v2965
      %v2982 = vxor.u32 %v2974, 2147483648
      %v2983 = vxor.u32 %v2975, 2147483648
      %v2984 = vxor.u32 %v2976, 2147483648
      %v2985 = vxor.u32 %v2977, 2147483648
      %v2986 = vxor.u32 %v2978, 2147483648
      %v2987 = vxor.u32 %v2979, 2147483648
      %v2988 = vxor.u32 %v2980, 2147483648
      %v2989 = vxor.u32 %v2981, 2147483648
      %v2990 = vmul.f32 %v2982, 1.442695
      %v2991 = vpow.pop %v2990
      %v2992 = vmul.f32 %v2983, 1.442695
      %v2993 = vpow.pop %v2992
      %v2994 = vmul.f32 %v2984, 1.442695
      %v2995 = vpow.pop %v2994
      %v2996 = vmul.f32 %v2985, 1.442695
      %v2997 = vpow.pop %v2996
      %v2998 = vmul.f32 %v2986, 1.442695
      %v2999 = vpow.pop %v2998
      %v3000 = vmul.f32 %v2987, 1.442695
      %v3001 = vpow.pop %v3000
      %v3002 = vmul.f32 %v2988, 1.442695
      %v3003 = vpow.pop %v3002
      %v3004 = vmul.f32 %v2989, 1.442695
      %v3005 = vpow.pop %v3004
      %v3006 = vadd.f32 %v2991, 1.0
      %v3007 = vadd.f32 %v2993, 1.0
      %v3008 = vadd.f32 %v2995, 1.0
      %v3009 = vadd.f32 %v2997, 1.0
      %v3010 = vadd.f32 %v2999, 1.0
      %v3011 = vadd.f32 %v3001, 1.0
      %v3012 = vadd.f32 %v3003, 1.0
      %v3013 = vadd.f32 %v3005, 1.0
      %v3014 = vrcp.pop %v3006
      %v3015 = vmul.f32 %v3006, %v3014
      %v3016 = vsub.f32 1.0, %v3015
      %v3017 = vmul.f32 %v3014, %v3016
      %v3018 = vadd.f32 %v3014, %v3017
      %vm3019 = vweird.f32 %v3006
      %vm3020 = vweird.f32 %v3014
      %vm3021 = vmor %vm3019, %vm3020
      %v3022 = vsel %vm3021, %v3014, %v3018
      %v3023 = vand.u32 2147483647, %v3006
      %vm3024 = vcmp.eq.f32.partialorder %v3023, 8.507059e+37
      %v3025 = vand.u32 %v3006, 2147483648
      %v3026 = vor.u32 1.1754944e-38, %v3025
      %v3027 = vsel %vm3024, %v3026, %v3022
      %v3028 = vmul.f32 1.0, %v3027
      %v3029 = vrcp.pop %v3007
      %v3030 = vmul.f32 %v3007, %v3029
      %v3031 = vsub.f32 1.0, %v3030
      %v3032 = vmul.f32 %v3029, %v3031
      %v3033 = vadd.f32 %v3029, %v3032
      %vm3034 = vweird.f32 %v3007
      %vm3035 = vweird.f32 %v3029
      %vm3036 = vmor %vm3034, %vm3035
      %v3037 = vsel %vm3036, %v3029, %v3033
      %v3038 = vand.u32 2147483647, %v3007
      %vm3039 = vcmp.eq.f32.partialorder %v3038, 8.507059e+37
      %v3040 = vand.u32 %v3007, 2147483648
      %v3041 = vor.u32 1.1754944e-38, %v3040
      %v3042 = vsel %vm3039, %v3041, %v3037
      %v3043 = vmul.f32 1.0, %v3042
      %v3044 = vrcp.pop %v3008
      %v3045 = vmul.f32 %v3008, %v3044
      %v3046 = vsub.f32 1.0, %v3045
      %v3047 = vmul.f32 %v3044, %v3046
      %v3048 = vadd.f32 %v3044, %v3047
      %vm3049 = vweird.f32 %v3008
      %vm3050 = vweird.f32 %v3044
      %vm3051 = vmor %vm3049, %vm3050
      %v3052 = vsel %vm3051, %v3044, %v3048
      %v3053 = vand.u32 2147483647, %v3008
      %vm3054 = vcmp.eq.f32.partialorder %v3053, 8.507059e+37
      %v3055 = vand.u32 %v3008, 2147483648
      %v3056 = vor.u32 1.1754944e-38, %v3055
      %v3057 = vsel %vm3054, %v3056, %v3052
      %v3058 = vmul.f32 1.0, %v3057
      %v3059 = vrcp.pop %v3009
      %v3060 = vmul.f32 %v3009, %v3059
      %v3061 = vsub.f32 1.0, %v3060
      %v3062 = vmul.f32 %v3059, %v3061
      %v3063 = vadd.f32 %v3059, %v3062
      %vm3064 = vweird.f32 %v3009
      %vm3065 = vweird.f32 %v3059
      %vm3066 = vmor %vm3064, %vm3065
      %v3067 = vsel %vm3066, %v3059, %v3063
      %v3068 = vand.u32 2147483647, %v3009
      %vm3069 = vcmp.eq.f32.partialorder %v3068, 8.507059e+37
      %v3070 = vand.u32 %v3009, 2147483648
      %v3071 = vor.u32 1.1754944e-38, %v3070
      %v3072 = vsel %vm3069, %v3071, %v3067
      %v3073 = vmul.f32 1.0, %v3072
      %v3074 = vrcp.pop %v3010
      %v3075 = vmul.f32 %v3010, %v3074
      %v3076 = vsub.f32 1.0, %v3075
      %v3077 = vmul.f32 %v3074, %v3076
      %v3078 = vadd.f32 %v3074, %v3077
      %vm3079 = vweird.f32 %v3010
      %vm3080 = vweird.f32 %v3074
      %vm3081 = vmor %vm3079, %vm3080
      %v3082 = vsel %vm3081, %v3074, %v3078
      %v3083 = vand.u32 2147483647, %v3010
      %vm3084 = vcmp.eq.f32.partialorder %v3083, 8.507059e+37
      %v3085 = vand.u32 %v3010, 2147483648
      %v3086 = vor.u32 1.1754944e-38, %v3085
      %v3087 = vsel %vm3084, %v3086, %v3082
      %v3088 = vmul.f32 1.0, %v3087
      %v3089 = vrcp.pop %v3011
      %v3090 = vmul.f32 %v3011, %v3089
      %v3091 = vsub.f32 1.0, %v3090
      %v3092 = vmul.f32 %v3089, %v3091
      %v3093 = vadd.f32 %v3089, %v3092
      %vm3094 = vweird.f32 %v3011
      %vm3095 = vweird.f32 %v3089
      %vm3096 = vmor %vm3094, %vm3095
      %v3097 = vsel %vm3096, %v3089, %v3093
      %v3098 = vand.u32 2147483647, %v3011
      %vm3099 = vcmp.eq.f32.partialorder %v3098, 8.507059e+37
      %v3100 = vand.u32 %v3011, 2147483648
      %v3101 = vor.u32 1.1754944e-38, %v3100
      %v3102 = vsel %vm3099, %v3101, %v3097
      %v3103 = vmul.f32 1.0, %v3102
      %v3104 = vrcp.pop %v3012
      %v3105 = vmul.f32 %v3012, %v3104
      %v3106 = vsub.f32 1.0, %v3105
      %v3107 = vmul.f32 %v3104, %v3106
      %v3108 = vadd.f32 %v3104, %v3107
      %vm3109 = vweird.f32 %v3012
      %vm3110 = vweird.f32 %v3104
      %vm3111 = vmor %vm3109, %vm3110
      %v3112 = vsel %vm3111, %v3104, %v3108
      %v3113 = vand.u32 2147483647, %v3012
      %vm3114 = vcmp.eq.f32.partialorder %v3113, 8.507059e+37
      %v3115 = vand.u32 %v3012, 2147483648
      %v3116 = vor.u32 1.1754944e-38, %v3115
      %v3117 = vsel %vm3114, %v3116, %v3112
      %v3118 = vmul.f32 1.0, %v3117
      %v3119 = vrcp.pop %v3013
      %v3120 = vmul.f32 %v3013, %v3119
      %v3121 = vsub.f32 1.0, %v3120
      %v3122 = vmul.f32 %v3119, %v3121
      %v3123 = vadd.f32 %v3119, %v3122
      %vm3124 = vweird.f32 %v3013
      %vm3125 = vweird.f32 %v3119
      %vm3126 = vmor %vm3124, %vm3125
      %v3127 = vsel %vm3126, %v3119, %v3123
      %v3128 = vand.u32 2147483647, %v3013
      %vm3129 = vcmp.eq.f32.partialorder %v3128, 8.507059e+37
      %v3130 = vand.u32 %v3013, 2147483648
      %v3131 = vor.u32 1.1754944e-38, %v3130
      %v3132 = vsel %vm3129, %v3131, %v3127
      %v3133 = vmul.f32 1.0, %v3132
      %v3134 = vadd.f32 %v2903, %v1155
      %v3135 = vadd.f32 %v2905, %v1160
      %v3136 = vadd.f32 %v2908, %v1165
      %v3137 = vadd.f32 %v2910, %v1170
      %3142 = vrot.lane.b32.xlu0 %v3134, 96
      %v3143 = vpop.permute.xlu0 %3142
      %3144 = vrot.lane.b32.xlu0 %v3135, 96
      %v3145 = vpop.permute.xlu0 %3144
      %3146 = vrot.lane.b32.xlu0 %v3136, 96
      %v3147 = vpop.permute.xlu0 %3146
      %3148 = vrot.lane.b32.xlu0 %v3137, 96
      %v3149 = vpop.permute.xlu0 %3148
      %v3154 = vmul.f32 %v3028, %v3143
      %v3155 = vmul.f32 %v3043, %v3145
      %v3156 = vmul.f32 %v3058, %v3147
      %v3157 = vmul.f32 %v3073, %v3149
      %v3158 = vadd.f32 %v739, %v3154
      %v3159 = vadd.f32 %v741, %v3155
      %v3160 = vadd.f32 %v744, %v3156
      %v3161 = vadd.f32 %v746, %v3157
      %v3162 = vtanh.pop %v3158
      %v3163 = vtanh.pop %v3159
      %v3164 = vtanh.pop %v3160
      %v3165 = vtanh.pop %v3161
      %v3166 = vsub.f32 1.0, %v3088
      %v3167 = vsub.f32 1.0, %v3103
      %v3168 = vsub.f32 1.0, %v3118
      %v3169 = vsub.f32 1.0, %v3133
      %v3170 = vmul.f32 %v3166, %v3162
      %v3171 = vmul.f32 %v3167, %v3163
      %v3172 = vmul.f32 %v3168, %v3164
      %v3173 = vmul.f32 %v3169, %v3165
      %3178 = vrot.lane.b32.xlu0 %v2853, 96
      %v3179 = vpop.permute.xlu0 %3178
      %3180 = vrot.lane.b32.xlu0 %v2854, 96
      %v3181 = vpop.permute.xlu0 %3180
      %3182 = vrot.lane.b32.xlu0 %v2855, 96
      %v3183 = vpop.permute.xlu0 %3182
      %3184 = vrot.lane.b32.xlu0 %v2856, 96
      %v3185 = vpop.permute.xlu0 %3184
      %v3190 = vmul.f32 %v3088, %v3179
      %v3191 = vmul.f32 %v3103, %v3181
      %v3192 = vmul.f32 %v3118, %v3183
      %v3193 = vmul.f32 %v3133, %v3185
      %v3194 = vadd.f32 %v3170, %v3190
      %v3195 = vadd.f32 %v3171, %v3191
      %v3196 = vadd.f32 %v3172, %v3192
      %v3197 = vadd.f32 %v3173, %v3193
      %v3198 = vpack.c.bf16 %v3195, %v3194
      %v3199 = vpack.c.bf16 %v3197, %v3196
      %3202 = vrot.lane.b32.xlu0 %v3198, 32
      %v3203 = vpop.permute.xlu0 %3202
      %3204 = vrot.lane.b32.xlu0 %v3199, 32
      %v3205 = vpop.permute.xlu0 %3204
      %3208 = vmatpush.bf16.msra.mxu0 0
      %3209 = vmatpush.bf16.msra.mxu0 0
      %3210 = vmatpush.bf16.msra.mxu0 0
      %3211 = vmatpush.bf16.msra.mxu0 0
      %3212 = vmatpush.bf16.msra.mxu0 0
      %3213 = vmatpush.bf16.msra.mxu0 0
      %3214 = vmatpush.bf16.msra.mxu0 %v3205
      %3215 = vmatpush.bf16.msra.mxu0 %v3203
      %3216 = vmatmul.bf16.gmra.mxu0 %v1238
      %v3217 = vpop.f32.mrf.mxu0
      %v3218 = vadd.f32 0.0, %v3217
      %v3219 = vpop.f32.mrf.mxu0
      %v3220 = vadd.f32 0.0, %v3219
      %3221 = vmatmul.bf16.gmra.mxu0 %v1241
      %v3222 = vpop.f32.mrf.mxu0
      %v3223 = vadd.f32 0.0, %v3222
      %v3224 = vpop.f32.mrf.mxu0
      %v3225 = vadd.f32 0.0, %v3224
      %3226 = vmatmul.bf16.gmra.mxu0 %v1244
      %v3227 = vpop.f32.mrf.mxu0
      %v3228 = vadd.f32 0.0, %v3227
      %v3229 = vpop.f32.mrf.mxu0
      %v3230 = vadd.f32 0.0, %v3229
      %3231 = vmatmul.bf16.gmra.mxu0 %v1247
      %v3232 = vpop.f32.mrf.mxu0
      %v3233 = vadd.f32 0.0, %v3232
      %v3234 = vpop.f32.mrf.mxu0
      %v3235 = vadd.f32 0.0, %v3234
      %3236 = vmatmul.bf16.gmra.mxu0 %v1250
      %v3237 = vpop.f32.mrf.mxu0
      %v3238 = vadd.f32 0.0, %v3237
      %v3239 = vpop.f32.mrf.mxu0
      %v3240 = vadd.f32 0.0, %v3239
      %3241 = vmatmul.bf16.gmra.mxu0 %v1253
      %v3242 = vpop.f32.mrf.mxu0
      %v3243 = vadd.f32 0.0, %v3242
      %v3244 = vpop.f32.mrf.mxu0
      %v3245 = vadd.f32 0.0, %v3244
      %3246 = vdwg.mxu0
      %v3247 = vadd.f32 %v3218, %v2913
      %v3248 = vadd.f32 %v3220, %v2915
      %v3249 = vadd.f32 %v3223, %v2918
      %v3250 = vadd.f32 %v3225, %v2920
      %v3251 = vadd.f32 %v3228, %v2923
      %v3252 = vadd.f32 %v3230, %v2925
      %v3253 = vadd.f32 %v3233, %v2928
      %v3254 = vadd.f32 %v3235, %v2930
      %v3255 = vadd.f32 %v3247, %v1305
      %v3256 = vadd.f32 %v3248, %v1310
      %v3257 = vadd.f32 %v3249, %v1315
      %v3258 = vadd.f32 %v3250, %v1320
      %v3259 = vadd.f32 %v3251, %v1325
      %v3260 = vadd.f32 %v3252, %v1330
      %v3261 = vadd.f32 %v3253, %v1335
      %v3262 = vadd.f32 %v3254, %v1340
      %v3263 = vxor.u32 %v3255, 2147483648
      %v3264 = vxor.u32 %v3256, 2147483648
      %v3265 = vxor.u32 %v3257, 2147483648
      %v3266 = vxor.u32 %v3258, 2147483648
      %v3267 = vxor.u32 %v3259, 2147483648
      %v3268 = vxor.u32 %v3260, 2147483648
      %v3269 = vxor.u32 %v3261, 2147483648
      %v3270 = vxor.u32 %v3262, 2147483648
      %v3271 = vmul.f32 %v3263, 1.442695
      %v3272 = vpow.pop %v3271
      %v3273 = vmul.f32 %v3264, 1.442695
      %v3274 = vpow.pop %v3273
      %v3275 = vmul.f32 %v3265, 1.442695
      %v3276 = vpow.pop %v3275
      %v3277 = vmul.f32 %v3266, 1.442695
      %v3278 = vpow.pop %v3277
      %v3279 = vmul.f32 %v3267, 1.442695
      %v3280 = vpow.pop %v3279
      %v3281 = vmul.f32 %v3268, 1.442695
      %v3282 = vpow.pop %v3281
      %v3283 = vmul.f32 %v3269, 1.442695
      %v3284 = vpow.pop %v3283
      %v3285 = vmul.f32 %v3270, 1.442695
      %v3286 = vpow.pop %v3285
      %v3287 = vadd.f32 %v3272, 1.0
      %v3288 = vadd.f32 %v3274, 1.0
      %v3289 = vadd.f32 %v3276, 1.0
      %v3290 = vadd.f32 %v3278, 1.0
      %v3291 = vadd.f32 %v3280, 1.0
      %v3292 = vadd.f32 %v3282, 1.0
      %v3293 = vadd.f32 %v3284, 1.0
      %v3294 = vadd.f32 %v3286, 1.0
      %v3295 = vrcp.pop %v3287
      %v3296 = vmul.f32 %v3287, %v3295
      %v3297 = vsub.f32 1.0, %v3296
      %v3298 = vmul.f32 %v3295, %v3297
      %v3299 = vadd.f32 %v3295, %v3298
      %vm3300 = vweird.f32 %v3287
      %vm3301 = vweird.f32 %v3295
      %vm3302 = vmor %vm3300, %vm3301
      %v3303 = vsel %vm3302, %v3295, %v3299
      %v3304 = vand.u32 2147483647, %v3287
      %vm3305 = vcmp.eq.f32.partialorder %v3304, 8.507059e+37
      %v3306 = vand.u32 %v3287, 2147483648
      %v3307 = vor.u32 1.1754944e-38, %v3306
      %v3308 = vsel %vm3305, %v3307, %v3303
      %v3309 = vmul.f32 1.0, %v3308
      %v3310 = vrcp.pop %v3288
      %v3311 = vmul.f32 %v3288, %v3310
      %v3312 = vsub.f32 1.0, %v3311
      %v3313 = vmul.f32 %v3310, %v3312
      %v3314 = vadd.f32 %v3310, %v3313
      %vm3315 = vweird.f32 %v3288
      %vm3316 = vweird.f32 %v3310
      %vm3317 = vmor %vm3315, %vm3316
      %v3318 = vsel %vm3317, %v3310, %v3314
      %v3319 = vand.u32 2147483647, %v3288
      %vm3320 = vcmp.eq.f32.partialorder %v3319, 8.507059e+37
      %v3321 = vand.u32 %v3288, 2147483648
      %v3322 = vor.u32 1.1754944e-38, %v3321
      %v3323 = vsel %vm3320, %v3322, %v3318
      %v3324 = vmul.f32 1.0, %v3323
      %v3325 = vrcp.pop %v3289
      %v3326 = vmul.f32 %v3289, %v3325
      %v3327 = vsub.f32 1.0, %v3326
      %v3328 = vmul.f32 %v3325, %v3327
      %v3329 = vadd.f32 %v3325, %v3328
      %vm3330 = vweird.f32 %v3289
      %vm3331 = vweird.f32 %v3325
      %vm3332 = vmor %vm3330, %vm3331
      %v3333 = vsel %vm3332, %v3325, %v3329
      %v3334 = vand.u32 2147483647, %v3289
      %vm3335 = vcmp.eq.f32.partialorder %v3334, 8.507059e+37
      %v3336 = vand.u32 %v3289, 2147483648
      %v3337 = vor.u32 1.1754944e-38, %v3336
      %v3338 = vsel %vm3335, %v3337, %v3333
      %v3339 = vmul.f32 1.0, %v3338
      %v3340 = vrcp.pop %v3290
      %v3341 = vmul.f32 %v3290, %v3340
      %v3342 = vsub.f32 1.0, %v3341
      %v3343 = vmul.f32 %v3340, %v3342
      %v3344 = vadd.f32 %v3340, %v3343
      %vm3345 = vweird.f32 %v3290
      %vm3346 = vweird.f32 %v3340
      %vm3347 = vmor %vm3345, %vm3346
      %v3348 = vsel %vm3347, %v3340, %v3344
      %v3349 = vand.u32 2147483647, %v3290
      %vm3350 = vcmp.eq.f32.partialorder %v3349, 8.507059e+37
      %v3351 = vand.u32 %v3290, 2147483648
      %v3352 = vor.u32 1.1754944e-38, %v3351
      %v3353 = vsel %vm3350, %v3352, %v3348
      %v3354 = vmul.f32 1.0, %v3353
      %v3355 = vrcp.pop %v3291
      %v3356 = vmul.f32 %v3291, %v3355
      %v3357 = vsub.f32 1.0, %v3356
      %v3358 = vmul.f32 %v3355, %v3357
      %v3359 = vadd.f32 %v3355, %v3358
      %vm3360 = vweird.f32 %v3291
      %vm3361 = vweird.f32 %v3355
      %vm3362 = vmor %vm3360, %vm3361
      %v3363 = vsel %vm3362, %v3355, %v3359
      %v3364 = vand.u32 2147483647, %v3291
      %vm3365 = vcmp.eq.f32.partialorder %v3364, 8.507059e+37
      %v3366 = vand.u32 %v3291, 2147483648
      %v3367 = vor.u32 1.1754944e-38, %v3366
      %v3368 = vsel %vm3365, %v3367, %v3363
      %v3369 = vmul.f32 1.0, %v3368
      %v3370 = vrcp.pop %v3292
      %v3371 = vmul.f32 %v3292, %v3370
      %v3372 = vsub.f32 1.0, %v3371
      %v3373 = vmul.f32 %v3370, %v3372
      %v3374 = vadd.f32 %v3370, %v3373
      %vm3375 = vweird.f32 %v3292
      %vm3376 = vweird.f32 %v3370
      %vm3377 = vmor %vm3375, %vm3376
      %v3378 = vsel %vm3377, %v3370, %v3374
      %v3379 = vand.u32 2147483647, %v3292
      %vm3380 = vcmp.eq.f32.partialorder %v3379, 8.507059e+37
      %v3381 = vand.u32 %v3292, 2147483648
      %v3382 = vor.u32 1.1754944e-38, %v3381
      %v3383 = vsel %vm3380, %v3382, %v3378
      %v3384 = vmul.f32 1.0, %v3383
      %v3385 = vrcp.pop %v3293
      %v3386 = vmul.f32 %v3293, %v3385
      %v3387 = vsub.f32 1.0, %v3386
      %v3388 = vmul.f32 %v3385, %v3387
      %v3389 = vadd.f32 %v3385, %v3388
      %vm3390 = vweird.f32 %v3293
      %vm3391 = vweird.f32 %v3385
      %vm3392 = vmor %vm3390, %vm3391
      %v3393 = vsel %vm3392, %v3385, %v3389
      %v3394 = vand.u32 2147483647, %v3293
      %vm3395 = vcmp.eq.f32.partialorder %v3394, 8.507059e+37
      %v3396 = vand.u32 %v3293, 2147483648
      %v3397 = vor.u32 1.1754944e-38, %v3396
      %v3398 = vsel %vm3395, %v3397, %v3393
      %v3399 = vmul.f32 1.0, %v3398
      %v3400 = vrcp.pop %v3294
      %v3401 = vmul.f32 %v3294, %v3400
      %v3402 = vsub.f32 1.0, %v3401
      %v3403 = vmul.f32 %v3400, %v3402
      %v3404 = vadd.f32 %v3400, %v3403
      %vm3405 = vweird.f32 %v3294
      %vm3406 = vweird.f32 %v3400
      %vm3407 = vmor %vm3405, %vm3406
      %v3408 = vsel %vm3407, %v3400, %v3404
      %v3409 = vand.u32 2147483647, %v3294
      %vm3410 = vcmp.eq.f32.partialorder %v3409, 8.507059e+37
      %v3411 = vand.u32 %v3294, 2147483648
      %v3412 = vor.u32 1.1754944e-38, %v3411
      %v3413 = vsel %vm3410, %v3412, %v3408
      %v3414 = vmul.f32 1.0, %v3413
      %v3415 = vadd.f32 %v3238, %v1505
      %v3416 = vadd.f32 %v3240, %v1510
      %v3417 = vadd.f32 %v3243, %v1515
      %v3418 = vadd.f32 %v3245, %v1520
      %v3419 = vadd.f32 %v2933, %v1529
      %v3420 = vadd.f32 %v2935, %v1534
      %v3421 = vadd.f32 %v2938, %v1539
      %v3422 = vadd.f32 %v2940, %v1544
      %v3423 = vmul.f32 %v3309, %v3419
      %v3424 = vmul.f32 %v3324, %v3420
      %v3425 = vmul.f32 %v3339, %v3421
      %v3426 = vmul.f32 %v3354, %v3422
      %v3427 = vadd.f32 %v3415, %v3423
      %v3428 = vadd.f32 %v3416, %v3424
      %v3429 = vadd.f32 %v3417, %v3425
      %v3430 = vadd.f32 %v3418, %v3426
      %v3431 = vtanh.pop %v3427
      %v3432 = vtanh.pop %v3428
      %v3433 = vtanh.pop %v3429
      %v3434 = vtanh.pop %v3430
      %v3435 = vsub.f32 1.0, %v3369
      %v3436 = vsub.f32 1.0, %v3384
      %v3437 = vsub.f32 1.0, %v3399
      %v3438 = vsub.f32 1.0, %v3414
      %v3439 = vmul.f32 %v3435, %v3431
      %v3440 = vmul.f32 %v3436, %v3432
      %v3441 = vmul.f32 %v3437, %v3433
      %v3442 = vmul.f32 %v3438, %v3434
      %v3443 = vmul.f32 %v3369, %v2865
      %v3444 = vmul.f32 %v3384, %v2866
      %v3445 = vmul.f32 %v3399, %v2867
      %v3446 = vmul.f32 %v3414, %v2868
      %v3447 = vadd.f32 %v3439, %v3443
      %v3448 = vadd.f32 %v3440, %v3444
      %v3449 = vadd.f32 %v3441, %v3445
      %v3450 = vadd.f32 %v3442, %v3446
      %vm3451 = vcmp.gt.s32.totalorder %v423, 3
      %v3452 = vsel %vm3451, 1, 0
      %v3453 = vcvt.s32.f32 %v3452
      %v3455 = vperm.slane %v3453, 0
      %3461 = vrot.lane.b32.xlu0 %v3194, 32
      %v3462 = vpop.permute.xlu0 %3461
      %3463 = vrot.lane.b32.xlu0 %v3195, 32
      %v3464 = vpop.permute.xlu0 %3463
      %3465 = vrot.lane.b32.xlu0 %v3196, 32
      %v3466 = vpop.permute.xlu0 %3465
      %3467 = vrot.lane.b32.xlu0 %v3197, 32
      %v3468 = vpop.permute.xlu0 %3467
      %v3473 = vmul.f32 %v3455, %v3462
      %v3474 = vmul.f32 %v3455, %v3464
      %v3475 = vmul.f32 %v3455, %v3466
      %v3476 = vmul.f32 %v3455, %v3468
      %v3477 = vsub.f32 1.0, %v3453
      %v3479 = vperm.slane %v3477, 0
      %v3481 = vmul.f32 %v3479, %v2853
      %v3482 = vmul.f32 %v3479, %v2854
      %v3483 = vmul.f32 %v3479, %v2855
      %v3484 = vmul.f32 %v3479, %v2856
      %v3485 = vadd.f32 %v3473, %v3481
      %v3486 = vadd.f32 %v3474, %v3482
      %v3487 = vadd.f32 %v3475, %v3483
      %v3488 = vadd.f32 %v3476, %v3484
      %v3489 = vmul.f32 %v3455, %v3447
      %v3490 = vmul.f32 %v3455, %v3448
      %v3491 = vmul.f32 %v3455, %v3449
      %v3492 = vmul.f32 %v3455, %v3450
      %v3493 = vmul.f32 %v3479, %v2865
      %v3494 = vmul.f32 %v3479, %v2866
      %v3495 = vmul.f32 %v3479, %v2867
      %v3496 = vmul.f32 %v3479, %v2868
      %v3497 = vadd.f32 %v3489, %v3493
      %v3498 = vadd.f32 %v3490, %v3494
      %v3499 = vadd.f32 %v3491, %v3495
      %v3500 = vadd.f32 %v3492, %v3496
      %v3501 = vpack.c.bf16 %v3486, %v3485
      %v3502 = vpack.c.bf16 %v3488, %v3487
      %v3503 = vpack.c.bf16 %v3498, %v3497
      %v3504 = vpack.c.bf16 %v3500, %v3499
      %3505 = vmatpush.bf16.msra.mxu0 0
      %3506 = vmatpush.bf16.msra.mxu0 0
      %3507 = vmatpush.bf16.msra.mxu0 0
      %3508 = vmatpush.bf16.msra.mxu0 0
      %3509 = vmatpush.bf16.msra.mxu0 %v3504
      %3510 = vmatpush.bf16.msra.mxu0 %v3503
      %3511 = vmatpush.bf16.msra.mxu0 %v3502
      %3512 = vmatpush.bf16.msra.mxu0 %v3501
      %3513 = vmatmul.bf16.gmra.mxu0 %v888
      %v3514 = vpop.f32.mrf.mxu0
      %v3515 = vadd.f32 0.0, %v3514
      %v3516 = vpop.f32.mrf.mxu0
      %v3517 = vadd.f32 0.0, %v3516
      %3518 = vmatmul.bf16.gmra.mxu0 %v891
      %v3519 = vpop.f32.mrf.mxu0
      %v3520 = vadd.f32 0.0, %v3519
      %v3521 = vpop.f32.mrf.mxu0
      %v3522 = vadd.f32 0.0, %v3521
      %3523 = vmatmul.bf16.gmra.mxu0 %v894
      %v3524 = vpop.f32.mrf.mxu0
      %v3525 = vadd.f32 0.0, %v3524
      %v3526 = vpop.f32.mrf.mxu0
      %v3527 = vadd.f32 0.0, %v3526
      %3528 = vmatmul.bf16.gmra.mxu0 %v897
      %v3529 = vpop.f32.mrf.mxu0
      %v3530 = vadd.f32 0.0, %v3529
      %v3531 = vpop.f32.mrf.mxu0
      %v3532 = vadd.f32 0.0, %v3531
      %3533 = vmatmul.bf16.gmra.mxu0 %v900
      %v3534 = vpop.f32.mrf.mxu0
      %v3535 = vadd.f32 0.0, %v3534
      %v3536 = vpop.f32.mrf.mxu0
      %v3537 = vadd.f32 0.0, %v3536
      %3538 = vmatmul.bf16.gmra.mxu0 %v903
      %v3539 = vpop.f32.mrf.mxu0
      %v3540 = vadd.f32 0.0, %v3539
      %v3541 = vpop.f32.mrf.mxu0
      %v3542 = vadd.f32 0.0, %v3541
      %3543 = vmatmul.bf16.gmra.mxu0 %v906
      %v3544 = vpop.f32.mrf.mxu0
      %v3545 = vadd.f32 0.0, %v3544
      %v3546 = vpop.f32.mrf.mxu0
      %v3547 = vadd.f32 0.0, %v3546
      %3548 = vmatmul.bf16.gmra.mxu0 %v909
      %v3549 = vpop.f32.mrf.mxu0
      %v3550 = vadd.f32 0.0, %v3549
      %v3551 = vpop.f32.mrf.mxu0
      %v3552 = vadd.f32 0.0, %v3551
      %3553 = vmatmul.bf16.gmra.mxu0 %v912
      %v3554 = vpop.f32.mrf.mxu0
      %v3555 = vadd.f32 0.0, %v3554
      %v3556 = vpop.f32.mrf.mxu0
      %v3557 = vadd.f32 0.0, %v3556
      %3558 = vmatmul.bf16.gmra.mxu0 %v915
      %v3559 = vpop.f32.mrf.mxu0
      %v3560 = vadd.f32 0.0, %v3559
      %v3561 = vpop.f32.mrf.mxu0
      %v3562 = vadd.f32 0.0, %v3561
      %3563 = vmatmul.bf16.gmra.mxu0 %v918
      %v3564 = vpop.f32.mrf.mxu0
      %v3565 = vadd.f32 0.0, %v3564
      %v3566 = vpop.f32.mrf.mxu0
      %v3567 = vadd.f32 0.0, %v3566
      %3568 = vmatmul.bf16.gmra.mxu0 %v921
      %v3569 = vpop.f32.mrf.mxu0
      %v3570 = vadd.f32 0.0, %v3569
      %v3571 = vpop.f32.mrf.mxu0
      %v3572 = vadd.f32 0.0, %v3571
      %3573 = vdwg.mxu0
      %v3574 = vadd.f32 %v758, %v3515
      %v3575 = vadd.f32 %v760, %v3517
      %v3576 = vadd.f32 %v763, %v3520
      %v3577 = vadd.f32 %v765, %v3522
      %v3578 = vadd.f32 %v768, %v3525
      %v3579 = vadd.f32 %v770, %v3527
      %v3580 = vadd.f32 %v773, %v3530
      %v3581 = vadd.f32 %v775, %v3532
      %v3582 = vxor.u32 %v3574, 2147483648
      %v3583 = vxor.u32 %v3575, 2147483648
      %v3584 = vxor.u32 %v3576, 2147483648
      %v3585 = vxor.u32 %v3577, 2147483648
      %v3586 = vxor.u32 %v3578, 2147483648
      %v3587 = vxor.u32 %v3579, 2147483648
      %v3588 = vxor.u32 %v3580, 2147483648
      %v3589 = vxor.u32 %v3581, 2147483648
      %v3590 = vmul.f32 %v3582, 1.442695
      %v3591 = vpow.pop %v3590
      %v3592 = vmul.f32 %v3583, 1.442695
      %v3593 = vpow.pop %v3592
      %v3594 = vmul.f32 %v3584, 1.442695
      %v3595 = vpow.pop %v3594
      %v3596 = vmul.f32 %v3585, 1.442695
      %v3597 = vpow.pop %v3596
      %v3598 = vmul.f32 %v3586, 1.442695
      %v3599 = vpow.pop %v3598
      %v3600 = vmul.f32 %v3587, 1.442695
      %v3601 = vpow.pop %v3600
      %v3602 = vmul.f32 %v3588, 1.442695
      %v3603 = vpow.pop %v3602
      %v3604 = vmul.f32 %v3589, 1.442695
      %v3605 = vpow.pop %v3604
      %v3606 = vadd.f32 %v3591, 1.0
      %v3607 = vadd.f32 %v3593, 1.0
      %v3608 = vadd.f32 %v3595, 1.0
      %v3609 = vadd.f32 %v3597, 1.0
      %v3610 = vadd.f32 %v3599, 1.0
      %v3611 = vadd.f32 %v3601, 1.0
      %v3612 = vadd.f32 %v3603, 1.0
      %v3613 = vadd.f32 %v3605, 1.0
      %v3614 = vrcp.pop %v3606
      %v3615 = vmul.f32 %v3606, %v3614
      %v3616 = vsub.f32 1.0, %v3615
      %v3617 = vmul.f32 %v3614, %v3616
      %v3618 = vadd.f32 %v3614, %v3617
      %vm3619 = vweird.f32 %v3606
      %vm3620 = vweird.f32 %v3614
      %vm3621 = vmor %vm3619, %vm3620
      %v3622 = vsel %vm3621, %v3614, %v3618
      %v3623 = vand.u32 2147483647, %v3606
      %vm3624 = vcmp.eq.f32.partialorder %v3623, 8.507059e+37
      %v3625 = vand.u32 %v3606, 2147483648
      %v3626 = vor.u32 1.1754944e-38, %v3625
      %v3627 = vsel %vm3624, %v3626, %v3622
      %v3628 = vmul.f32 1.0, %v3627
      %v3629 = vrcp.pop %v3607
      %v3630 = vmul.f32 %v3607, %v3629
      %v3631 = vsub.f32 1.0, %v3630
      %v3632 = vmul.f32 %v3629, %v3631
      %v3633 = vadd.f32 %v3629, %v3632
      %vm3634 = vweird.f32 %v3607
      %vm3635 = vweird.f32 %v3629
      %vm3636 = vmor %vm3634, %vm3635
      %v3637 = vsel %vm3636, %v3629, %v3633
      %v3638 = vand.u32 2147483647, %v3607
      %vm3639 = vcmp.eq.f32.partialorder %v3638, 8.507059e+37
      %v3640 = vand.u32 %v3607, 2147483648
      %v3641 = vor.u32 1.1754944e-38, %v3640
      %v3642 = vsel %vm3639, %v3641, %v3637
      %v3643 = vmul.f32 1.0, %v3642
      %v3644 = vrcp.pop %v3608
      %v3645 = vmul.f32 %v3608, %v3644
      %v3646 = vsub.f32 1.0, %v3645
      %v3647 = vmul.f32 %v3644, %v3646
      %v3648 = vadd.f32 %v3644, %v3647
      %vm3649 = vweird.f32 %v3608
      %vm3650 = vweird.f32 %v3644
      %vm3651 = vmor %vm3649, %vm3650
      %v3652 = vsel %vm3651, %v3644, %v3648
      %v3653 = vand.u32 2147483647, %v3608
      %vm3654 = vcmp.eq.f32.partialorder %v3653, 8.507059e+37
      %v3655 = vand.u32 %v3608, 2147483648
      %v3656 = vor.u32 1.1754944e-38, %v3655
      %v3657 = vsel %vm3654, %v3656, %v3652
      %v3658 = vmul.f32 1.0, %v3657
      %v3659 = vrcp.pop %v3609
      %v3660 = vmul.f32 %v3609, %v3659
      %v3661 = vsub.f32 1.0, %v3660
      %v3662 = vmul.f32 %v3659, %v3661
      %v3663 = vadd.f32 %v3659, %v3662
      %vm3664 = vweird.f32 %v3609
      %vm3665 = vweird.f32 %v3659
      %vm3666 = vmor %vm3664, %vm3665
      %v3667 = vsel %vm3666, %v3659, %v3663
      %v3668 = vand.u32 2147483647, %v3609
      %vm3669 = vcmp.eq.f32.partialorder %v3668, 8.507059e+37
      %v3670 = vand.u32 %v3609, 2147483648
      %v3671 = vor.u32 1.1754944e-38, %v3670
      %v3672 = vsel %vm3669, %v3671, %v3667
      %v3673 = vmul.f32 1.0, %v3672
      %v3674 = vrcp.pop %v3610
      %v3675 = vmul.f32 %v3610, %v3674
      %v3676 = vsub.f32 1.0, %v3675
      %v3677 = vmul.f32 %v3674, %v3676
      %v3678 = vadd.f32 %v3674, %v3677
      %vm3679 = vweird.f32 %v3610
      %vm3680 = vweird.f32 %v3674
      %vm3681 = vmor %vm3679, %vm3680
      %v3682 = vsel %vm3681, %v3674, %v3678
      %v3683 = vand.u32 2147483647, %v3610
      %vm3684 = vcmp.eq.f32.partialorder %v3683, 8.507059e+37
      %v3685 = vand.u32 %v3610, 2147483648
      %v3686 = vor.u32 1.1754944e-38, %v3685
      %v3687 = vsel %vm3684, %v3686, %v3682
      %v3688 = vmul.f32 1.0, %v3687
      %v3689 = vrcp.pop %v3611
      %v3690 = vmul.f32 %v3611, %v3689
      %v3691 = vsub.f32 1.0, %v3690
      %v3692 = vmul.f32 %v3689, %v3691
      %v3693 = vadd.f32 %v3689, %v3692
      %vm3694 = vweird.f32 %v3611
      %vm3695 = vweird.f32 %v3689
      %vm3696 = vmor %vm3694, %vm3695
      %v3697 = vsel %vm3696, %v3689, %v3693
      %v3698 = vand.u32 2147483647, %v3611
      %vm3699 = vcmp.eq.f32.partialorder %v3698, 8.507059e+37
      %v3700 = vand.u32 %v3611, 2147483648
      %v3701 = vor.u32 1.1754944e-38, %v3700
      %v3702 = vsel %vm3699, %v3701, %v3697
      %v3703 = vmul.f32 1.0, %v3702
      %v3704 = vrcp.pop %v3612
      %v3705 = vmul.f32 %v3612, %v3704
      %v3706 = vsub.f32 1.0, %v3705
      %v3707 = vmul.f32 %v3704, %v3706
      %v3708 = vadd.f32 %v3704, %v3707
      %vm3709 = vweird.f32 %v3612
      %vm3710 = vweird.f32 %v3704
      %vm3711 = vmor %vm3709, %vm3710
      %v3712 = vsel %vm3711, %v3704, %v3708
      %v3713 = vand.u32 2147483647, %v3612
      %vm3714 = vcmp.eq.f32.partialorder %v3713, 8.507059e+37
      %v3715 = vand.u32 %v3612, 2147483648
      %v3716 = vor.u32 1.1754944e-38, %v3715
      %v3717 = vsel %vm3714, %v3716, %v3712
      %v3718 = vmul.f32 1.0, %v3717
      %v3719 = vrcp.pop %v3613
      %v3720 = vmul.f32 %v3613, %v3719
      %v3721 = vsub.f32 1.0, %v3720
      %v3722 = vmul.f32 %v3719, %v3721
      %v3723 = vadd.f32 %v3719, %v3722
      %vm3724 = vweird.f32 %v3613
      %vm3725 = vweird.f32 %v3719
      %vm3726 = vmor %vm3724, %vm3725
      %v3727 = vsel %vm3726, %v3719, %v3723
      %v3728 = vand.u32 2147483647, %v3613
      %vm3729 = vcmp.eq.f32.partialorder %v3728, 8.507059e+37
      %v3730 = vand.u32 %v3613, 2147483648
      %v3731 = vor.u32 1.1754944e-38, %v3730
      %v3732 = vsel %vm3729, %v3731, %v3727
      %v3733 = vmul.f32 1.0, %v3732
      %v3734 = vadd.f32 %v3535, %v1155
      %v3735 = vadd.f32 %v3537, %v1160
      %v3736 = vadd.f32 %v3540, %v1165
      %v3737 = vadd.f32 %v3542, %v1170
      %v3738 = vmul.f32 %v3628, %v3734
      %v3739 = vmul.f32 %v3643, %v3735
      %v3740 = vmul.f32 %v3658, %v3736
      %v3741 = vmul.f32 %v3673, %v3737
      %v3742 = vadd.f32 %v778, %v3738
      %v3743 = vadd.f32 %v780, %v3739
      %v3744 = vadd.f32 %v783, %v3740
      %v3745 = vadd.f32 %v785, %v3741
      %v3746 = vtanh.pop %v3742
      %v3747 = vtanh.pop %v3743
      %v3748 = vtanh.pop %v3744
      %v3749 = vtanh.pop %v3745
      %v3750 = vsub.f32 1.0, %v3688
      %v3751 = vsub.f32 1.0, %v3703
      %v3752 = vsub.f32 1.0, %v3718
      %v3753 = vsub.f32 1.0, %v3733
      %v3754 = vmul.f32 %v3750, %v3746
      %v3755 = vmul.f32 %v3751, %v3747
      %v3756 = vmul.f32 %v3752, %v3748
      %v3757 = vmul.f32 %v3753, %v3749
      %v3758 = vmul.f32 %v3688, %v3485
      %v3759 = vmul.f32 %v3703, %v3486
      %v3760 = vmul.f32 %v3718, %v3487
      %v3761 = vmul.f32 %v3733, %v3488
      %v3762 = vadd.f32 %v3754, %v3758
      %v3763 = vadd.f32 %v3755, %v3759
      %v3764 = vadd.f32 %v3756, %v3760
      %v3765 = vadd.f32 %v3757, %v3761
      %v3766 = vpack.c.bf16 %v3763, %v3762
      %v3767 = vpack.c.bf16 %v3765, %v3764
      %3768 = vmatpush.bf16.msra.mxu0 0
      %3769 = vmatpush.bf16.msra.mxu0 0
      %3770 = vmatpush.bf16.msra.mxu0 0
      %3771 = vmatpush.bf16.msra.mxu0 0
      %3772 = vmatpush.bf16.msra.mxu0 0
      %3773 = vmatpush.bf16.msra.mxu0 0
      %3774 = vmatpush.bf16.msra.mxu0 %v3767
      %3775 = vmatpush.bf16.msra.mxu0 %v3766
      %3776 = vmatmul.bf16.gmra.mxu0 %v1238
      %v3777 = vpop.f32.mrf.mxu0
      %v3778 = vadd.f32 0.0, %v3777
      %v3779 = vpop.f32.mrf.mxu0
      %v3780 = vadd.f32 0.0, %v3779
      %3781 = vmatmul.bf16.gmra.mxu0 %v1241
      %v3782 = vpop.f32.mrf.mxu0
      %v3783 = vadd.f32 0.0, %v3782
      %v3784 = vpop.f32.mrf.mxu0
      %v3785 = vadd.f32 0.0, %v3784
      %3786 = vmatmul.bf16.gmra.mxu0 %v1244
      %v3787 = vpop.f32.mrf.mxu0
      %v3788 = vadd.f32 0.0, %v3787
      %v3789 = vpop.f32.mrf.mxu0
      %v3790 = vadd.f32 0.0, %v3789
      %3791 = vmatmul.bf16.gmra.mxu0 %v1247
      %v3792 = vpop.f32.mrf.mxu0
      %v3793 = vadd.f32 0.0, %v3792
      %v3794 = vpop.f32.mrf.mxu0
      %v3795 = vadd.f32 0.0, %v3794
      %3796 = vmatmul.bf16.gmra.mxu0 %v1250
      %v3797 = vpop.f32.mrf.mxu0
      %v3798 = vadd.f32 0.0, %v3797
      %v3799 = vpop.f32.mrf.mxu0
      %v3800 = vadd.f32 0.0, %v3799
      %3801 = vmatmul.bf16.gmra.mxu0 %v1253
      %v3802 = vpop.f32.mrf.mxu0
      %v3803 = vadd.f32 0.0, %v3802
      %v3804 = vpop.f32.mrf.mxu0
      %v3805 = vadd.f32 0.0, %v3804
      %3806 = vdwg.mxu0
      %v3807 = vadd.f32 %v3778, %v3545
      %v3808 = vadd.f32 %v3780, %v3547
      %v3809 = vadd.f32 %v3783, %v3550
      %v3810 = vadd.f32 %v3785, %v3552
      %v3811 = vadd.f32 %v3788, %v3555
      %v3812 = vadd.f32 %v3790, %v3557
      %v3813 = vadd.f32 %v3793, %v3560
      %v3814 = vadd.f32 %v3795, %v3562
      %v3815 = vadd.f32 %v3807, %v1305
      %v3816 = vadd.f32 %v3808, %v1310
      %v3817 = vadd.f32 %v3809, %v1315
      %v3818 = vadd.f32 %v3810, %v1320
      %v3819 = vadd.f32 %v3811, %v1325
      %v3820 = vadd.f32 %v3812, %v1330
      %v3821 = vadd.f32 %v3813, %v1335
      %v3822 = vadd.f32 %v3814, %v1340
      %v3823 = vxor.u32 %v3815, 2147483648
      %v3824 = vxor.u32 %v3816, 2147483648
      %v3825 = vxor.u32 %v3817, 2147483648
      %v3826 = vxor.u32 %v3818, 2147483648
      %v3827 = vxor.u32 %v3819, 2147483648
      %v3828 = vxor.u32 %v3820, 2147483648
      %v3829 = vxor.u32 %v3821, 2147483648
      %v3830 = vxor.u32 %v3822, 2147483648
      %v3831 = vmul.f32 %v3823, 1.442695
      %v3832 = vpow.pop %v3831
      %v3833 = vmul.f32 %v3824, 1.442695
      %v3834 = vpow.pop %v3833
      %v3835 = vmul.f32 %v3825, 1.442695
      %v3836 = vpow.pop %v3835
      %v3837 = vmul.f32 %v3826, 1.442695
      %v3838 = vpow.pop %v3837
      %v3839 = vmul.f32 %v3827, 1.442695
      %v3840 = vpow.pop %v3839
      %v3841 = vmul.f32 %v3828, 1.442695
      %v3842 = vpow.pop %v3841
      %v3843 = vmul.f32 %v3829, 1.442695
      %v3844 = vpow.pop %v3843
      %v3845 = vmul.f32 %v3830, 1.442695
      %v3846 = vpow.pop %v3845
      %v3847 = vadd.f32 %v3832, 1.0
      %v3848 = vadd.f32 %v3834, 1.0
      %v3849 = vadd.f32 %v3836, 1.0
      %v3850 = vadd.f32 %v3838, 1.0
      %v3851 = vadd.f32 %v3840, 1.0
      %v3852 = vadd.f32 %v3842, 1.0
      %v3853 = vadd.f32 %v3844, 1.0
      %v3854 = vadd.f32 %v3846, 1.0
      %v3855 = vrcp.pop %v3847
      %v3856 = vmul.f32 %v3847, %v3855
      %v3857 = vsub.f32 1.0, %v3856
      %v3858 = vmul.f32 %v3855, %v3857
      %v3859 = vadd.f32 %v3855, %v3858
      %vm3860 = vweird.f32 %v3847
      %vm3861 = vweird.f32 %v3855
      %vm3862 = vmor %vm3860, %vm3861
      %v3863 = vsel %vm3862, %v3855, %v3859
      %v3864 = vand.u32 2147483647, %v3847
      %vm3865 = vcmp.eq.f32.partialorder %v3864, 8.507059e+37
      %v3866 = vand.u32 %v3847, 2147483648
      %v3867 = vor.u32 1.1754944e-38, %v3866
      %v3868 = vsel %vm3865, %v3867, %v3863
      %v3869 = vmul.f32 1.0, %v3868
      %v3870 = vrcp.pop %v3848
      %v3871 = vmul.f32 %v3848, %v3870
      %v3872 = vsub.f32 1.0, %v3871
      %v3873 = vmul.f32 %v3870, %v3872
      %v3874 = vadd.f32 %v3870, %v3873
      %vm3875 = vweird.f32 %v3848
      %vm3876 = vweird.f32 %v3870
      %vm3877 = vmor %vm3875, %vm3876
      %v3878 = vsel %vm3877, %v3870, %v3874
      %v3879 = vand.u32 2147483647, %v3848
      %vm3880 = vcmp.eq.f32.partialorder %v3879, 8.507059e+37
      %v3881 = vand.u32 %v3848, 2147483648
      %v3882 = vor.u32 1.1754944e-38, %v3881
      %v3883 = vsel %vm3880, %v3882, %v3878
      %v3884 = vmul.f32 1.0, %v3883
      %v3885 = vrcp.pop %v3849
      %v3886 = vmul.f32 %v3849, %v3885
      %v3887 = vsub.f32 1.0, %v3886
      %v3888 = vmul.f32 %v3885, %v3887
      %v3889 = vadd.f32 %v3885, %v3888
      %vm3890 = vweird.f32 %v3849
      %vm3891 = vweird.f32 %v3885
      %vm3892 = vmor %vm3890, %vm3891
      %v3893 = vsel %vm3892, %v3885, %v3889
      %v3894 = vand.u32 2147483647, %v3849
      %vm3895 = vcmp.eq.f32.partialorder %v3894, 8.507059e+37
      %v3896 = vand.u32 %v3849, 2147483648
      %v3897 = vor.u32 1.1754944e-38, %v3896
      %v3898 = vsel %vm3895, %v3897, %v3893
      %v3899 = vmul.f32 1.0, %v3898
      %v3900 = vrcp.pop %v3850
      %v3901 = vmul.f32 %v3850, %v3900
      %v3902 = vsub.f32 1.0, %v3901
      %v3903 = vmul.f32 %v3900, %v3902
      %v3904 = vadd.f32 %v3900, %v3903
      %vm3905 = vweird.f32 %v3850
      %vm3906 = vweird.f32 %v3900
      %vm3907 = vmor %vm3905, %vm3906
      %v3908 = vsel %vm3907, %v3900, %v3904
      %v3909 = vand.u32 2147483647, %v3850
      %vm3910 = vcmp.eq.f32.partialorder %v3909, 8.507059e+37
      %v3911 = vand.u32 %v3850, 2147483648
      %v3912 = vor.u32 1.1754944e-38, %v3911
      %v3913 = vsel %vm3910, %v3912, %v3908
      %v3914 = vmul.f32 1.0, %v3913
      %v3915 = vrcp.pop %v3851
      %v3916 = vmul.f32 %v3851, %v3915
      %v3917 = vsub.f32 1.0, %v3916
      %v3918 = vmul.f32 %v3915, %v3917
      %v3919 = vadd.f32 %v3915, %v3918
      %vm3920 = vweird.f32 %v3851
      %vm3921 = vweird.f32 %v3915
      %vm3922 = vmor %vm3920, %vm3921
      %v3923 = vsel %vm3922, %v3915, %v3919
      %v3924 = vand.u32 2147483647, %v3851
      %vm3925 = vcmp.eq.f32.partialorder %v3924, 8.507059e+37
      %v3926 = vand.u32 %v3851, 2147483648
      %v3927 = vor.u32 1.1754944e-38, %v3926
      %v3928 = vsel %vm3925, %v3927, %v3923
      %v3929 = vmul.f32 1.0, %v3928
      %v3930 = vrcp.pop %v3852
      %v3931 = vmul.f32 %v3852, %v3930
      %v3932 = vsub.f32 1.0, %v3931
      %v3933 = vmul.f32 %v3930, %v3932
      %v3934 = vadd.f32 %v3930, %v3933
      %vm3935 = vweird.f32 %v3852
      %vm3936 = vweird.f32 %v3930
      %vm3937 = vmor %vm3935, %vm3936
      %v3938 = vsel %vm3937, %v3930, %v3934
      %v3939 = vand.u32 2147483647, %v3852
      %vm3940 = vcmp.eq.f32.partialorder %v3939, 8.507059e+37
      %v3941 = vand.u32 %v3852, 2147483648
      %v3942 = vor.u32 1.1754944e-38, %v3941
      %v3943 = vsel %vm3940, %v3942, %v3938
      %v3944 = vmul.f32 1.0, %v3943
      %v3945 = vrcp.pop %v3853
      %v3946 = vmul.f32 %v3853, %v3945
      %v3947 = vsub.f32 1.0, %v3946
      %v3948 = vmul.f32 %v3945, %v3947
      %v3949 = vadd.f32 %v3945, %v3948
      %vm3950 = vweird.f32 %v3853
      %vm3951 = vweird.f32 %v3945
      %vm3952 = vmor %vm3950, %vm3951
      %v3953 = vsel %vm3952, %v3945, %v3949
      %v3954 = vand.u32 2147483647, %v3853
      %vm3955 = vcmp.eq.f32.partialorder %v3954, 8.507059e+37
      %v3956 = vand.u32 %v3853, 2147483648
      %v3957 = vor.u32 1.1754944e-38, %v3956
      %v3958 = vsel %vm3955, %v3957, %v3953
      %v3959 = vmul.f32 1.0, %v3958
      %v3960 = vrcp.pop %v3854
      %v3961 = vmul.f32 %v3854, %v3960
      %v3962 = vsub.f32 1.0, %v3961
      %v3963 = vmul.f32 %v3960, %v3962
      %v3964 = vadd.f32 %v3960, %v3963
      %vm3965 = vweird.f32 %v3854
      %vm3966 = vweird.f32 %v3960
      %vm3967 = vmor %vm3965, %vm3966
      %v3968 = vsel %vm3967, %v3960, %v3964
      %v3969 = vand.u32 2147483647, %v3854
      %vm3970 = vcmp.eq.f32.partialorder %v3969, 8.507059e+37
      %v3971 = vand.u32 %v3854, 2147483648
      %v3972 = vor.u32 1.1754944e-38, %v3971
      %v3973 = vsel %vm3970, %v3972, %v3968
      %v3974 = vmul.f32 1.0, %v3973
      %v3975 = vadd.f32 %v3798, %v1505
      %v3976 = vadd.f32 %v3800, %v1510
      %v3977 = vadd.f32 %v3803, %v1515
      %v3978 = vadd.f32 %v3805, %v1520
      %v3979 = vadd.f32 %v3565, %v1529
      %v3980 = vadd.f32 %v3567, %v1534
      %v3981 = vadd.f32 %v3570, %v1539
      %v3982 = vadd.f32 %v3572, %v1544
      %v3983 = vmul.f32 %v3869, %v3979
      %v3984 = vmul.f32 %v3884, %v3980
      %v3985 = vmul.f32 %v3899, %v3981
      %v3986 = vmul.f32 %v3914, %v3982
      %v3987 = vadd.f32 %v3975, %v3983
      %v3988 = vadd.f32 %v3976, %v3984
      %v3989 = vadd.f32 %v3977, %v3985
      %v3990 = vadd.f32 %v3978, %v3986
      %v3991 = vtanh.pop %v3987
      %v3992 = vtanh.pop %v3988
      %v3993 = vtanh.pop %v3989
      %v3994 = vtanh.pop %v3990
      %v3995 = vsub.f32 1.0, %v3929
      %v3996 = vsub.f32 1.0, %v3944
      %v3997 = vsub.f32 1.0, %v3959
      %v3998 = vsub.f32 1.0, %v3974
      %v3999 = vmul.f32 %v3995, %v3991
      %v4000 = vmul.f32 %v3996, %v3992
      %v4001 = vmul.f32 %v3997, %v3993
      %v4002 = vmul.f32 %v3998, %v3994
      %v4003 = vmul.f32 %v3929, %v3497
      %v4004 = vmul.f32 %v3944, %v3498
      %v4005 = vmul.f32 %v3959, %v3499
      %v4006 = vmul.f32 %v3974, %v3500
      %v4007 = vadd.f32 %v3999, %v4003
      %v4008 = vadd.f32 %v4000, %v4004
      %v4009 = vadd.f32 %v4001, %v4005
      %v4010 = vadd.f32 %v4002, %v4006
      %vm4011 = vcmp.gt.s32.totalorder %v423, 4
      %v4012 = vsel %vm4011, 1, 0
      %v4013 = vcvt.s32.f32 %v4012
      %v4015 = vperm.slane %v4013, 0
      %v4017 = vmul.f32 %v4015, %v3762
      %v4018 = vmul.f32 %v4015, %v3763
      %v4019 = vmul.f32 %v4015, %v3764
      %v4020 = vmul.f32 %v4015, %v3765
      %v4021 = vsub.f32 1.0, %v4013
      %v4023 = vperm.slane %v4021, 0
      %v4025 = vmul.f32 %v4023, %v3485
      %v4026 = vmul.f32 %v4023, %v3486
      %v4027 = vmul.f32 %v4023, %v3487
      %v4028 = vmul.f32 %v4023, %v3488
      %v4029 = vadd.f32 %v4017, %v4025
      %v4030 = vadd.f32 %v4018, %v4026
      %v4031 = vadd.f32 %v4019, %v4027
      %v4032 = vadd.f32 %v4020, %v4028
      %v4033 = vmul.f32 %v4015, %v4007
      %v4034 = vmul.f32 %v4015, %v4008
      %v4035 = vmul.f32 %v4015, %v4009
      %v4036 = vmul.f32 %v4015, %v4010
      %v4037 = vmul.f32 %v4023, %v3497
      %v4038 = vmul.f32 %v4023, %v3498
      %v4039 = vmul.f32 %v4023, %v3499
      %v4040 = vmul.f32 %v4023, %v3500
      %v4041 = vadd.f32 %v4033, %v4037
      %v4042 = vadd.f32 %v4034, %v4038
      %v4043 = vadd.f32 %v4035, %v4039
      %v4044 = vadd.f32 %v4036, %v4040
      %v4045 = vpack.c.bf16 %v4030, %v4029
      %v4046 = vpack.c.bf16 %v4032, %v4031
      %v4047 = vpack.c.bf16 %v4042, %v4041
      %v4048 = vpack.c.bf16 %v4044, %v4043
      %4049 = vmatpush.bf16.msra.mxu0 0
      %4050 = vmatpush.bf16.msra.mxu0 0
      %4051 = vmatpush.bf16.msra.mxu0 0
      %4052 = vmatpush.bf16.msra.mxu0 0
      %4053 = vmatpush.bf16.msra.mxu0 %v4048
      %4054 = vmatpush.bf16.msra.mxu0 %v4047
      %4055 = vmatpush.bf16.msra.mxu0 %v4046
      %4056 = vmatpush.bf16.msra.mxu0 %v4045
      %4057 = vmatmul.bf16.gmra.mxu0 %v888
      %v4058 = vpop.f32.mrf.mxu0
      %v4059 = vadd.f32 0.0, %v4058
      %v4060 = vpop.f32.mrf.mxu0
      %v4061 = vadd.f32 0.0, %v4060
      %4062 = vmatmul.bf16.gmra.mxu0 %v891
      %v4063 = vpop.f32.mrf.mxu0
      %v4064 = vadd.f32 0.0, %v4063
      %v4065 = vpop.f32.mrf.mxu0
      %v4066 = vadd.f32 0.0, %v4065
      %4067 = vmatmul.bf16.gmra.mxu0 %v894
      %v4068 = vpop.f32.mrf.mxu0
      %v4069 = vadd.f32 0.0, %v4068
      %v4070 = vpop.f32.mrf.mxu0
      %v4071 = vadd.f32 0.0, %v4070
      %4072 = vmatmul.bf16.gmra.mxu0 %v897
      %v4073 = vpop.f32.mrf.mxu0
      %v4074 = vadd.f32 0.0, %v4073
      %v4075 = vpop.f32.mrf.mxu0
      %v4076 = vadd.f32 0.0, %v4075
      %4077 = vmatmul.bf16.gmra.mxu0 %v900
      %v4078 = vpop.f32.mrf.mxu0
      %v4079 = vadd.f32 0.0, %v4078
      %v4080 = vpop.f32.mrf.mxu0
      %v4081 = vadd.f32 0.0, %v4080
      %4082 = vmatmul.bf16.gmra.mxu0 %v903
      %v4083 = vpop.f32.mrf.mxu0
      %v4084 = vadd.f32 0.0, %v4083
      %v4085 = vpop.f32.mrf.mxu0
      %v4086 = vadd.f32 0.0, %v4085
      %4087 = vmatmul.bf16.gmra.mxu0 %v906
      %v4088 = vpop.f32.mrf.mxu0
      %v4089 = vadd.f32 0.0, %v4088
      %v4090 = vpop.f32.mrf.mxu0
      %v4091 = vadd.f32 0.0, %v4090
      %4092 = vmatmul.bf16.gmra.mxu0 %v909
      %v4093 = vpop.f32.mrf.mxu0
      %v4094 = vadd.f32 0.0, %v4093
      %v4095 = vpop.f32.mrf.mxu0
      %v4096 = vadd.f32 0.0, %v4095
      %4097 = vmatmul.bf16.gmra.mxu0 %v912
      %v4098 = vpop.f32.mrf.mxu0
      %v4099 = vadd.f32 0.0, %v4098
      %v4100 = vpop.f32.mrf.mxu0
      %v4101 = vadd.f32 0.0, %v4100
      %4102 = vmatmul.bf16.gmra.mxu0 %v915
      %v4103 = vpop.f32.mrf.mxu0
      %v4104 = vadd.f32 0.0, %v4103
      %v4105 = vpop.f32.mrf.mxu0
      %v4106 = vadd.f32 0.0, %v4105
      %4107 = vmatmul.bf16.gmra.mxu0 %v918
      %v4108 = vpop.f32.mrf.mxu0
      %v4109 = vadd.f32 0.0, %v4108
      %v4110 = vpop.f32.mrf.mxu0
      %v4111 = vadd.f32 0.0, %v4110
      %4112 = vmatmul.bf16.gmra.mxu0 %v921
      %v4113 = vpop.f32.mrf.mxu0
      %v4114 = vadd.f32 0.0, %v4113
      %v4115 = vpop.f32.mrf.mxu0
      %v4116 = vadd.f32 0.0, %v4115
      %4117 = vdwg.mxu0
      %4126 = vrot.lane.b32.xlu0 %v4059, 32
      %v4127 = vpop.permute.xlu0 %4126
      %4128 = vrot.lane.b32.xlu0 %v4061, 32
      %v4129 = vpop.permute.xlu0 %4128
      %4130 = vrot.lane.b32.xlu0 %v4064, 32
      %v4131 = vpop.permute.xlu0 %4130
      %4132 = vrot.lane.b32.xlu0 %v4066, 32
      %v4133 = vpop.permute.xlu0 %4132
      %4134 = vrot.lane.b32.xlu0 %v4069, 32
      %v4135 = vpop.permute.xlu0 %4134
      %4136 = vrot.lane.b32.xlu0 %v4071, 32
      %v4137 = vpop.permute.xlu0 %4136
      %4138 = vrot.lane.b32.xlu0 %v4074, 32
      %v4139 = vpop.permute.xlu0 %4138
      %4140 = vrot.lane.b32.xlu0 %v4076, 32
      %v4141 = vpop.permute.xlu0 %4140
      %v4150 = vadd.f32 %v758, %v4127
      %v4151 = vadd.f32 %v760, %v4129
      %v4152 = vadd.f32 %v763, %v4131
      %v4153 = vadd.f32 %v765, %v4133
      %v4154 = vadd.f32 %v768, %v4135
      %v4155 = vadd.f32 %v770, %v4137
      %v4156 = vadd.f32 %v773, %v4139
      %v4157 = vadd.f32 %v775, %v4141
      %v4158 = vxor.u32 %v4150, 2147483648
      %v4159 = vxor.u32 %v4151, 2147483648
      %v4160 = vxor.u32 %v4152, 2147483648
      %v4161 = vxor.u32 %v4153, 2147483648
      %v4162 = vxor.u32 %v4154, 2147483648
      %v4163 = vxor.u32 %v4155, 2147483648
      %v4164 = vxor.u32 %v4156, 2147483648
      %v4165 = vxor.u32 %v4157, 2147483648
      %v4166 = vmul.f32 %v4158, 1.442695
      %v4167 = vpow.pop %v4166
      %v4168 = vmul.f32 %v4159, 1.442695
      %v4169 = vpow.pop %v4168
      %v4170 = vmul.f32 %v4160, 1.442695
      %v4171 = vpow.pop %v4170
      %v4172 = vmul.f32 %v4161, 1.442695
      %v4173 = vpow.pop %v4172
      %v4174 = vmul.f32 %v4162, 1.442695
      %v4175 = vpow.pop %v4174
      %v4176 = vmul.f32 %v4163, 1.442695
      %v4177 = vpow.pop %v4176
      %v4178 = vmul.f32 %v4164, 1.442695
      %v4179 = vpow.pop %v4178
      %v4180 = vmul.f32 %v4165, 1.442695
      %v4181 = vpow.pop %v4180
      %v4182 = vadd.f32 %v4167, 1.0
      %v4183 = vadd.f32 %v4169, 1.0
      %v4184 = vadd.f32 %v4171, 1.0
      %v4185 = vadd.f32 %v4173, 1.0
      %v4186 = vadd.f32 %v4175, 1.0
      %v4187 = vadd.f32 %v4177, 1.0
      %v4188 = vadd.f32 %v4179, 1.0
      %v4189 = vadd.f32 %v4181, 1.0
      %v4190 = vrcp.pop %v4182
      %v4191 = vmul.f32 %v4182, %v4190
      %v4192 = vsub.f32 1.0, %v4191
      %v4193 = vmul.f32 %v4190, %v4192
      %v4194 = vadd.f32 %v4190, %v4193
      %vm4195 = vweird.f32 %v4182
      %vm4196 = vweird.f32 %v4190
      %vm4197 = vmor %vm4195, %vm4196
      %v4198 = vsel %vm4197, %v4190, %v4194
      %v4199 = vand.u32 2147483647, %v4182
      %vm4200 = vcmp.eq.f32.partialorder %v4199, 8.507059e+37
      %v4201 = vand.u32 %v4182, 2147483648
      %v4202 = vor.u32 1.1754944e-38, %v4201
      %v4203 = vsel %vm4200, %v4202, %v4198
      %v4204 = vmul.f32 1.0, %v4203
      %v4205 = vrcp.pop %v4183
      %v4206 = vmul.f32 %v4183, %v4205
      %v4207 = vsub.f32 1.0, %v4206
      %v4208 = vmul.f32 %v4205, %v4207
      %v4209 = vadd.f32 %v4205, %v4208
      %vm4210 = vweird.f32 %v4183
      %vm4211 = vweird.f32 %v4205
      %vm4212 = vmor %vm4210, %vm4211
      %v4213 = vsel %vm4212, %v4205, %v4209
      %v4214 = vand.u32 2147483647, %v4183
      %vm4215 = vcmp.eq.f32.partialorder %v4214, 8.507059e+37
      %v4216 = vand.u32 %v4183, 2147483648
      %v4217 = vor.u32 1.1754944e-38, %v4216
      %v4218 = vsel %vm4215, %v4217, %v4213
      %v4219 = vmul.f32 1.0, %v4218
      %v4220 = vrcp.pop %v4184
      %v4221 = vmul.f32 %v4184, %v4220
      %v4222 = vsub.f32 1.0, %v4221
      %v4223 = vmul.f32 %v4220, %v4222
      %v4224 = vadd.f32 %v4220, %v4223
      %vm4225 = vweird.f32 %v4184
      %vm4226 = vweird.f32 %v4220
      %vm4227 = vmor %vm4225, %vm4226
      %v4228 = vsel %vm4227, %v4220, %v4224
      %v4229 = vand.u32 2147483647, %v4184
      %vm4230 = vcmp.eq.f32.partialorder %v4229, 8.507059e+37
      %v4231 = vand.u32 %v4184, 2147483648
      %v4232 = vor.u32 1.1754944e-38, %v4231
      %v4233 = vsel %vm4230, %v4232, %v4228
      %v4234 = vmul.f32 1.0, %v4233
      %v4235 = vrcp.pop %v4185
      %v4236 = vmul.f32 %v4185, %v4235
      %v4237 = vsub.f32 1.0, %v4236
      %v4238 = vmul.f32 %v4235, %v4237
      %v4239 = vadd.f32 %v4235, %v4238
      %vm4240 = vweird.f32 %v4185
      %vm4241 = vweird.f32 %v4235
      %vm4242 = vmor %vm4240, %vm4241
      %v4243 = vsel %vm4242, %v4235, %v4239
      %v4244 = vand.u32 2147483647, %v4185
      %vm4245 = vcmp.eq.f32.partialorder %v4244, 8.507059e+37
      %v4246 = vand.u32 %v4185, 2147483648
      %v4247 = vor.u32 1.1754944e-38, %v4246
      %v4248 = vsel %vm4245, %v4247, %v4243
      %v4249 = vmul.f32 1.0, %v4248
      %v4250 = vrcp.pop %v4186
      %v4251 = vmul.f32 %v4186, %v4250
      %v4252 = vsub.f32 1.0, %v4251
      %v4253 = vmul.f32 %v4250, %v4252
      %v4254 = vadd.f32 %v4250, %v4253
      %vm4255 = vweird.f32 %v4186
      %vm4256 = vweird.f32 %v4250
      %vm4257 = vmor %vm4255, %vm4256
      %v4258 = vsel %vm4257, %v4250, %v4254
      %v4259 = vand.u32 2147483647, %v4186
      %vm4260 = vcmp.eq.f32.partialorder %v4259, 8.507059e+37
      %v4261 = vand.u32 %v4186, 2147483648
      %v4262 = vor.u32 1.1754944e-38, %v4261
      %v4263 = vsel %vm4260, %v4262, %v4258
      %v4264 = vmul.f32 1.0, %v4263
      %v4265 = vrcp.pop %v4187
      %v4266 = vmul.f32 %v4187, %v4265
      %v4267 = vsub.f32 1.0, %v4266
      %v4268 = vmul.f32 %v4265, %v4267
      %v4269 = vadd.f32 %v4265, %v4268
      %vm4270 = vweird.f32 %v4187
      %vm4271 = vweird.f32 %v4265
      %vm4272 = vmor %vm4270, %vm4271
      %v4273 = vsel %vm4272, %v4265, %v4269
      %v4274 = vand.u32 2147483647, %v4187
      %vm4275 = vcmp.eq.f32.partialorder %v4274, 8.507059e+37
      %v4276 = vand.u32 %v4187, 2147483648
      %v4277 = vor.u32 1.1754944e-38, %v4276
      %v4278 = vsel %vm4275, %v4277, %v4273
      %v4279 = vmul.f32 1.0, %v4278
      %v4280 = vrcp.pop %v4188
      %v4281 = vmul.f32 %v4188, %v4280
      %v4282 = vsub.f32 1.0, %v4281
      %v4283 = vmul.f32 %v4280, %v4282
      %v4284 = vadd.f32 %v4280, %v4283
      %vm4285 = vweird.f32 %v4188
      %vm4286 = vweird.f32 %v4280
      %vm4287 = vmor %vm4285, %vm4286
      %v4288 = vsel %vm4287, %v4280, %v4284
      %v4289 = vand.u32 2147483647, %v4188
      %vm4290 = vcmp.eq.f32.partialorder %v4289, 8.507059e+37
      %v4291 = vand.u32 %v4188, 2147483648
      %v4292 = vor.u32 1.1754944e-38, %v4291
      %v4293 = vsel %vm4290, %v4292, %v4288
      %v4294 = vmul.f32 1.0, %v4293
      %v4295 = vrcp.pop %v4189
      %v4296 = vmul.f32 %v4189, %v4295
      %v4297 = vsub.f32 1.0, %v4296
      %v4298 = vmul.f32 %v4295, %v4297
      %v4299 = vadd.f32 %v4295, %v4298
      %vm4300 = vweird.f32 %v4189
      %vm4301 = vweird.f32 %v4295
      %vm4302 = vmor %vm4300, %vm4301
      %v4303 = vsel %vm4302, %v4295, %v4299
      %v4304 = vand.u32 2147483647, %v4189
      %vm4305 = vcmp.eq.f32.partialorder %v4304, 8.507059e+37
      %v4306 = vand.u32 %v4189, 2147483648
      %v4307 = vor.u32 1.1754944e-38, %v4306
      %v4308 = vsel %vm4305, %v4307, %v4303
      %v4309 = vmul.f32 1.0, %v4308
      %v4310 = vadd.f32 %v4079, %v1155
      %v4311 = vadd.f32 %v4081, %v1160
      %v4312 = vadd.f32 %v4084, %v1165
      %v4313 = vadd.f32 %v4086, %v1170
      %4318 = vrot.lane.b32.xlu0 %v4310, 32
      %v4319 = vpop.permute.xlu0 %4318
      %4320 = vrot.lane.b32.xlu0 %v4311, 32
      %v4321 = vpop.permute.xlu0 %4320
      %4322 = vrot.lane.b32.xlu0 %v4312, 32
      %v4323 = vpop.permute.xlu0 %4322
      %4324 = vrot.lane.b32.xlu0 %v4313, 32
      %v4325 = vpop.permute.xlu0 %4324
      %v4330 = vmul.f32 %v4204, %v4319
      %v4331 = vmul.f32 %v4219, %v4321
      %v4332 = vmul.f32 %v4234, %v4323
      %v4333 = vmul.f32 %v4249, %v4325
      %v4334 = vadd.f32 %v778, %v4330
      %v4335 = vadd.f32 %v780, %v4331
      %v4336 = vadd.f32 %v783, %v4332
      %v4337 = vadd.f32 %v785, %v4333
      %v4338 = vtanh.pop %v4334
      %v4339 = vtanh.pop %v4335
      %v4340 = vtanh.pop %v4336
      %v4341 = vtanh.pop %v4337
      %v4342 = vsub.f32 1.0, %v4264
      %v4343 = vsub.f32 1.0, %v4279
      %v4344 = vsub.f32 1.0, %v4294
      %v4345 = vsub.f32 1.0, %v4309
      %v4346 = vmul.f32 %v4342, %v4338
      %v4347 = vmul.f32 %v4343, %v4339
      %v4348 = vmul.f32 %v4344, %v4340
      %v4349 = vmul.f32 %v4345, %v4341
      %4354 = vrot.lane.b32.xlu0 %v4029, 32
      %v4355 = vpop.permute.xlu0 %4354
      %4356 = vrot.lane.b32.xlu0 %v4030, 32
      %v4357 = vpop.permute.xlu0 %4356
      %4358 = vrot.lane.b32.xlu0 %v4031, 32
      %v4359 = vpop.permute.xlu0 %4358
      %4360 = vrot.lane.b32.xlu0 %v4032, 32
      %v4361 = vpop.permute.xlu0 %4360
      %v4366 = vmul.f32 %v4264, %v4355
      %v4367 = vmul.f32 %v4279, %v4357
      %v4368 = vmul.f32 %v4294, %v4359
      %v4369 = vmul.f32 %v4309, %v4361
      %v4370 = vadd.f32 %v4346, %v4366
      %v4371 = vadd.f32 %v4347, %v4367
      %v4372 = vadd.f32 %v4348, %v4368
      %v4373 = vadd.f32 %v4349, %v4369
      %v4374 = vpack.c.bf16 %v4371, %v4370
      %v4375 = vpack.c.bf16 %v4373, %v4372
      %4378 = vrot.lane.b32.xlu0 %v4374, 96
      %v4379 = vpop.permute.xlu0 %4378
      %4380 = vrot.lane.b32.xlu0 %v4375, 96
      %v4381 = vpop.permute.xlu0 %4380
      %4384 = vmatpush.bf16.msra.mxu0 0
      %4385 = vmatpush.bf16.msra.mxu0 0
      %4386 = vmatpush.bf16.msra.mxu0 0
      %4387 = vmatpush.bf16.msra.mxu0 0
      %4388 = vmatpush.bf16.msra.mxu0 0
      %4389 = vmatpush.bf16.msra.mxu0 0
      %4390 = vmatpush.bf16.msra.mxu0 %v4381
      %4391 = vmatpush.bf16.msra.mxu0 %v4379
      %4392 = vmatmul.bf16.gmra.mxu0 %v1238
      %v4393 = vpop.f32.mrf.mxu0
      %v4394 = vadd.f32 0.0, %v4393
      %v4395 = vpop.f32.mrf.mxu0
      %v4396 = vadd.f32 0.0, %v4395
      %4397 = vmatmul.bf16.gmra.mxu0 %v1241
      %v4398 = vpop.f32.mrf.mxu0
      %v4399 = vadd.f32 0.0, %v4398
      %v4400 = vpop.f32.mrf.mxu0
      %v4401 = vadd.f32 0.0, %v4400
      %4402 = vmatmul.bf16.gmra.mxu0 %v1244
      %v4403 = vpop.f32.mrf.mxu0
      %v4404 = vadd.f32 0.0, %v4403
      %v4405 = vpop.f32.mrf.mxu0
      %v4406 = vadd.f32 0.0, %v4405
      %4407 = vmatmul.bf16.gmra.mxu0 %v1247
      %v4408 = vpop.f32.mrf.mxu0
      %v4409 = vadd.f32 0.0, %v4408
      %v4410 = vpop.f32.mrf.mxu0
      %v4411 = vadd.f32 0.0, %v4410
      %4412 = vmatmul.bf16.gmra.mxu0 %v1250
      %v4413 = vpop.f32.mrf.mxu0
      %v4414 = vadd.f32 0.0, %v4413
      %v4415 = vpop.f32.mrf.mxu0
      %v4416 = vadd.f32 0.0, %v4415
      %4417 = vmatmul.bf16.gmra.mxu0 %v1253
      %v4418 = vpop.f32.mrf.mxu0
      %v4419 = vadd.f32 0.0, %v4418
      %v4420 = vpop.f32.mrf.mxu0
      %v4421 = vadd.f32 0.0, %v4420
      %4422 = vdwg.mxu0
      %v4423 = vadd.f32 %v4394, %v4089
      %v4424 = vadd.f32 %v4396, %v4091
      %v4425 = vadd.f32 %v4399, %v4094
      %v4426 = vadd.f32 %v4401, %v4096
      %v4427 = vadd.f32 %v4404, %v4099
      %v4428 = vadd.f32 %v4406, %v4101
      %v4429 = vadd.f32 %v4409, %v4104
      %v4430 = vadd.f32 %v4411, %v4106
      %v4431 = vadd.f32 %v4423, %v1305
      %v4432 = vadd.f32 %v4424, %v1310
      %v4433 = vadd.f32 %v4425, %v1315
      %v4434 = vadd.f32 %v4426, %v1320
      %v4435 = vadd.f32 %v4427, %v1325
      %v4436 = vadd.f32 %v4428, %v1330
      %v4437 = vadd.f32 %v4429, %v1335
      %v4438 = vadd.f32 %v4430, %v1340
      %v4439 = vxor.u32 %v4431, 2147483648
      %v4440 = vxor.u32 %v4432, 2147483648
      %v4441 = vxor.u32 %v4433, 2147483648
      %v4442 = vxor.u32 %v4434, 2147483648
      %v4443 = vxor.u32 %v4435, 2147483648
      %v4444 = vxor.u32 %v4436, 2147483648
      %v4445 = vxor.u32 %v4437, 2147483648
      %v4446 = vxor.u32 %v4438, 2147483648
      %v4447 = vmul.f32 %v4439, 1.442695
      %v4448 = vpow.pop %v4447
      %v4449 = vmul.f32 %v4440, 1.442695
      %v4450 = vpow.pop %v4449
      %v4451 = vmul.f32 %v4441, 1.442695
      %v4452 = vpow.pop %v4451
      %v4453 = vmul.f32 %v4442, 1.442695
      %v4454 = vpow.pop %v4453
      %v4455 = vmul.f32 %v4443, 1.442695
      %v4456 = vpow.pop %v4455
      %v4457 = vmul.f32 %v4444, 1.442695
      %v4458 = vpow.pop %v4457
      %v4459 = vmul.f32 %v4445, 1.442695
      %v4460 = vpow.pop %v4459
      %v4461 = vmul.f32 %v4446, 1.442695
      %v4462 = vpow.pop %v4461
      %v4463 = vadd.f32 %v4448, 1.0
      %v4464 = vadd.f32 %v4450, 1.0
      %v4465 = vadd.f32 %v4452, 1.0
      %v4466 = vadd.f32 %v4454, 1.0
      %v4467 = vadd.f32 %v4456, 1.0
      %v4468 = vadd.f32 %v4458, 1.0
      %v4469 = vadd.f32 %v4460, 1.0
      %v4470 = vadd.f32 %v4462, 1.0
      %v4471 = vrcp.pop %v4463
      %v4472 = vmul.f32 %v4463, %v4471
      %v4473 = vsub.f32 1.0, %v4472
      %v4474 = vmul.f32 %v4471, %v4473
      %v4475 = vadd.f32 %v4471, %v4474
      %vm4476 = vweird.f32 %v4463
      %vm4477 = vweird.f32 %v4471
      %vm4478 = vmor %vm4476, %vm4477
      %v4479 = vsel %vm4478, %v4471, %v4475
      %v4480 = vand.u32 2147483647, %v4463
      %vm4481 = vcmp.eq.f32.partialorder %v4480, 8.507059e+37
      %v4482 = vand.u32 %v4463, 2147483648
      %v4483 = vor.u32 1.1754944e-38, %v4482
      %v4484 = vsel %vm4481, %v4483, %v4479
      %v4485 = vmul.f32 1.0, %v4484
      %v4486 = vrcp.pop %v4464
      %v4487 = vmul.f32 %v4464, %v4486
      %v4488 = vsub.f32 1.0, %v4487
      %v4489 = vmul.f32 %v4486, %v4488
      %v4490 = vadd.f32 %v4486, %v4489
      %vm4491 = vweird.f32 %v4464
      %vm4492 = vweird.f32 %v4486
      %vm4493 = vmor %vm4491, %vm4492
      %v4494 = vsel %vm4493, %v4486, %v4490
      %v4495 = vand.u32 2147483647, %v4464
      %vm4496 = vcmp.eq.f32.partialorder %v4495, 8.507059e+37
      %v4497 = vand.u32 %v4464, 2147483648
      %v4498 = vor.u32 1.1754944e-38, %v4497
      %v4499 = vsel %vm4496, %v4498, %v4494
      %v4500 = vmul.f32 1.0, %v4499
      %v4501 = vrcp.pop %v4465
      %v4502 = vmul.f32 %v4465, %v4501
      %v4503 = vsub.f32 1.0, %v4502
      %v4504 = vmul.f32 %v4501, %v4503
      %v4505 = vadd.f32 %v4501, %v4504
      %vm4506 = vweird.f32 %v4465
      %vm4507 = vweird.f32 %v4501
      %vm4508 = vmor %vm4506, %vm4507
      %v4509 = vsel %vm4508, %v4501, %v4505
      %v4510 = vand.u32 2147483647, %v4465
      %vm4511 = vcmp.eq.f32.partialorder %v4510, 8.507059e+37
      %v4512 = vand.u32 %v4465, 2147483648
      %v4513 = vor.u32 1.1754944e-38, %v4512
      %v4514 = vsel %vm4511, %v4513, %v4509
      %v4515 = vmul.f32 1.0, %v4514
      %v4516 = vrcp.pop %v4466
      %v4517 = vmul.f32 %v4466, %v4516
      %v4518 = vsub.f32 1.0, %v4517
      %v4519 = vmul.f32 %v4516, %v4518
      %v4520 = vadd.f32 %v4516, %v4519
      %vm4521 = vweird.f32 %v4466
      %vm4522 = vweird.f32 %v4516
      %vm4523 = vmor %vm4521, %vm4522
      %v4524 = vsel %vm4523, %v4516, %v4520
      %v4525 = vand.u32 2147483647, %v4466
      %vm4526 = vcmp.eq.f32.partialorder %v4525, 8.507059e+37
      %v4527 = vand.u32 %v4466, 2147483648
      %v4528 = vor.u32 1.1754944e-38, %v4527
      %v4529 = vsel %vm4526, %v4528, %v4524
      %v4530 = vmul.f32 1.0, %v4529
      %v4531 = vrcp.pop %v4467
      %v4532 = vmul.f32 %v4467, %v4531
      %v4533 = vsub.f32 1.0, %v4532
      %v4534 = vmul.f32 %v4531, %v4533
      %v4535 = vadd.f32 %v4531, %v4534
      %vm4536 = vweird.f32 %v4467
      %vm4537 = vweird.f32 %v4531
      %vm4538 = vmor %vm4536, %vm4537
      %v4539 = vsel %vm4538, %v4531, %v4535
      %v4540 = vand.u32 2147483647, %v4467
      %vm4541 = vcmp.eq.f32.partialorder %v4540, 8.507059e+37
      %v4542 = vand.u32 %v4467, 2147483648
      %v4543 = vor.u32 1.1754944e-38, %v4542
      %v4544 = vsel %vm4541, %v4543, %v4539
      %v4545 = vmul.f32 1.0, %v4544
      %v4546 = vrcp.pop %v4468
      %v4547 = vmul.f32 %v4468, %v4546
      %v4548 = vsub.f32 1.0, %v4547
      %v4549 = vmul.f32 %v4546, %v4548
      %v4550 = vadd.f32 %v4546, %v4549
      %vm4551 = vweird.f32 %v4468
      %vm4552 = vweird.f32 %v4546
      %vm4553 = vmor %vm4551, %vm4552
      %v4554 = vsel %vm4553, %v4546, %v4550
      %v4555 = vand.u32 2147483647, %v4468
      %vm4556 = vcmp.eq.f32.partialorder %v4555, 8.507059e+37
      %v4557 = vand.u32 %v4468, 2147483648
      %v4558 = vor.u32 1.1754944e-38, %v4557
      %v4559 = vsel %vm4556, %v4558, %v4554
      %v4560 = vmul.f32 1.0, %v4559
      %v4561 = vrcp.pop %v4469
      %v4562 = vmul.f32 %v4469, %v4561
      %v4563 = vsub.f32 1.0, %v4562
      %v4564 = vmul.f32 %v4561, %v4563
      %v4565 = vadd.f32 %v4561, %v4564
      %vm4566 = vweird.f32 %v4469
      %vm4567 = vweird.f32 %v4561
      %vm4568 = vmor %vm4566, %vm4567
      %v4569 = vsel %vm4568, %v4561, %v4565
      %v4570 = vand.u32 2147483647, %v4469
      %vm4571 = vcmp.eq.f32.partialorder %v4570, 8.507059e+37
      %v4572 = vand.u32 %v4469, 2147483648
      %v4573 = vor.u32 1.1754944e-38, %v4572
      %v4574 = vsel %vm4571, %v4573, %v4569
      %v4575 = vmul.f32 1.0, %v4574
      %v4576 = vrcp.pop %v4470
      %v4577 = vmul.f32 %v4470, %v4576
      %v4578 = vsub.f32 1.0, %v4577
      %v4579 = vmul.f32 %v4576, %v4578
      %v4580 = vadd.f32 %v4576, %v4579
      %vm4581 = vweird.f32 %v4470
      %vm4582 = vweird.f32 %v4576
      %vm4583 = vmor %vm4581, %vm4582
      %v4584 = vsel %vm4583, %v4576, %v4580
      %v4585 = vand.u32 2147483647, %v4470
      %vm4586 = vcmp.eq.f32.partialorder %v4585, 8.507059e+37
      %v4587 = vand.u32 %v4470, 2147483648
      %v4588 = vor.u32 1.1754944e-38, %v4587
      %v4589 = vsel %vm4586, %v4588, %v4584
      %v4590 = vmul.f32 1.0, %v4589
      %v4591 = vadd.f32 %v4414, %v1505
      %v4592 = vadd.f32 %v4416, %v1510
      %v4593 = vadd.f32 %v4419, %v1515
      %v4594 = vadd.f32 %v4421, %v1520
      %v4595 = vadd.f32 %v4109, %v1529
      %v4596 = vadd.f32 %v4111, %v1534
      %v4597 = vadd.f32 %v4114, %v1539
      %v4598 = vadd.f32 %v4116, %v1544
      %v4599 = vmul.f32 %v4485, %v4595
      %v4600 = vmul.f32 %v4500, %v4596
      %v4601 = vmul.f32 %v4515, %v4597
      %v4602 = vmul.f32 %v4530, %v4598
      %v4603 = vadd.f32 %v4591, %v4599
      %v4604 = vadd.f32 %v4592, %v4600
      %v4605 = vadd.f32 %v4593, %v4601
      %v4606 = vadd.f32 %v4594, %v4602
      %v4607 = vtanh.pop %v4603
      %v4608 = vtanh.pop %v4604
      %v4609 = vtanh.pop %v4605
      %v4610 = vtanh.pop %v4606
      %v4611 = vsub.f32 1.0, %v4545
      %v4612 = vsub.f32 1.0, %v4560
      %v4613 = vsub.f32 1.0, %v4575
      %v4614 = vsub.f32 1.0, %v4590
      %v4615 = vmul.f32 %v4611, %v4607
      %v4616 = vmul.f32 %v4612, %v4608
      %v4617 = vmul.f32 %v4613, %v4609
      %v4618 = vmul.f32 %v4614, %v4610
      %v4619 = vmul.f32 %v4545, %v4041
      %v4620 = vmul.f32 %v4560, %v4042
      %v4621 = vmul.f32 %v4575, %v4043
      %v4622 = vmul.f32 %v4590, %v4044
      %v4623 = vadd.f32 %v4615, %v4619
      %v4624 = vadd.f32 %v4616, %v4620
      %v4625 = vadd.f32 %v4617, %v4621
      %v4626 = vadd.f32 %v4618, %v4622
      %vm4627 = vcmp.gt.s32.totalorder %v423, 5
      %v4628 = vsel %vm4627, 1, 0
      %v4629 = vcvt.s32.f32 %v4628
      %v4631 = vperm.slane %v4629, 0
      %4637 = vrot.lane.b32.xlu0 %v4370, 96
      %v4638 = vpop.permute.xlu0 %4637
      %4639 = vrot.lane.b32.xlu0 %v4371, 96
      %v4640 = vpop.permute.xlu0 %4639
      %4641 = vrot.lane.b32.xlu0 %v4372, 96
      %v4642 = vpop.permute.xlu0 %4641
      %4643 = vrot.lane.b32.xlu0 %v4373, 96
      %v4644 = vpop.permute.xlu0 %4643
      %v4649 = vmul.f32 %v4631, %v4638
      %v4650 = vmul.f32 %v4631, %v4640
      %v4651 = vmul.f32 %v4631, %v4642
      %v4652 = vmul.f32 %v4631, %v4644
      %v4653 = vsub.f32 1.0, %v4629
      %v4655 = vperm.slane %v4653, 0
      %v4657 = vmul.f32 %v4655, %v4029
      %v4658 = vmul.f32 %v4655, %v4030
      %v4659 = vmul.f32 %v4655, %v4031
      %v4660 = vmul.f32 %v4655, %v4032
      %v4661 = vadd.f32 %v4649, %v4657
      %v4662 = vadd.f32 %v4650, %v4658
      %v4663 = vadd.f32 %v4651, %v4659
      %v4664 = vadd.f32 %v4652, %v4660
      %v4665 = vmul.f32 %v4631, %v4623
      %v4666 = vmul.f32 %v4631, %v4624
      %v4667 = vmul.f32 %v4631, %v4625
      %v4668 = vmul.f32 %v4631, %v4626
      %v4669 = vmul.f32 %v4655, %v4041
      %v4670 = vmul.f32 %v4655, %v4042
      %v4671 = vmul.f32 %v4655, %v4043
      %v4672 = vmul.f32 %v4655, %v4044
      %v4673 = vadd.f32 %v4665, %v4669
      %v4674 = vadd.f32 %v4666, %v4670
      %v4675 = vadd.f32 %v4667, %v4671
      %v4676 = vadd.f32 %v4668, %v4672
      %v4677 = vpack.c.bf16 %v4662, %v4661
      %v4678 = vpack.c.bf16 %v4664, %v4663
      %v4679 = vpack.c.bf16 %v4674, %v4673
      %v4680 = vpack.c.bf16 %v4676, %v4675
      %4681 = vmatpush.bf16.msra.mxu0 0
      %4682 = vmatpush.bf16.msra.mxu0 0
      %4683 = vmatpush.bf16.msra.mxu0 0
      %4684 = vmatpush.bf16.msra.mxu0 0
      %4685 = vmatpush.bf16.msra.mxu0 %v4680
      %4686 = vmatpush.bf16.msra.mxu0 %v4679
      %4687 = vmatpush.bf16.msra.mxu0 %v4678
      %4688 = vmatpush.bf16.msra.mxu0 %v4677
      %4689 = vmatmul.bf16.gmra.mxu0 %v888
      %v4690 = vpop.f32.mrf.mxu0
      %v4691 = vadd.f32 0.0, %v4690
      %v4692 = vpop.f32.mrf.mxu0
      %v4693 = vadd.f32 0.0, %v4692
      %4694 = vmatmul.bf16.gmra.mxu0 %v891
      %v4695 = vpop.f32.mrf.mxu0
      %v4696 = vadd.f32 0.0, %v4695
      %v4697 = vpop.f32.mrf.mxu0
      %v4698 = vadd.f32 0.0, %v4697
      %4699 = vmatmul.bf16.gmra.mxu0 %v894
      %v4700 = vpop.f32.mrf.mxu0
      %v4701 = vadd.f32 0.0, %v4700
      %v4702 = vpop.f32.mrf.mxu0
      %v4703 = vadd.f32 0.0, %v4702
      %4704 = vmatmul.bf16.gmra.mxu0 %v897
      %v4705 = vpop.f32.mrf.mxu0
      %v4706 = vadd.f32 0.0, %v4705
      %v4707 = vpop.f32.mrf.mxu0
      %v4708 = vadd.f32 0.0, %v4707
      %4709 = vmatmul.bf16.gmra.mxu0 %v900
      %v4710 = vpop.f32.mrf.mxu0
      %v4711 = vadd.f32 0.0, %v4710
      %v4712 = vpop.f32.mrf.mxu0
      %v4713 = vadd.f32 0.0, %v4712
      %4714 = vmatmul.bf16.gmra.mxu0 %v903
      %v4715 = vpop.f32.mrf.mxu0
      %v4716 = vadd.f32 0.0, %v4715
      %v4717 = vpop.f32.mrf.mxu0
      %v4718 = vadd.f32 0.0, %v4717
      %4719 = vmatmul.bf16.gmra.mxu0 %v906
      %v4720 = vpop.f32.mrf.mxu0
      %v4721 = vadd.f32 0.0, %v4720
      %v4722 = vpop.f32.mrf.mxu0
      %v4723 = vadd.f32 0.0, %v4722
      %4724 = vmatmul.bf16.gmra.mxu0 %v909
      %v4725 = vpop.f32.mrf.mxu0
      %v4726 = vadd.f32 0.0, %v4725
      %v4727 = vpop.f32.mrf.mxu0
      %v4728 = vadd.f32 0.0, %v4727
      %4729 = vmatmul.bf16.gmra.mxu0 %v912
      %v4730 = vpop.f32.mrf.mxu0
      %v4731 = vadd.f32 0.0, %v4730
      %v4732 = vpop.f32.mrf.mxu0
      %v4733 = vadd.f32 0.0, %v4732
      %4734 = vmatmul.bf16.gmra.mxu0 %v915
      %v4735 = vpop.f32.mrf.mxu0
      %v4736 = vadd.f32 0.0, %v4735
      %v4737 = vpop.f32.mrf.mxu0
      %v4738 = vadd.f32 0.0, %v4737
      %4739 = vmatmul.bf16.gmra.mxu0 %v918
      %v4740 = vpop.f32.mrf.mxu0
      %v4741 = vadd.f32 0.0, %v4740
      %v4742 = vpop.f32.mrf.mxu0
      %v4743 = vadd.f32 0.0, %v4742
      %4744 = vmatmul.bf16.gmra.mxu0 %v921
      %v4745 = vpop.f32.mrf.mxu0
      %v4746 = vadd.f32 0.0, %v4745
      %v4747 = vpop.f32.mrf.mxu0
      %v4748 = vadd.f32 0.0, %v4747
      %4749 = vdwg.mxu0
      %4758 = vrot.lane.b32.xlu0 %v4691, 64
      %v4759 = vpop.permute.xlu0 %4758
      %4760 = vrot.lane.b32.xlu0 %v4693, 64
      %v4761 = vpop.permute.xlu0 %4760
      %4762 = vrot.lane.b32.xlu0 %v4696, 64
      %v4763 = vpop.permute.xlu0 %4762
      %4764 = vrot.lane.b32.xlu0 %v4698, 64
      %v4765 = vpop.permute.xlu0 %4764
      %4766 = vrot.lane.b32.xlu0 %v4701, 64
      %v4767 = vpop.permute.xlu0 %4766
      %4768 = vrot.lane.b32.xlu0 %v4703, 64
      %v4769 = vpop.permute.xlu0 %4768
      %4770 = vrot.lane.b32.xlu0 %v4706, 64
      %v4771 = vpop.permute.xlu0 %4770
      %4772 = vrot.lane.b32.xlu0 %v4708, 64
      %v4773 = vpop.permute.xlu0 %4772
      %v4782 = vadd.f32 %v758, %v4759
      %v4783 = vadd.f32 %v760, %v4761
      %v4784 = vadd.f32 %v763, %v4763
      %v4785 = vadd.f32 %v765, %v4765
      %v4786 = vadd.f32 %v768, %v4767
      %v4787 = vadd.f32 %v770, %v4769
      %v4788 = vadd.f32 %v773, %v4771
      %v4789 = vadd.f32 %v775, %v4773
      %v4790 = vxor.u32 %v4782, 2147483648
      %v4791 = vxor.u32 %v4783, 2147483648
      %v4792 = vxor.u32 %v4784, 2147483648
      %v4793 = vxor.u32 %v4785, 2147483648
      %v4794 = vxor.u32 %v4786, 2147483648
      %v4795 = vxor.u32 %v4787, 2147483648
      %v4796 = vxor.u32 %v4788, 2147483648
      %v4797 = vxor.u32 %v4789, 2147483648
      %v4798 = vmul.f32 %v4790, 1.442695
      %v4799 = vpow.pop %v4798
      %v4800 = vmul.f32 %v4791, 1.442695
      %v4801 = vpow.pop %v4800
      %v4802 = vmul.f32 %v4792, 1.442695
      %v4803 = vpow.pop %v4802
      %v4804 = vmul.f32 %v4793, 1.442695
      %v4805 = vpow.pop %v4804
      %v4806 = vmul.f32 %v4794, 1.442695
      %v4807 = vpow.pop %v4806
      %v4808 = vmul.f32 %v4795, 1.442695
      %v4809 = vpow.pop %v4808
      %v4810 = vmul.f32 %v4796, 1.442695
      %v4811 = vpow.pop %v4810
      %v4812 = vmul.f32 %v4797, 1.442695
      %v4813 = vpow.pop %v4812
      %v4814 = vadd.f32 %v4799, 1.0
      %v4815 = vadd.f32 %v4801, 1.0
      %v4816 = vadd.f32 %v4803, 1.0
      %v4817 = vadd.f32 %v4805, 1.0
      %v4818 = vadd.f32 %v4807, 1.0
      %v4819 = vadd.f32 %v4809, 1.0
      %v4820 = vadd.f32 %v4811, 1.0
      %v4821 = vadd.f32 %v4813, 1.0
      %v4822 = vrcp.pop %v4814
      %v4823 = vmul.f32 %v4814, %v4822
      %v4824 = vsub.f32 1.0, %v4823
      %v4825 = vmul.f32 %v4822, %v4824
      %v4826 = vadd.f32 %v4822, %v4825
      %vm4827 = vweird.f32 %v4814
      %vm4828 = vweird.f32 %v4822
      %vm4829 = vmor %vm4827, %vm4828
      %v4830 = vsel %vm4829, %v4822, %v4826
      %v4831 = vand.u32 2147483647, %v4814
      %vm4832 = vcmp.eq.f32.partialorder %v4831, 8.507059e+37
      %v4833 = vand.u32 %v4814, 2147483648
      %v4834 = vor.u32 1.1754944e-38, %v4833
      %v4835 = vsel %vm4832, %v4834, %v4830
      %v4836 = vmul.f32 1.0, %v4835
      %v4837 = vrcp.pop %v4815
      %v4838 = vmul.f32 %v4815, %v4837
      %v4839 = vsub.f32 1.0, %v4838
      %v4840 = vmul.f32 %v4837, %v4839
      %v4841 = vadd.f32 %v4837, %v4840
      %vm4842 = vweird.f32 %v4815
      %vm4843 = vweird.f32 %v4837
      %vm4844 = vmor %vm4842, %vm4843
      %v4845 = vsel %vm4844, %v4837, %v4841
      %v4846 = vand.u32 2147483647, %v4815
      %vm4847 = vcmp.eq.f32.partialorder %v4846, 8.507059e+37
      %v4848 = vand.u32 %v4815, 2147483648
      %v4849 = vor.u32 1.1754944e-38, %v4848
      %v4850 = vsel %vm4847, %v4849, %v4845
      %v4851 = vmul.f32 1.0, %v4850
      %v4852 = vrcp.pop %v4816
      %v4853 = vmul.f32 %v4816, %v4852
      %v4854 = vsub.f32 1.0, %v4853
      %v4855 = vmul.f32 %v4852, %v4854
      %v4856 = vadd.f32 %v4852, %v4855
      %vm4857 = vweird.f32 %v4816
      %vm4858 = vweird.f32 %v4852
      %vm4859 = vmor %vm4857, %vm4858
      %v4860 = vsel %vm4859, %v4852, %v4856
      %v4861 = vand.u32 2147483647, %v4816
      %vm4862 = vcmp.eq.f32.partialorder %v4861, 8.507059e+37
      %v4863 = vand.u32 %v4816, 2147483648
      %v4864 = vor.u32 1.1754944e-38, %v4863
      %v4865 = vsel %vm4862, %v4864, %v4860
      %v4866 = vmul.f32 1.0, %v4865
      %v4867 = vrcp.pop %v4817
      %v4868 = vmul.f32 %v4817, %v4867
      %v4869 = vsub.f32 1.0, %v4868
      %v4870 = vmul.f32 %v4867, %v4869
      %v4871 = vadd.f32 %v4867, %v4870
      %vm4872 = vweird.f32 %v4817
      %vm4873 = vweird.f32 %v4867
      %vm4874 = vmor %vm4872, %vm4873
      %v4875 = vsel %vm4874, %v4867, %v4871
      %v4876 = vand.u32 2147483647, %v4817
      %vm4877 = vcmp.eq.f32.partialorder %v4876, 8.507059e+37
      %v4878 = vand.u32 %v4817, 2147483648
      %v4879 = vor.u32 1.1754944e-38, %v4878
      %v4880 = vsel %vm4877, %v4879, %v4875
      %v4881 = vmul.f32 1.0, %v4880
      %v4882 = vrcp.pop %v4818
      %v4883 = vmul.f32 %v4818, %v4882
      %v4884 = vsub.f32 1.0, %v4883
      %v4885 = vmul.f32 %v4882, %v4884
      %v4886 = vadd.f32 %v4882, %v4885
      %vm4887 = vweird.f32 %v4818
      %vm4888 = vweird.f32 %v4882
      %vm4889 = vmor %vm4887, %vm4888
      %v4890 = vsel %vm4889, %v4882, %v4886
      %v4891 = vand.u32 2147483647, %v4818
      %vm4892 = vcmp.eq.f32.partialorder %v4891, 8.507059e+37
      %v4893 = vand.u32 %v4818, 2147483648
      %v4894 = vor.u32 1.1754944e-38, %v4893
      %v4895 = vsel %vm4892, %v4894, %v4890
      %v4896 = vmul.f32 1.0, %v4895
      %v4897 = vrcp.pop %v4819
      %v4898 = vmul.f32 %v4819, %v4897
      %v4899 = vsub.f32 1.0, %v4898
      %v4900 = vmul.f32 %v4897, %v4899
      %v4901 = vadd.f32 %v4897, %v4900
      %vm4902 = vweird.f32 %v4819
      %vm4903 = vweird.f32 %v4897
      %vm4904 = vmor %vm4902, %vm4903
      %v4905 = vsel %vm4904, %v4897, %v4901
      %v4906 = vand.u32 2147483647, %v4819
      %vm4907 = vcmp.eq.f32.partialorder %v4906, 8.507059e+37
      %v4908 = vand.u32 %v4819, 2147483648
      %v4909 = vor.u32 1.1754944e-38, %v4908
      %v4910 = vsel %vm4907, %v4909, %v4905
      %v4911 = vmul.f32 1.0, %v4910
      %v4912 = vrcp.pop %v4820
      %v4913 = vmul.f32 %v4820, %v4912
      %v4914 = vsub.f32 1.0, %v4913
      %v4915 = vmul.f32 %v4912, %v4914
      %v4916 = vadd.f32 %v4912, %v4915
      %vm4917 = vweird.f32 %v4820
      %vm4918 = vweird.f32 %v4912
      %vm4919 = vmor %vm4917, %vm4918
      %v4920 = vsel %vm4919, %v4912, %v4916
      %v4921 = vand.u32 2147483647, %v4820
      %vm4922 = vcmp.eq.f32.partialorder %v4921, 8.507059e+37
      %v4923 = vand.u32 %v4820, 2147483648
      %v4924 = vor.u32 1.1754944e-38, %v4923
      %v4925 = vsel %vm4922, %v4924, %v4920
      %v4926 = vmul.f32 1.0, %v4925
      %v4927 = vrcp.pop %v4821
      %v4928 = vmul.f32 %v4821, %v4927
      %v4929 = vsub.f32 1.0, %v4928
      %v4930 = vmul.f32 %v4927, %v4929
      %v4931 = vadd.f32 %v4927, %v4930
      %vm4932 = vweird.f32 %v4821
      %vm4933 = vweird.f32 %v4927
      %vm4934 = vmor %vm4932, %vm4933
      %v4935 = vsel %vm4934, %v4927, %v4931
      %v4936 = vand.u32 2147483647, %v4821
      %vm4937 = vcmp.eq.f32.partialorder %v4936, 8.507059e+37
      %v4938 = vand.u32 %v4821, 2147483648
      %v4939 = vor.u32 1.1754944e-38, %v4938
      %v4940 = vsel %vm4937, %v4939, %v4935
      %v4941 = vmul.f32 1.0, %v4940
      %v4942 = vadd.f32 %v4711, %v1155
      %v4943 = vadd.f32 %v4713, %v1160
      %v4944 = vadd.f32 %v4716, %v1165
      %v4945 = vadd.f32 %v4718, %v1170
      %4950 = vrot.lane.b32.xlu0 %v4942, 64
      %v4951 = vpop.permute.xlu0 %4950
      %4952 = vrot.lane.b32.xlu0 %v4943, 64
      %v4953 = vpop.permute.xlu0 %4952
      %4954 = vrot.lane.b32.xlu0 %v4944, 64
      %v4955 = vpop.permute.xlu0 %4954
      %4956 = vrot.lane.b32.xlu0 %v4945, 64
      %v4957 = vpop.permute.xlu0 %4956
      %v4962 = vmul.f32 %v4836, %v4951
      %v4963 = vmul.f32 %v4851, %v4953
      %v4964 = vmul.f32 %v4866, %v4955
      %v4965 = vmul.f32 %v4881, %v4957
      %v4966 = vadd.f32 %v778, %v4962
      %v4967 = vadd.f32 %v780, %v4963
      %v4968 = vadd.f32 %v783, %v4964
      %v4969 = vadd.f32 %v785, %v4965
      %v4970 = vtanh.pop %v4966
      %v4971 = vtanh.pop %v4967
      %v4972 = vtanh.pop %v4968
      %v4973 = vtanh.pop %v4969
      %v4974 = vsub.f32 1.0, %v4896
      %v4975 = vsub.f32 1.0, %v4911
      %v4976 = vsub.f32 1.0, %v4926
      %v4977 = vsub.f32 1.0, %v4941
      %v4978 = vmul.f32 %v4974, %v4970
      %v4979 = vmul.f32 %v4975, %v4971
      %v4980 = vmul.f32 %v4976, %v4972
      %v4981 = vmul.f32 %v4977, %v4973
      %4986 = vrot.lane.b32.xlu0 %v4661, 64
      %v4987 = vpop.permute.xlu0 %4986
      %4988 = vrot.lane.b32.xlu0 %v4662, 64
      %v4989 = vpop.permute.xlu0 %4988
      %4990 = vrot.lane.b32.xlu0 %v4663, 64
      %v4991 = vpop.permute.xlu0 %4990
      %4992 = vrot.lane.b32.xlu0 %v4664, 64
      %v4993 = vpop.permute.xlu0 %4992
      %v4998 = vmul.f32 %v4896, %v4987
      %v4999 = vmul.f32 %v4911, %v4989
      %v5000 = vmul.f32 %v4926, %v4991
      %v5001 = vmul.f32 %v4941, %v4993
      %v5002 = vadd.f32 %v4978, %v4998
      %v5003 = vadd.f32 %v4979, %v4999
      %v5004 = vadd.f32 %v4980, %v5000
      %v5005 = vadd.f32 %v4981, %v5001
      %v5006 = vpack.c.bf16 %v5003, %v5002
      %v5007 = vpack.c.bf16 %v5005, %v5004
      %5010 = vrot.lane.b32.xlu0 %v5006, 64
      %v5011 = vpop.permute.xlu0 %5010
      %5012 = vrot.lane.b32.xlu0 %v5007, 64
      %v5013 = vpop.permute.xlu0 %5012
      %5016 = vmatpush.bf16.msra.mxu0 0
      %5017 = vmatpush.bf16.msra.mxu0 0
      %5018 = vmatpush.bf16.msra.mxu0 0
      %5019 = vmatpush.bf16.msra.mxu0 0
      %5020 = vmatpush.bf16.msra.mxu0 0
      %5021 = vmatpush.bf16.msra.mxu0 0
      %5022 = vmatpush.bf16.msra.mxu0 %v5013
      %5023 = vmatpush.bf16.msra.mxu0 %v5011
      %5024 = vmatmul.bf16.gmra.mxu0 %v1238
      %v5025 = vpop.f32.mrf.mxu0
      %v5026 = vadd.f32 0.0, %v5025
      %v5027 = vpop.f32.mrf.mxu0
      %v5028 = vadd.f32 0.0, %v5027
      %5029 = vmatmul.bf16.gmra.mxu0 %v1241
      %v5030 = vpop.f32.mrf.mxu0
      %v5031 = vadd.f32 0.0, %v5030
      %v5032 = vpop.f32.mrf.mxu0
      %v5033 = vadd.f32 0.0, %v5032
      %5034 = vmatmul.bf16.gmra.mxu0 %v1244
      %v5035 = vpop.f32.mrf.mxu0
      %v5036 = vadd.f32 0.0, %v5035
      %v5037 = vpop.f32.mrf.mxu0
      %v5038 = vadd.f32 0.0, %v5037
      %5039 = vmatmul.bf16.gmra.mxu0 %v1247
      %v5040 = vpop.f32.mrf.mxu0
      %v5041 = vadd.f32 0.0, %v5040
      %v5042 = vpop.f32.mrf.mxu0
      %v5043 = vadd.f32 0.0, %v5042
      %5044 = vmatmul.bf16.gmra.mxu0 %v1250
      %v5045 = vpop.f32.mrf.mxu0
      %v5046 = vadd.f32 0.0, %v5045
      %v5047 = vpop.f32.mrf.mxu0
      %v5048 = vadd.f32 0.0, %v5047
      %5049 = vmatmul.bf16.gmra.mxu0 %v1253
      %v5050 = vpop.f32.mrf.mxu0
      %v5051 = vadd.f32 0.0, %v5050
      %v5052 = vpop.f32.mrf.mxu0
      %v5053 = vadd.f32 0.0, %v5052
      %5054 = vdwg.mxu0
      %v5055 = vadd.f32 %v5026, %v4721
      %v5056 = vadd.f32 %v5028, %v4723
      %v5057 = vadd.f32 %v5031, %v4726
      %v5058 = vadd.f32 %v5033, %v4728
      %v5059 = vadd.f32 %v5036, %v4731
      %v5060 = vadd.f32 %v5038, %v4733
      %v5061 = vadd.f32 %v5041, %v4736
      %v5062 = vadd.f32 %v5043, %v4738
      %v5063 = vadd.f32 %v5055, %v1305
      %v5064 = vadd.f32 %v5056, %v1310
      %v5065 = vadd.f32 %v5057, %v1315
      %v5066 = vadd.f32 %v5058, %v1320
      %v5067 = vadd.f32 %v5059, %v1325
      %v5068 = vadd.f32 %v5060, %v1330
      %v5069 = vadd.f32 %v5061, %v1335
      %v5070 = vadd.f32 %v5062, %v1340
      %v5071 = vxor.u32 %v5063, 2147483648
      %v5072 = vxor.u32 %v5064, 2147483648
      %v5073 = vxor.u32 %v5065, 2147483648
      %v5074 = vxor.u32 %v5066, 2147483648
      %v5075 = vxor.u32 %v5067, 2147483648
      %v5076 = vxor.u32 %v5068, 2147483648
      %v5077 = vxor.u32 %v5069, 2147483648
      %v5078 = vxor.u32 %v5070, 2147483648
      %v5079 = vmul.f32 %v5071, 1.442695
      %v5080 = vpow.pop %v5079
      %v5081 = vmul.f32 %v5072, 1.442695
      %v5082 = vpow.pop %v5081
      %v5083 = vmul.f32 %v5073, 1.442695
      %v5084 = vpow.pop %v5083
      %v5085 = vmul.f32 %v5074, 1.442695
      %v5086 = vpow.pop %v5085
      %v5087 = vmul.f32 %v5075, 1.442695
      %v5088 = vpow.pop %v5087
      %v5089 = vmul.f32 %v5076, 1.442695
      %v5090 = vpow.pop %v5089
      %v5091 = vmul.f32 %v5077, 1.442695
      %v5092 = vpow.pop %v5091
      %v5093 = vmul.f32 %v5078, 1.442695
      %v5094 = vpow.pop %v5093
      %v5095 = vadd.f32 %v5080, 1.0
      %v5096 = vadd.f32 %v5082, 1.0
      %v5097 = vadd.f32 %v5084, 1.0
      %v5098 = vadd.f32 %v5086, 1.0
      %v5099 = vadd.f32 %v5088, 1.0
      %v5100 = vadd.f32 %v5090, 1.0
      %v5101 = vadd.f32 %v5092, 1.0
      %v5102 = vadd.f32 %v5094, 1.0
      %v5103 = vrcp.pop %v5095
      %v5104 = vmul.f32 %v5095, %v5103
      %v5105 = vsub.f32 1.0, %v5104
      %v5106 = vmul.f32 %v5103, %v5105
      %v5107 = vadd.f32 %v5103, %v5106
      %vm5108 = vweird.f32 %v5095
      %vm5109 = vweird.f32 %v5103
      %vm5110 = vmor %vm5108, %vm5109
      %v5111 = vsel %vm5110, %v5103, %v5107
      %v5112 = vand.u32 2147483647, %v5095
      %vm5113 = vcmp.eq.f32.partialorder %v5112, 8.507059e+37
      %v5114 = vand.u32 %v5095, 2147483648
      %v5115 = vor.u32 1.1754944e-38, %v5114
      %v5116 = vsel %vm5113, %v5115, %v5111
      %v5117 = vmul.f32 1.0, %v5116
      %v5118 = vrcp.pop %v5096
      %v5119 = vmul.f32 %v5096, %v5118
      %v5120 = vsub.f32 1.0, %v5119
      %v5121 = vmul.f32 %v5118, %v5120
      %v5122 = vadd.f32 %v5118, %v5121
      %vm5123 = vweird.f32 %v5096
      %vm5124 = vweird.f32 %v5118
      %vm5125 = vmor %vm5123, %vm5124
      %v5126 = vsel %vm5125, %v5118, %v5122
      %v5127 = vand.u32 2147483647, %v5096
      %vm5128 = vcmp.eq.f32.partialorder %v5127, 8.507059e+37
      %v5129 = vand.u32 %v5096, 2147483648
      %v5130 = vor.u32 1.1754944e-38, %v5129
      %v5131 = vsel %vm5128, %v5130, %v5126
      %v5132 = vmul.f32 1.0, %v5131
      %v5133 = vrcp.pop %v5097
      %v5134 = vmul.f32 %v5097, %v5133
      %v5135 = vsub.f32 1.0, %v5134
      %v5136 = vmul.f32 %v5133, %v5135
      %v5137 = vadd.f32 %v5133, %v5136
      %vm5138 = vweird.f32 %v5097
      %vm5139 = vweird.f32 %v5133
      %vm5140 = vmor %vm5138, %vm5139
      %v5141 = vsel %vm5140, %v5133, %v5137
      %v5142 = vand.u32 2147483647, %v5097
      %vm5143 = vcmp.eq.f32.partialorder %v5142, 8.507059e+37
      %v5144 = vand.u32 %v5097, 2147483648
      %v5145 = vor.u32 1.1754944e-38, %v5144
      %v5146 = vsel %vm5143, %v5145, %v5141
      %v5147 = vmul.f32 1.0, %v5146
      %v5148 = vrcp.pop %v5098
      %v5149 = vmul.f32 %v5098, %v5148
      %v5150 = vsub.f32 1.0, %v5149
      %v5151 = vmul.f32 %v5148, %v5150
      %v5152 = vadd.f32 %v5148, %v5151
      %vm5153 = vweird.f32 %v5098
      %vm5154 = vweird.f32 %v5148
      %vm5155 = vmor %vm5153, %vm5154
      %v5156 = vsel %vm5155, %v5148, %v5152
      %v5157 = vand.u32 2147483647, %v5098
      %vm5158 = vcmp.eq.f32.partialorder %v5157, 8.507059e+37
      %v5159 = vand.u32 %v5098, 2147483648
      %v5160 = vor.u32 1.1754944e-38, %v5159
      %v5161 = vsel %vm5158, %v5160, %v5156
      %v5162 = vmul.f32 1.0, %v5161
      %v5163 = vrcp.pop %v5099
      %v5164 = vmul.f32 %v5099, %v5163
      %v5165 = vsub.f32 1.0, %v5164
      %v5166 = vmul.f32 %v5163, %v5165
      %v5167 = vadd.f32 %v5163, %v5166
      %vm5168 = vweird.f32 %v5099
      %vm5169 = vweird.f32 %v5163
      %vm5170 = vmor %vm5168, %vm5169
      %v5171 = vsel %vm5170, %v5163, %v5167
      %v5172 = vand.u32 2147483647, %v5099
      %vm5173 = vcmp.eq.f32.partialorder %v5172, 8.507059e+37
      %v5174 = vand.u32 %v5099, 2147483648
      %v5175 = vor.u32 1.1754944e-38, %v5174
      %v5176 = vsel %vm5173, %v5175, %v5171
      %v5177 = vmul.f32 1.0, %v5176
      %v5178 = vrcp.pop %v5100
      %v5179 = vmul.f32 %v5100, %v5178
      %v5180 = vsub.f32 1.0, %v5179
      %v5181 = vmul.f32 %v5178, %v5180
      %v5182 = vadd.f32 %v5178, %v5181
      %vm5183 = vweird.f32 %v5100
      %vm5184 = vweird.f32 %v5178
      %vm5185 = vmor %vm5183, %vm5184
      %v5186 = vsel %vm5185, %v5178, %v5182
      %v5187 = vand.u32 2147483647, %v5100
      %vm5188 = vcmp.eq.f32.partialorder %v5187, 8.507059e+37
      %v5189 = vand.u32 %v5100, 2147483648
      %v5190 = vor.u32 1.1754944e-38, %v5189
      %v5191 = vsel %vm5188, %v5190, %v5186
      %v5192 = vmul.f32 1.0, %v5191
      %v5193 = vrcp.pop %v5101
      %v5194 = vmul.f32 %v5101, %v5193
      %v5195 = vsub.f32 1.0, %v5194
      %v5196 = vmul.f32 %v5193, %v5195
      %v5197 = vadd.f32 %v5193, %v5196
      %vm5198 = vweird.f32 %v5101
      %vm5199 = vweird.f32 %v5193
      %vm5200 = vmor %vm5198, %vm5199
      %v5201 = vsel %vm5200, %v5193, %v5197
      %v5202 = vand.u32 2147483647, %v5101
      %vm5203 = vcmp.eq.f32.partialorder %v5202, 8.507059e+37
      %v5204 = vand.u32 %v5101, 2147483648
      %v5205 = vor.u32 1.1754944e-38, %v5204
      %v5206 = vsel %vm5203, %v5205, %v5201
      %v5207 = vmul.f32 1.0, %v5206
      %v5208 = vrcp.pop %v5102
      %v5209 = vmul.f32 %v5102, %v5208
      %v5210 = vsub.f32 1.0, %v5209
      %v5211 = vmul.f32 %v5208, %v5210
      %v5212 = vadd.f32 %v5208, %v5211
      %vm5213 = vweird.f32 %v5102
      %vm5214 = vweird.f32 %v5208
      %vm5215 = vmor %vm5213, %vm5214
      %v5216 = vsel %vm5215, %v5208, %v5212
      %v5217 = vand.u32 2147483647, %v5102
      %vm5218 = vcmp.eq.f32.partialorder %v5217, 8.507059e+37
      %v5219 = vand.u32 %v5102, 2147483648
      %v5220 = vor.u32 1.1754944e-38, %v5219
      %v5221 = vsel %vm5218, %v5220, %v5216
      %v5222 = vmul.f32 1.0, %v5221
      %v5223 = vadd.f32 %v5046, %v1505
      %v5224 = vadd.f32 %v5048, %v1510
      %v5225 = vadd.f32 %v5051, %v1515
      %v5226 = vadd.f32 %v5053, %v1520
      %v5227 = vadd.f32 %v4741, %v1529
      %v5228 = vadd.f32 %v4743, %v1534
      %v5229 = vadd.f32 %v4746, %v1539
      %v5230 = vadd.f32 %v4748, %v1544
      %v5231 = vmul.f32 %v5117, %v5227
      %v5232 = vmul.f32 %v5132, %v5228
      %v5233 = vmul.f32 %v5147, %v5229
      %v5234 = vmul.f32 %v5162, %v5230
      %v5235 = vadd.f32 %v5223, %v5231
      %v5236 = vadd.f32 %v5224, %v5232
      %v5237 = vadd.f32 %v5225, %v5233
      %v5238 = vadd.f32 %v5226, %v5234
      %v5239 = vtanh.pop %v5235
      %v5240 = vtanh.pop %v5236
      %v5241 = vtanh.pop %v5237
      %v5242 = vtanh.pop %v5238
      %v5243 = vsub.f32 1.0, %v5177
      %v5244 = vsub.f32 1.0, %v5192
      %v5245 = vsub.f32 1.0, %v5207
      %v5246 = vsub.f32 1.0, %v5222
      %v5247 = vmul.f32 %v5243, %v5239
      %v5248 = vmul.f32 %v5244, %v5240
      %v5249 = vmul.f32 %v5245, %v5241
      %v5250 = vmul.f32 %v5246, %v5242
      %v5251 = vmul.f32 %v5177, %v4673
      %v5252 = vmul.f32 %v5192, %v4674
      %v5253 = vmul.f32 %v5207, %v4675
      %v5254 = vmul.f32 %v5222, %v4676
      %v5255 = vadd.f32 %v5247, %v5251
      %v5256 = vadd.f32 %v5248, %v5252
      %v5257 = vadd.f32 %v5249, %v5253
      %v5258 = vadd.f32 %v5250, %v5254
      %vm5259 = vcmp.gt.s32.totalorder %v423, 6
      %v5260 = vsel %vm5259, 1, 0
      %v5261 = vcvt.s32.f32 %v5260
      %v5263 = vperm.slane %v5261, 0
      %5269 = vrot.lane.b32.xlu0 %v5002, 64
      %v5270 = vpop.permute.xlu0 %5269
      %5271 = vrot.lane.b32.xlu0 %v5003, 64
      %v5272 = vpop.permute.xlu0 %5271
      %5273 = vrot.lane.b32.xlu0 %v5004, 64
      %v5274 = vpop.permute.xlu0 %5273
      %5275 = vrot.lane.b32.xlu0 %v5005, 64
      %v5276 = vpop.permute.xlu0 %5275
      %v5281 = vmul.f32 %v5263, %v5270
      %v5282 = vmul.f32 %v5263, %v5272
      %v5283 = vmul.f32 %v5263, %v5274
      %v5284 = vmul.f32 %v5263, %v5276
      %v5285 = vsub.f32 1.0, %v5261
      %v5287 = vperm.slane %v5285, 0
      %v5289 = vmul.f32 %v5287, %v4661
      %v5290 = vmul.f32 %v5287, %v4662
      %v5291 = vmul.f32 %v5287, %v4663
      %v5292 = vmul.f32 %v5287, %v4664
      %v5293 = vadd.f32 %v5281, %v5289
      %v5294 = vadd.f32 %v5282, %v5290
      %v5295 = vadd.f32 %v5283, %v5291
      %v5296 = vadd.f32 %v5284, %v5292
      %v5297 = vmul.f32 %v5263, %v5255
      %v5298 = vmul.f32 %v5263, %v5256
      %v5299 = vmul.f32 %v5263, %v5257
      %v5300 = vmul.f32 %v5263, %v5258
      %v5301 = vmul.f32 %v5287, %v4673
      %v5302 = vmul.f32 %v5287, %v4674
      %v5303 = vmul.f32 %v5287, %v4675
      %v5304 = vmul.f32 %v5287, %v4676
      %v5305 = vadd.f32 %v5297, %v5301
      %v5306 = vadd.f32 %v5298, %v5302
      %v5307 = vadd.f32 %v5299, %v5303
      %v5308 = vadd.f32 %v5300, %v5304
      %v5309 = vpack.c.bf16 %v5294, %v5293
      %v5310 = vpack.c.bf16 %v5296, %v5295
      %v5311 = vpack.c.bf16 %v5306, %v5305
      %v5312 = vpack.c.bf16 %v5308, %v5307
      %5313 = vmatpush.bf16.msra.mxu0 0
      %5314 = vmatpush.bf16.msra.mxu0 0
      %5315 = vmatpush.bf16.msra.mxu0 0
      %5316 = vmatpush.bf16.msra.mxu0 0
      %5317 = vmatpush.bf16.msra.mxu0 %v5312
      %5318 = vmatpush.bf16.msra.mxu0 %v5311
      %5319 = vmatpush.bf16.msra.mxu0 %v5310
      %5320 = vmatpush.bf16.msra.mxu0 %v5309
      %5321 = vmatmul.bf16.gmra.mxu0 %v888
      %v5322 = vpop.f32.mrf.mxu0
      %v5323 = vadd.f32 0.0, %v5322
      %v5324 = vpop.f32.mrf.mxu0
      %v5325 = vadd.f32 0.0, %v5324
      %5326 = vmatmul.bf16.gmra.mxu0 %v891
      %v5327 = vpop.f32.mrf.mxu0
      %v5328 = vadd.f32 0.0, %v5327
      %v5329 = vpop.f32.mrf.mxu0
      %v5330 = vadd.f32 0.0, %v5329
      %5331 = vmatmul.bf16.gmra.mxu0 %v894
      %v5332 = vpop.f32.mrf.mxu0
      %v5333 = vadd.f32 0.0, %v5332
      %v5334 = vpop.f32.mrf.mxu0
      %v5335 = vadd.f32 0.0, %v5334
      %5336 = vmatmul.bf16.gmra.mxu0 %v897
      %v5337 = vpop.f32.mrf.mxu0
      %v5338 = vadd.f32 0.0, %v5337
      %v5339 = vpop.f32.mrf.mxu0
      %v5340 = vadd.f32 0.0, %v5339
      %5341 = vmatmul.bf16.gmra.mxu0 %v900
      %v5342 = vpop.f32.mrf.mxu0
      %v5343 = vadd.f32 0.0, %v5342
      %v5344 = vpop.f32.mrf.mxu0
      %v5345 = vadd.f32 0.0, %v5344
      %5346 = vmatmul.bf16.gmra.mxu0 %v903
      %v5347 = vpop.f32.mrf.mxu0
      %v5348 = vadd.f32 0.0, %v5347
      %v5349 = vpop.f32.mrf.mxu0
      %v5350 = vadd.f32 0.0, %v5349
      %5351 = vmatmul.bf16.gmra.mxu0 %v906
      %v5352 = vpop.f32.mrf.mxu0
      %v5353 = vadd.f32 0.0, %v5352
      %v5354 = vpop.f32.mrf.mxu0
      %v5355 = vadd.f32 0.0, %v5354
      %5356 = vmatmul.bf16.gmra.mxu0 %v909
      %v5357 = vpop.f32.mrf.mxu0
      %v5358 = vadd.f32 0.0, %v5357
      %v5359 = vpop.f32.mrf.mxu0
      %v5360 = vadd.f32 0.0, %v5359
      %5361 = vmatmul.bf16.gmra.mxu0 %v912
      %v5362 = vpop.f32.mrf.mxu0
      %v5363 = vadd.f32 0.0, %v5362
      %v5364 = vpop.f32.mrf.mxu0
      %v5365 = vadd.f32 0.0, %v5364
      %5366 = vmatmul.bf16.gmra.mxu0 %v915
      %v5367 = vpop.f32.mrf.mxu0
      %v5368 = vadd.f32 0.0, %v5367
      %v5369 = vpop.f32.mrf.mxu0
      %v5370 = vadd.f32 0.0, %v5369
      %5371 = vmatmul.bf16.gmra.mxu0 %v918
      %v5372 = vpop.f32.mrf.mxu0
      %v5373 = vadd.f32 0.0, %v5372
      %v5374 = vpop.f32.mrf.mxu0
      %v5375 = vadd.f32 0.0, %v5374
      %5376 = vmatmul.bf16.gmra.mxu0 %v921
      %v5377 = vpop.f32.mrf.mxu0
      %v5378 = vadd.f32 0.0, %v5377
      %v5379 = vpop.f32.mrf.mxu0
      %v5380 = vadd.f32 0.0, %v5379
      %5381 = vdwg.mxu0
      %5390 = vrot.lane.b32.xlu0 %v5323, 96
      %v5391 = vpop.permute.xlu0 %5390
      %5392 = vrot.lane.b32.xlu0 %v5325, 96
      %v5393 = vpop.permute.xlu0 %5392
      %5394 = vrot.lane.b32.xlu0 %v5328, 96
      %v5395 = vpop.permute.xlu0 %5394
      %5396 = vrot.lane.b32.xlu0 %v5330, 96
      %v5397 = vpop.permute.xlu0 %5396
      %5398 = vrot.lane.b32.xlu0 %v5333, 96
      %v5399 = vpop.permute.xlu0 %5398
      %5400 = vrot.lane.b32.xlu0 %v5335, 96
      %v5401 = vpop.permute.xlu0 %5400
      %5402 = vrot.lane.b32.xlu0 %v5338, 96
      %v5403 = vpop.permute.xlu0 %5402
      %5404 = vrot.lane.b32.xlu0 %v5340, 96
      %v5405 = vpop.permute.xlu0 %5404
      %v5414 = vadd.f32 %v758, %v5391
      %v5415 = vadd.f32 %v760, %v5393
      %v5416 = vadd.f32 %v763, %v5395
      %v5417 = vadd.f32 %v765, %v5397
      %v5418 = vadd.f32 %v768, %v5399
      %v5419 = vadd.f32 %v770, %v5401
      %v5420 = vadd.f32 %v773, %v5403
      %v5421 = vadd.f32 %v775, %v5405
      %v5422 = vxor.u32 %v5414, 2147483648
      %v5423 = vxor.u32 %v5415, 2147483648
      %v5424 = vxor.u32 %v5416, 2147483648
      %v5425 = vxor.u32 %v5417, 2147483648
      %v5426 = vxor.u32 %v5418, 2147483648
      %v5427 = vxor.u32 %v5419, 2147483648
      %v5428 = vxor.u32 %v5420, 2147483648
      %v5429 = vxor.u32 %v5421, 2147483648
      %v5430 = vmul.f32 %v5422, 1.442695
      %v5431 = vpow.pop %v5430
      %v5432 = vmul.f32 %v5423, 1.442695
      %v5433 = vpow.pop %v5432
      %v5434 = vmul.f32 %v5424, 1.442695
      %v5435 = vpow.pop %v5434
      %v5436 = vmul.f32 %v5425, 1.442695
      %v5437 = vpow.pop %v5436
      %v5438 = vmul.f32 %v5426, 1.442695
      %v5439 = vpow.pop %v5438
      %v5440 = vmul.f32 %v5427, 1.442695
      %v5441 = vpow.pop %v5440
      %v5442 = vmul.f32 %v5428, 1.442695
      %v5443 = vpow.pop %v5442
      %v5444 = vmul.f32 %v5429, 1.442695
      %v5445 = vpow.pop %v5444
      %v5446 = vadd.f32 %v5431, 1.0
      %v5447 = vadd.f32 %v5433, 1.0
      %v5448 = vadd.f32 %v5435, 1.0
      %v5449 = vadd.f32 %v5437, 1.0
      %v5450 = vadd.f32 %v5439, 1.0
      %v5451 = vadd.f32 %v5441, 1.0
      %v5452 = vadd.f32 %v5443, 1.0
      %v5453 = vadd.f32 %v5445, 1.0
      %v5454 = vrcp.pop %v5446
      %v5455 = vmul.f32 %v5446, %v5454
      %v5456 = vsub.f32 1.0, %v5455
      %v5457 = vmul.f32 %v5454, %v5456
      %v5458 = vadd.f32 %v5454, %v5457
      %vm5459 = vweird.f32 %v5446
      %vm5460 = vweird.f32 %v5454
      %vm5461 = vmor %vm5459, %vm5460
      %v5462 = vsel %vm5461, %v5454, %v5458
      %v5463 = vand.u32 2147483647, %v5446
      %vm5464 = vcmp.eq.f32.partialorder %v5463, 8.507059e+37
      %v5465 = vand.u32 %v5446, 2147483648
      %v5466 = vor.u32 1.1754944e-38, %v5465
      %v5467 = vsel %vm5464, %v5466, %v5462
      %v5468 = vmul.f32 1.0, %v5467
      %v5469 = vrcp.pop %v5447
      %v5470 = vmul.f32 %v5447, %v5469
      %v5471 = vsub.f32 1.0, %v5470
      %v5472 = vmul.f32 %v5469, %v5471
      %v5473 = vadd.f32 %v5469, %v5472
      %vm5474 = vweird.f32 %v5447
      %vm5475 = vweird.f32 %v5469
      %vm5476 = vmor %vm5474, %vm5475
      %v5477 = vsel %vm5476, %v5469, %v5473
      %v5478 = vand.u32 2147483647, %v5447
      %vm5479 = vcmp.eq.f32.partialorder %v5478, 8.507059e+37
      %v5480 = vand.u32 %v5447, 2147483648
      %v5481 = vor.u32 1.1754944e-38, %v5480
      %v5482 = vsel %vm5479, %v5481, %v5477
      %v5483 = vmul.f32 1.0, %v5482
      %v5484 = vrcp.pop %v5448
      %v5485 = vmul.f32 %v5448, %v5484
      %v5486 = vsub.f32 1.0, %v5485
      %v5487 = vmul.f32 %v5484, %v5486
      %v5488 = vadd.f32 %v5484, %v5487
      %vm5489 = vweird.f32 %v5448
      %vm5490 = vweird.f32 %v5484
      %vm5491 = vmor %vm5489, %vm5490
      %v5492 = vsel %vm5491, %v5484, %v5488
      %v5493 = vand.u32 2147483647, %v5448
      %vm5494 = vcmp.eq.f32.partialorder %v5493, 8.507059e+37
      %v5495 = vand.u32 %v5448, 2147483648
      %v5496 = vor.u32 1.1754944e-38, %v5495
      %v5497 = vsel %vm5494, %v5496, %v5492
      %v5498 = vmul.f32 1.0, %v5497
      %v5499 = vrcp.pop %v5449
      %v5500 = vmul.f32 %v5449, %v5499
      %v5501 = vsub.f32 1.0, %v5500
      %v5502 = vmul.f32 %v5499, %v5501
      %v5503 = vadd.f32 %v5499, %v5502
      %vm5504 = vweird.f32 %v5449
      %vm5505 = vweird.f32 %v5499
      %vm5506 = vmor %vm5504, %vm5505
      %v5507 = vsel %vm5506, %v5499, %v5503
      %v5508 = vand.u32 2147483647, %v5449
      %vm5509 = vcmp.eq.f32.partialorder %v5508, 8.507059e+37
      %v5510 = vand.u32 %v5449, 2147483648
      %v5511 = vor.u32 1.1754944e-38, %v5510
      %v5512 = vsel %vm5509, %v5511, %v5507
      %v5513 = vmul.f32 1.0, %v5512
      %v5514 = vrcp.pop %v5450
      %v5515 = vmul.f32 %v5450, %v5514
      %v5516 = vsub.f32 1.0, %v5515
      %v5517 = vmul.f32 %v5514, %v5516
      %v5518 = vadd.f32 %v5514, %v5517
      %vm5519 = vweird.f32 %v5450
      %vm5520 = vweird.f32 %v5514
      %vm5521 = vmor %vm5519, %vm5520
      %v5522 = vsel %vm5521, %v5514, %v5518
      %v5523 = vand.u32 2147483647, %v5450
      %vm5524 = vcmp.eq.f32.partialorder %v5523, 8.507059e+37
      %v5525 = vand.u32 %v5450, 2147483648
      %v5526 = vor.u32 1.1754944e-38, %v5525
      %v5527 = vsel %vm5524, %v5526, %v5522
      %v5528 = vmul.f32 1.0, %v5527
      %v5529 = vrcp.pop %v5451
      %v5530 = vmul.f32 %v5451, %v5529
      %v5531 = vsub.f32 1.0, %v5530
      %v5532 = vmul.f32 %v5529, %v5531
      %v5533 = vadd.f32 %v5529, %v5532
      %vm5534 = vweird.f32 %v5451
      %vm5535 = vweird.f32 %v5529
      %vm5536 = vmor %vm5534, %vm5535
      %v5537 = vsel %vm5536, %v5529, %v5533
      %v5538 = vand.u32 2147483647, %v5451
      %vm5539 = vcmp.eq.f32.partialorder %v5538, 8.507059e+37
      %v5540 = vand.u32 %v5451, 2147483648
      %v5541 = vor.u32 1.1754944e-38, %v5540
      %v5542 = vsel %vm5539, %v5541, %v5537
      %v5543 = vmul.f32 1.0, %v5542
      %v5544 = vrcp.pop %v5452
      %v5545 = vmul.f32 %v5452, %v5544
      %v5546 = vsub.f32 1.0, %v5545
      %v5547 = vmul.f32 %v5544, %v5546
      %v5548 = vadd.f32 %v5544, %v5547
      %vm5549 = vweird.f32 %v5452
      %vm5550 = vweird.f32 %v5544
      %vm5551 = vmor %vm5549, %vm5550
      %v5552 = vsel %vm5551, %v5544, %v5548
      %v5553 = vand.u32 2147483647, %v5452
      %vm5554 = vcmp.eq.f32.partialorder %v5553, 8.507059e+37
      %v5555 = vand.u32 %v5452, 2147483648
      %v5556 = vor.u32 1.1754944e-38, %v5555
      %v5557 = vsel %vm5554, %v5556, %v5552
      %v5558 = vmul.f32 1.0, %v5557
      %v5559 = vrcp.pop %v5453
      %v5560 = vmul.f32 %v5453, %v5559
      %v5561 = vsub.f32 1.0, %v5560
      %v5562 = vmul.f32 %v5559, %v5561
      %v5563 = vadd.f32 %v5559, %v5562
      %vm5564 = vweird.f32 %v5453
      %vm5565 = vweird.f32 %v5559
      %vm5566 = vmor %vm5564, %vm5565
      %v5567 = vsel %vm5566, %v5559, %v5563
      %v5568 = vand.u32 2147483647, %v5453
      %vm5569 = vcmp.eq.f32.partialorder %v5568, 8.507059e+37
      %v5570 = vand.u32 %v5453, 2147483648
      %v5571 = vor.u32 1.1754944e-38, %v5570
      %v5572 = vsel %vm5569, %v5571, %v5567
      %v5573 = vmul.f32 1.0, %v5572
      %v5574 = vadd.f32 %v5343, %v1155
      %v5575 = vadd.f32 %v5345, %v1160
      %v5576 = vadd.f32 %v5348, %v1165
      %v5577 = vadd.f32 %v5350, %v1170
      %5582 = vrot.lane.b32.xlu0 %v5574, 96
      %v5583 = vpop.permute.xlu0 %5582
      %5584 = vrot.lane.b32.xlu0 %v5575, 96
      %v5585 = vpop.permute.xlu0 %5584
      %5586 = vrot.lane.b32.xlu0 %v5576, 96
      %v5587 = vpop.permute.xlu0 %5586
      %5588 = vrot.lane.b32.xlu0 %v5577, 96
      %v5589 = vpop.permute.xlu0 %5588
      %v5594 = vmul.f32 %v5468, %v5583
      %v5595 = vmul.f32 %v5483, %v5585
      %v5596 = vmul.f32 %v5498, %v5587
      %v5597 = vmul.f32 %v5513, %v5589
      %v5598 = vadd.f32 %v778, %v5594
      %v5599 = vadd.f32 %v780, %v5595
      %v5600 = vadd.f32 %v783, %v5596
      %v5601 = vadd.f32 %v785, %v5597
      %v5602 = vtanh.pop %v5598
      %v5603 = vtanh.pop %v5599
      %v5604 = vtanh.pop %v5600
      %v5605 = vtanh.pop %v5601
      %v5606 = vsub.f32 1.0, %v5528
      %v5607 = vsub.f32 1.0, %v5543
      %v5608 = vsub.f32 1.0, %v5558
      %v5609 = vsub.f32 1.0, %v5573
      %v5610 = vmul.f32 %v5606, %v5602
      %v5611 = vmul.f32 %v5607, %v5603
      %v5612 = vmul.f32 %v5608, %v5604
      %v5613 = vmul.f32 %v5609, %v5605
      %5618 = vrot.lane.b32.xlu0 %v5293, 96
      %v5619 = vpop.permute.xlu0 %5618
      %5620 = vrot.lane.b32.xlu0 %v5294, 96
      %v5621 = vpop.permute.xlu0 %5620
      %5622 = vrot.lane.b32.xlu0 %v5295, 96
      %v5623 = vpop.permute.xlu0 %5622
      %5624 = vrot.lane.b32.xlu0 %v5296, 96
      %v5625 = vpop.permute.xlu0 %5624
      %v5630 = vmul.f32 %v5528, %v5619
      %v5631 = vmul.f32 %v5543, %v5621
      %v5632 = vmul.f32 %v5558, %v5623
      %v5633 = vmul.f32 %v5573, %v5625
      %v5634 = vadd.f32 %v5610, %v5630
      %v5635 = vadd.f32 %v5611, %v5631
      %v5636 = vadd.f32 %v5612, %v5632
      %v5637 = vadd.f32 %v5613, %v5633
      %v5638 = vpack.c.bf16 %v5635, %v5634
      %v5639 = vpack.c.bf16 %v5637, %v5636
      %5642 = vrot.lane.b32.xlu0 %v5638, 32
      %v5643 = vpop.permute.xlu0 %5642
      %5644 = vrot.lane.b32.xlu0 %v5639, 32
      %v5645 = vpop.permute.xlu0 %5644
      %5648 = vmatpush.bf16.msra.mxu0 0
      %5649 = vmatpush.bf16.msra.mxu0 0
      %5650 = vmatpush.bf16.msra.mxu0 0
      %5651 = vmatpush.bf16.msra.mxu0 0
      %5652 = vmatpush.bf16.msra.mxu0 0
      %5653 = vmatpush.bf16.msra.mxu0 0
      %5654 = vmatpush.bf16.msra.mxu0 %v5645
      %5655 = vmatpush.bf16.msra.mxu0 %v5643
      %5656 = vmatmul.bf16.gmra.mxu0 %v1238
      %v5657 = vpop.f32.mrf.mxu0
      %v5658 = vadd.f32 0.0, %v5657
      %v5659 = vpop.f32.mrf.mxu0
      %v5660 = vadd.f32 0.0, %v5659
      %5661 = vmatmul.bf16.gmra.mxu0 %v1241
      %v5662 = vpop.f32.mrf.mxu0
      %v5663 = vadd.f32 0.0, %v5662
      %v5664 = vpop.f32.mrf.mxu0
      %v5665 = vadd.f32 0.0, %v5664
      %5666 = vmatmul.bf16.gmra.mxu0 %v1244
      %v5667 = vpop.f32.mrf.mxu0
      %v5668 = vadd.f32 0.0, %v5667
      %v5669 = vpop.f32.mrf.mxu0
      %v5670 = vadd.f32 0.0, %v5669
      %5671 = vmatmul.bf16.gmra.mxu0 %v1247
      %v5672 = vpop.f32.mrf.mxu0
      %v5673 = vadd.f32 0.0, %v5672
      %v5674 = vpop.f32.mrf.mxu0
      %v5675 = vadd.f32 0.0, %v5674
      %5676 = vmatmul.bf16.gmra.mxu0 %v1250
      %v5677 = vpop.f32.mrf.mxu0
      %v5678 = vadd.f32 0.0, %v5677
      %v5679 = vpop.f32.mrf.mxu0
      %v5680 = vadd.f32 0.0, %v5679
      %5681 = vmatmul.bf16.gmra.mxu0 %v1253
      %v5682 = vpop.f32.mrf.mxu0
      %v5683 = vadd.f32 0.0, %v5682
      %v5684 = vpop.f32.mrf.mxu0
      %v5685 = vadd.f32 0.0, %v5684
      %5686 = vdwg.mxu0
      %v5687 = vadd.f32 %v5658, %v5353
      %v5688 = vadd.f32 %v5660, %v5355
      %v5689 = vadd.f32 %v5663, %v5358
      %v5690 = vadd.f32 %v5665, %v5360
      %v5691 = vadd.f32 %v5668, %v5363
      %v5692 = vadd.f32 %v5670, %v5365
      %v5693 = vadd.f32 %v5673, %v5368
      %v5694 = vadd.f32 %v5675, %v5370
      %v5695 = vadd.f32 %v5687, %v1305
      %v5696 = vadd.f32 %v5688, %v1310
      %v5697 = vadd.f32 %v5689, %v1315
      %v5698 = vadd.f32 %v5690, %v1320
      %v5699 = vadd.f32 %v5691, %v1325
      %v5700 = vadd.f32 %v5692, %v1330
      %v5701 = vadd.f32 %v5693, %v1335
      %v5702 = vadd.f32 %v5694, %v1340
      %v5703 = vxor.u32 %v5695, 2147483648
      %v5704 = vxor.u32 %v5696, 2147483648
      %v5705 = vxor.u32 %v5697, 2147483648
      %v5706 = vxor.u32 %v5698, 2147483648
      %v5707 = vxor.u32 %v5699, 2147483648
      %v5708 = vxor.u32 %v5700, 2147483648
      %v5709 = vxor.u32 %v5701, 2147483648
      %v5710 = vxor.u32 %v5702, 2147483648
      %v5711 = vmul.f32 %v5703, 1.442695
      %v5712 = vpow.pop %v5711
      %v5713 = vmul.f32 %v5704, 1.442695
      %v5714 = vpow.pop %v5713
      %v5715 = vmul.f32 %v5705, 1.442695
      %v5716 = vpow.pop %v5715
      %v5717 = vmul.f32 %v5706, 1.442695
      %v5718 = vpow.pop %v5717
      %v5719 = vmul.f32 %v5707, 1.442695
      %v5720 = vpow.pop %v5719
      %v5721 = vmul.f32 %v5708, 1.442695
      %v5722 = vpow.pop %v5721
      %v5723 = vmul.f32 %v5709, 1.442695
      %v5724 = vpow.pop %v5723
      %v5725 = vmul.f32 %v5710, 1.442695
      %v5726 = vpow.pop %v5725
      %v5727 = vadd.f32 %v5712, 1.0
      %v5728 = vadd.f32 %v5714, 1.0
      %v5729 = vadd.f32 %v5716, 1.0
      %v5730 = vadd.f32 %v5718, 1.0
      %v5731 = vadd.f32 %v5720, 1.0
      %v5732 = vadd.f32 %v5722, 1.0
      %v5733 = vadd.f32 %v5724, 1.0
      %v5734 = vadd.f32 %v5726, 1.0
      %v5735 = vrcp.pop %v5727
      %v5736 = vmul.f32 %v5727, %v5735
      %v5737 = vsub.f32 1.0, %v5736
      %v5738 = vmul.f32 %v5735, %v5737
      %v5739 = vadd.f32 %v5735, %v5738
      %vm5740 = vweird.f32 %v5727
      %vm5741 = vweird.f32 %v5735
      %vm5742 = vmor %vm5740, %vm5741
      %v5743 = vsel %vm5742, %v5735, %v5739
      %v5744 = vand.u32 2147483647, %v5727
      %vm5745 = vcmp.eq.f32.partialorder %v5744, 8.507059e+37
      %v5746 = vand.u32 %v5727, 2147483648
      %v5747 = vor.u32 1.1754944e-38, %v5746
      %v5748 = vsel %vm5745, %v5747, %v5743
      %v5749 = vmul.f32 1.0, %v5748
      %v5750 = vrcp.pop %v5728
      %v5751 = vmul.f32 %v5728, %v5750
      %v5752 = vsub.f32 1.0, %v5751
      %v5753 = vmul.f32 %v5750, %v5752
      %v5754 = vadd.f32 %v5750, %v5753
      %vm5755 = vweird.f32 %v5728
      %vm5756 = vweird.f32 %v5750
      %vm5757 = vmor %vm5755, %vm5756
      %v5758 = vsel %vm5757, %v5750, %v5754
      %v5759 = vand.u32 2147483647, %v5728
      %vm5760 = vcmp.eq.f32.partialorder %v5759, 8.507059e+37
      %v5761 = vand.u32 %v5728, 2147483648
      %v5762 = vor.u32 1.1754944e-38, %v5761
      %v5763 = vsel %vm5760, %v5762, %v5758
      %v5764 = vmul.f32 1.0, %v5763
      %v5765 = vrcp.pop %v5729
      %v5766 = vmul.f32 %v5729, %v5765
      %v5767 = vsub.f32 1.0, %v5766
      %v5768 = vmul.f32 %v5765, %v5767
      %v5769 = vadd.f32 %v5765, %v5768
      %vm5770 = vweird.f32 %v5729
      %vm5771 = vweird.f32 %v5765
      %vm5772 = vmor %vm5770, %vm5771
      %v5773 = vsel %vm5772, %v5765, %v5769
      %v5774 = vand.u32 2147483647, %v5729
      %vm5775 = vcmp.eq.f32.partialorder %v5774, 8.507059e+37
      %v5776 = vand.u32 %v5729, 2147483648
      %v5777 = vor.u32 1.1754944e-38, %v5776
      %v5778 = vsel %vm5775, %v5777, %v5773
      %v5779 = vmul.f32 1.0, %v5778
      %v5780 = vrcp.pop %v5730
      %v5781 = vmul.f32 %v5730, %v5780
      %v5782 = vsub.f32 1.0, %v5781
      %v5783 = vmul.f32 %v5780, %v5782
      %v5784 = vadd.f32 %v5780, %v5783
      %vm5785 = vweird.f32 %v5730
      %vm5786 = vweird.f32 %v5780
      %vm5787 = vmor %vm5785, %vm5786
      %v5788 = vsel %vm5787, %v5780, %v5784
      %v5789 = vand.u32 2147483647, %v5730
      %vm5790 = vcmp.eq.f32.partialorder %v5789, 8.507059e+37
      %v5791 = vand.u32 %v5730, 2147483648
      %v5792 = vor.u32 1.1754944e-38, %v5791
      %v5793 = vsel %vm5790, %v5792, %v5788
      %v5794 = vmul.f32 1.0, %v5793
      %v5795 = vrcp.pop %v5731
      %v5796 = vmul.f32 %v5731, %v5795
      %v5797 = vsub.f32 1.0, %v5796
      %v5798 = vmul.f32 %v5795, %v5797
      %v5799 = vadd.f32 %v5795, %v5798
      %vm5800 = vweird.f32 %v5731
      %vm5801 = vweird.f32 %v5795
      %vm5802 = vmor %vm5800, %vm5801
      %v5803 = vsel %vm5802, %v5795, %v5799
      %v5804 = vand.u32 2147483647, %v5731
      %vm5805 = vcmp.eq.f32.partialorder %v5804, 8.507059e+37
      %v5806 = vand.u32 %v5731, 2147483648
      %v5807 = vor.u32 1.1754944e-38, %v5806
      %v5808 = vsel %vm5805, %v5807, %v5803
      %v5809 = vmul.f32 1.0, %v5808
      %v5810 = vrcp.pop %v5732
      %v5811 = vmul.f32 %v5732, %v5810
      %v5812 = vsub.f32 1.0, %v5811
      %v5813 = vmul.f32 %v5810, %v5812
      %v5814 = vadd.f32 %v5810, %v5813
      %vm5815 = vweird.f32 %v5732
      %vm5816 = vweird.f32 %v5810
      %vm5817 = vmor %vm5815, %vm5816
      %v5818 = vsel %vm5817, %v5810, %v5814
      %v5819 = vand.u32 2147483647, %v5732
      %vm5820 = vcmp.eq.f32.partialorder %v5819, 8.507059e+37
      %v5821 = vand.u32 %v5732, 2147483648
      %v5822 = vor.u32 1.1754944e-38, %v5821
      %v5823 = vsel %vm5820, %v5822, %v5818
      %v5824 = vmul.f32 1.0, %v5823
      %v5825 = vrcp.pop %v5733
      %v5826 = vmul.f32 %v5733, %v5825
      %v5827 = vsub.f32 1.0, %v5826
      %v5828 = vmul.f32 %v5825, %v5827
      %v5829 = vadd.f32 %v5825, %v5828
      %vm5830 = vweird.f32 %v5733
      %vm5831 = vweird.f32 %v5825
      %vm5832 = vmor %vm5830, %vm5831
      %v5833 = vsel %vm5832, %v5825, %v5829
      %v5834 = vand.u32 2147483647, %v5733
      %vm5835 = vcmp.eq.f32.partialorder %v5834, 8.507059e+37
      %v5836 = vand.u32 %v5733, 2147483648
      %v5837 = vor.u32 1.1754944e-38, %v5836
      %v5838 = vsel %vm5835, %v5837, %v5833
      %v5839 = vmul.f32 1.0, %v5838
      %v5840 = vrcp.pop %v5734
      %v5841 = vmul.f32 %v5734, %v5840
      %v5842 = vsub.f32 1.0, %v5841
      %v5843 = vmul.f32 %v5840, %v5842
      %v5844 = vadd.f32 %v5840, %v5843
      %vm5845 = vweird.f32 %v5734
      %vm5846 = vweird.f32 %v5840
      %vm5847 = vmor %vm5845, %vm5846
      %v5848 = vsel %vm5847, %v5840, %v5844
      %v5849 = vand.u32 2147483647, %v5734
      %vm5850 = vcmp.eq.f32.partialorder %v5849, 8.507059e+37
      %v5851 = vand.u32 %v5734, 2147483648
      %v5852 = vor.u32 1.1754944e-38, %v5851
      %v5853 = vsel %vm5850, %v5852, %v5848
      %v5854 = vmul.f32 1.0, %v5853
      %v5855 = vadd.f32 %v5678, %v1505
      %v5856 = vadd.f32 %v5680, %v1510
      %v5857 = vadd.f32 %v5683, %v1515
      %v5858 = vadd.f32 %v5685, %v1520
      %v5859 = vadd.f32 %v5373, %v1529
      %v5860 = vadd.f32 %v5375, %v1534
      %v5861 = vadd.f32 %v5378, %v1539
      %v5862 = vadd.f32 %v5380, %v1544
      %v5863 = vmul.f32 %v5749, %v5859
      %v5864 = vmul.f32 %v5764, %v5860
      %v5865 = vmul.f32 %v5779, %v5861
      %v5866 = vmul.f32 %v5794, %v5862
      %v5867 = vadd.f32 %v5855, %v5863
      %v5868 = vadd.f32 %v5856, %v5864
      %v5869 = vadd.f32 %v5857, %v5865
      %v5870 = vadd.f32 %v5858, %v5866
      %v5871 = vtanh.pop %v5867
      %v5872 = vtanh.pop %v5868
      %v5873 = vtanh.pop %v5869
      %v5874 = vtanh.pop %v5870
      %v5875 = vsub.f32 1.0, %v5809
      %v5876 = vsub.f32 1.0, %v5824
      %v5877 = vsub.f32 1.0, %v5839
      %v5878 = vsub.f32 1.0, %v5854
      %v5879 = vmul.f32 %v5875, %v5871
      %v5880 = vmul.f32 %v5876, %v5872
      %v5881 = vmul.f32 %v5877, %v5873
      %v5882 = vmul.f32 %v5878, %v5874
      %v5883 = vmul.f32 %v5809, %v5305
      %v5884 = vmul.f32 %v5824, %v5306
      %v5885 = vmul.f32 %v5839, %v5307
      %v5886 = vmul.f32 %v5854, %v5308
      %v5887 = vadd.f32 %v5879, %v5883
      %v5888 = vadd.f32 %v5880, %v5884
      %v5889 = vadd.f32 %v5881, %v5885
      %v5890 = vadd.f32 %v5882, %v5886
      %vm5891 = vcmp.gt.s32.totalorder %v423, 7
      %v5892 = vsel %vm5891, 1, 0
      %v5893 = vcvt.s32.f32 %v5892
      %v5895 = vperm.slane %v5893, 0
      %5901 = vrot.lane.b32.xlu0 %v5634, 32
      %v5902 = vpop.permute.xlu0 %5901
      %5903 = vrot.lane.b32.xlu0 %v5635, 32
      %v5904 = vpop.permute.xlu0 %5903
      %5905 = vrot.lane.b32.xlu0 %v5636, 32
      %v5906 = vpop.permute.xlu0 %5905
      %5907 = vrot.lane.b32.xlu0 %v5637, 32
      %v5908 = vpop.permute.xlu0 %5907
      %v5913 = vmul.f32 %v5895, %v5902
      %v5914 = vmul.f32 %v5895, %v5904
      %v5915 = vmul.f32 %v5895, %v5906
      %v5916 = vmul.f32 %v5895, %v5908
      %v5917 = vsub.f32 1.0, %v5893
      %v5919 = vperm.slane %v5917, 0
      %v5921 = vmul.f32 %v5919, %v5293
      %v5922 = vmul.f32 %v5919, %v5294
      %v5923 = vmul.f32 %v5919, %v5295
      %v5924 = vmul.f32 %v5919, %v5296
      %v5925 = vadd.f32 %v5913, %v5921
      %v5926 = vadd.f32 %v5914, %v5922
      %v5927 = vadd.f32 %v5915, %v5923
      %v5928 = vadd.f32 %v5916, %v5924
      %v5929 = vmul.f32 %v5895, %v5887
      %v5930 = vmul.f32 %v5895, %v5888
      %v5931 = vmul.f32 %v5895, %v5889
      %v5932 = vmul.f32 %v5895, %v5890
      %v5933 = vmul.f32 %v5919, %v5305
      %v5934 = vmul.f32 %v5919, %v5306
      %v5935 = vmul.f32 %v5919, %v5307
      %v5936 = vmul.f32 %v5919, %v5308
      %v5937 = vadd.f32 %v5929, %v5933
      %v5938 = vadd.f32 %v5930, %v5934
      %v5939 = vadd.f32 %v5931, %v5935
      %v5940 = vadd.f32 %v5932, %v5936
      %v5941 = vpack.c.bf16 %v5926, %v5925
      %v5942 = vpack.c.bf16 %v5928, %v5927
      %v5943 = vpack.c.bf16 %v5938, %v5937
      %v5944 = vpack.c.bf16 %v5940, %v5939
      %5945 = vmatpush.bf16.msra.mxu0 0
      %5946 = vmatpush.bf16.msra.mxu0 0
      %5947 = vmatpush.bf16.msra.mxu0 0
      %5948 = vmatpush.bf16.msra.mxu0 0
      %5949 = vmatpush.bf16.msra.mxu0 %v5944
      %5950 = vmatpush.bf16.msra.mxu0 %v5943
      %5951 = vmatpush.bf16.msra.mxu0 %v5942
      %5952 = vmatpush.bf16.msra.mxu0 %v5941
      %5953 = vmatmul.bf16.gmra.mxu0 %v888
      %v5954 = vpop.f32.mrf.mxu0
      %v5955 = vadd.f32 0.0, %v5954
      %v5956 = vpop.f32.mrf.mxu0
      %v5957 = vadd.f32 0.0, %v5956
      %5958 = vmatmul.bf16.gmra.mxu0 %v891
      %v5959 = vpop.f32.mrf.mxu0
      %v5960 = vadd.f32 0.0, %v5959
      %v5961 = vpop.f32.mrf.mxu0
      %v5962 = vadd.f32 0.0, %v5961
      %5963 = vmatmul.bf16.gmra.mxu0 %v894
      %v5964 = vpop.f32.mrf.mxu0
      %v5965 = vadd.f32 0.0, %v5964
      %v5966 = vpop.f32.mrf.mxu0
      %v5967 = vadd.f32 0.0, %v5966
      %5968 = vmatmul.bf16.gmra.mxu0 %v897
      %v5969 = vpop.f32.mrf.mxu0
      %v5970 = vadd.f32 0.0, %v5969
      %v5971 = vpop.f32.mrf.mxu0
      %v5972 = vadd.f32 0.0, %v5971
      %5973 = vmatmul.bf16.gmra.mxu0 %v900
      %v5974 = vpop.f32.mrf.mxu0
      %v5975 = vadd.f32 0.0, %v5974
      %v5976 = vpop.f32.mrf.mxu0
      %v5977 = vadd.f32 0.0, %v5976
      %5978 = vmatmul.bf16.gmra.mxu0 %v903
      %v5979 = vpop.f32.mrf.mxu0
      %v5980 = vadd.f32 0.0, %v5979
      %v5981 = vpop.f32.mrf.mxu0
      %v5982 = vadd.f32 0.0, %v5981
      %5983 = vmatmul.bf16.gmra.mxu0 %v906
      %v5984 = vpop.f32.mrf.mxu0
      %v5985 = vadd.f32 0.0, %v5984
      %v5986 = vpop.f32.mrf.mxu0
      %v5987 = vadd.f32 0.0, %v5986
      %5988 = vmatmul.bf16.gmra.mxu0 %v909
      %v5989 = vpop.f32.mrf.mxu0
      %v5990 = vadd.f32 0.0, %v5989
      %v5991 = vpop.f32.mrf.mxu0
      %v5992 = vadd.f32 0.0, %v5991
      %5993 = vmatmul.bf16.gmra.mxu0 %v912
      %v5994 = vpop.f32.mrf.mxu0
      %v5995 = vadd.f32 0.0, %v5994
      %v5996 = vpop.f32.mrf.mxu0
      %v5997 = vadd.f32 0.0, %v5996
      %5998 = vmatmul.bf16.gmra.mxu0 %v915
      %v5999 = vpop.f32.mrf.mxu0
      %v6000 = vadd.f32 0.0, %v5999
      %v6001 = vpop.f32.mrf.mxu0
      %v6002 = vadd.f32 0.0, %v6001
      %6003 = vmatmul.bf16.gmra.mxu0 %v918
      %v6004 = vpop.f32.mrf.mxu0
      %v6005 = vadd.f32 0.0, %v6004
      %v6006 = vpop.f32.mrf.mxu0
      %v6007 = vadd.f32 0.0, %v6006
      %6008 = vmatmul.bf16.gmra.mxu0 %v921
      %v6009 = vpop.f32.mrf.mxu0
      %v6010 = vadd.f32 0.0, %v6009
      %v6011 = vpop.f32.mrf.mxu0
      %v6012 = vadd.f32 0.0, %v6011
      %6013 = vdwg.mxu0
      %v6014 = vadd.f32 %v797, %v5955
      %v6015 = vadd.f32 %v799, %v5957
      %v6016 = vadd.f32 %v802, %v5960
      %v6017 = vadd.f32 %v804, %v5962
      %v6018 = vadd.f32 %v807, %v5965
      %v6019 = vadd.f32 %v809, %v5967
      %v6020 = vadd.f32 %v812, %v5970
      %v6021 = vadd.f32 %v814, %v5972
      %v6022 = vxor.u32 %v6014, 2147483648
      %v6023 = vxor.u32 %v6015, 2147483648
      %v6024 = vxor.u32 %v6016, 2147483648
      %v6025 = vxor.u32 %v6017, 2147483648
      %v6026 = vxor.u32 %v6018, 2147483648
      %v6027 = vxor.u32 %v6019, 2147483648
      %v6028 = vxor.u32 %v6020, 2147483648
      %v6029 = vxor.u32 %v6021, 2147483648
      %v6030 = vmul.f32 %v6022, 1.442695
      %v6031 = vpow.pop %v6030
      %v6032 = vmul.f32 %v6023, 1.442695
      %v6033 = vpow.pop %v6032
      %v6034 = vmul.f32 %v6024, 1.442695
      %v6035 = vpow.pop %v6034
      %v6036 = vmul.f32 %v6025, 1.442695
      %v6037 = vpow.pop %v6036
      %v6038 = vmul.f32 %v6026, 1.442695
      %v6039 = vpow.pop %v6038
      %v6040 = vmul.f32 %v6027, 1.442695
      %v6041 = vpow.pop %v6040
      %v6042 = vmul.f32 %v6028, 1.442695
      %v6043 = vpow.pop %v6042
      %v6044 = vmul.f32 %v6029, 1.442695
      %v6045 = vpow.pop %v6044
      %v6046 = vadd.f32 %v6031, 1.0
      %v6047 = vadd.f32 %v6033, 1.0
      %v6048 = vadd.f32 %v6035, 1.0
      %v6049 = vadd.f32 %v6037, 1.0
      %v6050 = vadd.f32 %v6039, 1.0
      %v6051 = vadd.f32 %v6041, 1.0
      %v6052 = vadd.f32 %v6043, 1.0
      %v6053 = vadd.f32 %v6045, 1.0
      %v6054 = vrcp.pop %v6046
      %v6055 = vmul.f32 %v6046, %v6054
      %v6056 = vsub.f32 1.0, %v6055
      %v6057 = vmul.f32 %v6054, %v6056
      %v6058 = vadd.f32 %v6054, %v6057
      %vm6059 = vweird.f32 %v6046
      %vm6060 = vweird.f32 %v6054
      %vm6061 = vmor %vm6059, %vm6060
      %v6062 = vsel %vm6061, %v6054, %v6058
      %v6063 = vand.u32 2147483647, %v6046
      %vm6064 = vcmp.eq.f32.partialorder %v6063, 8.507059e+37
      %v6065 = vand.u32 %v6046, 2147483648
      %v6066 = vor.u32 1.1754944e-38, %v6065
      %v6067 = vsel %vm6064, %v6066, %v6062
      %v6068 = vmul.f32 1.0, %v6067
      %v6069 = vrcp.pop %v6047
      %v6070 = vmul.f32 %v6047, %v6069
      %v6071 = vsub.f32 1.0, %v6070
      %v6072 = vmul.f32 %v6069, %v6071
      %v6073 = vadd.f32 %v6069, %v6072
      %vm6074 = vweird.f32 %v6047
      %vm6075 = vweird.f32 %v6069
      %vm6076 = vmor %vm6074, %vm6075
      %v6077 = vsel %vm6076, %v6069, %v6073
      %v6078 = vand.u32 2147483647, %v6047
      %vm6079 = vcmp.eq.f32.partialorder %v6078, 8.507059e+37
      %v6080 = vand.u32 %v6047, 2147483648
      %v6081 = vor.u32 1.1754944e-38, %v6080
      %v6082 = vsel %vm6079, %v6081, %v6077
      %v6083 = vmul.f32 1.0, %v6082
      %v6084 = vrcp.pop %v6048
      %v6085 = vmul.f32 %v6048, %v6084
      %v6086 = vsub.f32 1.0, %v6085
      %v6087 = vmul.f32 %v6084, %v6086
      %v6088 = vadd.f32 %v6084, %v6087
      %vm6089 = vweird.f32 %v6048
      %vm6090 = vweird.f32 %v6084
      %vm6091 = vmor %vm6089, %vm6090
      %v6092 = vsel %vm6091, %v6084, %v6088
      %v6093 = vand.u32 2147483647, %v6048
      %vm6094 = vcmp.eq.f32.partialorder %v6093, 8.507059e+37
      %v6095 = vand.u32 %v6048, 2147483648
      %v6096 = vor.u32 1.1754944e-38, %v6095
      %v6097 = vsel %vm6094, %v6096, %v6092
      %v6098 = vmul.f32 1.0, %v6097
      %v6099 = vrcp.pop %v6049
      %v6100 = vmul.f32 %v6049, %v6099
      %v6101 = vsub.f32 1.0, %v6100
      %v6102 = vmul.f32 %v6099, %v6101
      %v6103 = vadd.f32 %v6099, %v6102
      %vm6104 = vweird.f32 %v6049
      %vm6105 = vweird.f32 %v6099
      %vm6106 = vmor %vm6104, %vm6105
      %v6107 = vsel %vm6106, %v6099, %v6103
      %v6108 = vand.u32 2147483647, %v6049
      %vm6109 = vcmp.eq.f32.partialorder %v6108, 8.507059e+37
      %v6110 = vand.u32 %v6049, 2147483648
      %v6111 = vor.u32 1.1754944e-38, %v6110
      %v6112 = vsel %vm6109, %v6111, %v6107
      %v6113 = vmul.f32 1.0, %v6112
      %v6114 = vrcp.pop %v6050
      %v6115 = vmul.f32 %v6050, %v6114
      %v6116 = vsub.f32 1.0, %v6115
      %v6117 = vmul.f32 %v6114, %v6116
      %v6118 = vadd.f32 %v6114, %v6117
      %vm6119 = vweird.f32 %v6050
      %vm6120 = vweird.f32 %v6114
      %vm6121 = vmor %vm6119, %vm6120
      %v6122 = vsel %vm6121, %v6114, %v6118
      %v6123 = vand.u32 2147483647, %v6050
      %vm6124 = vcmp.eq.f32.partialorder %v6123, 8.507059e+37
      %v6125 = vand.u32 %v6050, 2147483648
      %v6126 = vor.u32 1.1754944e-38, %v6125
      %v6127 = vsel %vm6124, %v6126, %v6122
      %v6128 = vmul.f32 1.0, %v6127
      %v6129 = vrcp.pop %v6051
      %v6130 = vmul.f32 %v6051, %v6129
      %v6131 = vsub.f32 1.0, %v6130
      %v6132 = vmul.f32 %v6129, %v6131
      %v6133 = vadd.f32 %v6129, %v6132
      %vm6134 = vweird.f32 %v6051
      %vm6135 = vweird.f32 %v6129
      %vm6136 = vmor %vm6134, %vm6135
      %v6137 = vsel %vm6136, %v6129, %v6133
      %v6138 = vand.u32 2147483647, %v6051
      %vm6139 = vcmp.eq.f32.partialorder %v6138, 8.507059e+37
      %v6140 = vand.u32 %v6051, 2147483648
      %v6141 = vor.u32 1.1754944e-38, %v6140
      %v6142 = vsel %vm6139, %v6141, %v6137
      %v6143 = vmul.f32 1.0, %v6142
      %v6144 = vrcp.pop %v6052
      %v6145 = vmul.f32 %v6052, %v6144
      %v6146 = vsub.f32 1.0, %v6145
      %v6147 = vmul.f32 %v6144, %v6146
      %v6148 = vadd.f32 %v6144, %v6147
      %vm6149 = vweird.f32 %v6052
      %vm6150 = vweird.f32 %v6144
      %vm6151 = vmor %vm6149, %vm6150
      %v6152 = vsel %vm6151, %v6144, %v6148
      %v6153 = vand.u32 2147483647, %v6052
      %vm6154 = vcmp.eq.f32.partialorder %v6153, 8.507059e+37
      %v6155 = vand.u32 %v6052, 2147483648
      %v6156 = vor.u32 1.1754944e-38, %v6155
      %v6157 = vsel %vm6154, %v6156, %v6152
      %v6158 = vmul.f32 1.0, %v6157
      %v6159 = vrcp.pop %v6053
      %v6160 = vmul.f32 %v6053, %v6159
      %v6161 = vsub.f32 1.0, %v6160
      %v6162 = vmul.f32 %v6159, %v6161
      %v6163 = vadd.f32 %v6159, %v6162
      %vm6164 = vweird.f32 %v6053
      %vm6165 = vweird.f32 %v6159
      %vm6166 = vmor %vm6164, %vm6165
      %v6167 = vsel %vm6166, %v6159, %v6163
      %v6168 = vand.u32 2147483647, %v6053
      %vm6169 = vcmp.eq.f32.partialorder %v6168, 8.507059e+37
      %v6170 = vand.u32 %v6053, 2147483648
      %v6171 = vor.u32 1.1754944e-38, %v6170
      %v6172 = vsel %vm6169, %v6171, %v6167
      %v6173 = vmul.f32 1.0, %v6172
      %v6174 = vadd.f32 %v5975, %v1155
      %v6175 = vadd.f32 %v5977, %v1160
      %v6176 = vadd.f32 %v5980, %v1165
      %v6177 = vadd.f32 %v5982, %v1170
      %v6178 = vmul.f32 %v6068, %v6174
      %v6179 = vmul.f32 %v6083, %v6175
      %v6180 = vmul.f32 %v6098, %v6176
      %v6181 = vmul.f32 %v6113, %v6177
      %v6182 = vadd.f32 %v817, %v6178
      %v6183 = vadd.f32 %v819, %v6179
      %v6184 = vadd.f32 %v822, %v6180
      %v6185 = vadd.f32 %v824, %v6181
      %v6186 = vtanh.pop %v6182
      %v6187 = vtanh.pop %v6183
      %v6188 = vtanh.pop %v6184
      %v6189 = vtanh.pop %v6185
      %v6190 = vsub.f32 1.0, %v6128
      %v6191 = vsub.f32 1.0, %v6143
      %v6192 = vsub.f32 1.0, %v6158
      %v6193 = vsub.f32 1.0, %v6173
      %v6194 = vmul.f32 %v6190, %v6186
      %v6195 = vmul.f32 %v6191, %v6187
      %v6196 = vmul.f32 %v6192, %v6188
      %v6197 = vmul.f32 %v6193, %v6189
      %v6198 = vmul.f32 %v6128, %v5925
      %v6199 = vmul.f32 %v6143, %v5926
      %v6200 = vmul.f32 %v6158, %v5927
      %v6201 = vmul.f32 %v6173, %v5928
      %v6202 = vadd.f32 %v6194, %v6198
      %v6203 = vadd.f32 %v6195, %v6199
      %v6204 = vadd.f32 %v6196, %v6200
      %v6205 = vadd.f32 %v6197, %v6201
      %v6206 = vpack.c.bf16 %v6203, %v6202
      %v6207 = vpack.c.bf16 %v6205, %v6204
      %6208 = vmatpush.bf16.msra.mxu0 0
      %6209 = vmatpush.bf16.msra.mxu0 0
      %6210 = vmatpush.bf16.msra.mxu0 0
      %6211 = vmatpush.bf16.msra.mxu0 0
      %6212 = vmatpush.bf16.msra.mxu0 0
      %6213 = vmatpush.bf16.msra.mxu0 0
      %6214 = vmatpush.bf16.msra.mxu0 %v6207
      %6215 = vmatpush.bf16.msra.mxu0 %v6206
      %6216 = vmatmul.bf16.gmra.mxu0 %v1238
      %v6217 = vpop.f32.mrf.mxu0
      %v6218 = vadd.f32 0.0, %v6217
      %v6219 = vpop.f32.mrf.mxu0
      %v6220 = vadd.f32 0.0, %v6219
      %6221 = vmatmul.bf16.gmra.mxu0 %v1241
      %v6222 = vpop.f32.mrf.mxu0
      %v6223 = vadd.f32 0.0, %v6222
      %v6224 = vpop.f32.mrf.mxu0
      %v6225 = vadd.f32 0.0, %v6224
      %6226 = vmatmul.bf16.gmra.mxu0 %v1244
      %v6227 = vpop.f32.mrf.mxu0
      %v6228 = vadd.f32 0.0, %v6227
      %v6229 = vpop.f32.mrf.mxu0
      %v6230 = vadd.f32 0.0, %v6229
      %6231 = vmatmul.bf16.gmra.mxu0 %v1247
      %v6232 = vpop.f32.mrf.mxu0
      %v6233 = vadd.f32 0.0, %v6232
      %v6234 = vpop.f32.mrf.mxu0
      %v6235 = vadd.f32 0.0, %v6234
      %6236 = vmatmul.bf16.gmra.mxu0 %v1250
      %v6237 = vpop.f32.mrf.mxu0
      %v6238 = vadd.f32 0.0, %v6237
      %v6239 = vpop.f32.mrf.mxu0
      %v6240 = vadd.f32 0.0, %v6239
      %6241 = vmatmul.bf16.gmra.mxu0 %v1253
      %v6242 = vpop.f32.mrf.mxu0
      %v6243 = vadd.f32 0.0, %v6242
      %v6244 = vpop.f32.mrf.mxu0
      %v6245 = vadd.f32 0.0, %v6244
      %6246 = vdwg.mxu0
      %v6247 = vadd.f32 %v6218, %v5985
      %v6248 = vadd.f32 %v6220, %v5987
      %v6249 = vadd.f32 %v6223, %v5990
      %v6250 = vadd.f32 %v6225, %v5992
      %v6251 = vadd.f32 %v6228, %v5995
      %v6252 = vadd.f32 %v6230, %v5997
      %v6253 = vadd.f32 %v6233, %v6000
      %v6254 = vadd.f32 %v6235, %v6002
      %v6255 = vadd.f32 %v6247, %v1305
      %v6256 = vadd.f32 %v6248, %v1310
      %v6257 = vadd.f32 %v6249, %v1315
      %v6258 = vadd.f32 %v6250, %v1320
      %v6259 = vadd.f32 %v6251, %v1325
      %v6260 = vadd.f32 %v6252, %v1330
      %v6261 = vadd.f32 %v6253, %v1335
      %v6262 = vadd.f32 %v6254, %v1340
      %v6263 = vxor.u32 %v6255, 2147483648
      %v6264 = vxor.u32 %v6256, 2147483648
      %v6265 = vxor.u32 %v6257, 2147483648
      %v6266 = vxor.u32 %v6258, 2147483648
      %v6267 = vxor.u32 %v6259, 2147483648
      %v6268 = vxor.u32 %v6260, 2147483648
      %v6269 = vxor.u32 %v6261, 2147483648
      %v6270 = vxor.u32 %v6262, 2147483648
      %v6271 = vmul.f32 %v6263, 1.442695
      %v6272 = vpow.pop %v6271
      %v6273 = vmul.f32 %v6264, 1.442695
      %v6274 = vpow.pop %v6273
      %v6275 = vmul.f32 %v6265, 1.442695
      %v6276 = vpow.pop %v6275
      %v6277 = vmul.f32 %v6266, 1.442695
      %v6278 = vpow.pop %v6277
      %v6279 = vmul.f32 %v6267, 1.442695
      %v6280 = vpow.pop %v6279
      %v6281 = vmul.f32 %v6268, 1.442695
      %v6282 = vpow.pop %v6281
      %v6283 = vmul.f32 %v6269, 1.442695
      %v6284 = vpow.pop %v6283
      %v6285 = vmul.f32 %v6270, 1.442695
      %v6286 = vpow.pop %v6285
      %v6287 = vadd.f32 %v6272, 1.0
      %v6288 = vadd.f32 %v6274, 1.0
      %v6289 = vadd.f32 %v6276, 1.0
      %v6290 = vadd.f32 %v6278, 1.0
      %v6291 = vadd.f32 %v6280, 1.0
      %v6292 = vadd.f32 %v6282, 1.0
      %v6293 = vadd.f32 %v6284, 1.0
      %v6294 = vadd.f32 %v6286, 1.0
      %v6295 = vrcp.pop %v6287
      %v6296 = vmul.f32 %v6287, %v6295
      %v6297 = vsub.f32 1.0, %v6296
      %v6298 = vmul.f32 %v6295, %v6297
      %v6299 = vadd.f32 %v6295, %v6298
      %vm6300 = vweird.f32 %v6287
      %vm6301 = vweird.f32 %v6295
      %vm6302 = vmor %vm6300, %vm6301
      %v6303 = vsel %vm6302, %v6295, %v6299
      %v6304 = vand.u32 2147483647, %v6287
      %vm6305 = vcmp.eq.f32.partialorder %v6304, 8.507059e+37
      %v6306 = vand.u32 %v6287, 2147483648
      %v6307 = vor.u32 1.1754944e-38, %v6306
      %v6308 = vsel %vm6305, %v6307, %v6303
      %v6309 = vmul.f32 1.0, %v6308
      %v6310 = vrcp.pop %v6288
      %v6311 = vmul.f32 %v6288, %v6310
      %v6312 = vsub.f32 1.0, %v6311
      %v6313 = vmul.f32 %v6310, %v6312
      %v6314 = vadd.f32 %v6310, %v6313
      %vm6315 = vweird.f32 %v6288
      %vm6316 = vweird.f32 %v6310
      %vm6317 = vmor %vm6315, %vm6316
      %v6318 = vsel %vm6317, %v6310, %v6314
      %v6319 = vand.u32 2147483647, %v6288
      %vm6320 = vcmp.eq.f32.partialorder %v6319, 8.507059e+37
      %v6321 = vand.u32 %v6288, 2147483648
      %v6322 = vor.u32 1.1754944e-38, %v6321
      %v6323 = vsel %vm6320, %v6322, %v6318
      %v6324 = vmul.f32 1.0, %v6323
      %v6325 = vrcp.pop %v6289
      %v6326 = vmul.f32 %v6289, %v6325
      %v6327 = vsub.f32 1.0, %v6326
      %v6328 = vmul.f32 %v6325, %v6327
      %v6329 = vadd.f32 %v6325, %v6328
      %vm6330 = vweird.f32 %v6289
      %vm6331 = vweird.f32 %v6325
      %vm6332 = vmor %vm6330, %vm6331
      %v6333 = vsel %vm6332, %v6325, %v6329
      %v6334 = vand.u32 2147483647, %v6289
      %vm6335 = vcmp.eq.f32.partialorder %v6334, 8.507059e+37
      %v6336 = vand.u32 %v6289, 2147483648
      %v6337 = vor.u32 1.1754944e-38, %v6336
      %v6338 = vsel %vm6335, %v6337, %v6333
      %v6339 = vmul.f32 1.0, %v6338
      %v6340 = vrcp.pop %v6290
      %v6341 = vmul.f32 %v6290, %v6340
      %v6342 = vsub.f32 1.0, %v6341
      %v6343 = vmul.f32 %v6340, %v6342
      %v6344 = vadd.f32 %v6340, %v6343
      %vm6345 = vweird.f32 %v6290
      %vm6346 = vweird.f32 %v6340
      %vm6347 = vmor %vm6345, %vm6346
      %v6348 = vsel %vm6347, %v6340, %v6344
      %v6349 = vand.u32 2147483647, %v6290
      %vm6350 = vcmp.eq.f32.partialorder %v6349, 8.507059e+37
      %v6351 = vand.u32 %v6290, 2147483648
      %v6352 = vor.u32 1.1754944e-38, %v6351
      %v6353 = vsel %vm6350, %v6352, %v6348
      %v6354 = vmul.f32 1.0, %v6353
      %v6355 = vrcp.pop %v6291
      %v6356 = vmul.f32 %v6291, %v6355
      %v6357 = vsub.f32 1.0, %v6356
      %v6358 = vmul.f32 %v6355, %v6357
      %v6359 = vadd.f32 %v6355, %v6358
      %vm6360 = vweird.f32 %v6291
      %vm6361 = vweird.f32 %v6355
      %vm6362 = vmor %vm6360, %vm6361
      %v6363 = vsel %vm6362, %v6355, %v6359
      %v6364 = vand.u32 2147483647, %v6291
      %vm6365 = vcmp.eq.f32.partialorder %v6364, 8.507059e+37
      %v6366 = vand.u32 %v6291, 2147483648
      %v6367 = vor.u32 1.1754944e-38, %v6366
      %v6368 = vsel %vm6365, %v6367, %v6363
      %v6369 = vmul.f32 1.0, %v6368
      %v6370 = vrcp.pop %v6292
      %v6371 = vmul.f32 %v6292, %v6370
      %v6372 = vsub.f32 1.0, %v6371
      %v6373 = vmul.f32 %v6370, %v6372
      %v6374 = vadd.f32 %v6370, %v6373
      %vm6375 = vweird.f32 %v6292
      %vm6376 = vweird.f32 %v6370
      %vm6377 = vmor %vm6375, %vm6376
      %v6378 = vsel %vm6377, %v6370, %v6374
      %v6379 = vand.u32 2147483647, %v6292
      %vm6380 = vcmp.eq.f32.partialorder %v6379, 8.507059e+37
      %v6381 = vand.u32 %v6292, 2147483648
      %v6382 = vor.u32 1.1754944e-38, %v6381
      %v6383 = vsel %vm6380, %v6382, %v6378
      %v6384 = vmul.f32 1.0, %v6383
      %v6385 = vrcp.pop %v6293
      %v6386 = vmul.f32 %v6293, %v6385
      %v6387 = vsub.f32 1.0, %v6386
      %v6388 = vmul.f32 %v6385, %v6387
      %v6389 = vadd.f32 %v6385, %v6388
      %vm6390 = vweird.f32 %v6293
      %vm6391 = vweird.f32 %v6385
      %vm6392 = vmor %vm6390, %vm6391
      %v6393 = vsel %vm6392, %v6385, %v6389
      %v6394 = vand.u32 2147483647, %v6293
      %vm6395 = vcmp.eq.f32.partialorder %v6394, 8.507059e+37
      %v6396 = vand.u32 %v6293, 2147483648
      %v6397 = vor.u32 1.1754944e-38, %v6396
      %v6398 = vsel %vm6395, %v6397, %v6393
      %v6399 = vmul.f32 1.0, %v6398
      %v6400 = vrcp.pop %v6294
      %v6401 = vmul.f32 %v6294, %v6400
      %v6402 = vsub.f32 1.0, %v6401
      %v6403 = vmul.f32 %v6400, %v6402
      %v6404 = vadd.f32 %v6400, %v6403
      %vm6405 = vweird.f32 %v6294
      %vm6406 = vweird.f32 %v6400
      %vm6407 = vmor %vm6405, %vm6406
      %v6408 = vsel %vm6407, %v6400, %v6404
      %v6409 = vand.u32 2147483647, %v6294
      %vm6410 = vcmp.eq.f32.partialorder %v6409, 8.507059e+37
      %v6411 = vand.u32 %v6294, 2147483648
      %v6412 = vor.u32 1.1754944e-38, %v6411
      %v6413 = vsel %vm6410, %v6412, %v6408
      %v6414 = vmul.f32 1.0, %v6413
      %v6415 = vadd.f32 %v6238, %v1505
      %v6416 = vadd.f32 %v6240, %v1510
      %v6417 = vadd.f32 %v6243, %v1515
      %v6418 = vadd.f32 %v6245, %v1520
      %v6419 = vadd.f32 %v6005, %v1529
      %v6420 = vadd.f32 %v6007, %v1534
      %v6421 = vadd.f32 %v6010, %v1539
      %v6422 = vadd.f32 %v6012, %v1544
      %v6423 = vmul.f32 %v6309, %v6419
      %v6424 = vmul.f32 %v6324, %v6420
      %v6425 = vmul.f32 %v6339, %v6421
      %v6426 = vmul.f32 %v6354, %v6422
      %v6427 = vadd.f32 %v6415, %v6423
      %v6428 = vadd.f32 %v6416, %v6424
      %v6429 = vadd.f32 %v6417, %v6425
      %v6430 = vadd.f32 %v6418, %v6426
      %v6431 = vtanh.pop %v6427
      %v6432 = vtanh.pop %v6428
      %v6433 = vtanh.pop %v6429
      %v6434 = vtanh.pop %v6430
      %v6435 = vsub.f32 1.0, %v6369
      %v6436 = vsub.f32 1.0, %v6384
      %v6437 = vsub.f32 1.0, %v6399
      %v6438 = vsub.f32 1.0, %v6414
      %v6439 = vmul.f32 %v6435, %v6431
      %v6440 = vmul.f32 %v6436, %v6432
      %v6441 = vmul.f32 %v6437, %v6433
      %v6442 = vmul.f32 %v6438, %v6434
      %v6443 = vmul.f32 %v6369, %v5937
      %v6444 = vmul.f32 %v6384, %v5938
      %v6445 = vmul.f32 %v6399, %v5939
      %v6446 = vmul.f32 %v6414, %v5940
      %v6447 = vadd.f32 %v6439, %v6443
      %v6448 = vadd.f32 %v6440, %v6444
      %v6449 = vadd.f32 %v6441, %v6445
      %v6450 = vadd.f32 %v6442, %v6446
      %vm6451 = vcmp.gt.s32.totalorder %v423, 8
      %v6452 = vsel %vm6451, 1, 0
      %v6453 = vcvt.s32.f32 %v6452
      %v6455 = vperm.slane %v6453, 0
      %v6457 = vmul.f32 %v6455, %v6202
      %v6458 = vmul.f32 %v6455, %v6203
      %v6459 = vmul.f32 %v6455, %v6204
      %v6460 = vmul.f32 %v6455, %v6205
      %v6461 = vsub.f32 1.0, %v6453
      %v6463 = vperm.slane %v6461, 0
      %v6465 = vmul.f32 %v6463, %v5925
      %v6466 = vmul.f32 %v6463, %v5926
      %v6467 = vmul.f32 %v6463, %v5927
      %v6468 = vmul.f32 %v6463, %v5928
      %v6469 = vadd.f32 %v6457, %v6465
      %v6470 = vadd.f32 %v6458, %v6466
      %v6471 = vadd.f32 %v6459, %v6467
      %v6472 = vadd.f32 %v6460, %v6468
      %v6473 = vmul.f32 %v6455, %v6447
      %v6474 = vmul.f32 %v6455, %v6448
      %v6475 = vmul.f32 %v6455, %v6449
      %v6476 = vmul.f32 %v6455, %v6450
      %v6477 = vmul.f32 %v6463, %v5937
      %v6478 = vmul.f32 %v6463, %v5938
      %v6479 = vmul.f32 %v6463, %v5939
      %v6480 = vmul.f32 %v6463, %v5940
      %v6481 = vadd.f32 %v6473, %v6477
      %v6482 = vadd.f32 %v6474, %v6478
      %v6483 = vadd.f32 %v6475, %v6479
      %v6484 = vadd.f32 %v6476, %v6480
      %v6485 = vpack.c.bf16 %v6470, %v6469
      %v6486 = vpack.c.bf16 %v6472, %v6471
      %v6487 = vpack.c.bf16 %v6482, %v6481
      %v6488 = vpack.c.bf16 %v6484, %v6483
      %6489 = vmatpush.bf16.msra.mxu0 0
      %6490 = vmatpush.bf16.msra.mxu0 0
      %6491 = vmatpush.bf16.msra.mxu0 0
      %6492 = vmatpush.bf16.msra.mxu0 0
      %6493 = vmatpush.bf16.msra.mxu0 %v6488
      %6494 = vmatpush.bf16.msra.mxu0 %v6487
      %6495 = vmatpush.bf16.msra.mxu0 %v6486
      %6496 = vmatpush.bf16.msra.mxu0 %v6485
      %6497 = vmatmul.bf16.gmra.mxu0 %v888
      %v6498 = vpop.f32.mrf.mxu0
      %v6499 = vadd.f32 0.0, %v6498
      %v6500 = vpop.f32.mrf.mxu0
      %v6501 = vadd.f32 0.0, %v6500
      %6502 = vmatmul.bf16.gmra.mxu0 %v891
      %v6503 = vpop.f32.mrf.mxu0
      %v6504 = vadd.f32 0.0, %v6503
      %v6505 = vpop.f32.mrf.mxu0
      %v6506 = vadd.f32 0.0, %v6505
      %6507 = vmatmul.bf16.gmra.mxu0 %v894
      %v6508 = vpop.f32.mrf.mxu0
      %v6509 = vadd.f32 0.0, %v6508
      %v6510 = vpop.f32.mrf.mxu0
      %v6511 = vadd.f32 0.0, %v6510
      %6512 = vmatmul.bf16.gmra.mxu0 %v897
      %v6513 = vpop.f32.mrf.mxu0
      %v6514 = vadd.f32 0.0, %v6513
      %v6515 = vpop.f32.mrf.mxu0
      %v6516 = vadd.f32 0.0, %v6515
      %6517 = vmatmul.bf16.gmra.mxu0 %v900
      %v6518 = vpop.f32.mrf.mxu0
      %v6519 = vadd.f32 0.0, %v6518
      %v6520 = vpop.f32.mrf.mxu0
      %v6521 = vadd.f32 0.0, %v6520
      %6522 = vmatmul.bf16.gmra.mxu0 %v903
      %v6523 = vpop.f32.mrf.mxu0
      %v6524 = vadd.f32 0.0, %v6523
      %v6525 = vpop.f32.mrf.mxu0
      %v6526 = vadd.f32 0.0, %v6525
      %6527 = vmatmul.bf16.gmra.mxu0 %v906
      %v6528 = vpop.f32.mrf.mxu0
      %v6529 = vadd.f32 0.0, %v6528
      %v6530 = vpop.f32.mrf.mxu0
      %v6531 = vadd.f32 0.0, %v6530
      %6532 = vmatmul.bf16.gmra.mxu0 %v909
      %v6533 = vpop.f32.mrf.mxu0
      %v6534 = vadd.f32 0.0, %v6533
      %v6535 = vpop.f32.mrf.mxu0
      %v6536 = vadd.f32 0.0, %v6535
      %6537 = vmatmul.bf16.gmra.mxu0 %v912
      %v6538 = vpop.f32.mrf.mxu0
      %v6539 = vadd.f32 0.0, %v6538
      %v6540 = vpop.f32.mrf.mxu0
      %v6541 = vadd.f32 0.0, %v6540
      %6542 = vmatmul.bf16.gmra.mxu0 %v915
      %v6543 = vpop.f32.mrf.mxu0
      %v6544 = vadd.f32 0.0, %v6543
      %v6545 = vpop.f32.mrf.mxu0
      %v6546 = vadd.f32 0.0, %v6545
      %6547 = vmatmul.bf16.gmra.mxu0 %v918
      %v6548 = vpop.f32.mrf.mxu0
      %v6549 = vadd.f32 0.0, %v6548
      %v6550 = vpop.f32.mrf.mxu0
      %v6551 = vadd.f32 0.0, %v6550
      %6552 = vmatmul.bf16.gmra.mxu0 %v921
      %v6553 = vpop.f32.mrf.mxu0
      %v6554 = vadd.f32 0.0, %v6553
      %v6555 = vpop.f32.mrf.mxu0
      %v6556 = vadd.f32 0.0, %v6555
      %6557 = vdwg.mxu0
      %6566 = vrot.lane.b32.xlu0 %v6499, 32
      %v6567 = vpop.permute.xlu0 %6566
      %6568 = vrot.lane.b32.xlu0 %v6501, 32
      %v6569 = vpop.permute.xlu0 %6568
      %6570 = vrot.lane.b32.xlu0 %v6504, 32
      %v6571 = vpop.permute.xlu0 %6570
      %6572 = vrot.lane.b32.xlu0 %v6506, 32
      %v6573 = vpop.permute.xlu0 %6572
      %6574 = vrot.lane.b32.xlu0 %v6509, 32
      %v6575 = vpop.permute.xlu0 %6574
      %6576 = vrot.lane.b32.xlu0 %v6511, 32
      %v6577 = vpop.permute.xlu0 %6576
      %6578 = vrot.lane.b32.xlu0 %v6514, 32
      %v6579 = vpop.permute.xlu0 %6578
      %6580 = vrot.lane.b32.xlu0 %v6516, 32
      %v6581 = vpop.permute.xlu0 %6580
      %v6590 = vadd.f32 %v797, %v6567
      %v6591 = vadd.f32 %v799, %v6569
      %v6592 = vadd.f32 %v802, %v6571
      %v6593 = vadd.f32 %v804, %v6573
      %v6594 = vadd.f32 %v807, %v6575
      %v6595 = vadd.f32 %v809, %v6577
      %v6596 = vadd.f32 %v812, %v6579
      %v6597 = vadd.f32 %v814, %v6581
      %v6598 = vxor.u32 %v6590, 2147483648
      %v6599 = vxor.u32 %v6591, 2147483648
      %v6600 = vxor.u32 %v6592, 2147483648
      %v6601 = vxor.u32 %v6593, 2147483648
      %v6602 = vxor.u32 %v6594, 2147483648
      %v6603 = vxor.u32 %v6595, 2147483648
      %v6604 = vxor.u32 %v6596, 2147483648
      %v6605 = vxor.u32 %v6597, 2147483648
      %v6606 = vmul.f32 %v6598, 1.442695
      %v6607 = vpow.pop %v6606
      %v6608 = vmul.f32 %v6599, 1.442695
      %v6609 = vpow.pop %v6608
      %v6610 = vmul.f32 %v6600, 1.442695
      %v6611 = vpow.pop %v6610
      %v6612 = vmul.f32 %v6601, 1.442695
      %v6613 = vpow.pop %v6612
      %v6614 = vmul.f32 %v6602, 1.442695
      %v6615 = vpow.pop %v6614
      %v6616 = vmul.f32 %v6603, 1.442695
      %v6617 = vpow.pop %v6616
      %v6618 = vmul.f32 %v6604, 1.442695
      %v6619 = vpow.pop %v6618
      %v6620 = vmul.f32 %v6605, 1.442695
      %v6621 = vpow.pop %v6620
      %v6622 = vadd.f32 %v6607, 1.0
      %v6623 = vadd.f32 %v6609, 1.0
      %v6624 = vadd.f32 %v6611, 1.0
      %v6625 = vadd.f32 %v6613, 1.0
      %v6626 = vadd.f32 %v6615, 1.0
      %v6627 = vadd.f32 %v6617, 1.0
      %v6628 = vadd.f32 %v6619, 1.0
      %v6629 = vadd.f32 %v6621, 1.0
      %v6630 = vrcp.pop %v6622
      %v6631 = vmul.f32 %v6622, %v6630
      %v6632 = vsub.f32 1.0, %v6631
      %v6633 = vmul.f32 %v6630, %v6632
      %v6634 = vadd.f32 %v6630, %v6633
      %vm6635 = vweird.f32 %v6622
      %vm6636 = vweird.f32 %v6630
      %vm6637 = vmor %vm6635, %vm6636
      %v6638 = vsel %vm6637, %v6630, %v6634
      %v6639 = vand.u32 2147483647, %v6622
      %vm6640 = vcmp.eq.f32.partialorder %v6639, 8.507059e+37
      %v6641 = vand.u32 %v6622, 2147483648
      %v6642 = vor.u32 1.1754944e-38, %v6641
      %v6643 = vsel %vm6640, %v6642, %v6638
      %v6644 = vmul.f32 1.0, %v6643
      %v6645 = vrcp.pop %v6623
      %v6646 = vmul.f32 %v6623, %v6645
      %v6647 = vsub.f32 1.0, %v6646
      %v6648 = vmul.f32 %v6645, %v6647
      %v6649 = vadd.f32 %v6645, %v6648
      %vm6650 = vweird.f32 %v6623
      %vm6651 = vweird.f32 %v6645
      %vm6652 = vmor %vm6650, %vm6651
      %v6653 = vsel %vm6652, %v6645, %v6649
      %v6654 = vand.u32 2147483647, %v6623
      %vm6655 = vcmp.eq.f32.partialorder %v6654, 8.507059e+37
      %v6656 = vand.u32 %v6623, 2147483648
      %v6657 = vor.u32 1.1754944e-38, %v6656
      %v6658 = vsel %vm6655, %v6657, %v6653
      %v6659 = vmul.f32 1.0, %v6658
      %v6660 = vrcp.pop %v6624
      %v6661 = vmul.f32 %v6624, %v6660
      %v6662 = vsub.f32 1.0, %v6661
      %v6663 = vmul.f32 %v6660, %v6662
      %v6664 = vadd.f32 %v6660, %v6663
      %vm6665 = vweird.f32 %v6624
      %vm6666 = vweird.f32 %v6660
      %vm6667 = vmor %vm6665, %vm6666
      %v6668 = vsel %vm6667, %v6660, %v6664
      %v6669 = vand.u32 2147483647, %v6624
      %vm6670 = vcmp.eq.f32.partialorder %v6669, 8.507059e+37
      %v6671 = vand.u32 %v6624, 2147483648
      %v6672 = vor.u32 1.1754944e-38, %v6671
      %v6673 = vsel %vm6670, %v6672, %v6668
      %v6674 = vmul.f32 1.0, %v6673
      %v6675 = vrcp.pop %v6625
      %v6676 = vmul.f32 %v6625, %v6675
      %v6677 = vsub.f32 1.0, %v6676
      %v6678 = vmul.f32 %v6675, %v6677
      %v6679 = vadd.f32 %v6675, %v6678
      %vm6680 = vweird.f32 %v6625
      %vm6681 = vweird.f32 %v6675
      %vm6682 = vmor %vm6680, %vm6681
      %v6683 = vsel %vm6682, %v6675, %v6679
      %v6684 = vand.u32 2147483647, %v6625
      %vm6685 = vcmp.eq.f32.partialorder %v6684, 8.507059e+37
      %v6686 = vand.u32 %v6625, 2147483648
      %v6687 = vor.u32 1.1754944e-38, %v6686
      %v6688 = vsel %vm6685, %v6687, %v6683
      %v6689 = vmul.f32 1.0, %v6688
      %v6690 = vrcp.pop %v6626
      %v6691 = vmul.f32 %v6626, %v6690
      %v6692 = vsub.f32 1.0, %v6691
      %v6693 = vmul.f32 %v6690, %v6692
      %v6694 = vadd.f32 %v6690, %v6693
      %vm6695 = vweird.f32 %v6626
      %vm6696 = vweird.f32 %v6690
      %vm6697 = vmor %vm6695, %vm6696
      %v6698 = vsel %vm6697, %v6690, %v6694
      %v6699 = vand.u32 2147483647, %v6626
      %vm6700 = vcmp.eq.f32.partialorder %v6699, 8.507059e+37
      %v6701 = vand.u32 %v6626, 2147483648
      %v6702 = vor.u32 1.1754944e-38, %v6701
      %v6703 = vsel %vm6700, %v6702, %v6698
      %v6704 = vmul.f32 1.0, %v6703
      %v6705 = vrcp.pop %v6627
      %v6706 = vmul.f32 %v6627, %v6705
      %v6707 = vsub.f32 1.0, %v6706
      %v6708 = vmul.f32 %v6705, %v6707
      %v6709 = vadd.f32 %v6705, %v6708
      %vm6710 = vweird.f32 %v6627
      %vm6711 = vweird.f32 %v6705
      %vm6712 = vmor %vm6710, %vm6711
      %v6713 = vsel %vm6712, %v6705, %v6709
      %v6714 = vand.u32 2147483647, %v6627
      %vm6715 = vcmp.eq.f32.partialorder %v6714, 8.507059e+37
      %v6716 = vand.u32 %v6627, 2147483648
      %v6717 = vor.u32 1.1754944e-38, %v6716
      %v6718 = vsel %vm6715, %v6717, %v6713
      %v6719 = vmul.f32 1.0, %v6718
      %v6720 = vrcp.pop %v6628
      %v6721 = vmul.f32 %v6628, %v6720
      %v6722 = vsub.f32 1.0, %v6721
      %v6723 = vmul.f32 %v6720, %v6722
      %v6724 = vadd.f32 %v6720, %v6723
      %vm6725 = vweird.f32 %v6628
      %vm6726 = vweird.f32 %v6720
      %vm6727 = vmor %vm6725, %vm6726
      %v6728 = vsel %vm6727, %v6720, %v6724
      %v6729 = vand.u32 2147483647, %v6628
      %vm6730 = vcmp.eq.f32.partialorder %v6729, 8.507059e+37
      %v6731 = vand.u32 %v6628, 2147483648
      %v6732 = vor.u32 1.1754944e-38, %v6731
      %v6733 = vsel %vm6730, %v6732, %v6728
      %v6734 = vmul.f32 1.0, %v6733
      %v6735 = vrcp.pop %v6629
      %v6736 = vmul.f32 %v6629, %v6735
      %v6737 = vsub.f32 1.0, %v6736
      %v6738 = vmul.f32 %v6735, %v6737
      %v6739 = vadd.f32 %v6735, %v6738
      %vm6740 = vweird.f32 %v6629
      %vm6741 = vweird.f32 %v6735
      %vm6742 = vmor %vm6740, %vm6741
      %v6743 = vsel %vm6742, %v6735, %v6739
      %v6744 = vand.u32 2147483647, %v6629
      %vm6745 = vcmp.eq.f32.partialorder %v6744, 8.507059e+37
      %v6746 = vand.u32 %v6629, 2147483648
      %v6747 = vor.u32 1.1754944e-38, %v6746
      %v6748 = vsel %vm6745, %v6747, %v6743
      %v6749 = vmul.f32 1.0, %v6748
      %v6750 = vadd.f32 %v6519, %v1155
      %v6751 = vadd.f32 %v6521, %v1160
      %v6752 = vadd.f32 %v6524, %v1165
      %v6753 = vadd.f32 %v6526, %v1170
      %6758 = vrot.lane.b32.xlu0 %v6750, 32
      %v6759 = vpop.permute.xlu0 %6758
      %6760 = vrot.lane.b32.xlu0 %v6751, 32
      %v6761 = vpop.permute.xlu0 %6760
      %6762 = vrot.lane.b32.xlu0 %v6752, 32
      %v6763 = vpop.permute.xlu0 %6762
      %6764 = vrot.lane.b32.xlu0 %v6753, 32
      %v6765 = vpop.permute.xlu0 %6764
      %v6770 = vmul.f32 %v6644, %v6759
      %v6771 = vmul.f32 %v6659, %v6761
      %v6772 = vmul.f32 %v6674, %v6763
      %v6773 = vmul.f32 %v6689, %v6765
      %v6774 = vadd.f32 %v817, %v6770
      %v6775 = vadd.f32 %v819, %v6771
      %v6776 = vadd.f32 %v822, %v6772
      %v6777 = vadd.f32 %v824, %v6773
      %v6778 = vtanh.pop %v6774
      %v6779 = vtanh.pop %v6775
      %v6780 = vtanh.pop %v6776
      %v6781 = vtanh.pop %v6777
      %v6782 = vsub.f32 1.0, %v6704
      %v6783 = vsub.f32 1.0, %v6719
      %v6784 = vsub.f32 1.0, %v6734
      %v6785 = vsub.f32 1.0, %v6749
      %v6786 = vmul.f32 %v6782, %v6778
      %v6787 = vmul.f32 %v6783, %v6779
      %v6788 = vmul.f32 %v6784, %v6780
      %v6789 = vmul.f32 %v6785, %v6781
      %6794 = vrot.lane.b32.xlu0 %v6469, 32
      %v6795 = vpop.permute.xlu0 %6794
      %6796 = vrot.lane.b32.xlu0 %v6470, 32
      %v6797 = vpop.permute.xlu0 %6796
      %6798 = vrot.lane.b32.xlu0 %v6471, 32
      %v6799 = vpop.permute.xlu0 %6798
      %6800 = vrot.lane.b32.xlu0 %v6472, 32
      %v6801 = vpop.permute.xlu0 %6800
      %v6806 = vmul.f32 %v6704, %v6795
      %v6807 = vmul.f32 %v6719, %v6797
      %v6808 = vmul.f32 %v6734, %v6799
      %v6809 = vmul.f32 %v6749, %v6801
      %v6810 = vadd.f32 %v6786, %v6806
      %v6811 = vadd.f32 %v6787, %v6807
      %v6812 = vadd.f32 %v6788, %v6808
      %v6813 = vadd.f32 %v6789, %v6809
      %v6814 = vpack.c.bf16 %v6811, %v6810
      %v6815 = vpack.c.bf16 %v6813, %v6812
      %6818 = vrot.lane.b32.xlu0 %v6814, 96
      %v6819 = vpop.permute.xlu0 %6818
      %6820 = vrot.lane.b32.xlu0 %v6815, 96
      %v6821 = vpop.permute.xlu0 %6820
      %6824 = vmatpush.bf16.msra.mxu0 0
      %6825 = vmatpush.bf16.msra.mxu0 0
      %6826 = vmatpush.bf16.msra.mxu0 0
      %6827 = vmatpush.bf16.msra.mxu0 0
      %6828 = vmatpush.bf16.msra.mxu0 0
      %6829 = vmatpush.bf16.msra.mxu0 0
      %6830 = vmatpush.bf16.msra.mxu0 %v6821
      %6831 = vmatpush.bf16.msra.mxu0 %v6819
      %6832 = vmatmul.bf16.gmra.mxu0 %v1238
      %v6833 = vpop.f32.mrf.mxu0
      %v6834 = vadd.f32 0.0, %v6833
      %v6835 = vpop.f32.mrf.mxu0
      %v6836 = vadd.f32 0.0, %v6835
      %6837 = vmatmul.bf16.gmra.mxu0 %v1241
      %v6838 = vpop.f32.mrf.mxu0
      %v6839 = vadd.f32 0.0, %v6838
      %v6840 = vpop.f32.mrf.mxu0
      %v6841 = vadd.f32 0.0, %v6840
      %6842 = vmatmul.bf16.gmra.mxu0 %v1244
      %v6843 = vpop.f32.mrf.mxu0
      %v6844 = vadd.f32 0.0, %v6843
      %v6845 = vpop.f32.mrf.mxu0
      %v6846 = vadd.f32 0.0, %v6845
      %6847 = vmatmul.bf16.gmra.mxu0 %v1247
      %v6848 = vpop.f32.mrf.mxu0
      %v6849 = vadd.f32 0.0, %v6848
      %v6850 = vpop.f32.mrf.mxu0
      %v6851 = vadd.f32 0.0, %v6850
      %6852 = vmatmul.bf16.gmra.mxu0 %v1250
      %v6853 = vpop.f32.mrf.mxu0
      %v6854 = vadd.f32 0.0, %v6853
      %v6855 = vpop.f32.mrf.mxu0
      %v6856 = vadd.f32 0.0, %v6855
      %6857 = vmatmul.bf16.gmra.mxu0 %v1253
      %v6858 = vpop.f32.mrf.mxu0
      %v6859 = vadd.f32 0.0, %v6858
      %v6860 = vpop.f32.mrf.mxu0
      %v6861 = vadd.f32 0.0, %v6860
      %6862 = vdwg.mxu0
      %v6863 = vadd.f32 %v6834, %v6529
      %v6864 = vadd.f32 %v6836, %v6531
      %v6865 = vadd.f32 %v6839, %v6534
      %v6866 = vadd.f32 %v6841, %v6536
      %v6867 = vadd.f32 %v6844, %v6539
      %v6868 = vadd.f32 %v6846, %v6541
      %v6869 = vadd.f32 %v6849, %v6544
      %v6870 = vadd.f32 %v6851, %v6546
      %v6871 = vadd.f32 %v6863, %v1305
      %v6872 = vadd.f32 %v6864, %v1310
      %v6873 = vadd.f32 %v6865, %v1315
      %v6874 = vadd.f32 %v6866, %v1320
      %v6875 = vadd.f32 %v6867, %v1325
      %v6876 = vadd.f32 %v6868, %v1330
      %v6877 = vadd.f32 %v6869, %v1335
      %v6878 = vadd.f32 %v6870, %v1340
      %v6879 = vxor.u32 %v6871, 2147483648
      %v6880 = vxor.u32 %v6872, 2147483648
      %v6881 = vxor.u32 %v6873, 2147483648
      %v6882 = vxor.u32 %v6874, 2147483648
      %v6883 = vxor.u32 %v6875, 2147483648
      %v6884 = vxor.u32 %v6876, 2147483648
      %v6885 = vxor.u32 %v6877, 2147483648
      %v6886 = vxor.u32 %v6878, 2147483648
      %v6887 = vmul.f32 %v6879, 1.442695
      %v6888 = vpow.pop %v6887
      %v6889 = vmul.f32 %v6880, 1.442695
      %v6890 = vpow.pop %v6889
      %v6891 = vmul.f32 %v6881, 1.442695
      %v6892 = vpow.pop %v6891
      %v6893 = vmul.f32 %v6882, 1.442695
      %v6894 = vpow.pop %v6893
      %v6895 = vmul.f32 %v6883, 1.442695
      %v6896 = vpow.pop %v6895
      %v6897 = vmul.f32 %v6884, 1.442695
      %v6898 = vpow.pop %v6897
      %v6899 = vmul.f32 %v6885, 1.442695
      %v6900 = vpow.pop %v6899
      %v6901 = vmul.f32 %v6886, 1.442695
      %v6902 = vpow.pop %v6901
      %v6903 = vadd.f32 %v6888, 1.0
      %v6904 = vadd.f32 %v6890, 1.0
      %v6905 = vadd.f32 %v6892, 1.0
      %v6906 = vadd.f32 %v6894, 1.0
      %v6907 = vadd.f32 %v6896, 1.0
      %v6908 = vadd.f32 %v6898, 1.0
      %v6909 = vadd.f32 %v6900, 1.0
      %v6910 = vadd.f32 %v6902, 1.0
      %v6911 = vrcp.pop %v6903
      %v6912 = vmul.f32 %v6903, %v6911
      %v6913 = vsub.f32 1.0, %v6912
      %v6914 = vmul.f32 %v6911, %v6913
      %v6915 = vadd.f32 %v6911, %v6914
      %vm6916 = vweird.f32 %v6903
      %vm6917 = vweird.f32 %v6911
      %vm6918 = vmor %vm6916, %vm6917
      %v6919 = vsel %vm6918, %v6911, %v6915
      %v6920 = vand.u32 2147483647, %v6903
      %vm6921 = vcmp.eq.f32.partialorder %v6920, 8.507059e+37
      %v6922 = vand.u32 %v6903, 2147483648
      %v6923 = vor.u32 1.1754944e-38, %v6922
      %v6924 = vsel %vm6921, %v6923, %v6919
      %v6925 = vmul.f32 1.0, %v6924
      %v6926 = vrcp.pop %v6904
      %v6927 = vmul.f32 %v6904, %v6926
      %v6928 = vsub.f32 1.0, %v6927
      %v6929 = vmul.f32 %v6926, %v6928
      %v6930 = vadd.f32 %v6926, %v6929
      %vm6931 = vweird.f32 %v6904
      %vm6932 = vweird.f32 %v6926
      %vm6933 = vmor %vm6931, %vm6932
      %v6934 = vsel %vm6933, %v6926, %v6930
      %v6935 = vand.u32 2147483647, %v6904
      %vm6936 = vcmp.eq.f32.partialorder %v6935, 8.507059e+37
      %v6937 = vand.u32 %v6904, 2147483648
      %v6938 = vor.u32 1.1754944e-38, %v6937
      %v6939 = vsel %vm6936, %v6938, %v6934
      %v6940 = vmul.f32 1.0, %v6939
      %v6941 = vrcp.pop %v6905
      %v6942 = vmul.f32 %v6905, %v6941
      %v6943 = vsub.f32 1.0, %v6942
      %v6944 = vmul.f32 %v6941, %v6943
      %v6945 = vadd.f32 %v6941, %v6944
      %vm6946 = vweird.f32 %v6905
      %vm6947 = vweird.f32 %v6941
      %vm6948 = vmor %vm6946, %vm6947
      %v6949 = vsel %vm6948, %v6941, %v6945
      %v6950 = vand.u32 2147483647, %v6905
      %vm6951 = vcmp.eq.f32.partialorder %v6950, 8.507059e+37
      %v6952 = vand.u32 %v6905, 2147483648
      %v6953 = vor.u32 1.1754944e-38, %v6952
      %v6954 = vsel %vm6951, %v6953, %v6949
      %v6955 = vmul.f32 1.0, %v6954
      %v6956 = vrcp.pop %v6906
      %v6957 = vmul.f32 %v6906, %v6956
      %v6958 = vsub.f32 1.0, %v6957
      %v6959 = vmul.f32 %v6956, %v6958
      %v6960 = vadd.f32 %v6956, %v6959
      %vm6961 = vweird.f32 %v6906
      %vm6962 = vweird.f32 %v6956
      %vm6963 = vmor %vm6961, %vm6962
      %v6964 = vsel %vm6963, %v6956, %v6960
      %v6965 = vand.u32 2147483647, %v6906
      %vm6966 = vcmp.eq.f32.partialorder %v6965, 8.507059e+37
      %v6967 = vand.u32 %v6906, 2147483648
      %v6968 = vor.u32 1.1754944e-38, %v6967
      %v6969 = vsel %vm6966, %v6968, %v6964
      %v6970 = vmul.f32 1.0, %v6969
      %v6971 = vrcp.pop %v6907
      %v6972 = vmul.f32 %v6907, %v6971
      %v6973 = vsub.f32 1.0, %v6972
      %v6974 = vmul.f32 %v6971, %v6973
      %v6975 = vadd.f32 %v6971, %v6974
      %vm6976 = vweird.f32 %v6907
      %vm6977 = vweird.f32 %v6971
      %vm6978 = vmor %vm6976, %vm6977
      %v6979 = vsel %vm6978, %v6971, %v6975
      %v6980 = vand.u32 2147483647, %v6907
      %vm6981 = vcmp.eq.f32.partialorder %v6980, 8.507059e+37
      %v6982 = vand.u32 %v6907, 2147483648
      %v6983 = vor.u32 1.1754944e-38, %v6982
      %v6984 = vsel %vm6981, %v6983, %v6979
      %v6985 = vmul.f32 1.0, %v6984
      %v6986 = vrcp.pop %v6908
      %v6987 = vmul.f32 %v6908, %v6986
      %v6988 = vsub.f32 1.0, %v6987
      %v6989 = vmul.f32 %v6986, %v6988
      %v6990 = vadd.f32 %v6986, %v6989
      %vm6991 = vweird.f32 %v6908
      %vm6992 = vweird.f32 %v6986
      %vm6993 = vmor %vm6991, %vm6992
      %v6994 = vsel %vm6993, %v6986, %v6990
      %v6995 = vand.u32 2147483647, %v6908
      %vm6996 = vcmp.eq.f32.partialorder %v6995, 8.507059e+37
      %v6997 = vand.u32 %v6908, 2147483648
      %v6998 = vor.u32 1.1754944e-38, %v6997
      %v6999 = vsel %vm6996, %v6998, %v6994
      %v7000 = vmul.f32 1.0, %v6999
      %v7001 = vrcp.pop %v6909
      %v7002 = vmul.f32 %v6909, %v7001
      %v7003 = vsub.f32 1.0, %v7002
      %v7004 = vmul.f32 %v7001, %v7003
      %v7005 = vadd.f32 %v7001, %v7004
      %vm7006 = vweird.f32 %v6909
      %vm7007 = vweird.f32 %v7001
      %vm7008 = vmor %vm7006, %vm7007
      %v7009 = vsel %vm7008, %v7001, %v7005
      %v7010 = vand.u32 2147483647, %v6909
      %vm7011 = vcmp.eq.f32.partialorder %v7010, 8.507059e+37
      %v7012 = vand.u32 %v6909, 2147483648
      %v7013 = vor.u32 1.1754944e-38, %v7012
      %v7014 = vsel %vm7011, %v7013, %v7009
      %v7015 = vmul.f32 1.0, %v7014
      %v7016 = vrcp.pop %v6910
      %v7017 = vmul.f32 %v6910, %v7016
      %v7018 = vsub.f32 1.0, %v7017
      %v7019 = vmul.f32 %v7016, %v7018
      %v7020 = vadd.f32 %v7016, %v7019
      %vm7021 = vweird.f32 %v6910
      %vm7022 = vweird.f32 %v7016
      %vm7023 = vmor %vm7021, %vm7022
      %v7024 = vsel %vm7023, %v7016, %v7020
      %v7025 = vand.u32 2147483647, %v6910
      %vm7026 = vcmp.eq.f32.partialorder %v7025, 8.507059e+37
      %v7027 = vand.u32 %v6910, 2147483648
      %v7028 = vor.u32 1.1754944e-38, %v7027
      %v7029 = vsel %vm7026, %v7028, %v7024
      %v7030 = vmul.f32 1.0, %v7029
      %v7031 = vadd.f32 %v6854, %v1505
      %v7032 = vadd.f32 %v6856, %v1510
      %v7033 = vadd.f32 %v6859, %v1515
      %v7034 = vadd.f32 %v6861, %v1520
      %v7035 = vadd.f32 %v6549, %v1529
      %v7036 = vadd.f32 %v6551, %v1534
      %v7037 = vadd.f32 %v6554, %v1539
      %v7038 = vadd.f32 %v6556, %v1544
      %v7039 = vmul.f32 %v6925, %v7035
      %v7040 = vmul.f32 %v6940, %v7036
      %v7041 = vmul.f32 %v6955, %v7037
      %v7042 = vmul.f32 %v6970, %v7038
      %v7043 = vadd.f32 %v7031, %v7039
      %v7044 = vadd.f32 %v7032, %v7040
      %v7045 = vadd.f32 %v7033, %v7041
      %v7046 = vadd.f32 %v7034, %v7042
      %v7047 = vtanh.pop %v7043
      %v7048 = vtanh.pop %v7044
      %v7049 = vtanh.pop %v7045
      %v7050 = vtanh.pop %v7046
      %v7051 = vsub.f32 1.0, %v6985
      %v7052 = vsub.f32 1.0, %v7000
      %v7053 = vsub.f32 1.0, %v7015
      %v7054 = vsub.f32 1.0, %v7030
      %v7055 = vmul.f32 %v7051, %v7047
      %v7056 = vmul.f32 %v7052, %v7048
      %v7057 = vmul.f32 %v7053, %v7049
      %v7058 = vmul.f32 %v7054, %v7050
      %v7059 = vmul.f32 %v6985, %v6481
      %v7060 = vmul.f32 %v7000, %v6482
      %v7061 = vmul.f32 %v7015, %v6483
      %v7062 = vmul.f32 %v7030, %v6484
      %v7063 = vadd.f32 %v7055, %v7059
      %v7064 = vadd.f32 %v7056, %v7060
      %v7065 = vadd.f32 %v7057, %v7061
      %v7066 = vadd.f32 %v7058, %v7062
      %vm7067 = vcmp.gt.s32.totalorder %v423, 9
      %v7068 = vsel %vm7067, 1, 0
      %v7069 = vcvt.s32.f32 %v7068
      %v7071 = vperm.slane %v7069, 0
      %v7073 = vmul.f32 %v7071, %v7063
      %v7074 = vmul.f32 %v7071, %v7064
      %v7075 = vmul.f32 %v7071, %v7065
      %v7076 = vmul.f32 %v7071, %v7066
      %v7077 = vsub.f32 1.0, %v7069
      %v7079 = vperm.slane %v7077, 0
      %v7081 = vmul.f32 %v7079, %v6481
      %v7082 = vmul.f32 %v7079, %v6482
      %v7083 = vmul.f32 %v7079, %v6483
      %v7084 = vmul.f32 %v7079, %v6484
      %v7085 = vadd.f32 %v7073, %v7081
      %v7086 = vadd.f32 %v7074, %v7082
      %v7087 = vadd.f32 %v7075, %v7083
      %v7088 = vadd.f32 %v7076, %v7084
      %v7089 = vld [vmem:[%s10] sm:$0xf]
      %v7090 = vld [vmem:[%s10 + $0x4] sm:$0xf]
      %v7091 = vpack.c.bf16 %v7086, %v7085
      %v7092 = vpack.c.bf16 %v7088, %v7087
      %v7093 = vld [vmem:[%s11] sm:$0xff]
      %v7094 = vld [vmem:[%s11 + $0x8] sm:$0xff]
      %7096 = vset.pattern.permute.xlu0 0
      %7097 = vperm.xlu0 %7096, %v7093
      %v7098 = vpop.permute.xlu0 %7097
      %7101 = vset.pattern.permute.xlu0 0
      %7102 = vperm.xlu0 %7101, %v7094
      %v7103 = vpop.permute.xlu0 %7102
      %v7107 = vunpack.c.l.b16 %v7089
      %v7108 = vunpack.c.l.b16 %v7090
      %v7109 = vpack.c.b16 %v7108, %v7107
      %v7111 = vsel %vm1236, %v7109, 0
      %7113 = vmatpush.bf16.msra.mxu0 0
      %7114 = vmatpush.bf16.msra.mxu0 0
      %7115 = vmatpush.bf16.msra.mxu0 0
      %7116 = vmatpush.bf16.msra.mxu0 0
      %7117 = vmatpush.bf16.msra.mxu0 0
      %7118 = vmatpush.bf16.msra.mxu0 0
      %7119 = vmatpush.bf16.msra.mxu0 %v7092
      %7120 = vmatpush.bf16.msra.mxu0 %v7091
      %7121 = vmatmul.bf16.gmra.mxu0 %v7111
      %v7122 = vpop.f32.mrf.mxu0
      %v7123 = vadd.f32 %v7098, %v7122
      %v7124 = vpop.f32.mrf.mxu0
      %v7125 = vadd.f32 %v7103, %v7124
      %7126 = vdwg.mxu0
      %v7127 = vtanh.pop %v7123
      %v7128 = vtanh.pop %v7125
      %7131 = vrot.lane.b32.xlu0 %v7127, 112
      %v7132 = vpop.permute.xlu0 %7131
      %7133 = vrot.lane.b32.xlu0 %v7128, 112
      %v7134 = vpop.permute.xlu0 %7133
      %v7137 = vmul.f32 %v7127, %v7132
      %v7138 = vmul.f32 %v7128, %v7134
      %vm7139 = vcmask 130048
      %v7140 = vsel %vm7139, %v7137, 0.0
      %v7141 = vsel %vm7139, %v7138, 0.0
      %v7142 = vadd.f32 %v7140, %v7141
      %v7143 = vrot.slane %v7142, 4
      %v7144 = vadd.f32 %v7142, %v7143
      %v7145 = vrot.slane %v7144, 2
      %v7146 = vadd.f32 %v7144, %v7145
      %v7147 = vrot.slane %v7146, 1
      %v7148 = vadd.f32 %v7146, %v7147
      %v7149 = vmul.f32 %v7127, %v7127
      %v7150 = vmul.f32 %v7128, %v7128
      %v7151 = vsel %vm7139, %v7149, 0.0
      %v7152 = vsel %vm7139, %v7150, 0.0
      %v7153 = vadd.f32 %v7151, %v7152
      %v7154 = vrot.slane %v7153, 4
      %v7155 = vadd.f32 %v7153, %v7154
      %v7156 = vrot.slane %v7155, 2
      %v7157 = vadd.f32 %v7155, %v7156
      %v7158 = vrot.slane %v7157, 1
      %v7159 = vadd.f32 %v7157, %v7158
      %vm7160 = vcmask 261248
      %v7161 = vsel %vm7160, %v7149, 0.0
      %v7162 = vsel %vm7160, %v7150, 0.0
      %v7163 = vadd.f32 %v7161, %v7162
      %v7164 = vrot.slane %v7163, 4
      %v7165 = vadd.f32 %v7163, %v7164
      %v7166 = vrot.slane %v7165, 2
      %v7167 = vadd.f32 %v7165, %v7166
      %v7168 = vrot.slane %v7167, 1
      %v7169 = vadd.f32 %v7167, %v7168
      %v7170 = vmax.f32 %v7159, 1e-16
      %v7171 = vmax.f32 %v7169, 1e-16
      %7173 = vrot.lane.b32.xlu0 %v7171, 112
      %v7174 = vpop.permute.xlu0 %7173
      %v7176 = vmul.f32 %v7170, %v7174
      %v7177 = vrsqrt.pop %v7176
      %v7178 = vmul.f32 %v7177, %v7176
      %v7179 = vmul.f32 %v7178, %v7177
      %v7180 = vmul.f32 0.5, %v7179
      %v7181 = vsub.f32 1.5, %v7180
      %v7182 = vmul.f32 %v7177, %v7181
      %vm7183 = vweird.f32 %v7176
      %vm7184 = vweird.f32 %v7177
      %vm7185 = vmor %vm7183, %vm7184
      %v7186 = vsel %vm7185, %v7177, %v7182
      %v7187 = vmul.f32 %v7148, %v7186
      %vm7188 = vcmask 122880
      %7189 = vst.msk [vmem:[%s420] sm:$0x1] %vm7188, %v7187
      %p7190 = scmp.lt.s32.totalorder %s23, 3
      %s7191 = scalar_select %p7190, %s23, 3
      %s7192 = scalar_lea.vmem %s12, %s7191
      // Predicated region
      $region69: #{reward_model_forward.1} parent=67 // pred_check
        %p7193 = pneg %p303
      $region70: #{reward_model_forward.1} parent=67 // pred_check_branch
        %7195 = sbr.rel (%p7193) target = $region72
      $region71: #{reward_model_forward.1} parent=67 // pred_region
        _
      $region72: #{reward_model_forward.1} parent=67 // pred_fallthru
        _
    $region68: #{reward_model_forward.1} parent=5 // pred_fallthru
      _
    %p7196 = scmp.le.s32.totalorder 2, %s18
    // Predicated region
    $region73: #{reward_model_forward.1} parent=5 // pred_check
      %p7197 = pneg %p7196
    $region74: #{reward_model_forward.1} parent=5 // pred_check_branch
      %7199 = sbr.rel (%p7197) target = $region76
    $region75: #{reward_model_forward.1} parent=5 // pred_region
      %s7200 = ssub.s32 %s18, 2
      // Predicated region
      $region77: #{reward_model_forward.1} parent=75 // pred_check
        %p7201 = pneg %p309
      $region78: #{reward_model_forward.1} parent=75 // pred_check_branch
        %7203 = sbr.rel (%p7201) target = $region80
      $region79: #{reward_model_forward.1} parent=75 // pred_region
        %p7204 = scmp.lt.s32.totalorder %s24, 3
        %s7205 = scalar_select %p7204, %s24, 3
        %s7206 = scalar_lea.vmem %s12, %s7205
      $region80: #{reward_model_forward.1} parent=75 // pred_fallthru
        _
    $region76: #{reward_model_forward.1} parent=5 // pred_fallthru
      _
  $region6: #{reward_model_forward.1} parent=0 // loop_footer
    %s22 = sadd.s32 1, %s18
  $region7: #{reward_model_forward.1} parent=0 // loop_footer_branch
    %17 = sbr.rel target = $region3
  $region8: #{reward_model_forward.1} parent=0 // loop_exit
    _

</llo_original>
